<compile_context>
chip_gen: v5e
topology: v5e:2x2
jax: 0.10.0
libtpu: 0.0.40
codegen_flags: <defaults>
</compile_context>

<pallas_src>
import functools
import math

import jax
import jax.numpy as jnp
import numpy as np
from jax.experimental import pallas as pl
from jax.experimental.pallas import tpu as pltpu

WINDOW_SIZE = 11
SIGMA = 1.5
CHANNELS = 3                      # module hardcodes self.channel = 3
WEIGHTS = (0.0448, 0.2856, 0.3001, 0.2363, 0.1333)
C1 = 0.01 ** 2
C2 = 0.03 ** 2


def _round_up(v, m):
    return (v + m - 1) // m * m


def _gaussian_1d(window_size, sigma):
    g = np.array(
        [math.exp(-((x - window_size // 2) ** 2) / float(2 * sigma ** 2))
         for x in range(window_size)],
        dtype=np.float32,
    )
    return (g / g.sum()).astype(np.float32)


def _band_mats(h, w, hp, wp, gauss):
    """Band matrices implementing the separable 'same' Gaussian conv."""
    ws = gauss.shape[0]
    gw = np.zeros((wp, w), np.float32)        # W-direction (right matmul)
    for j in range(w):
        gw[j:j + ws, j] = gauss
    gh = np.zeros((h, hp), np.float32)        # H-direction (left matmul)
    for i in range(h):
        gh[i, i:i + ws] = gauss
    return gh, gw


def _ms_ssim_kernel(*refs, metas, weights):
    """All 5 pyramid levels fused; writes prod_l(weight_l * mean(ssim_map_l))."""
    n_lvl = len(metas)
    in_refs = refs[:4 * n_lvl]
    out_ref = refs[4 * n_lvl]
    scratch_refs = refs[4 * n_lvl + 1:]

    result = None
    for lvl in range(n_lvl):
        bc, h, w, hp, wp = metas[lvl]
        x1_ref, x2_ref, gw_ref, gh_ref = in_refs[4 * lvl:4 * lvl + 4]
        s_ref = scratch_refs[lvl]

        x1 = x1_ref[...]                                   # (bc*hp, wp), zero padded
        x2 = x2_ref[...]
        # Five conv operands fused into a single sublane-stacked operand
        # (zero padding commutes with the elementwise products).
        xs = jnp.concatenate([x1, x2, x1 * x1, x2 * x2, x1 * x2], axis=0)

        # Matmul 1: W-direction Gaussian conv, one (5*bc*hp, wp)@(wp, w) dot.
        t = jnp.dot(xs, gw_ref[...], preferred_element_type=jnp.float32)

        # Re-layout (5*bc, hp, w) -> (hp, 5*bc*w): image b's rows become lane
        # block [b*w, (b+1)*w).  Row reads are 8-aligned (hp % 8 == 0); the
        # stores are static masked lane-offset stores into VMEM scratch.
        # No block-diagonal kron anywhere.
        for b in range(5 * bc):
            s_ref[:, b * w:(b + 1) * w] = t[b * hp:(b + 1) * hp, :]

        # Matmul 2: H-direction Gaussian conv, one lane-dense
        # (h, hp)@(hp, 5*bc*w) dot.
        u = jnp.dot(gh_ref[...], s_ref[...], preferred_element_type=jnp.float32)

        n = bc * w
        mu1 = u[:, 0 * n:1 * n]
        mu2 = u[:, 1 * n:2 * n]
        e11 = u[:, 2 * n:3 * n]
        e22 = u[:, 3 * n:4 * n]
        e12 = u[:, 4 * n:5 * n]

        mu1_sq = mu1 * mu1
        mu2_sq = mu2 * mu2
        mu1_mu2 = mu1 * mu2
        sigma1_sq = e11 - mu1_sq
        sigma2_sq = e22 - mu2_sq
        sigma12 = e12 - mu1_mu2

        num = (2.0 * mu1_mu2 + C1) * (2.0 * sigma12 + C2)
        den = (mu1_sq + mu2_sq + C1) * (sigma1_sq + sigma2_sq + C2)
        ssim_map = num / den                               # exact f32 division

        level_val = jnp.sum(ssim_map) * (1.0 / float(bc * h * w)) * weights[lvl]
        result = level_val if result is None else result * level_val

    out_ref[0] = result


def _avg_pool2(x):
    # F.avg_pool2d(kernel_size=2, stride=2) for even H, W (plain-JAX glue).
    b, c, h, w = x.shape
    return x.reshape(b, c, h // 2, 2, w // 2, 2).mean(axis=(3, 5))


def _prepare_level(x1, x2, gauss):
    """Zero padding + NCHW -> (BC*Hp, Wp) flattening + band matrices."""
    b, c, h, w = x1.shape
    pad = gauss.shape[0] // 2
    hp = _round_up(h + 2 * pad, 8)            # sublane-aligned padded height
    wp = w + 2 * pad
    bc = b * c
    gh, gw = _band_mats(h, w, hp, wp, gauss)

    def prep(x):
        x = x.reshape(bc, h, w)
        x = jnp.pad(x, ((0, 0), (pad, hp - h - pad), (pad, pad)))
        return x.reshape(bc * hp, wp)

    return prep(x1), prep(x2), jnp.asarray(gw), jnp.asarray(gh), (bc, h, w, hp, wp)


@jax.jit
def ms_ssim(pred, target):
    """Matches MS_SSIM.forward(pred, target) for NCHW float32 inputs (C=3)."""
    gauss = _gaussian_1d(WINDOW_SIZE, SIGMA)
    x = pred.astype(jnp.float32)
    y = target.astype(jnp.float32)

    inputs = []
    metas = []
    for i in range(len(WEIGHTS)):
        x1p, x2p, gw, gh, meta = _prepare_level(x, y, gauss)
        inputs.extend([x1p, x2p, gw, gh])
        metas.append(meta)
        if i < len(WEIGHTS) - 1:
            x = _avg_pool2(x)
            y = _avg_pool2(y)

    kernel = functools.partial(_ms_ssim_kernel, metas=tuple(metas), weights=WEIGHTS)
    scratch_shapes = [pltpu.VMEM((hp, 5 * bc * w), jnp.float32)
                      for (bc, h, w, hp, wp) in metas]

    out = pl.pallas_call(
        kernel,
        out_shape=jax.ShapeDtypeStruct((1,), jnp.float32),
        in_specs=[pl.BlockSpec(memory_space=pltpu.MemorySpace.VMEM)] * len(inputs),
        out_specs=pl.BlockSpec(memory_space=pltpu.MemorySpace.SMEM),
        scratch_shapes=scratch_shapes,
        compiler_params=pltpu.CompilerParams(vmem_limit_bytes=32 * 1024 * 1024),
    )(*inputs)
    return out[0]


if __name__ == "__main__":
    key = jax.random.PRNGKey(0)
    k1, k2 = jax.random.split(key)
    # NCHW, channels=3 as required by the module; 32x32 survives the 4 levels
    # of 2x2 average pooling (32 -> 16 -> 8 -> 4 -> 2).
    pred = jax.random.uniform(k1, (2, CHANNELS, 32, 32), dtype=jnp.float32)
    target = jax.random.uniform(k2, (2, CHANNELS, 32, 32), dtype=jnp.float32)
    out = ms_ssim(pred, target)
    jax.block_until_ready(out)
    print("KERNEL_OK")
</pallas_src>

<mosaic_0001>
module attributes {stable_mosaic.version = 11 : i64} {
  func.func @_ms_ssim_kernel(%arg0: memref<288x42xf32, #tpu.memory_space<vmem>>, %arg1: memref<288x42xf32, #tpu.memory_space<vmem>>, %arg2: memref<42x32xf32, #tpu.memory_space<vmem>>, %arg3: memref<32x48xf32, #tpu.memory_space<vmem>>, %arg4: memref<192x26xf32, #tpu.memory_space<vmem>>, %arg5: memref<192x26xf32, #tpu.memory_space<vmem>>, %arg6: memref<26x16xf32, #tpu.memory_space<vmem>>, %arg7: memref<16x32xf32, #tpu.memory_space<vmem>>, %arg8: memref<144x18xf32, #tpu.memory_space<vmem>>, %arg9: memref<144x18xf32, #tpu.memory_space<vmem>>, %arg10: memref<18x8xf32, #tpu.memory_space<vmem>>, %arg11: memref<8x24xf32, #tpu.memory_space<vmem>>, %arg12: memref<96x14xf32, #tpu.memory_space<vmem>>, %arg13: memref<96x14xf32, #tpu.memory_space<vmem>>, %arg14: memref<14x4xf32, #tpu.memory_space<vmem>>, %arg15: memref<4x16xf32, #tpu.memory_space<vmem>>, %arg16: memref<96x12xf32, #tpu.memory_space<vmem>>, %arg17: memref<96x12xf32, #tpu.memory_space<vmem>>, %arg18: memref<12x2xf32, #tpu.memory_space<vmem>>, %arg19: memref<2x16xf32, #tpu.memory_space<vmem>>, %arg20: memref<1xf32, #tpu.memory_space<smem>>, %arg21: memref<48x960xf32, #tpu.memory_space<vmem>>, %arg22: memref<32x480xf32, #tpu.memory_space<vmem>>, %arg23: memref<24x240xf32, #tpu.memory_space<vmem>>, %arg24: memref<16x120xf32, #tpu.memory_space<vmem>>, %arg25: memref<16x60xf32, #tpu.memory_space<vmem>>) attributes {dimension_semantics = [], scalar_prefetch = 0 : i64, scratch_operands = 5 : i64, tpu.core_type = #tpu.core_type<tc>} {
    %c0 = arith.constant 0 : index
    %c0_0 = arith.constant 0 : index
    %0 = vector.load %arg0[%c0, %c0_0] : memref<288x42xf32, #tpu.memory_space<vmem>>, vector<288x42xf32>
    %c0_1 = arith.constant 0 : index
    %c0_2 = arith.constant 0 : index
    %1 = vector.load %arg1[%c0_1, %c0_2] : memref<288x42xf32, #tpu.memory_space<vmem>>, vector<288x42xf32>
    %2 = arith.mulf %0, %0 : vector<288x42xf32>
    %3 = arith.mulf %1, %1 : vector<288x42xf32>
    %4 = arith.mulf %0, %1 : vector<288x42xf32>
    %5 = tpu.concatenate %0, %1, %2, %3, %4 in 0 : vector<288x42xf32>, vector<288x42xf32>, vector<288x42xf32>, vector<288x42xf32>, vector<288x42xf32> -> vector<1440x42xf32>
    %c0_3 = arith.constant 0 : index
    %c0_4 = arith.constant 0 : index
    %6 = vector.load %arg2[%c0_3, %c0_4] : memref<42x32xf32, #tpu.memory_space<vmem>>, vector<42x32xf32>
    %cst = arith.constant dense<0.000000e+00> : vector<1440x32xf32>
    %7 = tpu.matmul %5, %6, %cst {dimension_numbers = #tpu.dot_dimension_numbers<[1], [0], [0], [1], [0, 0, 1, 1], [], []>} : vector<1440x42xf32>, vector<42x32xf32>, vector<1440x32xf32> -> vector<1440x32xf32>
    %8 = vector.extract_strided_slice %7 {offsets = [0, 0], sizes = [48, 32], strides = [1, 1]} : vector<1440x32xf32> to vector<48x32xf32>
    %c0_5 = arith.constant 0 : index
    %c0_6 = arith.constant 0 : index
    %9 = vector.load %arg21[%c0_5, %c0_6] : memref<48x960xf32, #tpu.memory_space<vmem>>, vector<48x32xf32>
    tpu.vector_store %arg21[%c0_5, %c0_6], %8 {strides = array<i32>} : memref<48x960xf32, #tpu.memory_space<vmem>>, vector<48x32xf32>,
    %10 = vector.extract_strided_slice %7 {offsets = [48, 0], sizes = [48, 32], strides = [1, 1]} : vector<1440x32xf32> to vector<48x32xf32>
    %c0_7 = arith.constant 0 : index
    %c32 = arith.constant 32 : index
    %11 = vector.load %arg21[%c0_7, %c32] : memref<48x960xf32, #tpu.memory_space<vmem>>, vector<48x32xf32>
    tpu.vector_store %arg21[%c0_7, %c32], %10 {strides = array<i32>} : memref<48x960xf32, #tpu.memory_space<vmem>>, vector<48x32xf32>,
    %12 = vector.extract_strided_slice %7 {offsets = [96, 0], sizes = [48, 32], strides = [1, 1]} : vector<1440x32xf32> to vector<48x32xf32>
    %c0_8 = arith.constant 0 : index
    %c64 = arith.constant 64 : index
    %13 = vector.load %arg21[%c0_8, %c64] : memref<48x960xf32, #tpu.memory_space<vmem>>, vector<48x32xf32>
    tpu.vector_store %arg21[%c0_8, %c64], %12 {strides = array<i32>} : memref<48x960xf32, #tpu.memory_space<vmem>>, vector<48x32xf32>,
    %14 = vector.extract_strided_slice %7 {offsets = [144, 0], sizes = [48, 32], strides = [1, 1]} : vector<1440x32xf32> to vector<48x32xf32>
    %c0_9 = arith.constant 0 : index
    %c96 = arith.constant 96 : index
    %15 = vector.load %arg21[%c0_9, %c96] : memref<48x960xf32, #tpu.memory_space<vmem>>, vector<48x32xf32>
    tpu.vector_store %arg21[%c0_9, %c96], %14 {strides = array<i32>} : memref<48x960xf32, #tpu.memory_space<vmem>>, vector<48x32xf32>,
    %16 = vector.extract_strided_slice %7 {offsets = [192, 0], sizes = [48, 32], strides = [1, 1]} : vector<1440x32xf32> to vector<48x32xf32>
    %c0_10 = arith.constant 0 : index
    %c128 = arith.constant 128 : index
    %17 = vector.load %arg21[%c0_10, %c128] : memref<48x960xf32, #tpu.memory_space<vmem>>, vector<48x32xf32>
    tpu.vector_store %arg21[%c0_10, %c128], %16 {strides = array<i32>} : memref<48x960xf32, #tpu.memory_space<vmem>>, vector<48x32xf32>,
    %18 = vector.extract_strided_slice %7 {offsets = [240, 0], sizes = [48, 32], strides = [1, 1]} : vector<1440x32xf32> to vector<48x32xf32>
    %c0_11 = arith.constant 0 : index
    %c160 = arith.constant 160 : index
    %19 = vector.load %arg21[%c0_11, %c160] : memref<48x960xf32, #tpu.memory_space<vmem>>, vector<48x32xf32>
    tpu.vector_store %arg21[%c0_11, %c160], %18 {strides = array<i32>} : memref<48x960xf32, #tpu.memory_space<vmem>>, vector<48x32xf32>,
    %20 = vector.extract_strided_slice %7 {offsets = [288, 0], sizes = [48, 32], strides = [1, 1]} : vector<1440x32xf32> to vector<48x32xf32>
    %c0_12 = arith.constant 0 : index
    %c192 = arith.constant 192 : index
    %21 = vector.load %arg21[%c0_12, %c192] : memref<48x960xf32, #tpu.memory_space<vmem>>, vector<48x32xf32>
    tpu.vector_store %arg21[%c0_12, %c192], %20 {strides = array<i32>} : memref<48x960xf32, #tpu.memory_space<vmem>>, vector<48x32xf32>,
    %22 = vector.extract_strided_slice %7 {offsets = [336, 0], sizes = [48, 32], strides = [1, 1]} : vector<1440x32xf32> to vector<48x32xf32>
    %c0_13 = arith.constant 0 : index
    %c224 = arith.constant 224 : index
    %23 = vector.load %arg21[%c0_13, %c224] : memref<48x960xf32, #tpu.memory_space<vmem>>, vector<48x32xf32>
    tpu.vector_store %arg21[%c0_13, %c224], %22 {strides = array<i32>} : memref<48x960xf32, #tpu.memory_space<vmem>>, vector<48x32xf32>,
    %24 = vector.extract_strided_slice %7 {offsets = [384, 0], sizes = [48, 32], strides = [1, 1]} : vector<1440x32xf32> to vector<48x32xf32>
    %c0_14 = arith.constant 0 : index
    %c256 = arith.constant 256 : index
    %25 = vector.load %arg21[%c0_14, %c256] : memref<48x960xf32, #tpu.memory_space<vmem>>, vector<48x32xf32>
    tpu.vector_store %arg21[%c0_14, %c256], %24 {strides = array<i32>} : memref<48x960xf32, #tpu.memory_space<vmem>>, vector<48x32xf32>,
    %26 = vector.extract_strided_slice %7 {offsets = [432, 0], sizes = [48, 32], strides = [1, 1]} : vector<1440x32xf32> to vector<48x32xf32>
    %c0_15 = arith.constant 0 : index
    %c288 = arith.constant 288 : index
    %27 = vector.load %arg21[%c0_15, %c288] : memref<48x960xf32, #tpu.memory_space<vmem>>, vector<48x32xf32>
    tpu.vector_store %arg21[%c0_15, %c288], %26 {strides = array<i32>} : memref<48x960xf32, #tpu.memory_space<vmem>>, vector<48x32xf32>,
    %28 = vector.extract_strided_slice %7 {offsets = [480, 0], sizes = [48, 32], strides = [1, 1]} : vector<1440x32xf32> to vector<48x32xf32>
    %c0_16 = arith.constant 0 : index
    %c320 = arith.constant 320 : index
    %29 = vector.load %arg21[%c0_16, %c320] : memref<48x960xf32, #tpu.memory_space<vmem>>, vector<48x32xf32>
    tpu.vector_store %arg21[%c0_16, %c320], %28 {strides = array<i32>} : memref<48x960xf32, #tpu.memory_space<vmem>>, vector<48x32xf32>,
    %30 = vector.extract_strided_slice %7 {offsets = [528, 0], sizes = [48, 32], strides = [1, 1]} : vector<1440x32xf32> to vector<48x32xf32>
    %c0_17 = arith.constant 0 : index
    %c352 = arith.constant 352 : index
    %31 = vector.load %arg21[%c0_17, %c352] : memref<48x960xf32, #tpu.memory_space<vmem>>, vector<48x32xf32>
    tpu.vector_store %arg21[%c0_17, %c352], %30 {strides = array<i32>} : memref<48x960xf32, #tpu.memory_space<vmem>>, vector<48x32xf32>,
    %32 = vector.extract_strided_slice %7 {offsets = [576, 0], sizes = [48, 32], strides = [1, 1]} : vector<1440x32xf32> to vector<48x32xf32>
    %c0_18 = arith.constant 0 : index
    %c384 = arith.constant 384 : index
    %33 = vector.load %arg21[%c0_18, %c384] : memref<48x960xf32, #tpu.memory_space<vmem>>, vector<48x32xf32>
    tpu.vector_store %arg21[%c0_18, %c384], %32 {strides = array<i32>} : memref<48x960xf32, #tpu.memory_space<vmem>>, vector<48x32xf32>,
    %34 = vector.extract_strided_slice %7 {offsets = [624, 0], sizes = [48, 32], strides = [1, 1]} : vector<1440x32xf32> to vector<48x32xf32>
    %c0_19 = arith.constant 0 : index
    %c416 = arith.constant 416 : index
    %35 = vector.load %arg21[%c0_19, %c416] : memref<48x960xf32, #tpu.memory_space<vmem>>, vector<48x32xf32>
    tpu.vector_store %arg21[%c0_19, %c416], %34 {strides = array<i32>} : memref<48x960xf32, #tpu.memory_space<vmem>>, vector<48x32xf32>,
    %36 = vector.extract_strided_slice %7 {offsets = [672, 0], sizes = [48, 32], strides = [1, 1]} : vector<1440x32xf32> to vector<48x32xf32>
    %c0_20 = arith.constant 0 : index
    %c448 = arith.constant 448 : index
    %37 = vector.load %arg21[%c0_20, %c448] : memref<48x960xf32, #tpu.memory_space<vmem>>, vector<48x32xf32>
    tpu.vector_store %arg21[%c0_20, %c448], %36 {strides = array<i32>} : memref<48x960xf32, #tpu.memory_space<vmem>>, vector<48x32xf32>,
    %38 = vector.extract_strided_slice %7 {offsets = [720, 0], sizes = [48, 32], strides = [1, 1]} : vector<1440x32xf32> to vector<48x32xf32>
    %c0_21 = arith.constant 0 : index
    %c480 = arith.constant 480 : index
    %39 = vector.load %arg21[%c0_21, %c480] : memref<48x960xf32, #tpu.memory_space<vmem>>, vector<48x32xf32>
    tpu.vector_store %arg21[%c0_21, %c480], %38 {strides = array<i32>} : memref<48x960xf32, #tpu.memory_space<vmem>>, vector<48x32xf32>,
    %40 = vector.extract_strided_slice %7 {offsets = [768, 0], sizes = [48, 32], strides = [1, 1]} : vector<1440x32xf32> to vector<48x32xf32>
    %c0_22 = arith.constant 0 : index
    %c512 = arith.constant 512 : index
    %41 = vector.load %arg21[%c0_22, %c512] : memref<48x960xf32, #tpu.memory_space<vmem>>, vector<48x32xf32>
    tpu.vector_store %arg21[%c0_22, %c512], %40 {strides = array<i32>} : memref<48x960xf32, #tpu.memory_space<vmem>>, vector<48x32xf32>,
    %42 = vector.extract_strided_slice %7 {offsets = [816, 0], sizes = [48, 32], strides = [1, 1]} : vector<1440x32xf32> to vector<48x32xf32>
    %c0_23 = arith.constant 0 : index
    %c544 = arith.constant 544 : index
    %43 = vector.load %arg21[%c0_23, %c544] : memref<48x960xf32, #tpu.memory_space<vmem>>, vector<48x32xf32>
    tpu.vector_store %arg21[%c0_23, %c544], %42 {strides = array<i32>} : memref<48x960xf32, #tpu.memory_space<vmem>>, vector<48x32xf32>,
    %44 = vector.extract_strided_slice %7 {offsets = [864, 0], sizes = [48, 32], strides = [1, 1]} : vector<1440x32xf32> to vector<48x32xf32>
    %c0_24 = arith.constant 0 : index
    %c576 = arith.constant 576 : index
    %45 = vector.load %arg21[%c0_24, %c576] : memref<48x960xf32, #tpu.memory_space<vmem>>, vector<48x32xf32>
    tpu.vector_store %arg21[%c0_24, %c576], %44 {strides = array<i32>} : memref<48x960xf32, #tpu.memory_space<vmem>>, vector<48x32xf32>,
    %46 = vector.extract_strided_slice %7 {offsets = [912, 0], sizes = [48, 32], strides = [1, 1]} : vector<1440x32xf32> to vector<48x32xf32>
    %c0_25 = arith.constant 0 : index
    %c608 = arith.constant 608 : index
    %47 = vector.load %arg21[%c0_25, %c608] : memref<48x960xf32, #tpu.memory_space<vmem>>, vector<48x32xf32>
    tpu.vector_store %arg21[%c0_25, %c608], %46 {strides = array<i32>} : memref<48x960xf32, #tpu.memory_space<vmem>>, vector<48x32xf32>,
    %48 = vector.extract_strided_slice %7 {offsets = [960, 0], sizes = [48, 32], strides = [1, 1]} : vector<1440x32xf32> to vector<48x32xf32>
    %c0_26 = arith.constant 0 : index
    %c640 = arith.constant 640 : index
    %49 = vector.load %arg21[%c0_26, %c640] : memref<48x960xf32, #tpu.memory_space<vmem>>, vector<48x32xf32>
    tpu.vector_store %arg21[%c0_26, %c640], %48 {strides = array<i32>} : memref<48x960xf32, #tpu.memory_space<vmem>>, vector<48x32xf32>,
    %50 = vector.extract_strided_slice %7 {offsets = [1008, 0], sizes = [48, 32], strides = [1, 1]} : vector<1440x32xf32> to vector<48x32xf32>
    %c0_27 = arith.constant 0 : index
    %c672 = arith.constant 672 : index
    %51 = vector.load %arg21[%c0_27, %c672] : memref<48x960xf32, #tpu.memory_space<vmem>>, vector<48x32xf32>
    tpu.vector_store %arg21[%c0_27, %c672], %50 {strides = array<i32>} : memref<48x960xf32, #tpu.memory_space<vmem>>, vector<48x32xf32>,
    %52 = vector.extract_strided_slice %7 {offsets = [1056, 0], sizes = [48, 32], strides = [1, 1]} : vector<1440x32xf32> to vector<48x32xf32>
    %c0_28 = arith.constant 0 : index
    %c704 = arith.constant 704 : index
    %53 = vector.load %arg21[%c0_28, %c704] : memref<48x960xf32, #tpu.memory_space<vmem>>, vector<48x32xf32>
    tpu.vector_store %arg21[%c0_28, %c704], %52 {strides = array<i32>} : memref<48x960xf32, #tpu.memory_space<vmem>>, vector<48x32xf32>,
    %54 = vector.extract_strided_slice %7 {offsets = [1104, 0], sizes = [48, 32], strides = [1, 1]} : vector<1440x32xf32> to vector<48x32xf32>
    %c0_29 = arith.constant 0 : index
    %c736 = arith.constant 736 : index
    %55 = vector.load %arg21[%c0_29, %c736] : memref<48x960xf32, #tpu.memory_space<vmem>>, vector<48x32xf32>
    tpu.vector_store %arg21[%c0_29, %c736], %54 {strides = array<i32>} : memref<48x960xf32, #tpu.memory_space<vmem>>, vector<48x32xf32>,
    %56 = vector.extract_strided_slice %7 {offsets = [1152, 0], sizes = [48, 32], strides = [1, 1]} : vector<1440x32xf32> to vector<48x32xf32>
    %c0_30 = arith.constant 0 : index
    %c768 = arith.constant 768 : index
    %57 = vector.load %arg21[%c0_30, %c768] : memref<48x960xf32, #tpu.memory_space<vmem>>, vector<48x32xf32>
    tpu.vector_store %arg21[%c0_30, %c768], %56 {strides = array<i32>} : memref<48x960xf32, #tpu.memory_space<vmem>>, vector<48x32xf32>,
    %58 = vector.extract_strided_slice %7 {offsets = [1200, 0], sizes = [48, 32], strides = [1, 1]} : vector<1440x32xf32> to vector<48x32xf32>
    %c0_31 = arith.constant 0 : index
    %c800 = arith.constant 800 : index
    %59 = vector.load %arg21[%c0_31, %c800] : memref<48x960xf32, #tpu.memory_space<vmem>>, vector<48x32xf32>
    tpu.vector_store %arg21[%c0_31, %c800], %58 {strides = array<i32>} : memref<48x960xf32, #tpu.memory_space<vmem>>, vector<48x32xf32>,
    %60 = vector.extract_strided_slice %7 {offsets = [1248, 0], sizes = [48, 32], strides = [1, 1]} : vector<1440x32xf32> to vector<48x32xf32>
    %c0_32 = arith.constant 0 : index
    %c832 = arith.constant 832 : index
    %61 = vector.load %arg21[%c0_32, %c832] : memref<48x960xf32, #tpu.memory_space<vmem>>, vector<48x32xf32>
    tpu.vector_store %arg21[%c0_32, %c832], %60 {strides = array<i32>} : memref<48x960xf32, #tpu.memory_space<vmem>>, vector<48x32xf32>,
    %62 = vector.extract_strided_slice %7 {offsets = [1296, 0], sizes = [48, 32], strides = [1, 1]} : vector<1440x32xf32> to vector<48x32xf32>
    %c0_33 = arith.constant 0 : index
    %c864 = arith.constant 864 : index
    %63 = vector.load %arg21[%c0_33, %c864] : memref<48x960xf32, #tpu.memory_space<vmem>>, vector<48x32xf32>
    tpu.vector_store %arg21[%c0_33, %c864], %62 {strides = array<i32>} : memref<48x960xf32, #tpu.memory_space<vmem>>, vector<48x32xf32>,
    %64 = vector.extract_strided_slice %7 {offsets = [1344, 0], sizes = [48, 32], strides = [1, 1]} : vector<1440x32xf32> to vector<48x32xf32>
    %c0_34 = arith.constant 0 : index
    %c896 = arith.constant 896 : index
    %65 = vector.load %arg21[%c0_34, %c896] : memref<48x960xf32, #tpu.memory_space<vmem>>, vector<48x32xf32>
    tpu.vector_store %arg21[%c0_34, %c896], %64 {strides = array<i32>} : memref<48x960xf32, #tpu.memory_space<vmem>>, vector<48x32xf32>,
    %66 = vector.extract_strided_slice %7 {offsets = [1392, 0], sizes = [48, 32], strides = [1, 1]} : vector<1440x32xf32> to vector<48x32xf32>
    %c0_35 = arith.constant 0 : index
    %c928 = arith.constant 928 : index
    %67 = vector.load %arg21[%c0_35, %c928] : memref<48x960xf32, #tpu.memory_space<vmem>>, vector<48x32xf32>
    tpu.vector_store %arg21[%c0_35, %c928], %66 {strides = array<i32>} : memref<48x960xf32, #tpu.memory_space<vmem>>, vector<48x32xf32>,
    %c0_36 = arith.constant 0 : index
    %c0_37 = arith.constant 0 : index
    %68 = vector.load %arg3[%c0_36, %c0_37] : memref<32x48xf32, #tpu.memory_space<vmem>>, vector<32x48xf32>
    %c0_38 = arith.constant 0 : index
    %c0_39 = arith.constant 0 : index
    %69 = vector.load %arg21[%c0_38, %c0_39] : memref<48x960xf32, #tpu.memory_space<vmem>>, vector<48x960xf32>
    %cst_40 = arith.constant dense<0.000000e+00> : vector<32x960xf32>
    %70 = tpu.matmul %68, %69, %cst_40 {dimension_numbers = #tpu.dot_dimension_numbers<[1], [0], [0], [1], [0, 0, 1, 1], [], []>} : vector<32x48xf32>, vector<48x960xf32>, vector<32x960xf32> -> vector<32x960xf32>
    %71 = vector.extract_strided_slice %70 {offsets = [0, 0], sizes = [32, 192], strides = [1, 1]} : vector<32x960xf32> to vector<32x192xf32>
    %72 = vector.extract_strided_slice %70 {offsets = [0, 192], sizes = [32, 192], strides = [1, 1]} : vector<32x960xf32> to vector<32x192xf32>
    %73 = vector.extract_strided_slice %70 {offsets = [0, 384], sizes = [32, 192], strides = [1, 1]} : vector<32x960xf32> to vector<32x192xf32>
    %74 = vector.extract_strided_slice %70 {offsets = [0, 576], sizes = [32, 192], strides = [1, 1]} : vector<32x960xf32> to vector<32x192xf32>
    %75 = vector.extract_strided_slice %70 {offsets = [0, 768], sizes = [32, 192], strides = [1, 1]} : vector<32x960xf32> to vector<32x192xf32>
    %76 = arith.mulf %71, %71 : vector<32x192xf32>
    %77 = arith.mulf %72, %72 : vector<32x192xf32>
    %78 = arith.mulf %71, %72 : vector<32x192xf32>
    %79 = arith.subf %73, %76 : vector<32x192xf32>
    %80 = arith.subf %74, %77 : vector<32x192xf32>
    %81 = arith.subf %75, %78 : vector<32x192xf32>
    %cst_41 = arith.constant 2.000000e+00 : f32
    %82 = vector.broadcast %cst_41 : f32 to vector<32x192xf32>
    %83 = arith.mulf %82, %78 : vector<32x192xf32>
    %cst_42 = arith.constant 9.99999974E-5 : f32
    %84 = vector.broadcast %cst_42 : f32 to vector<32x192xf32>
    %85 = arith.addf %83, %84 : vector<32x192xf32>
    %cst_43 = arith.constant 2.000000e+00 : f32
    %86 = vector.broadcast %cst_43 : f32 to vector<32x192xf32>
    %87 = arith.mulf %86, %81 : vector<32x192xf32>
    %cst_44 = arith.constant 8.99999984E-4 : f32
    %88 = vector.broadcast %cst_44 : f32 to vector<32x192xf32>
    %89 = arith.addf %87, %88 : vector<32x192xf32>
    %90 = arith.mulf %85, %89 : vector<32x192xf32>
    %91 = arith.addf %76, %77 : vector<32x192xf32>
    %cst_45 = arith.constant 9.99999974E-5 : f32
    %92 = vector.broadcast %cst_45 : f32 to vector<32x192xf32>
    %93 = arith.addf %91, %92 : vector<32x192xf32>
    %94 = arith.addf %79, %80 : vector<32x192xf32>
    %cst_46 = arith.constant 8.99999984E-4 : f32
    %95 = vector.broadcast %cst_46 : f32 to vector<32x192xf32>
    %96 = arith.addf %94, %95 : vector<32x192xf32>
    %97 = arith.mulf %93, %96 : vector<32x192xf32>
    %98 = arith.divf %90, %97 : vector<32x192xf32>
    %99 = vector.shape_cast %98 : vector<32x192xf32> to vector<1x32x192xf32>
    %cst_47 = arith.constant dense<0.000000e+00> : vector<1xf32>
    %100 = vector.multi_reduction <add>, %99, %cst_47 [1, 2] : vector<1x32x192xf32> to vector<1xf32>
    %101 = vector.shape_cast %100 : vector<1xf32> to vector<1x1x1xf32>
    %102 = vector.extract %101[0, 0, 0] : f32 from vector<1x1x1xf32>
    %cst_48 = arith.constant 1.62760422E-4 : f32
    %103 = arith.mulf %102, %cst_48 : f32
    %cst_49 = arith.constant 4.480000e-02 : f32
    %104 = arith.mulf %103, %cst_49 : f32
    %c0_50 = arith.constant 0 : index
    %c0_51 = arith.constant 0 : index
    %105 = vector.load %arg4[%c0_50, %c0_51] : memref<192x26xf32, #tpu.memory_space<vmem>>, vector<192x26xf32>
    %c0_52 = arith.constant 0 : index
    %c0_53 = arith.constant 0 : index
    %106 = vector.load %arg5[%c0_52, %c0_53] : memref<192x26xf32, #tpu.memory_space<vmem>>, vector<192x26xf32>
    %107 = arith.mulf %105, %105 : vector<192x26xf32>
    %108 = arith.mulf %106, %106 : vector<192x26xf32>
    %109 = arith.mulf %105, %106 : vector<192x26xf32>
    %110 = tpu.concatenate %105, %106, %107, %108, %109 in 0 : vector<192x26xf32>, vector<192x26xf32>, vector<192x26xf32>, vector<192x26xf32>, vector<192x26xf32> -> vector<960x26xf32>
    %c0_54 = arith.constant 0 : index
    %c0_55 = arith.constant 0 : index
    %111 = vector.load %arg6[%c0_54, %c0_55] : memref<26x16xf32, #tpu.memory_space<vmem>>, vector<26x16xf32>
    %cst_56 = arith.constant dense<0.000000e+00> : vector<960x16xf32>
    %112 = tpu.matmul %110, %111, %cst_56 {dimension_numbers = #tpu.dot_dimension_numbers<[1], [0], [0], [1], [0, 0, 1, 1], [], []>} : vector<960x26xf32>, vector<26x16xf32>, vector<960x16xf32> -> vector<960x16xf32>
    %113 = vector.extract_strided_slice %112 {offsets = [0, 0], sizes = [32, 16], strides = [1, 1]} : vector<960x16xf32> to vector<32x16xf32>
    %c0_57 = arith.constant 0 : index
    %c0_58 = arith.constant 0 : index
    %114 = vector.load %arg22[%c0_57, %c0_58] : memref<32x480xf32, #tpu.memory_space<vmem>>, vector<32x16xf32>
    tpu.vector_store %arg22[%c0_57, %c0_58], %113 {strides = array<i32>} : memref<32x480xf32, #tpu.memory_space<vmem>>, vector<32x16xf32>,
    %115 = vector.extract_strided_slice %112 {offsets = [32, 0], sizes = [32, 16], strides = [1, 1]} : vector<960x16xf32> to vector<32x16xf32>
    %c0_59 = arith.constant 0 : index
    %c16 = arith.constant 16 : index
    %116 = vector.load %arg22[%c0_59, %c16] : memref<32x480xf32, #tpu.memory_space<vmem>>, vector<32x16xf32>
    tpu.vector_store %arg22[%c0_59, %c16], %115 {strides = array<i32>} : memref<32x480xf32, #tpu.memory_space<vmem>>, vector<32x16xf32>,
    %117 = vector.extract_strided_slice %112 {offsets = [64, 0], sizes = [32, 16], strides = [1, 1]} : vector<960x16xf32> to vector<32x16xf32>
    %c0_60 = arith.constant 0 : index
    %c32_61 = arith.constant 32 : index
    %118 = vector.load %arg22[%c0_60, %c32_61] : memref<32x480xf32, #tpu.memory_space<vmem>>, vector<32x16xf32>
    tpu.vector_store %arg22[%c0_60, %c32_61], %117 {strides = array<i32>} : memref<32x480xf32, #tpu.memory_space<vmem>>, vector<32x16xf32>,
    %119 = vector.extract_strided_slice %112 {offsets = [96, 0], sizes = [32, 16], strides = [1, 1]} : vector<960x16xf32> to vector<32x16xf32>
    %c0_62 = arith.constant 0 : index
    %c48 = arith.constant 48 : index
    %120 = vector.load %arg22[%c0_62, %c48] : memref<32x480xf32, #tpu.memory_space<vmem>>, vector<32x16xf32>
    tpu.vector_store %arg22[%c0_62, %c48], %119 {strides = array<i32>} : memref<32x480xf32, #tpu.memory_space<vmem>>, vector<32x16xf32>,
    %121 = vector.extract_strided_slice %112 {offsets = [128, 0], sizes = [32, 16], strides = [1, 1]} : vector<960x16xf32> to vector<32x16xf32>
    %c0_63 = arith.constant 0 : index
    %c64_64 = arith.constant 64 : index
    %122 = vector.load %arg22[%c0_63, %c64_64] : memref<32x480xf32, #tpu.memory_space<vmem>>, vector<32x16xf32>
    tpu.vector_store %arg22[%c0_63, %c64_64], %121 {strides = array<i32>} : memref<32x480xf32, #tpu.memory_space<vmem>>, vector<32x16xf32>,
    %123 = vector.extract_strided_slice %112 {offsets = [160, 0], sizes = [32, 16], strides = [1, 1]} : vector<960x16xf32> to vector<32x16xf32>
    %c0_65 = arith.constant 0 : index
    %c80 = arith.constant 80 : index
    %124 = vector.load %arg22[%c0_65, %c80] : memref<32x480xf32, #tpu.memory_space<vmem>>, vector<32x16xf32>
    tpu.vector_store %arg22[%c0_65, %c80], %123 {strides = array<i32>} : memref<32x480xf32, #tpu.memory_space<vmem>>, vector<32x16xf32>,
    %125 = vector.extract_strided_slice %112 {offsets = [192, 0], sizes = [32, 16], strides = [1, 1]} : vector<960x16xf32> to vector<32x16xf32>
    %c0_66 = arith.constant 0 : index
    %c96_67 = arith.constant 96 : index
    %126 = vector.load %arg22[%c0_66, %c96_67] : memref<32x480xf32, #tpu.memory_space<vmem>>, vector<32x16xf32>
    tpu.vector_store %arg22[%c0_66, %c96_67], %125 {strides = array<i32>} : memref<32x480xf32, #tpu.memory_space<vmem>>, vector<32x16xf32>,
    %127 = vector.extract_strided_slice %112 {offsets = [224, 0], sizes = [32, 16], strides = [1, 1]} : vector<960x16xf32> to vector<32x16xf32>
    %c0_68 = arith.constant 0 : index
    %c112 = arith.constant 112 : index
    %128 = vector.load %arg22[%c0_68, %c112] : memref<32x480xf32, #tpu.memory_space<vmem>>, vector<32x16xf32>
    tpu.vector_store %arg22[%c0_68, %c112], %127 {strides = array<i32>} : memref<32x480xf32, #tpu.memory_space<vmem>>, vector<32x16xf32>,
    %129 = vector.extract_strided_slice %112 {offsets = [256, 0], sizes = [32, 16], strides = [1, 1]} : vector<960x16xf32> to vector<32x16xf32>
    %c0_69 = arith.constant 0 : index
    %c128_70 = arith.constant 128 : index
    %130 = vector.load %arg22[%c0_69, %c128_70] : memref<32x480xf32, #tpu.memory_space<vmem>>, vector<32x16xf32>
    tpu.vector_store %arg22[%c0_69, %c128_70], %129 {strides = array<i32>} : memref<32x480xf32, #tpu.memory_space<vmem>>, vector<32x16xf32>,
    %131 = vector.extract_strided_slice %112 {offsets = [288, 0], sizes = [32, 16], strides = [1, 1]} : vector<960x16xf32> to vector<32x16xf32>
    %c0_71 = arith.constant 0 : index
    %c144 = arith.constant 144 : index
    %132 = vector.load %arg22[%c0_71, %c144] : memref<32x480xf32, #tpu.memory_space<vmem>>, vector<32x16xf32>
    tpu.vector_store %arg22[%c0_71, %c144], %131 {strides = array<i32>} : memref<32x480xf32, #tpu.memory_space<vmem>>, vector<32x16xf32>,
    %133 = vector.extract_strided_slice %112 {offsets = [320, 0], sizes = [32, 16], strides = [1, 1]} : vector<960x16xf32> to vector<32x16xf32>
    %c0_72 = arith.constant 0 : index
    %c160_73 = arith.constant 160 : index
    %134 = vector.load %arg22[%c0_72, %c160_73] : memref<32x480xf32, #tpu.memory_space<vmem>>, vector<32x16xf32>
    tpu.vector_store %arg22[%c0_72, %c160_73], %133 {strides = array<i32>} : memref<32x480xf32, #tpu.memory_space<vmem>>, vector<32x16xf32>,
    %135 = vector.extract_strided_slice %112 {offsets = [352, 0], sizes = [32, 16], strides = [1, 1]} : vector<960x16xf32> to vector<32x16xf32>
    %c0_74 = arith.constant 0 : index
    %c176 = arith.constant 176 : index
    %136 = vector.load %arg22[%c0_74, %c176] : memref<32x480xf32, #tpu.memory_space<vmem>>, vector<32x16xf32>
    tpu.vector_store %arg22[%c0_74, %c176], %135 {strides = array<i32>} : memref<32x480xf32, #tpu.memory_space<vmem>>, vector<32x16xf32>,
    %137 = vector.extract_strided_slice %112 {offsets = [384, 0], sizes = [32, 16], strides = [1, 1]} : vector<960x16xf32> to vector<32x16xf32>
    %c0_75 = arith.constant 0 : index
    %c192_76 = arith.constant 192 : index
    %138 = vector.load %arg22[%c0_75, %c192_76] : memref<32x480xf32, #tpu.memory_space<vmem>>, vector<32x16xf32>
    tpu.vector_store %arg22[%c0_75, %c192_76], %137 {strides = array<i32>} : memref<32x480xf32, #tpu.memory_space<vmem>>, vector<32x16xf32>,
    %139 = vector.extract_strided_slice %112 {offsets = [416, 0], sizes = [32, 16], strides = [1, 1]} : vector<960x16xf32> to vector<32x16xf32>
    %c0_77 = arith.constant 0 : index
    %c208 = arith.constant 208 : index
    %140 = vector.load %arg22[%c0_77, %c208] : memref<32x480xf32, #tpu.memory_space<vmem>>, vector<32x16xf32>
    tpu.vector_store %arg22[%c0_77, %c208], %139 {strides = array<i32>} : memref<32x480xf32, #tpu.memory_space<vmem>>, vector<32x16xf32>,
    %141 = vector.extract_strided_slice %112 {offsets = [448, 0], sizes = [32, 16], strides = [1, 1]} : vector<960x16xf32> to vector<32x16xf32>
    %c0_78 = arith.constant 0 : index
    %c224_79 = arith.constant 224 : index
    %142 = vector.load %arg22[%c0_78, %c224_79] : memref<32x480xf32, #tpu.memory_space<vmem>>, vector<32x16xf32>
    tpu.vector_store %arg22[%c0_78, %c224_79], %141 {strides = array<i32>} : memref<32x480xf32, #tpu.memory_space<vmem>>, vector<32x16xf32>,
    %143 = vector.extract_strided_slice %112 {offsets = [480, 0], sizes = [32, 16], strides = [1, 1]} : vector<960x16xf32> to vector<32x16xf32>
    %c0_80 = arith.constant 0 : index
    %c240 = arith.constant 240 : index
    %144 = vector.load %arg22[%c0_80, %c240] : memref<32x480xf32, #tpu.memory_space<vmem>>, vector<32x16xf32>
    tpu.vector_store %arg22[%c0_80, %c240], %143 {strides = array<i32>} : memref<32x480xf32, #tpu.memory_space<vmem>>, vector<32x16xf32>,
    %145 = vector.extract_strided_slice %112 {offsets = [512, 0], sizes = [32, 16], strides = [1, 1]} : vector<960x16xf32> to vector<32x16xf32>
    %c0_81 = arith.constant 0 : index
    %c256_82 = arith.constant 256 : index
    %146 = vector.load %arg22[%c0_81, %c256_82] : memref<32x480xf32, #tpu.memory_space<vmem>>, vector<32x16xf32>
    tpu.vector_store %arg22[%c0_81, %c256_82], %145 {strides = array<i32>} : memref<32x480xf32, #tpu.memory_space<vmem>>, vector<32x16xf32>,
    %147 = vector.extract_strided_slice %112 {offsets = [544, 0], sizes = [32, 16], strides = [1, 1]} : vector<960x16xf32> to vector<32x16xf32>
    %c0_83 = arith.constant 0 : index
    %c272 = arith.constant 272 : index
    %148 = vector.load %arg22[%c0_83, %c272] : memref<32x480xf32, #tpu.memory_space<vmem>>, vector<32x16xf32>
    tpu.vector_store %arg22[%c0_83, %c272], %147 {strides = array<i32>} : memref<32x480xf32, #tpu.memory_space<vmem>>, vector<32x16xf32>,
    %149 = vector.extract_strided_slice %112 {offsets = [576, 0], sizes = [32, 16], strides = [1, 1]} : vector<960x16xf32> to vector<32x16xf32>
    %c0_84 = arith.constant 0 : index
    %c288_85 = arith.constant 288 : index
    %150 = vector.load %arg22[%c0_84, %c288_85] : memref<32x480xf32, #tpu.memory_space<vmem>>, vector<32x16xf32>
    tpu.vector_store %arg22[%c0_84, %c288_85], %149 {strides = array<i32>} : memref<32x480xf32, #tpu.memory_space<vmem>>, vector<32x16xf32>,
    %151 = vector.extract_strided_slice %112 {offsets = [608, 0], sizes = [32, 16], strides = [1, 1]} : vector<960x16xf32> to vector<32x16xf32>
    %c0_86 = arith.constant 0 : index
    %c304 = arith.constant 304 : index
    %152 = vector.load %arg22[%c0_86, %c304] : memref<32x480xf32, #tpu.memory_space<vmem>>, vector<32x16xf32>
    tpu.vector_store %arg22[%c0_86, %c304], %151 {strides = array<i32>} : memref<32x480xf32, #tpu.memory_space<vmem>>, vector<32x16xf32>,
    %153 = vector.extract_strided_slice %112 {offsets = [640, 0], sizes = [32, 16], strides = [1, 1]} : vector<960x16xf32> to vector<32x16xf32>
    %c0_87 = arith.constant 0 : index
    %c320_88 = arith.constant 320 : index
    %154 = vector.load %arg22[%c0_87, %c320_88] : memref<32x480xf32, #tpu.memory_space<vmem>>, vector<32x16xf32>
    tpu.vector_store %arg22[%c0_87, %c320_88], %153 {strides = array<i32>} : memref<32x480xf32, #tpu.memory_space<vmem>>, vector<32x16xf32>,
    %155 = vector.extract_strided_slice %112 {offsets = [672, 0], sizes = [32, 16], strides = [1, 1]} : vector<960x16xf32> to vector<32x16xf32>
    %c0_89 = arith.constant 0 : index
    %c336 = arith.constant 336 : index
    %156 = vector.load %arg22[%c0_89, %c336] : memref<32x480xf32, #tpu.memory_space<vmem>>, vector<32x16xf32>
    tpu.vector_store %arg22[%c0_89, %c336], %155 {strides = array<i32>} : memref<32x480xf32, #tpu.memory_space<vmem>>, vector<32x16xf32>,
    %157 = vector.extract_strided_slice %112 {offsets = [704, 0], sizes = [32, 16], strides = [1, 1]} : vector<960x16xf32> to vector<32x16xf32>
    %c0_90 = arith.constant 0 : index
    %c352_91 = arith.constant 352 : index
    %158 = vector.load %arg22[%c0_90, %c352_91] : memref<32x480xf32, #tpu.memory_space<vmem>>, vector<32x16xf32>
    tpu.vector_store %arg22[%c0_90, %c352_91], %157 {strides = array<i32>} : memref<32x480xf32, #tpu.memory_space<vmem>>, vector<32x16xf32>,
    %159 = vector.extract_strided_slice %112 {offsets = [736, 0], sizes = [32, 16], strides = [1, 1]} : vector<960x16xf32> to vector<32x16xf32>
    %c0_92 = arith.constant 0 : index
    %c368 = arith.constant 368 : index
    %160 = vector.load %arg22[%c0_92, %c368] : memref<32x480xf32, #tpu.memory_space<vmem>>, vector<32x16xf32>
    tpu.vector_store %arg22[%c0_92, %c368], %159 {strides = array<i32>} : memref<32x480xf32, #tpu.memory_space<vmem>>, vector<32x16xf32>,
    %161 = vector.extract_strided_slice %112 {offsets = [768, 0], sizes = [32, 16], strides = [1, 1]} : vector<960x16xf32> to vector<32x16xf32>
    %c0_93 = arith.constant 0 : index
    %c384_94 = arith.constant 384 : index
    %162 = vector.load %arg22[%c0_93, %c384_94] : memref<32x480xf32, #tpu.memory_space<vmem>>, vector<32x16xf32>
    tpu.vector_store %arg22[%c0_93, %c384_94], %161 {strides = array<i32>} : memref<32x480xf32, #tpu.memory_space<vmem>>, vector<32x16xf32>,
    %163 = vector.extract_strided_slice %112 {offsets = [800, 0], sizes = [32, 16], strides = [1, 1]} : vector<960x16xf32> to vector<32x16xf32>
    %c0_95 = arith.constant 0 : index
    %c400 = arith.constant 400 : index
    %164 = vector.load %arg22[%c0_95, %c400] : memref<32x480xf32, #tpu.memory_space<vmem>>, vector<32x16xf32>
    tpu.vector_store %arg22[%c0_95, %c400], %163 {strides = array<i32>} : memref<32x480xf32, #tpu.memory_space<vmem>>, vector<32x16xf32>,
    %165 = vector.extract_strided_slice %112 {offsets = [832, 0], sizes = [32, 16], strides = [1, 1]} : vector<960x16xf32> to vector<32x16xf32>
    %c0_96 = arith.constant 0 : index
    %c416_97 = arith.constant 416 : index
    %166 = vector.load %arg22[%c0_96, %c416_97] : memref<32x480xf32, #tpu.memory_space<vmem>>, vector<32x16xf32>
    tpu.vector_store %arg22[%c0_96, %c416_97], %165 {strides = array<i32>} : memref<32x480xf32, #tpu.memory_space<vmem>>, vector<32x16xf32>,
    %167 = vector.extract_strided_slice %112 {offsets = [864, 0], sizes = [32, 16], strides = [1, 1]} : vector<960x16xf32> to vector<32x16xf32>
    %c0_98 = arith.constant 0 : index
    %c432 = arith.constant 432 : index
    %168 = vector.load %arg22[%c0_98, %c432] : memref<32x480xf32, #tpu.memory_space<vmem>>, vector<32x16xf32>
    tpu.vector_store %arg22[%c0_98, %c432], %167 {strides = array<i32>} : memref<32x480xf32, #tpu.memory_space<vmem>>, vector<32x16xf32>,
    %169 = vector.extract_strided_slice %112 {offsets = [896, 0], sizes = [32, 16], strides = [1, 1]} : vector<960x16xf32> to vector<32x16xf32>
    %c0_99 = arith.constant 0 : index
    %c448_100 = arith.constant 448 : index
    %170 = vector.load %arg22[%c0_99, %c448_100] : memref<32x480xf32, #tpu.memory_space<vmem>>, vector<32x16xf32>
    tpu.vector_store %arg22[%c0_99, %c448_100], %169 {strides = array<i32>} : memref<32x480xf32, #tpu.memory_space<vmem>>, vector<32x16xf32>,
    %171 = vector.extract_strided_slice %112 {offsets = [928, 0], sizes = [32, 16], strides = [1, 1]} : vector<960x16xf32> to vector<32x16xf32>
    %c0_101 = arith.constant 0 : index
    %c464 = arith.constant 464 : index
    %172 = vector.load %arg22[%c0_101, %c464] : memref<32x480xf32, #tpu.memory_space<vmem>>, vector<32x16xf32>
    tpu.vector_store %arg22[%c0_101, %c464], %171 {strides = array<i32>} : memref<32x480xf32, #tpu.memory_space<vmem>>, vector<32x16xf32>,
    %c0_102 = arith.constant 0 : index
    %c0_103 = arith.constant 0 : index
    %173 = vector.load %arg7[%c0_102, %c0_103] : memref<16x32xf32, #tpu.memory_space<vmem>>, vector<16x32xf32>
    %c0_104 = arith.constant 0 : index
    %c0_105 = arith.constant 0 : index
    %174 = vector.load %arg22[%c0_104, %c0_105] : memref<32x480xf32, #tpu.memory_space<vmem>>, vector<32x480xf32>
    %cst_106 = arith.constant dense<0.000000e+00> : vector<16x480xf32>
    %175 = tpu.matmul %173, %174, %cst_106 {dimension_numbers = #tpu.dot_dimension_numbers<[1], [0], [0], [1], [0, 0, 1, 1], [], []>} : vector<16x32xf32>, vector<32x480xf32>, vector<16x480xf32> -> vector<16x480xf32>
    %176 = vector.extract_strided_slice %175 {offsets = [0, 0], sizes = [16, 96], strides = [1, 1]} : vector<16x480xf32> to vector<16x96xf32>
    %177 = vector.extract_strided_slice %175 {offsets = [0, 96], sizes = [16, 96], strides = [1, 1]} : vector<16x480xf32> to vector<16x96xf32>
    %178 = vector.extract_strided_slice %175 {offsets = [0, 192], sizes = [16, 96], strides = [1, 1]} : vector<16x480xf32> to vector<16x96xf32>
    %179 = vector.extract_strided_slice %175 {offsets = [0, 288], sizes = [16, 96], strides = [1, 1]} : vector<16x480xf32> to vector<16x96xf32>
    %180 = vector.extract_strided_slice %175 {offsets = [0, 384], sizes = [16, 96], strides = [1, 1]} : vector<16x480xf32> to vector<16x96xf32>
    %181 = arith.mulf %176, %176 : vector<16x96xf32>
    %182 = arith.mulf %177, %177 : vector<16x96xf32>
    %183 = arith.mulf %176, %177 : vector<16x96xf32>
    %184 = arith.subf %178, %181 : vector<16x96xf32>
    %185 = arith.subf %179, %182 : vector<16x96xf32>
    %186 = arith.subf %180, %183 : vector<16x96xf32>
    %cst_107 = arith.constant 2.000000e+00 : f32
    %187 = vector.broadcast %cst_107 : f32 to vector<16x96xf32>
    %188 = arith.mulf %187, %183 : vector<16x96xf32>
    %cst_108 = arith.constant 9.99999974E-5 : f32
    %189 = vector.broadcast %cst_108 : f32 to vector<16x96xf32>
    %190 = arith.addf %188, %189 : vector<16x96xf32>
    %cst_109 = arith.constant 2.000000e+00 : f32
    %191 = vector.broadcast %cst_109 : f32 to vector<16x96xf32>
    %192 = arith.mulf %191, %186 : vector<16x96xf32>
    %cst_110 = arith.constant 8.99999984E-4 : f32
    %193 = vector.broadcast %cst_110 : f32 to vector<16x96xf32>
    %194 = arith.addf %192, %193 : vector<16x96xf32>
    %195 = arith.mulf %190, %194 : vector<16x96xf32>
    %196 = arith.addf %181, %182 : vector<16x96xf32>
    %cst_111 = arith.constant 9.99999974E-5 : f32
    %197 = vector.broadcast %cst_111 : f32 to vector<16x96xf32>
    %198 = arith.addf %196, %197 : vector<16x96xf32>
    %199 = arith.addf %184, %185 : vector<16x96xf32>
    %cst_112 = arith.constant 8.99999984E-4 : f32
    %200 = vector.broadcast %cst_112 : f32 to vector<16x96xf32>
    %201 = arith.addf %199, %200 : vector<16x96xf32>
    %202 = arith.mulf %198, %201 : vector<16x96xf32>
    %203 = arith.divf %195, %202 : vector<16x96xf32>
    %204 = vector.shape_cast %203 : vector<16x96xf32> to vector<1x16x96xf32>
    %cst_113 = arith.constant dense<0.000000e+00> : vector<1xf32>
    %205 = vector.multi_reduction <add>, %204, %cst_113 [1, 2] : vector<1x16x96xf32> to vector<1xf32>
    %206 = vector.shape_cast %205 : vector<1xf32> to vector<1x1x1xf32>
    %207 = vector.extract %206[0, 0, 0] : f32 from vector<1x1x1xf32>
    %cst_114 = arith.constant 6.51041686E-4 : f32
    %208 = arith.mulf %207, %cst_114 : f32
    %cst_115 = arith.constant 2.856000e-01 : f32
    %209 = arith.mulf %208, %cst_115 : f32
    %210 = arith.mulf %104, %209 : f32
    %c0_116 = arith.constant 0 : index
    %c0_117 = arith.constant 0 : index
    %211 = vector.load %arg8[%c0_116, %c0_117] : memref<144x18xf32, #tpu.memory_space<vmem>>, vector<144x18xf32>
    %c0_118 = arith.constant 0 : index
    %c0_119 = arith.constant 0 : index
    %212 = vector.load %arg9[%c0_118, %c0_119] : memref<144x18xf32, #tpu.memory_space<vmem>>, vector<144x18xf32>
    %213 = arith.mulf %211, %211 : vector<144x18xf32>
    %214 = arith.mulf %212, %212 : vector<144x18xf32>
    %215 = arith.mulf %211, %212 : vector<144x18xf32>
    %216 = tpu.concatenate %211, %212, %213, %214, %215 in 0 : vector<144x18xf32>, vector<144x18xf32>, vector<144x18xf32>, vector<144x18xf32>, vector<144x18xf32> -> vector<720x18xf32>
    %c0_120 = arith.constant 0 : index
    %c0_121 = arith.constant 0 : index
    %217 = vector.load %arg10[%c0_120, %c0_121] : memref<18x8xf32, #tpu.memory_space<vmem>>, vector<18x8xf32>
    %cst_122 = arith.constant dense<0.000000e+00> : vector<720x8xf32>
    %218 = tpu.matmul %216, %217, %cst_122 {dimension_numbers = #tpu.dot_dimension_numbers<[1], [0], [0], [1], [0, 0, 1, 1], [], []>} : vector<720x18xf32>, vector<18x8xf32>, vector<720x8xf32> -> vector<720x8xf32>
    %219 = vector.extract_strided_slice %218 {offsets = [0, 0], sizes = [24, 8], strides = [1, 1]} : vector<720x8xf32> to vector<24x8xf32>
    %c0_123 = arith.constant 0 : index
    %c0_124 = arith.constant 0 : index
    %220 = vector.load %arg23[%c0_123, %c0_124] : memref<24x240xf32, #tpu.memory_space<vmem>>, vector<24x8xf32>
    tpu.vector_store %arg23[%c0_123, %c0_124], %219 {strides = array<i32>} : memref<24x240xf32, #tpu.memory_space<vmem>>, vector<24x8xf32>,
    %221 = vector.extract_strided_slice %218 {offsets = [24, 0], sizes = [24, 8], strides = [1, 1]} : vector<720x8xf32> to vector<24x8xf32>
    %c0_125 = arith.constant 0 : index
    %c8 = arith.constant 8 : index
    %222 = vector.load %arg23[%c0_125, %c8] : memref<24x240xf32, #tpu.memory_space<vmem>>, vector<24x8xf32>
    tpu.vector_store %arg23[%c0_125, %c8], %221 {strides = array<i32>} : memref<24x240xf32, #tpu.memory_space<vmem>>, vector<24x8xf32>,
    %223 = vector.extract_strided_slice %218 {offsets = [48, 0], sizes = [24, 8], strides = [1, 1]} : vector<720x8xf32> to vector<24x8xf32>
    %c0_126 = arith.constant 0 : index
    %c16_127 = arith.constant 16 : index
    %224 = vector.load %arg23[%c0_126, %c16_127] : memref<24x240xf32, #tpu.memory_space<vmem>>, vector<24x8xf32>
    tpu.vector_store %arg23[%c0_126, %c16_127], %223 {strides = array<i32>} : memref<24x240xf32, #tpu.memory_space<vmem>>, vector<24x8xf32>,
    %225 = vector.extract_strided_slice %218 {offsets = [72, 0], sizes = [24, 8], strides = [1, 1]} : vector<720x8xf32> to vector<24x8xf32>
    %c0_128 = arith.constant 0 : index
    %c24 = arith.constant 24 : index
    %226 = vector.load %arg23[%c0_128, %c24] : memref<24x240xf32, #tpu.memory_space<vmem>>, vector<24x8xf32>
    tpu.vector_store %arg23[%c0_128, %c24], %225 {strides = array<i32>} : memref<24x240xf32, #tpu.memory_space<vmem>>, vector<24x8xf32>,
    %227 = vector.extract_strided_slice %218 {offsets = [96, 0], sizes = [24, 8], strides = [1, 1]} : vector<720x8xf32> to vector<24x8xf32>
    %c0_129 = arith.constant 0 : index
    %c32_130 = arith.constant 32 : index
    %228 = vector.load %arg23[%c0_129, %c32_130] : memref<24x240xf32, #tpu.memory_space<vmem>>, vector<24x8xf32>
    tpu.vector_store %arg23[%c0_129, %c32_130], %227 {strides = array<i32>} : memref<24x240xf32, #tpu.memory_space<vmem>>, vector<24x8xf32>,
    %229 = vector.extract_strided_slice %218 {offsets = [120, 0], sizes = [24, 8], strides = [1, 1]} : vector<720x8xf32> to vector<24x8xf32>
    %c0_131 = arith.constant 0 : index
    %c40 = arith.constant 40 : index
    %230 = vector.load %arg23[%c0_131, %c40] : memref<24x240xf32, #tpu.memory_space<vmem>>, vector<24x8xf32>
    tpu.vector_store %arg23[%c0_131, %c40], %229 {strides = array<i32>} : memref<24x240xf32, #tpu.memory_space<vmem>>, vector<24x8xf32>,
    %231 = vector.extract_strided_slice %218 {offsets = [144, 0], sizes = [24, 8], strides = [1, 1]} : vector<720x8xf32> to vector<24x8xf32>
    %c0_132 = arith.constant 0 : index
    %c48_133 = arith.constant 48 : index
    %232 = vector.load %arg23[%c0_132, %c48_133] : memref<24x240xf32, #tpu.memory_space<vmem>>, vector<24x8xf32>
    tpu.vector_store %arg23[%c0_132, %c48_133], %231 {strides = array<i32>} : memref<24x240xf32, #tpu.memory_space<vmem>>, vector<24x8xf32>,
    %233 = vector.extract_strided_slice %218 {offsets = [168, 0], sizes = [24, 8], strides = [1, 1]} : vector<720x8xf32> to vector<24x8xf32>
    %c0_134 = arith.constant 0 : index
    %c56 = arith.constant 56 : index
    %234 = vector.load %arg23[%c0_134, %c56] : memref<24x240xf32, #tpu.memory_space<vmem>>, vector<24x8xf32>
    tpu.vector_store %arg23[%c0_134, %c56], %233 {strides = array<i32>} : memref<24x240xf32, #tpu.memory_space<vmem>>, vector<24x8xf32>,
    %235 = vector.extract_strided_slice %218 {offsets = [192, 0], sizes = [24, 8], strides = [1, 1]} : vector<720x8xf32> to vector<24x8xf32>
    %c0_135 = arith.constant 0 : index
    %c64_136 = arith.constant 64 : index
    %236 = vector.load %arg23[%c0_135, %c64_136] : memref<24x240xf32, #tpu.memory_space<vmem>>, vector<24x8xf32>
    tpu.vector_store %arg23[%c0_135, %c64_136], %235 {strides = array<i32>} : memref<24x240xf32, #tpu.memory_space<vmem>>, vector<24x8xf32>,
    %237 = vector.extract_strided_slice %218 {offsets = [216, 0], sizes = [24, 8], strides = [1, 1]} : vector<720x8xf32> to vector<24x8xf32>
    %c0_137 = arith.constant 0 : index
    %c72 = arith.constant 72 : index
    %238 = vector.load %arg23[%c0_137, %c72] : memref<24x240xf32, #tpu.memory_space<vmem>>, vector<24x8xf32>
    tpu.vector_store %arg23[%c0_137, %c72], %237 {strides = array<i32>} : memref<24x240xf32, #tpu.memory_space<vmem>>, vector<24x8xf32>,
    %239 = vector.extract_strided_slice %218 {offsets = [240, 0], sizes = [24, 8], strides = [1, 1]} : vector<720x8xf32> to vector<24x8xf32>
    %c0_138 = arith.constant 0 : index
    %c80_139 = arith.constant 80 : index
    %240 = vector.load %arg23[%c0_138, %c80_139] : memref<24x240xf32, #tpu.memory_space<vmem>>, vector<24x8xf32>
    tpu.vector_store %arg23[%c0_138, %c80_139], %239 {strides = array<i32>} : memref<24x240xf32, #tpu.memory_space<vmem>>, vector<24x8xf32>,
    %241 = vector.extract_strided_slice %218 {offsets = [264, 0], sizes = [24, 8], strides = [1, 1]} : vector<720x8xf32> to vector<24x8xf32>
    %c0_140 = arith.constant 0 : index
    %c88 = arith.constant 88 : index
    %242 = vector.load %arg23[%c0_140, %c88] : memref<24x240xf32, #tpu.memory_space<vmem>>, vector<24x8xf32>
    tpu.vector_store %arg23[%c0_140, %c88], %241 {strides = array<i32>} : memref<24x240xf32, #tpu.memory_space<vmem>>, vector<24x8xf32>,
    %243 = vector.extract_strided_slice %218 {offsets = [288, 0], sizes = [24, 8], strides = [1, 1]} : vector<720x8xf32> to vector<24x8xf32>
    %c0_141 = arith.constant 0 : index
    %c96_142 = arith.constant 96 : index
    %244 = vector.load %arg23[%c0_141, %c96_142] : memref<24x240xf32, #tpu.memory_space<vmem>>, vector<24x8xf32>
    tpu.vector_store %arg23[%c0_141, %c96_142], %243 {strides = array<i32>} : memref<24x240xf32, #tpu.memory_space<vmem>>, vector<24x8xf32>,
    %245 = vector.extract_strided_slice %218 {offsets = [312, 0], sizes = [24, 8], strides = [1, 1]} : vector<720x8xf32> to vector<24x8xf32>
    %c0_143 = arith.constant 0 : index
    %c104 = arith.constant 104 : index
    %246 = vector.load %arg23[%c0_143, %c104] : memref<24x240xf32, #tpu.memory_space<vmem>>, vector<24x8xf32>
    tpu.vector_store %arg23[%c0_143, %c104], %245 {strides = array<i32>} : memref<24x240xf32, #tpu.memory_space<vmem>>, vector<24x8xf32>,
    %247 = vector.extract_strided_slice %218 {offsets = [336, 0], sizes = [24, 8], strides = [1, 1]} : vector<720x8xf32> to vector<24x8xf32>
    %c0_144 = arith.constant 0 : index
    %c112_145 = arith.constant 112 : index
    %248 = vector.load %arg23[%c0_144, %c112_145] : memref<24x240xf32, #tpu.memory_space<vmem>>, vector<24x8xf32>
    tpu.vector_store %arg23[%c0_144, %c112_145], %247 {strides = array<i32>} : memref<24x240xf32, #tpu.memory_space<vmem>>, vector<24x8xf32>,
    %249 = vector.extract_strided_slice %218 {offsets = [360, 0], sizes = [24, 8], strides = [1, 1]} : vector<720x8xf32> to vector<24x8xf32>
    %c0_146 = arith.constant 0 : index
    %c120 = arith.constant 120 : index
    %250 = vector.load %arg23[%c0_146, %c120] : memref<24x240xf32, #tpu.memory_space<vmem>>, vector<24x8xf32>
    tpu.vector_store %arg23[%c0_146, %c120], %249 {strides = array<i32>} : memref<24x240xf32, #tpu.memory_space<vmem>>, vector<24x8xf32>,
    %251 = vector.extract_strided_slice %218 {offsets = [384, 0], sizes = [24, 8], strides = [1, 1]} : vector<720x8xf32> to vector<24x8xf32>
    %c0_147 = arith.constant 0 : index
    %c128_148 = arith.constant 128 : index
    %252 = vector.load %arg23[%c0_147, %c128_148] : memref<24x240xf32, #tpu.memory_space<vmem>>, vector<24x8xf32>
    tpu.vector_store %arg23[%c0_147, %c128_148], %251 {strides = array<i32>} : memref<24x240xf32, #tpu.memory_space<vmem>>, vector<24x8xf32>,
    %253 = vector.extract_strided_slice %218 {offsets = [408, 0], sizes = [24, 8], strides = [1, 1]} : vector<720x8xf32> to vector<24x8xf32>
    %c0_149 = arith.constant 0 : index
    %c136 = arith.constant 136 : index
    %254 = vector.load %arg23[%c0_149, %c136] : memref<24x240xf32, #tpu.memory_space<vmem>>, vector<24x8xf32>
    tpu.vector_store %arg23[%c0_149, %c136], %253 {strides = array<i32>} : memref<24x240xf32, #tpu.memory_space<vmem>>, vector<24x8xf32>,
    %255 = vector.extract_strided_slice %218 {offsets = [432, 0], sizes = [24, 8], strides = [1, 1]} : vector<720x8xf32> to vector<24x8xf32>
    %c0_150 = arith.constant 0 : index
    %c144_151 = arith.constant 144 : index
    %256 = vector.load %arg23[%c0_150, %c144_151] : memref<24x240xf32, #tpu.memory_space<vmem>>, vector<24x8xf32>
    tpu.vector_store %arg23[%c0_150, %c144_151], %255 {strides = array<i32>} : memref<24x240xf32, #tpu.memory_space<vmem>>, vector<24x8xf32>,
    %257 = vector.extract_strided_slice %218 {offsets = [456, 0], sizes = [24, 8], strides = [1, 1]} : vector<720x8xf32> to vector<24x8xf32>
    %c0_152 = arith.constant 0 : index
    %c152 = arith.constant 152 : index
    %258 = vector.load %arg23[%c0_152, %c152] : memref<24x240xf32, #tpu.memory_space<vmem>>, vector<24x8xf32>
    tpu.vector_store %arg23[%c0_152, %c152], %257 {strides = array<i32>} : memref<24x240xf32, #tpu.memory_space<vmem>>, vector<24x8xf32>,
    %259 = vector.extract_strided_slice %218 {offsets = [480, 0], sizes = [24, 8], strides = [1, 1]} : vector<720x8xf32> to vector<24x8xf32>
    %c0_153 = arith.constant 0 : index
    %c160_154 = arith.constant 160 : index
    %260 = vector.load %arg23[%c0_153, %c160_154] : memref<24x240xf32, #tpu.memory_space<vmem>>, vector<24x8xf32>
    tpu.vector_store %arg23[%c0_153, %c160_154], %259 {strides = array<i32>} : memref<24x240xf32, #tpu.memory_space<vmem>>, vector<24x8xf32>,
    %261 = vector.extract_strided_slice %218 {offsets = [504, 0], sizes = [24, 8], strides = [1, 1]} : vector<720x8xf32> to vector<24x8xf32>
    %c0_155 = arith.constant 0 : index
    %c168 = arith.constant 168 : index
    %262 = vector.load %arg23[%c0_155, %c168] : memref<24x240xf32, #tpu.memory_space<vmem>>, vector<24x8xf32>
    tpu.vector_store %arg23[%c0_155, %c168], %261 {strides = array<i32>} : memref<24x240xf32, #tpu.memory_space<vmem>>, vector<24x8xf32>,
    %263 = vector.extract_strided_slice %218 {offsets = [528, 0], sizes = [24, 8], strides = [1, 1]} : vector<720x8xf32> to vector<24x8xf32>
    %c0_156 = arith.constant 0 : index
    %c176_157 = arith.constant 176 : index
    %264 = vector.load %arg23[%c0_156, %c176_157] : memref<24x240xf32, #tpu.memory_space<vmem>>, vector<24x8xf32>
    tpu.vector_store %arg23[%c0_156, %c176_157], %263 {strides = array<i32>} : memref<24x240xf32, #tpu.memory_space<vmem>>, vector<24x8xf32>,
    %265 = vector.extract_strided_slice %218 {offsets = [552, 0], sizes = [24, 8], strides = [1, 1]} : vector<720x8xf32> to vector<24x8xf32>
    %c0_158 = arith.constant 0 : index
    %c184 = arith.constant 184 : index
    %266 = vector.load %arg23[%c0_158, %c184] : memref<24x240xf32, #tpu.memory_space<vmem>>, vector<24x8xf32>
    tpu.vector_store %arg23[%c0_158, %c184], %265 {strides = array<i32>} : memref<24x240xf32, #tpu.memory_space<vmem>>, vector<24x8xf32>,
    %267 = vector.extract_strided_slice %218 {offsets = [576, 0], sizes = [24, 8], strides = [1, 1]} : vector<720x8xf32> to vector<24x8xf32>
    %c0_159 = arith.constant 0 : index
    %c192_160 = arith.constant 192 : index
    %268 = vector.load %arg23[%c0_159, %c192_160] : memref<24x240xf32, #tpu.memory_space<vmem>>, vector<24x8xf32>
    tpu.vector_store %arg23[%c0_159, %c192_160], %267 {strides = array<i32>} : memref<24x240xf32, #tpu.memory_space<vmem>>, vector<24x8xf32>,
    %269 = vector.extract_strided_slice %218 {offsets = [600, 0], sizes = [24, 8], strides = [1, 1]} : vector<720x8xf32> to vector<24x8xf32>
    %c0_161 = arith.constant 0 : index
    %c200 = arith.constant 200 : index
    %270 = vector.load %arg23[%c0_161, %c200] : memref<24x240xf32, #tpu.memory_space<vmem>>, vector<24x8xf32>
    tpu.vector_store %arg23[%c0_161, %c200], %269 {strides = array<i32>} : memref<24x240xf32, #tpu.memory_space<vmem>>, vector<24x8xf32>,
    %271 = vector.extract_strided_slice %218 {offsets = [624, 0], sizes = [24, 8], strides = [1, 1]} : vector<720x8xf32> to vector<24x8xf32>
    %c0_162 = arith.constant 0 : index
    %c208_163 = arith.constant 208 : index
    %272 = vector.load %arg23[%c0_162, %c208_163] : memref<24x240xf32, #tpu.memory_space<vmem>>, vector<24x8xf32>
    tpu.vector_store %arg23[%c0_162, %c208_163], %271 {strides = array<i32>} : memref<24x240xf32, #tpu.memory_space<vmem>>, vector<24x8xf32>,
    %273 = vector.extract_strided_slice %218 {offsets = [648, 0], sizes = [24, 8], strides = [1, 1]} : vector<720x8xf32> to vector<24x8xf32>
    %c0_164 = arith.constant 0 : index
    %c216 = arith.constant 216 : index
    %274 = vector.load %arg23[%c0_164, %c216] : memref<24x240xf32, #tpu.memory_space<vmem>>, vector<24x8xf32>
    tpu.vector_store %arg23[%c0_164, %c216], %273 {strides = array<i32>} : memref<24x240xf32, #tpu.memory_space<vmem>>, vector<24x8xf32>,
    %275 = vector.extract_strided_slice %218 {offsets = [672, 0], sizes = [24, 8], strides = [1, 1]} : vector<720x8xf32> to vector<24x8xf32>
    %c0_165 = arith.constant 0 : index
    %c224_166 = arith.constant 224 : index
    %276 = vector.load %arg23[%c0_165, %c224_166] : memref<24x240xf32, #tpu.memory_space<vmem>>, vector<24x8xf32>
    tpu.vector_store %arg23[%c0_165, %c224_166], %275 {strides = array<i32>} : memref<24x240xf32, #tpu.memory_space<vmem>>, vector<24x8xf32>,
    %277 = vector.extract_strided_slice %218 {offsets = [696, 0], sizes = [24, 8], strides = [1, 1]} : vector<720x8xf32> to vector<24x8xf32>
    %c0_167 = arith.constant 0 : index
    %c232 = arith.constant 232 : index
    %278 = vector.load %arg23[%c0_167, %c232] : memref<24x240xf32, #tpu.memory_space<vmem>>, vector<24x8xf32>
    tpu.vector_store %arg23[%c0_167, %c232], %277 {strides = array<i32>} : memref<24x240xf32, #tpu.memory_space<vmem>>, vector<24x8xf32>,
    %c0_168 = arith.constant 0 : index
    %c0_169 = arith.constant 0 : index
    %279 = vector.load %arg11[%c0_168, %c0_169] : memref<8x24xf32, #tpu.memory_space<vmem>>, vector<8x24xf32>
    %c0_170 = arith.constant 0 : index
    %c0_171 = arith.constant 0 : index
    %280 = vector.load %arg23[%c0_170, %c0_171] : memref<24x240xf32, #tpu.memory_space<vmem>>, vector<24x240xf32>
    %cst_172 = arith.constant dense<0.000000e+00> : vector<8x240xf32>
    %281 = tpu.matmul %279, %280, %cst_172 {dimension_numbers = #tpu.dot_dimension_numbers<[1], [0], [0], [1], [0, 0, 1, 1], [], []>} : vector<8x24xf32>, vector<24x240xf32>, vector<8x240xf32> -> vector<8x240xf32>
    %282 = vector.extract_strided_slice %281 {offsets = [0, 0], sizes = [8, 48], strides = [1, 1]} : vector<8x240xf32> to vector<8x48xf32>
    %283 = vector.extract_strided_slice %281 {offsets = [0, 48], sizes = [8, 48], strides = [1, 1]} : vector<8x240xf32> to vector<8x48xf32>
    %284 = vector.extract_strided_slice %281 {offsets = [0, 96], sizes = [8, 48], strides = [1, 1]} : vector<8x240xf32> to vector<8x48xf32>
    %285 = vector.extract_strided_slice %281 {offsets = [0, 144], sizes = [8, 48], strides = [1, 1]} : vector<8x240xf32> to vector<8x48xf32>
    %286 = vector.extract_strided_slice %281 {offsets = [0, 192], sizes = [8, 48], strides = [1, 1]} : vector<8x240xf32> to vector<8x48xf32>
    %287 = arith.mulf %282, %282 : vector<8x48xf32>
    %288 = arith.mulf %283, %283 : vector<8x48xf32>
    %289 = arith.mulf %282, %283 : vector<8x48xf32>
    %290 = arith.subf %284, %287 : vector<8x48xf32>
    %291 = arith.subf %285, %288 : vector<8x48xf32>
    %292 = arith.subf %286, %289 : vector<8x48xf32>
    %cst_173 = arith.constant 2.000000e+00 : f32
    %293 = vector.broadcast %cst_173 : f32 to vector<8x48xf32>
    %294 = arith.mulf %293, %289 : vector<8x48xf32>
    %cst_174 = arith.constant 9.99999974E-5 : f32
    %295 = vector.broadcast %cst_174 : f32 to vector<8x48xf32>
    %296 = arith.addf %294, %295 : vector<8x48xf32>
    %cst_175 = arith.constant 2.000000e+00 : f32
    %297 = vector.broadcast %cst_175 : f32 to vector<8x48xf32>
    %298 = arith.mulf %297, %292 : vector<8x48xf32>
    %cst_176 = arith.constant 8.99999984E-4 : f32
    %299 = vector.broadcast %cst_176 : f32 to vector<8x48xf32>
    %300 = arith.addf %298, %299 : vector<8x48xf32>
    %301 = arith.mulf %296, %300 : vector<8x48xf32>
    %302 = arith.addf %287, %288 : vector<8x48xf32>
    %cst_177 = arith.constant 9.99999974E-5 : f32
    %303 = vector.broadcast %cst_177 : f32 to vector<8x48xf32>
    %304 = arith.addf %302, %303 : vector<8x48xf32>
    %305 = arith.addf %290, %291 : vector<8x48xf32>
    %cst_178 = arith.constant 8.99999984E-4 : f32
    %306 = vector.broadcast %cst_178 : f32 to vector<8x48xf32>
    %307 = arith.addf %305, %306 : vector<8x48xf32>
    %308 = arith.mulf %304, %307 : vector<8x48xf32>
    %309 = arith.divf %301, %308 : vector<8x48xf32>
    %310 = vector.shape_cast %309 : vector<8x48xf32> to vector<1x8x48xf32>
    %cst_179 = arith.constant dense<0.000000e+00> : vector<1xf32>
    %311 = vector.multi_reduction <add>, %310, %cst_179 [1, 2] : vector<1x8x48xf32> to vector<1xf32>
    %312 = vector.shape_cast %311 : vector<1xf32> to vector<1x1x1xf32>
    %313 = vector.extract %312[0, 0, 0] : f32 from vector<1x1x1xf32>
    %cst_180 = arith.constant 0.00260416674 : f32
    %314 = arith.mulf %313, %cst_180 : f32
    %cst_181 = arith.constant 3.001000e-01 : f32
    %315 = arith.mulf %314, %cst_181 : f32
    %316 = arith.mulf %210, %315 : f32
    %c0_182 = arith.constant 0 : index
    %c0_183 = arith.constant 0 : index
    %317 = vector.load %arg12[%c0_182, %c0_183] : memref<96x14xf32, #tpu.memory_space<vmem>>, vector<96x14xf32>
    %c0_184 = arith.constant 0 : index
    %c0_185 = arith.constant 0 : index
    %318 = vector.load %arg13[%c0_184, %c0_185] : memref<96x14xf32, #tpu.memory_space<vmem>>, vector<96x14xf32>
    %319 = arith.mulf %317, %317 : vector<96x14xf32>
    %320 = arith.mulf %318, %318 : vector<96x14xf32>
    %321 = arith.mulf %317, %318 : vector<96x14xf32>
    %322 = tpu.concatenate %317, %318, %319, %320, %321 in 0 : vector<96x14xf32>, vector<96x14xf32>, vector<96x14xf32>, vector<96x14xf32>, vector<96x14xf32> -> vector<480x14xf32>
    %c0_186 = arith.constant 0 : index
    %c0_187 = arith.constant 0 : index
    %323 = vector.load %arg14[%c0_186, %c0_187] : memref<14x4xf32, #tpu.memory_space<vmem>>, vector<14x4xf32>
    %cst_188 = arith.constant dense<0.000000e+00> : vector<480x4xf32>
    %324 = tpu.matmul %322, %323, %cst_188 {dimension_numbers = #tpu.dot_dimension_numbers<[1], [0], [0], [1], [0, 0, 1, 1], [], []>} : vector<480x14xf32>, vector<14x4xf32>, vector<480x4xf32> -> vector<480x4xf32>
    %325 = vector.extract_strided_slice %324 {offsets = [0, 0], sizes = [16, 4], strides = [1, 1]} : vector<480x4xf32> to vector<16x4xf32>
    %c0_189 = arith.constant 0 : index
    %c0_190 = arith.constant 0 : index
    %326 = vector.load %arg24[%c0_189, %c0_190] : memref<16x120xf32, #tpu.memory_space<vmem>>, vector<16x4xf32>
    tpu.vector_store %arg24[%c0_189, %c0_190], %325 {strides = array<i32>} : memref<16x120xf32, #tpu.memory_space<vmem>>, vector<16x4xf32>,
    %327 = vector.extract_strided_slice %324 {offsets = [16, 0], sizes = [16, 4], strides = [1, 1]} : vector<480x4xf32> to vector<16x4xf32>
    %c0_191 = arith.constant 0 : index
    %c4 = arith.constant 4 : index
    %328 = vector.load %arg24[%c0_191, %c4] : memref<16x120xf32, #tpu.memory_space<vmem>>, vector<16x4xf32>
    tpu.vector_store %arg24[%c0_191, %c4], %327 {strides = array<i32>} : memref<16x120xf32, #tpu.memory_space<vmem>>, vector<16x4xf32>,
    %329 = vector.extract_strided_slice %324 {offsets = [32, 0], sizes = [16, 4], strides = [1, 1]} : vector<480x4xf32> to vector<16x4xf32>
    %c0_192 = arith.constant 0 : index
    %c8_193 = arith.constant 8 : index
    %330 = vector.load %arg24[%c0_192, %c8_193] : memref<16x120xf32, #tpu.memory_space<vmem>>, vector<16x4xf32>
    tpu.vector_store %arg24[%c0_192, %c8_193], %329 {strides = array<i32>} : memref<16x120xf32, #tpu.memory_space<vmem>>, vector<16x4xf32>,
    %331 = vector.extract_strided_slice %324 {offsets = [48, 0], sizes = [16, 4], strides = [1, 1]} : vector<480x4xf32> to vector<16x4xf32>
    %c0_194 = arith.constant 0 : index
    %c12 = arith.constant 12 : index
    %332 = vector.load %arg24[%c0_194, %c12] : memref<16x120xf32, #tpu.memory_space<vmem>>, vector<16x4xf32>
    tpu.vector_store %arg24[%c0_194, %c12], %331 {strides = array<i32>} : memref<16x120xf32, #tpu.memory_space<vmem>>, vector<16x4xf32>,
    %333 = vector.extract_strided_slice %324 {offsets = [64, 0], sizes = [16, 4], strides = [1, 1]} : vector<480x4xf32> to vector<16x4xf32>
    %c0_195 = arith.constant 0 : index
    %c16_196 = arith.constant 16 : index
    %334 = vector.load %arg24[%c0_195, %c16_196] : memref<16x120xf32, #tpu.memory_space<vmem>>, vector<16x4xf32>
    tpu.vector_store %arg24[%c0_195, %c16_196], %333 {strides = array<i32>} : memref<16x120xf32, #tpu.memory_space<vmem>>, vector<16x4xf32>,
    %335 = vector.extract_strided_slice %324 {offsets = [80, 0], sizes = [16, 4], strides = [1, 1]} : vector<480x4xf32> to vector<16x4xf32>
    %c0_197 = arith.constant 0 : index
    %c20 = arith.constant 20 : index
    %336 = vector.load %arg24[%c0_197, %c20] : memref<16x120xf32, #tpu.memory_space<vmem>>, vector<16x4xf32>
    tpu.vector_store %arg24[%c0_197, %c20], %335 {strides = array<i32>} : memref<16x120xf32, #tpu.memory_space<vmem>>, vector<16x4xf32>,
    %337 = vector.extract_strided_slice %324 {offsets = [96, 0], sizes = [16, 4], strides = [1, 1]} : vector<480x4xf32> to vector<16x4xf32>
    %c0_198 = arith.constant 0 : index
    %c24_199 = arith.constant 24 : index
    %338 = vector.load %arg24[%c0_198, %c24_199] : memref<16x120xf32, #tpu.memory_space<vmem>>, vector<16x4xf32>
    tpu.vector_store %arg24[%c0_198, %c24_199], %337 {strides = array<i32>} : memref<16x120xf32, #tpu.memory_space<vmem>>, vector<16x4xf32>,
    %339 = vector.extract_strided_slice %324 {offsets = [112, 0], sizes = [16, 4], strides = [1, 1]} : vector<480x4xf32> to vector<16x4xf32>
    %c0_200 = arith.constant 0 : index
    %c28 = arith.constant 28 : index
    %340 = vector.load %arg24[%c0_200, %c28] : memref<16x120xf32, #tpu.memory_space<vmem>>, vector<16x4xf32>
    tpu.vector_store %arg24[%c0_200, %c28], %339 {strides = array<i32>} : memref<16x120xf32, #tpu.memory_space<vmem>>, vector<16x4xf32>,
    %341 = vector.extract_strided_slice %324 {offsets = [128, 0], sizes = [16, 4], strides = [1, 1]} : vector<480x4xf32> to vector<16x4xf32>
    %c0_201 = arith.constant 0 : index
    %c32_202 = arith.constant 32 : index
    %342 = vector.load %arg24[%c0_201, %c32_202] : memref<16x120xf32, #tpu.memory_space<vmem>>, vector<16x4xf32>
    tpu.vector_store %arg24[%c0_201, %c32_202], %341 {strides = array<i32>} : memref<16x120xf32, #tpu.memory_space<vmem>>, vector<16x4xf32>,
    %343 = vector.extract_strided_slice %324 {offsets = [144, 0], sizes = [16, 4], strides = [1, 1]} : vector<480x4xf32> to vector<16x4xf32>
    %c0_203 = arith.constant 0 : index
    %c36 = arith.constant 36 : index
    %344 = vector.load %arg24[%c0_203, %c36] : memref<16x120xf32, #tpu.memory_space<vmem>>, vector<16x4xf32>
    tpu.vector_store %arg24[%c0_203, %c36], %343 {strides = array<i32>} : memref<16x120xf32, #tpu.memory_space<vmem>>, vector<16x4xf32>,
    %345 = vector.extract_strided_slice %324 {offsets = [160, 0], sizes = [16, 4], strides = [1, 1]} : vector<480x4xf32> to vector<16x4xf32>
    %c0_204 = arith.constant 0 : index
    %c40_205 = arith.constant 40 : index
    %346 = vector.load %arg24[%c0_204, %c40_205] : memref<16x120xf32, #tpu.memory_space<vmem>>, vector<16x4xf32>
    tpu.vector_store %arg24[%c0_204, %c40_205], %345 {strides = array<i32>} : memref<16x120xf32, #tpu.memory_space<vmem>>, vector<16x4xf32>,
    %347 = vector.extract_strided_slice %324 {offsets = [176, 0], sizes = [16, 4], strides = [1, 1]} : vector<480x4xf32> to vector<16x4xf32>
    %c0_206 = arith.constant 0 : index
    %c44 = arith.constant 44 : index
    %348 = vector.load %arg24[%c0_206, %c44] : memref<16x120xf32, #tpu.memory_space<vmem>>, vector<16x4xf32>
    tpu.vector_store %arg24[%c0_206, %c44], %347 {strides = array<i32>} : memref<16x120xf32, #tpu.memory_space<vmem>>, vector<16x4xf32>,
    %349 = vector.extract_strided_slice %324 {offsets = [192, 0], sizes = [16, 4], strides = [1, 1]} : vector<480x4xf32> to vector<16x4xf32>
    %c0_207 = arith.constant 0 : index
    %c48_208 = arith.constant 48 : index
    %350 = vector.load %arg24[%c0_207, %c48_208] : memref<16x120xf32, #tpu.memory_space<vmem>>, vector<16x4xf32>
    tpu.vector_store %arg24[%c0_207, %c48_208], %349 {strides = array<i32>} : memref<16x120xf32, #tpu.memory_space<vmem>>, vector<16x4xf32>,
    %351 = vector.extract_strided_slice %324 {offsets = [208, 0], sizes = [16, 4], strides = [1, 1]} : vector<480x4xf32> to vector<16x4xf32>
    %c0_209 = arith.constant 0 : index
    %c52 = arith.constant 52 : index
    %352 = vector.load %arg24[%c0_209, %c52] : memref<16x120xf32, #tpu.memory_space<vmem>>, vector<16x4xf32>
    tpu.vector_store %arg24[%c0_209, %c52], %351 {strides = array<i32>} : memref<16x120xf32, #tpu.memory_space<vmem>>, vector<16x4xf32>,
    %353 = vector.extract_strided_slice %324 {offsets = [224, 0], sizes = [16, 4], strides = [1, 1]} : vector<480x4xf32> to vector<16x4xf32>
    %c0_210 = arith.constant 0 : index
    %c56_211 = arith.constant 56 : index
    %354 = vector.load %arg24[%c0_210, %c56_211] : memref<16x120xf32, #tpu.memory_space<vmem>>, vector<16x4xf32>
    tpu.vector_store %arg24[%c0_210, %c56_211], %353 {strides = array<i32>} : memref<16x120xf32, #tpu.memory_space<vmem>>, vector<16x4xf32>,
    %355 = vector.extract_strided_slice %324 {offsets = [240, 0], sizes = [16, 4], strides = [1, 1]} : vector<480x4xf32> to vector<16x4xf32>
    %c0_212 = arith.constant 0 : index
    %c60 = arith.constant 60 : index
    %356 = vector.load %arg24[%c0_212, %c60] : memref<16x120xf32, #tpu.memory_space<vmem>>, vector<16x4xf32>
    tpu.vector_store %arg24[%c0_212, %c60], %355 {strides = array<i32>} : memref<16x120xf32, #tpu.memory_space<vmem>>, vector<16x4xf32>,
    %357 = vector.extract_strided_slice %324 {offsets = [256, 0], sizes = [16, 4], strides = [1, 1]} : vector<480x4xf32> to vector<16x4xf32>
    %c0_213 = arith.constant 0 : index
    %c64_214 = arith.constant 64 : index
    %358 = vector.load %arg24[%c0_213, %c64_214] : memref<16x120xf32, #tpu.memory_space<vmem>>, vector<16x4xf32>
    tpu.vector_store %arg24[%c0_213, %c64_214], %357 {strides = array<i32>} : memref<16x120xf32, #tpu.memory_space<vmem>>, vector<16x4xf32>,
    %359 = vector.extract_strided_slice %324 {offsets = [272, 0], sizes = [16, 4], strides = [1, 1]} : vector<480x4xf32> to vector<16x4xf32>
    %c0_215 = arith.constant 0 : index
    %c68 = arith.constant 68 : index
    %360 = vector.load %arg24[%c0_215, %c68] : memref<16x120xf32, #tpu.memory_space<vmem>>, vector<16x4xf32>
    tpu.vector_store %arg24[%c0_215, %c68], %359 {strides = array<i32>} : memref<16x120xf32, #tpu.memory_space<vmem>>, vector<16x4xf32>,
    %361 = vector.extract_strided_slice %324 {offsets = [288, 0], sizes = [16, 4], strides = [1, 1]} : vector<480x4xf32> to vector<16x4xf32>
    %c0_216 = arith.constant 0 : index
    %c72_217 = arith.constant 72 : index
    %362 = vector.load %arg24[%c0_216, %c72_217] : memref<16x120xf32, #tpu.memory_space<vmem>>, vector<16x4xf32>
    tpu.vector_store %arg24[%c0_216, %c72_217], %361 {strides = array<i32>} : memref<16x120xf32, #tpu.memory_space<vmem>>, vector<16x4xf32>,
    %363 = vector.extract_strided_slice %324 {offsets = [304, 0], sizes = [16, 4], strides = [1, 1]} : vector<480x4xf32> to vector<16x4xf32>
    %c0_218 = arith.constant 0 : index
    %c76 = arith.constant 76 : index
    %364 = vector.load %arg24[%c0_218, %c76] : memref<16x120xf32, #tpu.memory_space<vmem>>, vector<16x4xf32>
    tpu.vector_store %arg24[%c0_218, %c76], %363 {strides = array<i32>} : memref<16x120xf32, #tpu.memory_space<vmem>>, vector<16x4xf32>,
    %365 = vector.extract_strided_slice %324 {offsets = [320, 0], sizes = [16, 4], strides = [1, 1]} : vector<480x4xf32> to vector<16x4xf32>
    %c0_219 = arith.constant 0 : index
    %c80_220 = arith.constant 80 : index
    %366 = vector.load %arg24[%c0_219, %c80_220] : memref<16x120xf32, #tpu.memory_space<vmem>>, vector<16x4xf32>
    tpu.vector_store %arg24[%c0_219, %c80_220], %365 {strides = array<i32>} : memref<16x120xf32, #tpu.memory_space<vmem>>, vector<16x4xf32>,
    %367 = vector.extract_strided_slice %324 {offsets = [336, 0], sizes = [16, 4], strides = [1, 1]} : vector<480x4xf32> to vector<16x4xf32>
    %c0_221 = arith.constant 0 : index
    %c84 = arith.constant 84 : index
    %368 = vector.load %arg24[%c0_221, %c84] : memref<16x120xf32, #tpu.memory_space<vmem>>, vector<16x4xf32>
    tpu.vector_store %arg24[%c0_221, %c84], %367 {strides = array<i32>} : memref<16x120xf32, #tpu.memory_space<vmem>>, vector<16x4xf32>,
    %369 = vector.extract_strided_slice %324 {offsets = [352, 0], sizes = [16, 4], strides = [1, 1]} : vector<480x4xf32> to vector<16x4xf32>
    %c0_222 = arith.constant 0 : index
    %c88_223 = arith.constant 88 : index
    %370 = vector.load %arg24[%c0_222, %c88_223] : memref<16x120xf32, #tpu.memory_space<vmem>>, vector<16x4xf32>
    tpu.vector_store %arg24[%c0_222, %c88_223], %369 {strides = array<i32>} : memref<16x120xf32, #tpu.memory_space<vmem>>, vector<16x4xf32>,
    %371 = vector.extract_strided_slice %324 {offsets = [368, 0], sizes = [16, 4], strides = [1, 1]} : vector<480x4xf32> to vector<16x4xf32>
    %c0_224 = arith.constant 0 : index
    %c92 = arith.constant 92 : index
    %372 = vector.load %arg24[%c0_224, %c92] : memref<16x120xf32, #tpu.memory_space<vmem>>, vector<16x4xf32>
    tpu.vector_store %arg24[%c0_224, %c92], %371 {strides = array<i32>} : memref<16x120xf32, #tpu.memory_space<vmem>>, vector<16x4xf32>,
    %373 = vector.extract_strided_slice %324 {offsets = [384, 0], sizes = [16, 4], strides = [1, 1]} : vector<480x4xf32> to vector<16x4xf32>
    %c0_225 = arith.constant 0 : index
    %c96_226 = arith.constant 96 : index
    %374 = vector.load %arg24[%c0_225, %c96_226] : memref<16x120xf32, #tpu.memory_space<vmem>>, vector<16x4xf32>
    tpu.vector_store %arg24[%c0_225, %c96_226], %373 {strides = array<i32>} : memref<16x120xf32, #tpu.memory_space<vmem>>, vector<16x4xf32>,
    %375 = vector.extract_strided_slice %324 {offsets = [400, 0], sizes = [16, 4], strides = [1, 1]} : vector<480x4xf32> to vector<16x4xf32>
    %c0_227 = arith.constant 0 : index
    %c100 = arith.constant 100 : index
    %376 = vector.load %arg24[%c0_227, %c100] : memref<16x120xf32, #tpu.memory_space<vmem>>, vector<16x4xf32>
    tpu.vector_store %arg24[%c0_227, %c100], %375 {strides = array<i32>} : memref<16x120xf32, #tpu.memory_space<vmem>>, vector<16x4xf32>,
    %377 = vector.extract_strided_slice %324 {offsets = [416, 0], sizes = [16, 4], strides = [1, 1]} : vector<480x4xf32> to vector<16x4xf32>
    %c0_228 = arith.constant 0 : index
    %c104_229 = arith.constant 104 : index
    %378 = vector.load %arg24[%c0_228, %c104_229] : memref<16x120xf32, #tpu.memory_space<vmem>>, vector<16x4xf32>
    tpu.vector_store %arg24[%c0_228, %c104_229], %377 {strides = array<i32>} : memref<16x120xf32, #tpu.memory_space<vmem>>, vector<16x4xf32>,
    %379 = vector.extract_strided_slice %324 {offsets = [432, 0], sizes = [16, 4], strides = [1, 1]} : vector<480x4xf32> to vector<16x4xf32>
    %c0_230 = arith.constant 0 : index
    %c108 = arith.constant 108 : index
    %380 = vector.load %arg24[%c0_230, %c108] : memref<16x120xf32, #tpu.memory_space<vmem>>, vector<16x4xf32>
    tpu.vector_store %arg24[%c0_230, %c108], %379 {strides = array<i32>} : memref<16x120xf32, #tpu.memory_space<vmem>>, vector<16x4xf32>,
    %381 = vector.extract_strided_slice %324 {offsets = [448, 0], sizes = [16, 4], strides = [1, 1]} : vector<480x4xf32> to vector<16x4xf32>
    %c0_231 = arith.constant 0 : index
    %c112_232 = arith.constant 112 : index
    %382 = vector.load %arg24[%c0_231, %c112_232] : memref<16x120xf32, #tpu.memory_space<vmem>>, vector<16x4xf32>
    tpu.vector_store %arg24[%c0_231, %c112_232], %381 {strides = array<i32>} : memref<16x120xf32, #tpu.memory_space<vmem>>, vector<16x4xf32>,
    %383 = vector.extract_strided_slice %324 {offsets = [464, 0], sizes = [16, 4], strides = [1, 1]} : vector<480x4xf32> to vector<16x4xf32>
    %c0_233 = arith.constant 0 : index
    %c116 = arith.constant 116 : index
    %384 = vector.load %arg24[%c0_233, %c116] : memref<16x120xf32, #tpu.memory_space<vmem>>, vector<16x4xf32>
    tpu.vector_store %arg24[%c0_233, %c116], %383 {strides = array<i32>} : memref<16x120xf32, #tpu.memory_space<vmem>>, vector<16x4xf32>,
    %c0_234 = arith.constant 0 : index
    %c0_235 = arith.constant 0 : index
    %385 = vector.load %arg15[%c0_234, %c0_235] : memref<4x16xf32, #tpu.memory_space<vmem>>, vector<4x16xf32>
    %c0_236 = arith.constant 0 : index
    %c0_237 = arith.constant 0 : index
    %386 = vector.load %arg24[%c0_236, %c0_237] : memref<16x120xf32, #tpu.memory_space<vmem>>, vector<16x120xf32>
    %cst_238 = arith.constant dense<0.000000e+00> : vector<4x120xf32>
    %387 = tpu.matmul %385, %386, %cst_238 {dimension_numbers = #tpu.dot_dimension_numbers<[1], [0], [0], [1], [0, 0, 1, 1], [], []>} : vector<4x16xf32>, vector<16x120xf32>, vector<4x120xf32> -> vector<4x120xf32>
    %388 = vector.extract_strided_slice %387 {offsets = [0, 0], sizes = [4, 24], strides = [1, 1]} : vector<4x120xf32> to vector<4x24xf32>
    %389 = vector.extract_strided_slice %387 {offsets = [0, 24], sizes = [4, 24], strides = [1, 1]} : vector<4x120xf32> to vector<4x24xf32>
    %390 = vector.extract_strided_slice %387 {offsets = [0, 48], sizes = [4, 24], strides = [1, 1]} : vector<4x120xf32> to vector<4x24xf32>
    %391 = vector.extract_strided_slice %387 {offsets = [0, 72], sizes = [4, 24], strides = [1, 1]} : vector<4x120xf32> to vector<4x24xf32>
    %392 = vector.extract_strided_slice %387 {offsets = [0, 96], sizes = [4, 24], strides = [1, 1]} : vector<4x120xf32> to vector<4x24xf32>
    %393 = arith.mulf %388, %388 : vector<4x24xf32>
    %394 = arith.mulf %389, %389 : vector<4x24xf32>
    %395 = arith.mulf %388, %389 : vector<4x24xf32>
    %396 = arith.subf %390, %393 : vector<4x24xf32>
    %397 = arith.subf %391, %394 : vector<4x24xf32>
    %398 = arith.subf %392, %395 : vector<4x24xf32>
    %cst_239 = arith.constant 2.000000e+00 : f32
    %399 = vector.broadcast %cst_239 : f32 to vector<4x24xf32>
    %400 = arith.mulf %399, %395 : vector<4x24xf32>
    %cst_240 = arith.constant 9.99999974E-5 : f32
    %401 = vector.broadcast %cst_240 : f32 to vector<4x24xf32>
    %402 = arith.addf %400, %401 : vector<4x24xf32>
    %cst_241 = arith.constant 2.000000e+00 : f32
    %403 = vector.broadcast %cst_241 : f32 to vector<4x24xf32>
    %404 = arith.mulf %403, %398 : vector<4x24xf32>
    %cst_242 = arith.constant 8.99999984E-4 : f32
    %405 = vector.broadcast %cst_242 : f32 to vector<4x24xf32>
    %406 = arith.addf %404, %405 : vector<4x24xf32>
    %407 = arith.mulf %402, %406 : vector<4x24xf32>
    %408 = arith.addf %393, %394 : vector<4x24xf32>
    %cst_243 = arith.constant 9.99999974E-5 : f32
    %409 = vector.broadcast %cst_243 : f32 to vector<4x24xf32>
    %410 = arith.addf %408, %409 : vector<4x24xf32>
    %411 = arith.addf %396, %397 : vector<4x24xf32>
    %cst_244 = arith.constant 8.99999984E-4 : f32
    %412 = vector.broadcast %cst_244 : f32 to vector<4x24xf32>
    %413 = arith.addf %411, %412 : vector<4x24xf32>
    %414 = arith.mulf %410, %413 : vector<4x24xf32>
    %415 = arith.divf %407, %414 : vector<4x24xf32>
    %416 = vector.shape_cast %415 : vector<4x24xf32> to vector<1x4x24xf32>
    %cst_245 = arith.constant dense<0.000000e+00> : vector<1xf32>
    %417 = vector.multi_reduction <add>, %416, %cst_245 [1, 2] : vector<1x4x24xf32> to vector<1xf32>
    %418 = vector.shape_cast %417 : vector<1xf32> to vector<1x1x1xf32>
    %419 = vector.extract %418[0, 0, 0] : f32 from vector<1x1x1xf32>
    %cst_246 = arith.constant 0.010416667 : f32
    %420 = arith.mulf %419, %cst_246 : f32
    %cst_247 = arith.constant 2.363000e-01 : f32
    %421 = arith.mulf %420, %cst_247 : f32
    %422 = arith.mulf %316, %421 : f32
    %c0_248 = arith.constant 0 : index
    %c0_249 = arith.constant 0 : index
    %423 = vector.load %arg16[%c0_248, %c0_249] : memref<96x12xf32, #tpu.memory_space<vmem>>, vector<96x12xf32>
    %c0_250 = arith.constant 0 : index
    %c0_251 = arith.constant 0 : index
    %424 = vector.load %arg17[%c0_250, %c0_251] : memref<96x12xf32, #tpu.memory_space<vmem>>, vector<96x12xf32>
    %425 = arith.mulf %423, %423 : vector<96x12xf32>
    %426 = arith.mulf %424, %424 : vector<96x12xf32>
    %427 = arith.mulf %423, %424 : vector<96x12xf32>
    %428 = tpu.concatenate %423, %424, %425, %426, %427 in 0 : vector<96x12xf32>, vector<96x12xf32>, vector<96x12xf32>, vector<96x12xf32>, vector<96x12xf32> -> vector<480x12xf32>
    %c0_252 = arith.constant 0 : index
    %c0_253 = arith.constant 0 : index
    %429 = vector.load %arg18[%c0_252, %c0_253] : memref<12x2xf32, #tpu.memory_space<vmem>>, vector<12x2xf32>
    %cst_254 = arith.constant dense<0.000000e+00> : vector<480x2xf32>
    %430 = tpu.matmul %428, %429, %cst_254 {dimension_numbers = #tpu.dot_dimension_numbers<[1], [0], [0], [1], [0, 0, 1, 1], [], []>} : vector<480x12xf32>, vector<12x2xf32>, vector<480x2xf32> -> vector<480x2xf32>
    %431 = vector.extract_strided_slice %430 {offsets = [0, 0], sizes = [16, 2], strides = [1, 1]} : vector<480x2xf32> to vector<16x2xf32>
    %c0_255 = arith.constant 0 : index
    %c0_256 = arith.constant 0 : index
    %432 = vector.load %arg25[%c0_255, %c0_256] : memref<16x60xf32, #tpu.memory_space<vmem>>, vector<16x2xf32>
    tpu.vector_store %arg25[%c0_255, %c0_256], %431 {strides = array<i32>} : memref<16x60xf32, #tpu.memory_space<vmem>>, vector<16x2xf32>,
    %433 = vector.extract_strided_slice %430 {offsets = [16, 0], sizes = [16, 2], strides = [1, 1]} : vector<480x2xf32> to vector<16x2xf32>
    %c0_257 = arith.constant 0 : index
    %c2 = arith.constant 2 : index
    %434 = vector.load %arg25[%c0_257, %c2] : memref<16x60xf32, #tpu.memory_space<vmem>>, vector<16x2xf32>
    tpu.vector_store %arg25[%c0_257, %c2], %433 {strides = array<i32>} : memref<16x60xf32, #tpu.memory_space<vmem>>, vector<16x2xf32>,
    %435 = vector.extract_strided_slice %430 {offsets = [32, 0], sizes = [16, 2], strides = [1, 1]} : vector<480x2xf32> to vector<16x2xf32>
    %c0_258 = arith.constant 0 : index
    %c4_259 = arith.constant 4 : index
    %436 = vector.load %arg25[%c0_258, %c4_259] : memref<16x60xf32, #tpu.memory_space<vmem>>, vector<16x2xf32>
    tpu.vector_store %arg25[%c0_258, %c4_259], %435 {strides = array<i32>} : memref<16x60xf32, #tpu.memory_space<vmem>>, vector<16x2xf32>,
    %437 = vector.extract_strided_slice %430 {offsets = [48, 0], sizes = [16, 2], strides = [1, 1]} : vector<480x2xf32> to vector<16x2xf32>
    %c0_260 = arith.constant 0 : index
    %c6 = arith.constant 6 : index
    %438 = vector.load %arg25[%c0_260, %c6] : memref<16x60xf32, #tpu.memory_space<vmem>>, vector<16x2xf32>
    tpu.vector_store %arg25[%c0_260, %c6], %437 {strides = array<i32>} : memref<16x60xf32, #tpu.memory_space<vmem>>, vector<16x2xf32>,
    %439 = vector.extract_strided_slice %430 {offsets = [64, 0], sizes = [16, 2], strides = [1, 1]} : vector<480x2xf32> to vector<16x2xf32>
    %c0_261 = arith.constant 0 : index
    %c8_262 = arith.constant 8 : index
    %440 = vector.load %arg25[%c0_261, %c8_262] : memref<16x60xf32, #tpu.memory_space<vmem>>, vector<16x2xf32>
    tpu.vector_store %arg25[%c0_261, %c8_262], %439 {strides = array<i32>} : memref<16x60xf32, #tpu.memory_space<vmem>>, vector<16x2xf32>,
    %441 = vector.extract_strided_slice %430 {offsets = [80, 0], sizes = [16, 2], strides = [1, 1]} : vector<480x2xf32> to vector<16x2xf32>
    %c0_263 = arith.constant 0 : index
    %c10 = arith.constant 10 : index
    %442 = vector.load %arg25[%c0_263, %c10] : memref<16x60xf32, #tpu.memory_space<vmem>>, vector<16x2xf32>
    tpu.vector_store %arg25[%c0_263, %c10], %441 {strides = array<i32>} : memref<16x60xf32, #tpu.memory_space<vmem>>, vector<16x2xf32>,
    %443 = vector.extract_strided_slice %430 {offsets = [96, 0], sizes = [16, 2], strides = [1, 1]} : vector<480x2xf32> to vector<16x2xf32>
    %c0_264 = arith.constant 0 : index
    %c12_265 = arith.constant 12 : index
    %444 = vector.load %arg25[%c0_264, %c12_265] : memref<16x60xf32, #tpu.memory_space<vmem>>, vector<16x2xf32>
    tpu.vector_store %arg25[%c0_264, %c12_265], %443 {strides = array<i32>} : memref<16x60xf32, #tpu.memory_space<vmem>>, vector<16x2xf32>,
    %445 = vector.extract_strided_slice %430 {offsets = [112, 0], sizes = [16, 2], strides = [1, 1]} : vector<480x2xf32> to vector<16x2xf32>
    %c0_266 = arith.constant 0 : index
    %c14 = arith.constant 14 : index
    %446 = vector.load %arg25[%c0_266, %c14] : memref<16x60xf32, #tpu.memory_space<vmem>>, vector<16x2xf32>
    tpu.vector_store %arg25[%c0_266, %c14], %445 {strides = array<i32>} : memref<16x60xf32, #tpu.memory_space<vmem>>, vector<16x2xf32>,
    %447 = vector.extract_strided_slice %430 {offsets = [128, 0], sizes = [16, 2], strides = [1, 1]} : vector<480x2xf32> to vector<16x2xf32>
    %c0_267 = arith.constant 0 : index
    %c16_268 = arith.constant 16 : index
    %448 = vector.load %arg25[%c0_267, %c16_268] : memref<16x60xf32, #tpu.memory_space<vmem>>, vector<16x2xf32>
    tpu.vector_store %arg25[%c0_267, %c16_268], %447 {strides = array<i32>} : memref<16x60xf32, #tpu.memory_space<vmem>>, vector<16x2xf32>,
    %449 = vector.extract_strided_slice %430 {offsets = [144, 0], sizes = [16, 2], strides = [1, 1]} : vector<480x2xf32> to vector<16x2xf32>
    %c0_269 = arith.constant 0 : index
    %c18 = arith.constant 18 : index
    %450 = vector.load %arg25[%c0_269, %c18] : memref<16x60xf32, #tpu.memory_space<vmem>>, vector<16x2xf32>
    tpu.vector_store %arg25[%c0_269, %c18], %449 {strides = array<i32>} : memref<16x60xf32, #tpu.memory_space<vmem>>, vector<16x2xf32>,
    %451 = vector.extract_strided_slice %430 {offsets = [160, 0], sizes = [16, 2], strides = [1, 1]} : vector<480x2xf32> to vector<16x2xf32>
    %c0_270 = arith.constant 0 : index
    %c20_271 = arith.constant 20 : index
    %452 = vector.load %arg25[%c0_270, %c20_271] : memref<16x60xf32, #tpu.memory_space<vmem>>, vector<16x2xf32>
    tpu.vector_store %arg25[%c0_270, %c20_271], %451 {strides = array<i32>} : memref<16x60xf32, #tpu.memory_space<vmem>>, vector<16x2xf32>,
    %453 = vector.extract_strided_slice %430 {offsets = [176, 0], sizes = [16, 2], strides = [1, 1]} : vector<480x2xf32> to vector<16x2xf32>
    %c0_272 = arith.constant 0 : index
    %c22 = arith.constant 22 : index
    %454 = vector.load %arg25[%c0_272, %c22] : memref<16x60xf32, #tpu.memory_space<vmem>>, vector<16x2xf32>
    tpu.vector_store %arg25[%c0_272, %c22], %453 {strides = array<i32>} : memref<16x60xf32, #tpu.memory_space<vmem>>, vector<16x2xf32>,
    %455 = vector.extract_strided_slice %430 {offsets = [192, 0], sizes = [16, 2], strides = [1, 1]} : vector<480x2xf32> to vector<16x2xf32>
    %c0_273 = arith.constant 0 : index
    %c24_274 = arith.constant 24 : index
    %456 = vector.load %arg25[%c0_273, %c24_274] : memref<16x60xf32, #tpu.memory_space<vmem>>, vector<16x2xf32>
    tpu.vector_store %arg25[%c0_273, %c24_274], %455 {strides = array<i32>} : memref<16x60xf32, #tpu.memory_space<vmem>>, vector<16x2xf32>,
    %457 = vector.extract_strided_slice %430 {offsets = [208, 0], sizes = [16, 2], strides = [1, 1]} : vector<480x2xf32> to vector<16x2xf32>
    %c0_275 = arith.constant 0 : index
    %c26 = arith.constant 26 : index
    %458 = vector.load %arg25[%c0_275, %c26] : memref<16x60xf32, #tpu.memory_space<vmem>>, vector<16x2xf32>
    tpu.vector_store %arg25[%c0_275, %c26], %457 {strides = array<i32>} : memref<16x60xf32, #tpu.memory_space<vmem>>, vector<16x2xf32>,
    %459 = vector.extract_strided_slice %430 {offsets = [224, 0], sizes = [16, 2], strides = [1, 1]} : vector<480x2xf32> to vector<16x2xf32>
    %c0_276 = arith.constant 0 : index
    %c28_277 = arith.constant 28 : index
    %460 = vector.load %arg25[%c0_276, %c28_277] : memref<16x60xf32, #tpu.memory_space<vmem>>, vector<16x2xf32>
    tpu.vector_store %arg25[%c0_276, %c28_277], %459 {strides = array<i32>} : memref<16x60xf32, #tpu.memory_space<vmem>>, vector<16x2xf32>,
    %461 = vector.extract_strided_slice %430 {offsets = [240, 0], sizes = [16, 2], strides = [1, 1]} : vector<480x2xf32> to vector<16x2xf32>
    %c0_278 = arith.constant 0 : index
    %c30 = arith.constant 30 : index
    %462 = vector.load %arg25[%c0_278, %c30] : memref<16x60xf32, #tpu.memory_space<vmem>>, vector<16x2xf32>
    tpu.vector_store %arg25[%c0_278, %c30], %461 {strides = array<i32>} : memref<16x60xf32, #tpu.memory_space<vmem>>, vector<16x2xf32>,
    %463 = vector.extract_strided_slice %430 {offsets = [256, 0], sizes = [16, 2], strides = [1, 1]} : vector<480x2xf32> to vector<16x2xf32>
    %c0_279 = arith.constant 0 : index
    %c32_280 = arith.constant 32 : index
    %464 = vector.load %arg25[%c0_279, %c32_280] : memref<16x60xf32, #tpu.memory_space<vmem>>, vector<16x2xf32>
    tpu.vector_store %arg25[%c0_279, %c32_280], %463 {strides = array<i32>} : memref<16x60xf32, #tpu.memory_space<vmem>>, vector<16x2xf32>,
    %465 = vector.extract_strided_slice %430 {offsets = [272, 0], sizes = [16, 2], strides = [1, 1]} : vector<480x2xf32> to vector<16x2xf32>
    %c0_281 = arith.constant 0 : index
    %c34 = arith.constant 34 : index
    %466 = vector.load %arg25[%c0_281, %c34] : memref<16x60xf32, #tpu.memory_space<vmem>>, vector<16x2xf32>
    tpu.vector_store %arg25[%c0_281, %c34], %465 {strides = array<i32>} : memref<16x60xf32, #tpu.memory_space<vmem>>, vector<16x2xf32>,
    %467 = vector.extract_strided_slice %430 {offsets = [288, 0], sizes = [16, 2], strides = [1, 1]} : vector<480x2xf32> to vector<16x2xf32>
    %c0_282 = arith.constant 0 : index
    %c36_283 = arith.constant 36 : index
    %468 = vector.load %arg25[%c0_282, %c36_283] : memref<16x60xf32, #tpu.memory_space<vmem>>, vector<16x2xf32>
    tpu.vector_store %arg25[%c0_282, %c36_283], %467 {strides = array<i32>} : memref<16x60xf32, #tpu.memory_space<vmem>>, vector<16x2xf32>,
    %469 = vector.extract_strided_slice %430 {offsets = [304, 0], sizes = [16, 2], strides = [1, 1]} : vector<480x2xf32> to vector<16x2xf32>
    %c0_284 = arith.constant 0 : index
    %c38 = arith.constant 38 : index
    %470 = vector.load %arg25[%c0_284, %c38] : memref<16x60xf32, #tpu.memory_space<vmem>>, vector<16x2xf32>
    tpu.vector_store %arg25[%c0_284, %c38], %469 {strides = array<i32>} : memref<16x60xf32, #tpu.memory_space<vmem>>, vector<16x2xf32>,
    %471 = vector.extract_strided_slice %430 {offsets = [320, 0], sizes = [16, 2], strides = [1, 1]} : vector<480x2xf32> to vector<16x2xf32>
    %c0_285 = arith.constant 0 : index
    %c40_286 = arith.constant 40 : index
    %472 = vector.load %arg25[%c0_285, %c40_286] : memref<16x60xf32, #tpu.memory_space<vmem>>, vector<16x2xf32>
    tpu.vector_store %arg25[%c0_285, %c40_286], %471 {strides = array<i32>} : memref<16x60xf32, #tpu.memory_space<vmem>>, vector<16x2xf32>,
    %473 = vector.extract_strided_slice %430 {offsets = [336, 0], sizes = [16, 2], strides = [1, 1]} : vector<480x2xf32> to vector<16x2xf32>
    %c0_287 = arith.constant 0 : index
    %c42 = arith.constant 42 : index
    %474 = vector.load %arg25[%c0_287, %c42] : memref<16x60xf32, #tpu.memory_space<vmem>>, vector<16x2xf32>
    tpu.vector_store %arg25[%c0_287, %c42], %473 {strides = array<i32>} : memref<16x60xf32, #tpu.memory_space<vmem>>, vector<16x2xf32>,
    %475 = vector.extract_strided_slice %430 {offsets = [352, 0], sizes = [16, 2], strides = [1, 1]} : vector<480x2xf32> to vector<16x2xf32>
    %c0_288 = arith.constant 0 : index
    %c44_289 = arith.constant 44 : index
    %476 = vector.load %arg25[%c0_288, %c44_289] : memref<16x60xf32, #tpu.memory_space<vmem>>, vector<16x2xf32>
    tpu.vector_store %arg25[%c0_288, %c44_289], %475 {strides = array<i32>} : memref<16x60xf32, #tpu.memory_space<vmem>>, vector<16x2xf32>,
    %477 = vector.extract_strided_slice %430 {offsets = [368, 0], sizes = [16, 2], strides = [1, 1]} : vector<480x2xf32> to vector<16x2xf32>
    %c0_290 = arith.constant 0 : index
    %c46 = arith.constant 46 : index
    %478 = vector.load %arg25[%c0_290, %c46] : memref<16x60xf32, #tpu.memory_space<vmem>>, vector<16x2xf32>
    tpu.vector_store %arg25[%c0_290, %c46], %477 {strides = array<i32>} : memref<16x60xf32, #tpu.memory_space<vmem>>, vector<16x2xf32>,
    %479 = vector.extract_strided_slice %430 {offsets = [384, 0], sizes = [16, 2], strides = [1, 1]} : vector<480x2xf32> to vector<16x2xf32>
    %c0_291 = arith.constant 0 : index
    %c48_292 = arith.constant 48 : index
    %480 = vector.load %arg25[%c0_291, %c48_292] : memref<16x60xf32, #tpu.memory_space<vmem>>, vector<16x2xf32>
    tpu.vector_store %arg25[%c0_291, %c48_292], %479 {strides = array<i32>} : memref<16x60xf32, #tpu.memory_space<vmem>>, vector<16x2xf32>,
    %481 = vector.extract_strided_slice %430 {offsets = [400, 0], sizes = [16, 2], strides = [1, 1]} : vector<480x2xf32> to vector<16x2xf32>
    %c0_293 = arith.constant 0 : index
    %c50 = arith.constant 50 : index
    %482 = vector.load %arg25[%c0_293, %c50] : memref<16x60xf32, #tpu.memory_space<vmem>>, vector<16x2xf32>
    tpu.vector_store %arg25[%c0_293, %c50], %481 {strides = array<i32>} : memref<16x60xf32, #tpu.memory_space<vmem>>, vector<16x2xf32>,
    %483 = vector.extract_strided_slice %430 {offsets = [416, 0], sizes = [16, 2], strides = [1, 1]} : vector<480x2xf32> to vector<16x2xf32>
    %c0_294 = arith.constant 0 : index
    %c52_295 = arith.constant 52 : index
    %484 = vector.load %arg25[%c0_294, %c52_295] : memref<16x60xf32, #tpu.memory_space<vmem>>, vector<16x2xf32>
    tpu.vector_store %arg25[%c0_294, %c52_295], %483 {strides = array<i32>} : memref<16x60xf32, #tpu.memory_space<vmem>>, vector<16x2xf32>,
    %485 = vector.extract_strided_slice %430 {offsets = [432, 0], sizes = [16, 2], strides = [1, 1]} : vector<480x2xf32> to vector<16x2xf32>
    %c0_296 = arith.constant 0 : index
    %c54 = arith.constant 54 : index
    %486 = vector.load %arg25[%c0_296, %c54] : memref<16x60xf32, #tpu.memory_space<vmem>>, vector<16x2xf32>
    tpu.vector_store %arg25[%c0_296, %c54], %485 {strides = array<i32>} : memref<16x60xf32, #tpu.memory_space<vmem>>, vector<16x2xf32>,
    %487 = vector.extract_strided_slice %430 {offsets = [448, 0], sizes = [16, 2], strides = [1, 1]} : vector<480x2xf32> to vector<16x2xf32>
    %c0_297 = arith.constant 0 : index
    %c56_298 = arith.constant 56 : index
    %488 = vector.load %arg25[%c0_297, %c56_298] : memref<16x60xf32, #tpu.memory_space<vmem>>, vector<16x2xf32>
    tpu.vector_store %arg25[%c0_297, %c56_298], %487 {strides = array<i32>} : memref<16x60xf32, #tpu.memory_space<vmem>>, vector<16x2xf32>,
    %489 = vector.extract_strided_slice %430 {offsets = [464, 0], sizes = [16, 2], strides = [1, 1]} : vector<480x2xf32> to vector<16x2xf32>
    %c0_299 = arith.constant 0 : index
    %c58 = arith.constant 58 : index
    %490 = vector.load %arg25[%c0_299, %c58] : memref<16x60xf32, #tpu.memory_space<vmem>>, vector<16x2xf32>
    tpu.vector_store %arg25[%c0_299, %c58], %489 {strides = array<i32>} : memref<16x60xf32, #tpu.memory_space<vmem>>, vector<16x2xf32>,
    %c0_300 = arith.constant 0 : index
    %c0_301 = arith.constant 0 : index
    %491 = vector.load %arg19[%c0_300, %c0_301] : memref<2x16xf32, #tpu.memory_space<vmem>>, vector<2x16xf32>
    %c0_302 = arith.constant 0 : index
    %c0_303 = arith.constant 0 : index
    %492 = vector.load %arg25[%c0_302, %c0_303] : memref<16x60xf32, #tpu.memory_space<vmem>>, vector<16x60xf32>
    %cst_304 = arith.constant dense<0.000000e+00> : vector<2x60xf32>
    %493 = tpu.matmul %491, %492, %cst_304 {dimension_numbers = #tpu.dot_dimension_numbers<[1], [0], [0], [1], [0, 0, 1, 1], [], []>} : vector<2x16xf32>, vector<16x60xf32>, vector<2x60xf32> -> vector<2x60xf32>
    %494 = vector.extract_strided_slice %493 {offsets = [0, 0], sizes = [2, 12], strides = [1, 1]} : vector<2x60xf32> to vector<2x12xf32>
    %495 = vector.extract_strided_slice %493 {offsets = [0, 12], sizes = [2, 12], strides = [1, 1]} : vector<2x60xf32> to vector<2x12xf32>
    %496 = vector.extract_strided_slice %493 {offsets = [0, 24], sizes = [2, 12], strides = [1, 1]} : vector<2x60xf32> to vector<2x12xf32>
    %497 = vector.extract_strided_slice %493 {offsets = [0, 36], sizes = [2, 12], strides = [1, 1]} : vector<2x60xf32> to vector<2x12xf32>
    %498 = vector.extract_strided_slice %493 {offsets = [0, 48], sizes = [2, 12], strides = [1, 1]} : vector<2x60xf32> to vector<2x12xf32>
    %499 = arith.mulf %494, %494 : vector<2x12xf32>
    %500 = arith.mulf %495, %495 : vector<2x12xf32>
    %501 = arith.mulf %494, %495 : vector<2x12xf32>
    %502 = arith.subf %496, %499 : vector<2x12xf32>
    %503 = arith.subf %497, %500 : vector<2x12xf32>
    %504 = arith.subf %498, %501 : vector<2x12xf32>
    %cst_305 = arith.constant 2.000000e+00 : f32
    %505 = vector.broadcast %cst_305 : f32 to vector<2x12xf32>
    %506 = arith.mulf %505, %501 : vector<2x12xf32>
    %cst_306 = arith.constant 9.99999974E-5 : f32
    %507 = vector.broadcast %cst_306 : f32 to vector<2x12xf32>
    %508 = arith.addf %506, %507 : vector<2x12xf32>
    %cst_307 = arith.constant 2.000000e+00 : f32
    %509 = vector.broadcast %cst_307 : f32 to vector<2x12xf32>
    %510 = arith.mulf %509, %504 : vector<2x12xf32>
    %cst_308 = arith.constant 8.99999984E-4 : f32
    %511 = vector.broadcast %cst_308 : f32 to vector<2x12xf32>
    %512 = arith.addf %510, %511 : vector<2x12xf32>
    %513 = arith.mulf %508, %512 : vector<2x12xf32>
    %514 = arith.addf %499, %500 : vector<2x12xf32>
    %cst_309 = arith.constant 9.99999974E-5 : f32
    %515 = vector.broadcast %cst_309 : f32 to vector<2x12xf32>
    %516 = arith.addf %514, %515 : vector<2x12xf32>
    %517 = arith.addf %502, %503 : vector<2x12xf32>
    %cst_310 = arith.constant 8.99999984E-4 : f32
    %518 = vector.broadcast %cst_310 : f32 to vector<2x12xf32>
    %519 = arith.addf %517, %518 : vector<2x12xf32>
    %520 = arith.mulf %516, %519 : vector<2x12xf32>
    %521 = arith.divf %513, %520 : vector<2x12xf32>
    %522 = vector.shape_cast %521 : vector<2x12xf32> to vector<1x2x12xf32>
    %cst_311 = arith.constant dense<0.000000e+00> : vector<1xf32>
    %523 = vector.multi_reduction <add>, %522, %cst_311 [1, 2] : vector<1x2x12xf32> to vector<1xf32>
    %524 = vector.shape_cast %523 : vector<1xf32> to vector<1x1x1xf32>
    %525 = vector.extract %524[0, 0, 0] : f32 from vector<1x1x1xf32>
    %cst_312 = arith.constant 0.0416666679 : f32
    %526 = arith.mulf %525, %cst_312 : f32
    %cst_313 = arith.constant 1.333000e-01 : f32
    %527 = arith.mulf %526, %cst_313 : f32
    %528 = arith.mulf %422, %527 : f32
    %c0_314 = arith.constant 0 : index
    %529 = memref.load %arg20[%c0_314] : memref<1xf32, #tpu.memory_space<smem>>
    memref.store %528, %arg20[%c0_314] : memref<1xf32, #tpu.memory_space<smem>>
    return
  }
}

</mosaic_0001>

<llo_original>
// kernel: ms_ssim.1
$region0: #{ms_ssim.1}
  #allocation0 [shape = 'u32[]', space=smem, size = 0x4, offset = 0x4, fixed_abs, tag = 'smem constant byte address 0x4 - core index']
  #allocation1 [shape = 'u32[72,128]{1,0:T(1,128)}', space=vmem, size = 0x9000, scoped, tag = 'internal scratch']
  #allocation2 [shape = 'f32[48,960]{1,0:T(8,128)}', space=vmem, size = 0x30000, scoped, tag = 'scratch operand']
  #allocation3 [shape = 'f32[32,480]{1,0:T(8,128)}', space=vmem, size = 0x10000, scoped, tag = 'scratch operand']
  #allocation4 [shape = 'f32[24,240]{1,0:T(8,128)}', space=vmem, size = 0x6000, scoped, tag = 'scratch operand']
  #allocation5 [shape = 'f32[16,120]{1,0:T(8,128)}', space=vmem, size = 0x2000, scoped, tag = 'scratch operand']
  #allocation6 [shape = 'f32[16,60]{1,0:T(8,128)}', space=vmem, size = 0x2000, scoped, tag = 'scratch operand']
  %s0 = inlined_call_operand.vmem [shape: f32[288,42], index: 0, kind: input, shape index: {}]
  %s1 = inlined_call_operand.vmem [shape: f32[288,42], index: 1, kind: input, shape index: {}]
  %s2 = inlined_call_operand.vmem [shape: f32[42,32], index: 2, kind: input, shape index: {}]
  %s3 = inlined_call_operand.vmem [shape: f32[32,48], index: 3, kind: input, shape index: {}]
  %s4 = inlined_call_operand.vmem [shape: f32[192,26], index: 4, kind: input, shape index: {}]
  %s5 = inlined_call_operand.vmem [shape: f32[192,26], index: 5, kind: input, shape index: {}]
  %s6 = inlined_call_operand.vmem [shape: f32[26,16], index: 6, kind: input, shape index: {}]
  %s7 = inlined_call_operand.vmem [shape: f32[16,32], index: 7, kind: input, shape index: {}]
  %s8 = inlined_call_operand.vmem [shape: f32[144,18], index: 8, kind: input, shape index: {}]
  %s9 = inlined_call_operand.vmem [shape: f32[144,18], index: 9, kind: input, shape index: {}]
  %s10 = inlined_call_operand.vmem [shape: f32[18,8], index: 10, kind: input, shape index: {}]
  %s11 = inlined_call_operand.vmem [shape: f32[8,24], index: 11, kind: input, shape index: {}]
  %s12 = inlined_call_operand.vmem [shape: f32[96,14], index: 12, kind: input, shape index: {}]
  %s13 = inlined_call_operand.vmem [shape: f32[96,14], index: 13, kind: input, shape index: {}]
  %s14 = inlined_call_operand.vmem [shape: f32[14,4], index: 14, kind: input, shape index: {}]
  %s15 = inlined_call_operand.vmem [shape: f32[4,16], index: 15, kind: input, shape index: {}]
  %s16 = inlined_call_operand.vmem [shape: f32[96,12], index: 16, kind: input, shape index: {}]
  %s17 = inlined_call_operand.vmem [shape: f32[96,12], index: 17, kind: input, shape index: {}]
  %s18 = inlined_call_operand.vmem [shape: f32[12,2], index: 18, kind: input, shape index: {}]
  %s19 = inlined_call_operand.vmem [shape: f32[2,16], index: 19, kind: input, shape index: {}]
  %s20 = inlined_call_operand.hbm [shape: f32[1], index: 20, kind: output, shape index: {}]
  %s21 = sld [smem:[#allocation0]]
  $region90: #{ms_ssim.1} parent=0
    _
  %s23 = ssub.s32 1, %s21
  %s24 = scalar_select 0, %s23, %s21
  $region1: #{ms_ssim.1} parent=0
    #allocation7 [shape = 'u8[512]{0}', space=smem, size = 0x200, scoped, tag = 'output window, operand 0, single buffered']
    #allocation8 [shape = 's32[1]{0}', space=sflag, size = 0x4, scoped, tag = 'scoped memory for ms_ssim.1']
    %25 = vsyncpa [#allocation8], 0
    // Predicated region
    $region2: #{ms_ssim.1} parent=1 // pred_check
      _
    $region3: #{ms_ssim.1} parent=1 // pred_check_branch
      %27 = sbr.rel (0) target = $region5
    $region4: #{ms_ssim.1} parent=1 // pred_region
      _
    $region5: #{ms_ssim.1} parent=1 // pred_fallthru
      _
    // Predicated region
    $region6: #{ms_ssim.1} parent=1 // pred_check
      _
    $region7: #{ms_ssim.1} parent=1 // pred_check_branch
      %29 = sbr.rel (0) target = $region9
    $region8: #{ms_ssim.1} parent=1 // pred_region
      _
    $region9: #{ms_ssim.1} parent=1 // pred_fallthru
      _
    // Predicated region
    $region10: #{ms_ssim.1} parent=1 // pred_check
      _
    $region11: #{ms_ssim.1} parent=1 // pred_check_branch
      %31 = sbr.rel (0) target = $region13
    $region12: #{ms_ssim.1} parent=1 // pred_region
      _
    $region13: #{ms_ssim.1} parent=1 // pred_fallthru
      _
    // Predicated region
    $region14: #{ms_ssim.1} parent=1 // pred_check
      _
    $region15: #{ms_ssim.1} parent=1 // pred_check_branch
      %33 = sbr.rel (0) target = $region17
    $region16: #{ms_ssim.1} parent=1 // pred_region
      _
    $region17: #{ms_ssim.1} parent=1 // pred_fallthru
      _
    // Predicated region
    $region18: #{ms_ssim.1} parent=1 // pred_check
      _
    $region19: #{ms_ssim.1} parent=1 // pred_check_branch
      %35 = sbr.rel (0) target = $region21
    $region20: #{ms_ssim.1} parent=1 // pred_region
      _
    $region21: #{ms_ssim.1} parent=1 // pred_fallthru
      _
    // Predicated region
    $region22: #{ms_ssim.1} parent=1 // pred_check
      _
    $region23: #{ms_ssim.1} parent=1 // pred_check_branch
      %37 = sbr.rel (0) target = $region25
    $region24: #{ms_ssim.1} parent=1 // pred_region
      _
    $region25: #{ms_ssim.1} parent=1 // pred_fallthru
      _
    // Predicated region
    $region26: #{ms_ssim.1} parent=1 // pred_check
      _
    $region27: #{ms_ssim.1} parent=1 // pred_check_branch
      %39 = sbr.rel (0) target = $region29
    $region28: #{ms_ssim.1} parent=1 // pred_region
      _
    $region29: #{ms_ssim.1} parent=1 // pred_fallthru
      _
    // Predicated region
    $region30: #{ms_ssim.1} parent=1 // pred_check
      _
    $region31: #{ms_ssim.1} parent=1 // pred_check_branch
      %41 = sbr.rel (0) target = $region33
    $region32: #{ms_ssim.1} parent=1 // pred_region
      _
    $region33: #{ms_ssim.1} parent=1 // pred_fallthru
      _
    // Predicated region
    $region34: #{ms_ssim.1} parent=1 // pred_check
      _
    $region35: #{ms_ssim.1} parent=1 // pred_check_branch
      %43 = sbr.rel (0) target = $region37
    $region36: #{ms_ssim.1} parent=1 // pred_region
      _
    $region37: #{ms_ssim.1} parent=1 // pred_fallthru
      _
    // Predicated region
    $region38: #{ms_ssim.1} parent=1 // pred_check
      _
    $region39: #{ms_ssim.1} parent=1 // pred_check_branch
      %45 = sbr.rel (0) target = $region41
    $region40: #{ms_ssim.1} parent=1 // pred_region
      _
    $region41: #{ms_ssim.1} parent=1 // pred_fallthru
      _
    // Predicated region
    $region42: #{ms_ssim.1} parent=1 // pred_check
      _
    $region43: #{ms_ssim.1} parent=1 // pred_check_branch
      %47 = sbr.rel (0) target = $region45
    $region44: #{ms_ssim.1} parent=1 // pred_region
      _
    $region45: #{ms_ssim.1} parent=1 // pred_fallthru
      _
    // Predicated region
    $region46: #{ms_ssim.1} parent=1 // pred_check
      _
    $region47: #{ms_ssim.1} parent=1 // pred_check_branch
      %49 = sbr.rel (0) target = $region49
    $region48: #{ms_ssim.1} parent=1 // pred_region
      _
    $region49: #{ms_ssim.1} parent=1 // pred_fallthru
      _
    // Predicated region
    $region50: #{ms_ssim.1} parent=1 // pred_check
      _
    $region51: #{ms_ssim.1} parent=1 // pred_check_branch
      %51 = sbr.rel (0) target = $region53
    $region52: #{ms_ssim.1} parent=1 // pred_region
      _
    $region53: #{ms_ssim.1} parent=1 // pred_fallthru
      _
    // Predicated region
    $region54: #{ms_ssim.1} parent=1 // pred_check
      _
    $region55: #{ms_ssim.1} parent=1 // pred_check_branch
      %53 = sbr.rel (0) target = $region57
    $region56: #{ms_ssim.1} parent=1 // pred_region
      _
    $region57: #{ms_ssim.1} parent=1 // pred_fallthru
      _
    // Predicated region
    $region58: #{ms_ssim.1} parent=1 // pred_check
      _
    $region59: #{ms_ssim.1} parent=1 // pred_check_branch
      %55 = sbr.rel (0) target = $region61
    $region60: #{ms_ssim.1} parent=1 // pred_region
      _
    $region61: #{ms_ssim.1} parent=1 // pred_fallthru
      _
    // Predicated region
    $region62: #{ms_ssim.1} parent=1 // pred_check
      _
    $region63: #{ms_ssim.1} parent=1 // pred_check_branch
      %57 = sbr.rel (0) target = $region65
    $region64: #{ms_ssim.1} parent=1 // pred_region
      _
    $region65: #{ms_ssim.1} parent=1 // pred_fallthru
      _
    // Predicated region
    $region66: #{ms_ssim.1} parent=1 // pred_check
      _
    $region67: #{ms_ssim.1} parent=1 // pred_check_branch
      %59 = sbr.rel (0) target = $region69
    $region68: #{ms_ssim.1} parent=1 // pred_region
      _
    $region69: #{ms_ssim.1} parent=1 // pred_fallthru
      _
    // Predicated region
    $region70: #{ms_ssim.1} parent=1 // pred_check
      _
    $region71: #{ms_ssim.1} parent=1 // pred_check_branch
      %61 = sbr.rel (0) target = $region73
    $region72: #{ms_ssim.1} parent=1 // pred_region
      _
    $region73: #{ms_ssim.1} parent=1 // pred_fallthru
      _
    // Predicated region
    $region74: #{ms_ssim.1} parent=1 // pred_check
      _
    $region75: #{ms_ssim.1} parent=1 // pred_check_branch
      %63 = sbr.rel (0) target = $region77
    $region76: #{ms_ssim.1} parent=1 // pred_region
      _
    $region77: #{ms_ssim.1} parent=1 // pred_fallthru
      _
    // Predicated region
    $region78: #{ms_ssim.1} parent=1 // pred_check
      _
    $region79: #{ms_ssim.1} parent=1 // pred_check_branch
      %65 = sbr.rel (0) target = $region81
    $region80: #{ms_ssim.1} parent=1 // pred_region
      _
    $region81: #{ms_ssim.1} parent=1 // pred_fallthru
      _
    %v66 = vld [vmem:[%s0] sm:$0xff]
    %v67 = vld [vmem:[%s0 + $0x8] sm:$0xff]
    %v68 = vld [vmem:[%s0 + $0x10] sm:$0xff]
    %v69 = vld [vmem:[%s0 + $0x18] sm:$0xff]
    %v70 = vld [vmem:[%s0 + $0x20] sm:$0xff]
    %v71 = vld [vmem:[%s0 + $0x28] sm:$0xff]
    %v72 = vld [vmem:[%s0 + $0x30] sm:$0xff]
    %v73 = vld [vmem:[%s0 + $0x38] sm:$0xff]
    %v74 = vld [vmem:[%s0 + $0x40] sm:$0xff]
    %v75 = vld [vmem:[%s0 + $0x48] sm:$0xff]
    %v76 = vld [vmem:[%s0 + $0x50] sm:$0xff]
    %v77 = vld [vmem:[%s0 + $0x58] sm:$0xff]
    %v78 = vld [vmem:[%s0 + $0x60] sm:$0xff]
    %v79 = vld [vmem:[%s0 + $0x68] sm:$0xff]
    %v80 = vld [vmem:[%s0 + $0x70] sm:$0xff]
    %v81 = vld [vmem:[%s0 + $0x78] sm:$0xff]
    %v82 = vld [vmem:[%s0 + $0x80] sm:$0xff]
    %v83 = vld [vmem:[%s0 + $0x88] sm:$0xff]
    %v84 = vld [vmem:[%s0 + $0x90] sm:$0xff]
    %v85 = vld [vmem:[%s0 + $0x98] sm:$0xff]
    %v86 = vld [vmem:[%s0 + $0xa0] sm:$0xff]
    %v87 = vld [vmem:[%s0 + $0xa8] sm:$0xff]
    %v88 = vld [vmem:[%s0 + $0xb0] sm:$0xff]
    %v89 = vld [vmem:[%s0 + $0xb8] sm:$0xff]
    %v90 = vld [vmem:[%s0 + $0xc0] sm:$0xff]
    %v91 = vld [vmem:[%s0 + $0xc8] sm:$0xff]
    %v92 = vld [vmem:[%s0 + $0xd0] sm:$0xff]
    %v93 = vld [vmem:[%s0 + $0xd8] sm:$0xff]
    %v94 = vld [vmem:[%s0 + $0xe0] sm:$0xff]
    %v95 = vld [vmem:[%s0 + $0xe8] sm:$0xff]
    %v96 = vld [vmem:[%s0 + $0xf0] sm:$0xff]
    %v97 = vld [vmem:[%s0 + $0xf8] sm:$0xff]
    %v98 = vld [vmem:[%s0 + $0x100] sm:$0xff]
    %v99 = vld [vmem:[%s0 + $0x108] sm:$0xff]
    %v100 = vld [vmem:[%s0 + $0x110] sm:$0xff]
    %v101 = vld [vmem:[%s0 + $0x118] sm:$0xff]
    %v102 = vld [vmem:[%s1] sm:$0xff]
    %v103 = vld [vmem:[%s1 + $0x8] sm:$0xff]
    %v104 = vld [vmem:[%s1 + $0x10] sm:$0xff]
    %v105 = vld [vmem:[%s1 + $0x18] sm:$0xff]
    %v106 = vld [vmem:[%s1 + $0x20] sm:$0xff]
    %v107 = vld [vmem:[%s1 + $0x28] sm:$0xff]
    %v108 = vld [vmem:[%s1 + $0x30] sm:$0xff]
    %v109 = vld [vmem:[%s1 + $0x38] sm:$0xff]
    %v110 = vld [vmem:[%s1 + $0x40] sm:$0xff]
    %v111 = vld [vmem:[%s1 + $0x48] sm:$0xff]
    %v112 = vld [vmem:[%s1 + $0x50] sm:$0xff]
    %v113 = vld [vmem:[%s1 + $0x58] sm:$0xff]
    %v114 = vld [vmem:[%s1 + $0x60] sm:$0xff]
    %v115 = vld [vmem:[%s1 + $0x68] sm:$0xff]
    %v116 = vld [vmem:[%s1 + $0x70] sm:$0xff]
    %v117 = vld [vmem:[%s1 + $0x78] sm:$0xff]
    %v118 = vld [vmem:[%s1 + $0x80] sm:$0xff]
    %v119 = vld [vmem:[%s1 + $0x88] sm:$0xff]
    %v120 = vld [vmem:[%s1 + $0x90] sm:$0xff]
    %v121 = vld [vmem:[%s1 + $0x98] sm:$0xff]
    %v122 = vld [vmem:[%s1 + $0xa0] sm:$0xff]
    %v123 = vld [vmem:[%s1 + $0xa8] sm:$0xff]
    %v124 = vld [vmem:[%s1 + $0xb0] sm:$0xff]
    %v125 = vld [vmem:[%s1 + $0xb8] sm:$0xff]
    %v126 = vld [vmem:[%s1 + $0xc0] sm:$0xff]
    %v127 = vld [vmem:[%s1 + $0xc8] sm:$0xff]
    %v128 = vld [vmem:[%s1 + $0xd0] sm:$0xff]
    %v129 = vld [vmem:[%s1 + $0xd8] sm:$0xff]
    %v130 = vld [vmem:[%s1 + $0xe0] sm:$0xff]
    %v131 = vld [vmem:[%s1 + $0xe8] sm:$0xff]
    %v132 = vld [vmem:[%s1 + $0xf0] sm:$0xff]
    %v133 = vld [vmem:[%s1 + $0xf8] sm:$0xff]
    %v134 = vld [vmem:[%s1 + $0x100] sm:$0xff]
    %v135 = vld [vmem:[%s1 + $0x108] sm:$0xff]
    %v136 = vld [vmem:[%s1 + $0x110] sm:$0xff]
    %v137 = vld [vmem:[%s1 + $0x118] sm:$0xff]
    %v138 = vmul.f32 %v66, %v66
    %v139 = vmul.f32 %v67, %v67
    %v140 = vmul.f32 %v68, %v68
    %v141 = vmul.f32 %v69, %v69
    %v142 = vmul.f32 %v70, %v70
    %v143 = vmul.f32 %v71, %v71
    %v144 = vmul.f32 %v72, %v72
    %v145 = vmul.f32 %v73, %v73
    %v146 = vmul.f32 %v74, %v74
    %v147 = vmul.f32 %v75, %v75
    %v148 = vmul.f32 %v76, %v76
    %v149 = vmul.f32 %v77, %v77
    %v150 = vmul.f32 %v78, %v78
    %v151 = vmul.f32 %v79, %v79
    %v152 = vmul.f32 %v80, %v80
    %v153 = vmul.f32 %v81, %v81
    %v154 = vmul.f32 %v82, %v82
    %v155 = vmul.f32 %v83, %v83
    %v156 = vmul.f32 %v84, %v84
    %v157 = vmul.f32 %v85, %v85
    %v158 = vmul.f32 %v86, %v86
    %v159 = vmul.f32 %v87, %v87
    %v160 = vmul.f32 %v88, %v88
    %v161 = vmul.f32 %v89, %v89
    %v162 = vmul.f32 %v90, %v90
    %v163 = vmul.f32 %v91, %v91
    %v164 = vmul.f32 %v92, %v92
    %v165 = vmul.f32 %v93, %v93
    %v166 = vmul.f32 %v94, %v94
    %v167 = vmul.f32 %v95, %v95
    %v168 = vmul.f32 %v96, %v96
    %v169 = vmul.f32 %v97, %v97
    %v170 = vmul.f32 %v98, %v98
    %v171 = vmul.f32 %v99, %v99
    %v172 = vmul.f32 %v100, %v100
    %v173 = vmul.f32 %v101, %v101
    %v174 = vmul.f32 %v102, %v102
    %v175 = vmul.f32 %v103, %v103
    %v176 = vmul.f32 %v104, %v104
    %v177 = vmul.f32 %v105, %v105
    %v178 = vmul.f32 %v106, %v106
    %v179 = vmul.f32 %v107, %v107
    %v180 = vmul.f32 %v108, %v108
    %v181 = vmul.f32 %v109, %v109
    %v182 = vmul.f32 %v110, %v110
    %v183 = vmul.f32 %v111, %v111
    %v184 = vmul.f32 %v112, %v112
    %v185 = vmul.f32 %v113, %v113
    %v186 = vmul.f32 %v114, %v114
    %v187 = vmul.f32 %v115, %v115
    %v188 = vmul.f32 %v116, %v116
    %v189 = vmul.f32 %v117, %v117
    %v190 = vmul.f32 %v118, %v118
    %v191 = vmul.f32 %v119, %v119
    %v192 = vmul.f32 %v120, %v120
    %v193 = vmul.f32 %v121, %v121
    %v194 = vmul.f32 %v122, %v122
    %v195 = vmul.f32 %v123, %v123
    %v196 = vmul.f32 %v124, %v124
    %v197 = vmul.f32 %v125, %v125
    %v198 = vmul.f32 %v126, %v126
    %v199 = vmul.f32 %v127, %v127
    %v200 = vmul.f32 %v128, %v128
    %v201 = vmul.f32 %v129, %v129
    %v202 = vmul.f32 %v130, %v130
    %v203 = vmul.f32 %v131, %v131
    %v204 = vmul.f32 %v132, %v132
    %v205 = vmul.f32 %v133, %v133
    %v206 = vmul.f32 %v134, %v134
    %v207 = vmul.f32 %v135, %v135
    %v208 = vmul.f32 %v136, %v136
    %v209 = vmul.f32 %v137, %v137
    %v210 = vmul.f32 %v66, %v102
    %v211 = vmul.f32 %v67, %v103
    %v212 = vmul.f32 %v68, %v104
    %v213 = vmul.f32 %v69, %v105
    %v214 = vmul.f32 %v70, %v106
    %v215 = vmul.f32 %v71, %v107
    %v216 = vmul.f32 %v72, %v108
    %v217 = vmul.f32 %v73, %v109
    %v218 = vmul.f32 %v74, %v110
    %v219 = vmul.f32 %v75, %v111
    %v220 = vmul.f32 %v76, %v112
    %v221 = vmul.f32 %v77, %v113
    %v222 = vmul.f32 %v78, %v114
    %v223 = vmul.f32 %v79, %v115
    %v224 = vmul.f32 %v80, %v116
    %v225 = vmul.f32 %v81, %v117
    %v226 = vmul.f32 %v82, %v118
    %v227 = vmul.f32 %v83, %v119
    %v228 = vmul.f32 %v84, %v120
    %v229 = vmul.f32 %v85, %v121
    %v230 = vmul.f32 %v86, %v122
    %v231 = vmul.f32 %v87, %v123
    %v232 = vmul.f32 %v88, %v124
    %v233 = vmul.f32 %v89, %v125
    %v234 = vmul.f32 %v90, %v126
    %v235 = vmul.f32 %v91, %v127
    %v236 = vmul.f32 %v92, %v128
    %v237 = vmul.f32 %v93, %v129
    %v238 = vmul.f32 %v94, %v130
    %v239 = vmul.f32 %v95, %v131
    %v240 = vmul.f32 %v96, %v132
    %v241 = vmul.f32 %v97, %v133
    %v242 = vmul.f32 %v98, %v134
    %v243 = vmul.f32 %v99, %v135
    %v244 = vmul.f32 %v100, %v136
    %v245 = vmul.f32 %v101, %v137
    %v246 = vld [vmem:[%s2] sm:$0xff]
    %v247 = vld [vmem:[%s2 + $0x8] sm:$0xff]
    %v248 = vld [vmem:[%s2 + $0x10] sm:$0xff]
    %v249 = vld [vmem:[%s2 + $0x18] sm:$0xff]
    %v250 = vld [vmem:[%s2 + $0x20] sm:$0xff]
    %v251 = vld [vmem:[%s2 + $0x28] sm:$0x3]
    %vm252 = vcmask 343040
    %v254 = vsel %vm252, %v66, 0
    %v257 = vsel %vm252, %v67, 0
    %v260 = vsel %vm252, %v68, 0
    %v263 = vsel %vm252, %v69, 0
    %v266 = vsel %vm252, %v70, 0
    %v269 = vsel %vm252, %v71, 0
    %v272 = vsel %vm252, %v72, 0
    %v275 = vsel %vm252, %v73, 0
    %v278 = vsel %vm252, %v74, 0
    %v281 = vsel %vm252, %v75, 0
    %v284 = vsel %vm252, %v76, 0
    %v287 = vsel %vm252, %v77, 0
    %v290 = vsel %vm252, %v78, 0
    %v293 = vsel %vm252, %v79, 0
    %v296 = vsel %vm252, %v80, 0
    %v299 = vsel %vm252, %v81, 0
    %v302 = vsel %vm252, %v82, 0
    %v305 = vsel %vm252, %v83, 0
    %v308 = vsel %vm252, %v84, 0
    %v311 = vsel %vm252, %v85, 0
    %v314 = vsel %vm252, %v86, 0
    %v317 = vsel %vm252, %v87, 0
    %v320 = vsel %vm252, %v88, 0
    %v323 = vsel %vm252, %v89, 0
    %v326 = vsel %vm252, %v90, 0
    %v329 = vsel %vm252, %v91, 0
    %v332 = vsel %vm252, %v92, 0
    %v335 = vsel %vm252, %v93, 0
    %v338 = vsel %vm252, %v94, 0
    %v341 = vsel %vm252, %v95, 0
    %v344 = vsel %vm252, %v96, 0
    %v347 = vsel %vm252, %v97, 0
    %v350 = vsel %vm252, %v98, 0
    %v353 = vsel %vm252, %v99, 0
    %v356 = vsel %vm252, %v100, 0
    %v359 = vsel %vm252, %v101, 0
    %v362 = vsel %vm252, %v102, 0
    %v365 = vsel %vm252, %v103, 0
    %v368 = vsel %vm252, %v104, 0
    %v371 = vsel %vm252, %v105, 0
    %v374 = vsel %vm252, %v106, 0
    %v377 = vsel %vm252, %v107, 0
    %v380 = vsel %vm252, %v108, 0
    %v383 = vsel %vm252, %v109, 0
    %v386 = vsel %vm252, %v110, 0
    %v389 = vsel %vm252, %v111, 0
    %v392 = vsel %vm252, %v112, 0
    %v395 = vsel %vm252, %v113, 0
    %v398 = vsel %vm252, %v114, 0
    %v401 = vsel %vm252, %v115, 0
    %v404 = vsel %vm252, %v116, 0
    %v407 = vsel %vm252, %v117, 0
    %v410 = vsel %vm252, %v118, 0
    %v413 = vsel %vm252, %v119, 0
    %v416 = vsel %vm252, %v120, 0
    %v419 = vsel %vm252, %v121, 0
    %v422 = vsel %vm252, %v122, 0
    %v425 = vsel %vm252, %v123, 0
    %v428 = vsel %vm252, %v124, 0
    %v431 = vsel %vm252, %v125, 0
    %v434 = vsel %vm252, %v126, 0
    %v437 = vsel %vm252, %v127, 0
    %v440 = vsel %vm252, %v128, 0
    %v443 = vsel %vm252, %v129, 0
    %v446 = vsel %vm252, %v130, 0
    %v449 = vsel %vm252, %v131, 0
    %v452 = vsel %vm252, %v132, 0
    %v455 = vsel %vm252, %v133, 0
    %v458 = vsel %vm252, %v134, 0
    %v461 = vsel %vm252, %v135, 0
    %v464 = vsel %vm252, %v136, 0
    %v467 = vsel %vm252, %v137, 0
    %v470 = vsel %vm252, %v138, 0
    %v473 = vsel %vm252, %v139, 0
    %v476 = vsel %vm252, %v140, 0
    %v479 = vsel %vm252, %v141, 0
    %v482 = vsel %vm252, %v142, 0
    %v485 = vsel %vm252, %v143, 0
    %v488 = vsel %vm252, %v144, 0
    %v491 = vsel %vm252, %v145, 0
    %v494 = vsel %vm252, %v146, 0
    %v497 = vsel %vm252, %v147, 0
    %v500 = vsel %vm252, %v148, 0
    %v503 = vsel %vm252, %v149, 0
    %v506 = vsel %vm252, %v150, 0
    %v509 = vsel %vm252, %v151, 0
    %v512 = vsel %vm252, %v152, 0
    %v515 = vsel %vm252, %v153, 0
    %v518 = vsel %vm252, %v154, 0
    %v521 = vsel %vm252, %v155, 0
    %v524 = vsel %vm252, %v156, 0
    %v527 = vsel %vm252, %v157, 0
    %v530 = vsel %vm252, %v158, 0
    %v533 = vsel %vm252, %v159, 0
    %v536 = vsel %vm252, %v160, 0
    %v539 = vsel %vm252, %v161, 0
    %v542 = vsel %vm252, %v162, 0
    %v545 = vsel %vm252, %v163, 0
    %v548 = vsel %vm252, %v164, 0
    %v551 = vsel %vm252, %v165, 0
    %v554 = vsel %vm252, %v166, 0
    %v557 = vsel %vm252, %v167, 0
    %v560 = vsel %vm252, %v168, 0
    %v563 = vsel %vm252, %v169, 0
    %v566 = vsel %vm252, %v170, 0
    %v569 = vsel %vm252, %v171, 0
    %v572 = vsel %vm252, %v172, 0
    %v575 = vsel %vm252, %v173, 0
    %v578 = vsel %vm252, %v174, 0
    %v581 = vsel %vm252, %v175, 0
    %v584 = vsel %vm252, %v176, 0
    %v587 = vsel %vm252, %v177, 0
    %v590 = vsel %vm252, %v178, 0
    %v593 = vsel %vm252, %v179, 0
    %v596 = vsel %vm252, %v180, 0
    %v599 = vsel %vm252, %v181, 0
    %v602 = vsel %vm252, %v182, 0
    %v605 = vsel %vm252, %v183, 0
    %v608 = vsel %vm252, %v184, 0
    %v611 = vsel %vm252, %v185, 0
    %v614 = vsel %vm252, %v186, 0
    %v617 = vsel %vm252, %v187, 0
    %v620 = vsel %vm252, %v188, 0
    %v623 = vsel %vm252, %v189, 0
    %v626 = vsel %vm252, %v190, 0
    %v629 = vsel %vm252, %v191, 0
    %v632 = vsel %vm252, %v192, 0
    %v635 = vsel %vm252, %v193, 0
    %v638 = vsel %vm252, %v194, 0
    %v641 = vsel %vm252, %v195, 0
    %v644 = vsel %vm252, %v196, 0
    %v647 = vsel %vm252, %v197, 0
    %v650 = vsel %vm252, %v198, 0
    %v653 = vsel %vm252, %v199, 0
    %v656 = vsel %vm252, %v200, 0
    %v659 = vsel %vm252, %v201, 0
    %v662 = vsel %vm252, %v202, 0
    %v665 = vsel %vm252, %v203, 0
    %v668 = vsel %vm252, %v204, 0
    %v671 = vsel %vm252, %v205, 0
    %v674 = vsel %vm252, %v206, 0
    %v677 = vsel %vm252, %v207, 0
    %v680 = vsel %vm252, %v208, 0
    %v683 = vsel %vm252, %v209, 0
    %v686 = vsel %vm252, %v210, 0
    %v689 = vsel %vm252, %v211, 0
    %v692 = vsel %vm252, %v212, 0
    %v695 = vsel %vm252, %v213, 0
    %v698 = vsel %vm252, %v214, 0
    %v701 = vsel %vm252, %v215, 0
    %v704 = vsel %vm252, %v216, 0
    %v707 = vsel %vm252, %v217, 0
    %v710 = vsel %vm252, %v218, 0
    %v713 = vsel %vm252, %v219, 0
    %v716 = vsel %vm252, %v220, 0
    %v719 = vsel %vm252, %v221, 0
    %v722 = vsel %vm252, %v222, 0
    %v725 = vsel %vm252, %v223, 0
    %v728 = vsel %vm252, %v224, 0
    %v731 = vsel %vm252, %v225, 0
    %v734 = vsel %vm252, %v226, 0
    %v737 = vsel %vm252, %v227, 0
    %v740 = vsel %vm252, %v228, 0
    %v743 = vsel %vm252, %v229, 0
    %v746 = vsel %vm252, %v230, 0
    %v749 = vsel %vm252, %v231, 0
    %v752 = vsel %vm252, %v232, 0
    %v755 = vsel %vm252, %v233, 0
    %v758 = vsel %vm252, %v234, 0
    %v761 = vsel %vm252, %v235, 0
    %v764 = vsel %vm252, %v236, 0
    %v767 = vsel %vm252, %v237, 0
    %v770 = vsel %vm252, %v238, 0
    %v773 = vsel %vm252, %v239, 0
    %v776 = vsel %vm252, %v240, 0
    %v779 = vsel %vm252, %v241, 0
    %v782 = vsel %vm252, %v242, 0
    %v785 = vsel %vm252, %v243, 0
    %v788 = vsel %vm252, %v244, 0
    %v791 = vsel %vm252, %v245, 0
    %vm793 = vcmask 1041408
    %v795 = vsel %vm793, %v251, 0
    %797 = vmatpush.msra.mxu0 0.0
    %798 = vmatpush.msra.mxu0 0.0
    %799 = vmatpush.msra.mxu0 0.0
    %800 = vmatpush.msra.mxu0 0.0
    %801 = vmatpush.msra.mxu0 0.0
    %802 = vmatpush.msra.mxu0 0.0
    %803 = vmatpush.msra.mxu0 0.0
    %804 = vmatpush.msra.mxu0 0.0
    %805 = vmatpush.msra.mxu0 0.0
    %806 = vmatpush.msra.mxu0 0.0
    %807 = vmatpush.msra.mxu0 %v795
    %808 = vmatpush.msra.mxu0 %v250
    %809 = vmatpush.msra.mxu0 %v249
    %810 = vmatpush.msra.mxu0 %v248
    %811 = vmatpush.msra.mxu0 %v247
    %812 = vmatpush.msra.mxu0 %v246
    %813 = vmatmul.f32.gmra.mxu0 %v254
    %v814 = vpop.f32.mrf.mxu0
    %v815 = vadd.f32 0.0, %v814
    %816 = vmatmul.f32.gmra.mxu0 %v257
    %v817 = vpop.f32.mrf.mxu0
    %v818 = vadd.f32 0.0, %v817
    %819 = vmatmul.f32.gmra.mxu0 %v260
    %v820 = vpop.f32.mrf.mxu0
    %v821 = vadd.f32 0.0, %v820
    %822 = vmatmul.f32.gmra.mxu0 %v263
    %v823 = vpop.f32.mrf.mxu0
    %v824 = vadd.f32 0.0, %v823
    %825 = vmatmul.f32.gmra.mxu0 %v266
    %v826 = vpop.f32.mrf.mxu0
    %v827 = vadd.f32 0.0, %v826
    %828 = vmatmul.f32.gmra.mxu0 %v269
    %v829 = vpop.f32.mrf.mxu0
    %v830 = vadd.f32 0.0, %v829
    %831 = vmatmul.f32.gmra.mxu0 %v272
    %v832 = vpop.f32.mrf.mxu0
    %v833 = vadd.f32 0.0, %v832
    %834 = vmatmul.f32.gmra.mxu0 %v275
    %v835 = vpop.f32.mrf.mxu0
    %v836 = vadd.f32 0.0, %v835
    %837 = vmatmul.f32.gmra.mxu0 %v278
    %v838 = vpop.f32.mrf.mxu0
    %v839 = vadd.f32 0.0, %v838
    %840 = vmatmul.f32.gmra.mxu0 %v281
    %v841 = vpop.f32.mrf.mxu0
    %v842 = vadd.f32 0.0, %v841
    %843 = vmatmul.f32.gmra.mxu0 %v284
    %v844 = vpop.f32.mrf.mxu0
    %v845 = vadd.f32 0.0, %v844
    %846 = vmatmul.f32.gmra.mxu0 %v287
    %v847 = vpop.f32.mrf.mxu0
    %v848 = vadd.f32 0.0, %v847
    %849 = vmatmul.f32.gmra.mxu0 %v290
    %v850 = vpop.f32.mrf.mxu0
    %v851 = vadd.f32 0.0, %v850
    %852 = vmatmul.f32.gmra.mxu0 %v293
    %v853 = vpop.f32.mrf.mxu0
    %v854 = vadd.f32 0.0, %v853
    %855 = vmatmul.f32.gmra.mxu0 %v296
    %v856 = vpop.f32.mrf.mxu0
    %v857 = vadd.f32 0.0, %v856
    %858 = vmatmul.f32.gmra.mxu0 %v299
    %v859 = vpop.f32.mrf.mxu0
    %v860 = vadd.f32 0.0, %v859
    %861 = vmatmul.f32.gmra.mxu0 %v302
    %v862 = vpop.f32.mrf.mxu0
    %v863 = vadd.f32 0.0, %v862
    %864 = vmatmul.f32.gmra.mxu0 %v305
    %v865 = vpop.f32.mrf.mxu0
    %v866 = vadd.f32 0.0, %v865
    %867 = vmatmul.f32.gmra.mxu0 %v308
    %v868 = vpop.f32.mrf.mxu0
    %v869 = vadd.f32 0.0, %v868
    %870 = vmatmul.f32.gmra.mxu0 %v311
    %v871 = vpop.f32.mrf.mxu0
    %v872 = vadd.f32 0.0, %v871
    %873 = vmatmul.f32.gmra.mxu0 %v314
    %v874 = vpop.f32.mrf.mxu0
    %v875 = vadd.f32 0.0, %v874
    %876 = vmatmul.f32.gmra.mxu0 %v317
    %v877 = vpop.f32.mrf.mxu0
    %v878 = vadd.f32 0.0, %v877
    %879 = vmatmul.f32.gmra.mxu0 %v320
    %v880 = vpop.f32.mrf.mxu0
    %v881 = vadd.f32 0.0, %v880
    %882 = vmatmul.f32.gmra.mxu0 %v323
    %v883 = vpop.f32.mrf.mxu0
    %v884 = vadd.f32 0.0, %v883
    %885 = vmatmul.f32.gmra.mxu0 %v326
    %v886 = vpop.f32.mrf.mxu0
    %v887 = vadd.f32 0.0, %v886
    %888 = vmatmul.f32.gmra.mxu0 %v329
    %v889 = vpop.f32.mrf.mxu0
    %v890 = vadd.f32 0.0, %v889
    %891 = vmatmul.f32.gmra.mxu0 %v332
    %v892 = vpop.f32.mrf.mxu0
    %v893 = vadd.f32 0.0, %v892
    %894 = vmatmul.f32.gmra.mxu0 %v335
    %v895 = vpop.f32.mrf.mxu0
    %v896 = vadd.f32 0.0, %v895
    %897 = vmatmul.f32.gmra.mxu0 %v338
    %v898 = vpop.f32.mrf.mxu0
    %v899 = vadd.f32 0.0, %v898
    %900 = vmatmul.f32.gmra.mxu0 %v341
    %v901 = vpop.f32.mrf.mxu0
    %v902 = vadd.f32 0.0, %v901
    %903 = vmatmul.f32.gmra.mxu0 %v344
    %v904 = vpop.f32.mrf.mxu0
    %v905 = vadd.f32 0.0, %v904
    %906 = vmatmul.f32.gmra.mxu0 %v347
    %v907 = vpop.f32.mrf.mxu0
    %v908 = vadd.f32 0.0, %v907
    %909 = vmatmul.f32.gmra.mxu0 %v350
    %v910 = vpop.f32.mrf.mxu0
    %v911 = vadd.f32 0.0, %v910
    %912 = vmatmul.f32.gmra.mxu0 %v353
    %v913 = vpop.f32.mrf.mxu0
    %v914 = vadd.f32 0.0, %v913
    %915 = vmatmul.f32.gmra.mxu0 %v356
    %v916 = vpop.f32.mrf.mxu0
    %v917 = vadd.f32 0.0, %v916
    %918 = vmatmul.f32.gmra.mxu0 %v359
    %v919 = vpop.f32.mrf.mxu0
    %v920 = vadd.f32 0.0, %v919
    %921 = vmatmul.f32.gmra.mxu0 %v362
    %v922 = vpop.f32.mrf.mxu0
    %v923 = vadd.f32 0.0, %v922
    %924 = vmatmul.f32.gmra.mxu0 %v365
    %v925 = vpop.f32.mrf.mxu0
    %v926 = vadd.f32 0.0, %v925
    %927 = vmatmul.f32.gmra.mxu0 %v368
    %v928 = vpop.f32.mrf.mxu0
    %v929 = vadd.f32 0.0, %v928
    %930 = vmatmul.f32.gmra.mxu0 %v371
    %v931 = vpop.f32.mrf.mxu0
    %v932 = vadd.f32 0.0, %v931
    %933 = vmatmul.f32.gmra.mxu0 %v374
    %v934 = vpop.f32.mrf.mxu0
    %v935 = vadd.f32 0.0, %v934
    %936 = vmatmul.f32.gmra.mxu0 %v377
    %v937 = vpop.f32.mrf.mxu0
    %v938 = vadd.f32 0.0, %v937
    %939 = vmatmul.f32.gmra.mxu0 %v380
    %v940 = vpop.f32.mrf.mxu0
    %v941 = vadd.f32 0.0, %v940
    %942 = vmatmul.f32.gmra.mxu0 %v383
    %v943 = vpop.f32.mrf.mxu0
    %v944 = vadd.f32 0.0, %v943
    %945 = vmatmul.f32.gmra.mxu0 %v386
    %v946 = vpop.f32.mrf.mxu0
    %v947 = vadd.f32 0.0, %v946
    %948 = vmatmul.f32.gmra.mxu0 %v389
    %v949 = vpop.f32.mrf.mxu0
    %v950 = vadd.f32 0.0, %v949
    %951 = vmatmul.f32.gmra.mxu0 %v392
    %v952 = vpop.f32.mrf.mxu0
    %v953 = vadd.f32 0.0, %v952
    %954 = vmatmul.f32.gmra.mxu0 %v395
    %v955 = vpop.f32.mrf.mxu0
    %v956 = vadd.f32 0.0, %v955
    %957 = vmatmul.f32.gmra.mxu0 %v398
    %v958 = vpop.f32.mrf.mxu0
    %v959 = vadd.f32 0.0, %v958
    %960 = vmatmul.f32.gmra.mxu0 %v401
    %v961 = vpop.f32.mrf.mxu0
    %v962 = vadd.f32 0.0, %v961
    %963 = vmatmul.f32.gmra.mxu0 %v404
    %v964 = vpop.f32.mrf.mxu0
    %v965 = vadd.f32 0.0, %v964
    %966 = vmatmul.f32.gmra.mxu0 %v407
    %v967 = vpop.f32.mrf.mxu0
    %v968 = vadd.f32 0.0, %v967
    %969 = vmatmul.f32.gmra.mxu0 %v410
    %v970 = vpop.f32.mrf.mxu0
    %v971 = vadd.f32 0.0, %v970
    %972 = vmatmul.f32.gmra.mxu0 %v413
    %v973 = vpop.f32.mrf.mxu0
    %v974 = vadd.f32 0.0, %v973
    %975 = vmatmul.f32.gmra.mxu0 %v416
    %v976 = vpop.f32.mrf.mxu0
    %v977 = vadd.f32 0.0, %v976
    %978 = vmatmul.f32.gmra.mxu0 %v419
    %v979 = vpop.f32.mrf.mxu0
    %v980 = vadd.f32 0.0, %v979
    %981 = vmatmul.f32.gmra.mxu0 %v422
    %v982 = vpop.f32.mrf.mxu0
    %v983 = vadd.f32 0.0, %v982
    %984 = vmatmul.f32.gmra.mxu0 %v425
    %v985 = vpop.f32.mrf.mxu0
    %v986 = vadd.f32 0.0, %v985
    %987 = vmatmul.f32.gmra.mxu0 %v428
    %v988 = vpop.f32.mrf.mxu0
    %v989 = vadd.f32 0.0, %v988
    %990 = vmatmul.f32.gmra.mxu0 %v431
    %v991 = vpop.f32.mrf.mxu0
    %v992 = vadd.f32 0.0, %v991
    %993 = vmatmul.f32.gmra.mxu0 %v434
    %v994 = vpop.f32.mrf.mxu0
    %v995 = vadd.f32 0.0, %v994
    %996 = vmatmul.f32.gmra.mxu0 %v437
    %v997 = vpop.f32.mrf.mxu0
    %v998 = vadd.f32 0.0, %v997
    %999 = vmatmul.f32.gmra.mxu0 %v440
    %v1000 = vpop.f32.mrf.mxu0
    %v1001 = vadd.f32 0.0, %v1000
    %1002 = vmatmul.f32.gmra.mxu0 %v443
    %v1003 = vpop.f32.mrf.mxu0
    %v1004 = vadd.f32 0.0, %v1003
    %1005 = vmatmul.f32.gmra.mxu0 %v446
    %v1006 = vpop.f32.mrf.mxu0
    %v1007 = vadd.f32 0.0, %v1006
    %1008 = vmatmul.f32.gmra.mxu0 %v449
    %v1009 = vpop.f32.mrf.mxu0
    %v1010 = vadd.f32 0.0, %v1009
    %1011 = vmatmul.f32.gmra.mxu0 %v452
    %v1012 = vpop.f32.mrf.mxu0
    %v1013 = vadd.f32 0.0, %v1012
    %1014 = vmatmul.f32.gmra.mxu0 %v455
    %v1015 = vpop.f32.mrf.mxu0
    %v1016 = vadd.f32 0.0, %v1015
    %1017 = vmatmul.f32.gmra.mxu0 %v458
    %v1018 = vpop.f32.mrf.mxu0
    %v1019 = vadd.f32 0.0, %v1018
    %1020 = vmatmul.f32.gmra.mxu0 %v461
    %v1021 = vpop.f32.mrf.mxu0
    %v1022 = vadd.f32 0.0, %v1021
    %1023 = vmatmul.f32.gmra.mxu0 %v464
    %v1024 = vpop.f32.mrf.mxu0
    %v1025 = vadd.f32 0.0, %v1024
    %1026 = vmatmul.f32.gmra.mxu0 %v467
    %v1027 = vpop.f32.mrf.mxu0
    %v1028 = vadd.f32 0.0, %v1027
    %1029 = vmatmul.f32.gmra.mxu0 %v470
    %v1030 = vpop.f32.mrf.mxu0
    %v1031 = vadd.f32 0.0, %v1030
    %1032 = vmatmul.f32.gmra.mxu0 %v473
    %v1033 = vpop.f32.mrf.mxu0
    %v1034 = vadd.f32 0.0, %v1033
    %1035 = vmatmul.f32.gmra.mxu0 %v476
    %v1036 = vpop.f32.mrf.mxu0
    %v1037 = vadd.f32 0.0, %v1036
    %1038 = vmatmul.f32.gmra.mxu0 %v479
    %v1039 = vpop.f32.mrf.mxu0
    %v1040 = vadd.f32 0.0, %v1039
    %1041 = vmatmul.f32.gmra.mxu0 %v482
    %v1042 = vpop.f32.mrf.mxu0
    %v1043 = vadd.f32 0.0, %v1042
    %1044 = vmatmul.f32.gmra.mxu0 %v485
    %v1045 = vpop.f32.mrf.mxu0
    %v1046 = vadd.f32 0.0, %v1045
    %1047 = vmatmul.f32.gmra.mxu0 %v488
    %v1048 = vpop.f32.mrf.mxu0
    %v1049 = vadd.f32 0.0, %v1048
    %1050 = vmatmul.f32.gmra.mxu0 %v491
    %v1051 = vpop.f32.mrf.mxu0
    %v1052 = vadd.f32 0.0, %v1051
    %1053 = vmatmul.f32.gmra.mxu0 %v494
    %v1054 = vpop.f32.mrf.mxu0
    %v1055 = vadd.f32 0.0, %v1054
    %1056 = vmatmul.f32.gmra.mxu0 %v497
    %v1057 = vpop.f32.mrf.mxu0
    %v1058 = vadd.f32 0.0, %v1057
    %1059 = vmatmul.f32.gmra.mxu0 %v500
    %v1060 = vpop.f32.mrf.mxu0
    %v1061 = vadd.f32 0.0, %v1060
    %1062 = vmatmul.f32.gmra.mxu0 %v503
    %v1063 = vpop.f32.mrf.mxu0
    %v1064 = vadd.f32 0.0, %v1063
    %1065 = vmatmul.f32.gmra.mxu0 %v506
    %v1066 = vpop.f32.mrf.mxu0
    %v1067 = vadd.f32 0.0, %v1066
    %1068 = vmatmul.f32.gmra.mxu0 %v509
    %v1069 = vpop.f32.mrf.mxu0
    %v1070 = vadd.f32 0.0, %v1069
    %1071 = vmatmul.f32.gmra.mxu0 %v512
    %v1072 = vpop.f32.mrf.mxu0
    %v1073 = vadd.f32 0.0, %v1072
    %1074 = vmatmul.f32.gmra.mxu0 %v515
    %v1075 = vpop.f32.mrf.mxu0
    %v1076 = vadd.f32 0.0, %v1075
    %1077 = vmatmul.f32.gmra.mxu0 %v518
    %v1078 = vpop.f32.mrf.mxu0
    %v1079 = vadd.f32 0.0, %v1078
    %1080 = vmatmul.f32.gmra.mxu0 %v521
    %v1081 = vpop.f32.mrf.mxu0
    %v1082 = vadd.f32 0.0, %v1081
    %1083 = vmatmul.f32.gmra.mxu0 %v524
    %v1084 = vpop.f32.mrf.mxu0
    %v1085 = vadd.f32 0.0, %v1084
    %1086 = vmatmul.f32.gmra.mxu0 %v527
    %v1087 = vpop.f32.mrf.mxu0
    %v1088 = vadd.f32 0.0, %v1087
    %1089 = vmatmul.f32.gmra.mxu0 %v530
    %v1090 = vpop.f32.mrf.mxu0
    %v1091 = vadd.f32 0.0, %v1090
    %1092 = vmatmul.f32.gmra.mxu0 %v533
    %v1093 = vpop.f32.mrf.mxu0
    %v1094 = vadd.f32 0.0, %v1093
    %1095 = vmatmul.f32.gmra.mxu0 %v536
    %v1096 = vpop.f32.mrf.mxu0
    %v1097 = vadd.f32 0.0, %v1096
    %1098 = vmatmul.f32.gmra.mxu0 %v539
    %v1099 = vpop.f32.mrf.mxu0
    %v1100 = vadd.f32 0.0, %v1099
    %1101 = vmatmul.f32.gmra.mxu0 %v542
    %v1102 = vpop.f32.mrf.mxu0
    %v1103 = vadd.f32 0.0, %v1102
    %1104 = vmatmul.f32.gmra.mxu0 %v545
    %v1105 = vpop.f32.mrf.mxu0
    %v1106 = vadd.f32 0.0, %v1105
    %1107 = vmatmul.f32.gmra.mxu0 %v548
    %v1108 = vpop.f32.mrf.mxu0
    %v1109 = vadd.f32 0.0, %v1108
    %1110 = vmatmul.f32.gmra.mxu0 %v551
    %v1111 = vpop.f32.mrf.mxu0
    %v1112 = vadd.f32 0.0, %v1111
    %1113 = vmatmul.f32.gmra.mxu0 %v554
    %v1114 = vpop.f32.mrf.mxu0
    %v1115 = vadd.f32 0.0, %v1114
    %1116 = vmatmul.f32.gmra.mxu0 %v557
    %v1117 = vpop.f32.mrf.mxu0
    %v1118 = vadd.f32 0.0, %v1117
    %1119 = vmatmul.f32.gmra.mxu0 %v560
    %v1120 = vpop.f32.mrf.mxu0
    %v1121 = vadd.f32 0.0, %v1120
    %1122 = vmatmul.f32.gmra.mxu0 %v563
    %v1123 = vpop.f32.mrf.mxu0
    %v1124 = vadd.f32 0.0, %v1123
    %1125 = vmatmul.f32.gmra.mxu0 %v566
    %v1126 = vpop.f32.mrf.mxu0
    %v1127 = vadd.f32 0.0, %v1126
    %1128 = vmatmul.f32.gmra.mxu0 %v569
    %v1129 = vpop.f32.mrf.mxu0
    %v1130 = vadd.f32 0.0, %v1129
    %1131 = vmatmul.f32.gmra.mxu0 %v572
    %v1132 = vpop.f32.mrf.mxu0
    %v1133 = vadd.f32 0.0, %v1132
    %1134 = vmatmul.f32.gmra.mxu0 %v575
    %v1135 = vpop.f32.mrf.mxu0
    %v1136 = vadd.f32 0.0, %v1135
    %1137 = vmatmul.f32.gmra.mxu0 %v578
    %v1138 = vpop.f32.mrf.mxu0
    %v1139 = vadd.f32 0.0, %v1138
    %1140 = vmatmul.f32.gmra.mxu0 %v581
    %v1141 = vpop.f32.mrf.mxu0
    %v1142 = vadd.f32 0.0, %v1141
    %1143 = vmatmul.f32.gmra.mxu0 %v584
    %v1144 = vpop.f32.mrf.mxu0
    %v1145 = vadd.f32 0.0, %v1144
    %1146 = vmatmul.f32.gmra.mxu0 %v587
    %v1147 = vpop.f32.mrf.mxu0
    %v1148 = vadd.f32 0.0, %v1147
    %1149 = vmatmul.f32.gmra.mxu0 %v590
    %v1150 = vpop.f32.mrf.mxu0
    %v1151 = vadd.f32 0.0, %v1150
    %1152 = vmatmul.f32.gmra.mxu0 %v593
    %v1153 = vpop.f32.mrf.mxu0
    %v1154 = vadd.f32 0.0, %v1153
    %1155 = vmatmul.f32.gmra.mxu0 %v596
    %v1156 = vpop.f32.mrf.mxu0
    %v1157 = vadd.f32 0.0, %v1156
    %1158 = vmatmul.f32.gmra.mxu0 %v599
    %v1159 = vpop.f32.mrf.mxu0
    %v1160 = vadd.f32 0.0, %v1159
    %1161 = vmatmul.f32.gmra.mxu0 %v602
    %v1162 = vpop.f32.mrf.mxu0
    %v1163 = vadd.f32 0.0, %v1162
    %1164 = vmatmul.f32.gmra.mxu0 %v605
    %v1165 = vpop.f32.mrf.mxu0
    %v1166 = vadd.f32 0.0, %v1165
    %1167 = vmatmul.f32.gmra.mxu0 %v608
    %v1168 = vpop.f32.mrf.mxu0
    %v1169 = vadd.f32 0.0, %v1168
    %1170 = vmatmul.f32.gmra.mxu0 %v611
    %v1171 = vpop.f32.mrf.mxu0
    %v1172 = vadd.f32 0.0, %v1171
    %1173 = vmatmul.f32.gmra.mxu0 %v614
    %v1174 = vpop.f32.mrf.mxu0
    %v1175 = vadd.f32 0.0, %v1174
    %1176 = vmatmul.f32.gmra.mxu0 %v617
    %v1177 = vpop.f32.mrf.mxu0
    %v1178 = vadd.f32 0.0, %v1177
    %1179 = vmatmul.f32.gmra.mxu0 %v620
    %v1180 = vpop.f32.mrf.mxu0
    %v1181 = vadd.f32 0.0, %v1180
    %1182 = vmatmul.f32.gmra.mxu0 %v623
    %v1183 = vpop.f32.mrf.mxu0
    %v1184 = vadd.f32 0.0, %v1183
    %1185 = vmatmul.f32.gmra.mxu0 %v626
    %v1186 = vpop.f32.mrf.mxu0
    %v1187 = vadd.f32 0.0, %v1186
    %1188 = vmatmul.f32.gmra.mxu0 %v629
    %v1189 = vpop.f32.mrf.mxu0
    %v1190 = vadd.f32 0.0, %v1189
    %1191 = vmatmul.f32.gmra.mxu0 %v632
    %v1192 = vpop.f32.mrf.mxu0
    %v1193 = vadd.f32 0.0, %v1192
    %1194 = vmatmul.f32.gmra.mxu0 %v635
    %v1195 = vpop.f32.mrf.mxu0
    %v1196 = vadd.f32 0.0, %v1195
    %1197 = vmatmul.f32.gmra.mxu0 %v638
    %v1198 = vpop.f32.mrf.mxu0
    %v1199 = vadd.f32 0.0, %v1198
    %1200 = vmatmul.f32.gmra.mxu0 %v641
    %v1201 = vpop.f32.mrf.mxu0
    %v1202 = vadd.f32 0.0, %v1201
    %1203 = vmatmul.f32.gmra.mxu0 %v644
    %v1204 = vpop.f32.mrf.mxu0
    %v1205 = vadd.f32 0.0, %v1204
    %1206 = vmatmul.f32.gmra.mxu0 %v647
    %v1207 = vpop.f32.mrf.mxu0
    %v1208 = vadd.f32 0.0, %v1207
    %1209 = vmatmul.f32.gmra.mxu0 %v650
    %v1210 = vpop.f32.mrf.mxu0
    %v1211 = vadd.f32 0.0, %v1210
    %1212 = vmatmul.f32.gmra.mxu0 %v653
    %v1213 = vpop.f32.mrf.mxu0
    %v1214 = vadd.f32 0.0, %v1213
    %1215 = vmatmul.f32.gmra.mxu0 %v656
    %v1216 = vpop.f32.mrf.mxu0
    %v1217 = vadd.f32 0.0, %v1216
    %1218 = vmatmul.f32.gmra.mxu0 %v659
    %v1219 = vpop.f32.mrf.mxu0
    %v1220 = vadd.f32 0.0, %v1219
    %1221 = vmatmul.f32.gmra.mxu0 %v662
    %v1222 = vpop.f32.mrf.mxu0
    %v1223 = vadd.f32 0.0, %v1222
    %1224 = vmatmul.f32.gmra.mxu0 %v665
    %v1225 = vpop.f32.mrf.mxu0
    %v1226 = vadd.f32 0.0, %v1225
    %1227 = vmatmul.f32.gmra.mxu0 %v668
    %v1228 = vpop.f32.mrf.mxu0
    %v1229 = vadd.f32 0.0, %v1228
    %1230 = vmatmul.f32.gmra.mxu0 %v671
    %v1231 = vpop.f32.mrf.mxu0
    %v1232 = vadd.f32 0.0, %v1231
    %1233 = vmatmul.f32.gmra.mxu0 %v674
    %v1234 = vpop.f32.mrf.mxu0
    %v1235 = vadd.f32 0.0, %v1234
    %1236 = vmatmul.f32.gmra.mxu0 %v677
    %v1237 = vpop.f32.mrf.mxu0
    %v1238 = vadd.f32 0.0, %v1237
    %1239 = vmatmul.f32.gmra.mxu0 %v680
    %v1240 = vpop.f32.mrf.mxu0
    %v1241 = vadd.f32 0.0, %v1240
    %1242 = vmatmul.f32.gmra.mxu0 %v683
    %v1243 = vpop.f32.mrf.mxu0
    %v1244 = vadd.f32 0.0, %v1243
    %1245 = vmatmul.f32.gmra.mxu0 %v686
    %v1246 = vpop.f32.mrf.mxu0
    %v1247 = vadd.f32 0.0, %v1246
    %1248 = vmatmul.f32.gmra.mxu0 %v689
    %v1249 = vpop.f32.mrf.mxu0
    %v1250 = vadd.f32 0.0, %v1249
    %1251 = vmatmul.f32.gmra.mxu0 %v692
    %v1252 = vpop.f32.mrf.mxu0
    %v1253 = vadd.f32 0.0, %v1252
    %1254 = vmatmul.f32.gmra.mxu0 %v695
    %v1255 = vpop.f32.mrf.mxu0
    %v1256 = vadd.f32 0.0, %v1255
    %1257 = vmatmul.f32.gmra.mxu0 %v698
    %v1258 = vpop.f32.mrf.mxu0
    %v1259 = vadd.f32 0.0, %v1258
    %1260 = vmatmul.f32.gmra.mxu0 %v701
    %v1261 = vpop.f32.mrf.mxu0
    %v1262 = vadd.f32 0.0, %v1261
    %1263 = vmatmul.f32.gmra.mxu0 %v704
    %v1264 = vpop.f32.mrf.mxu0
    %v1265 = vadd.f32 0.0, %v1264
    %1266 = vmatmul.f32.gmra.mxu0 %v707
    %v1267 = vpop.f32.mrf.mxu0
    %v1268 = vadd.f32 0.0, %v1267
    %1269 = vmatmul.f32.gmra.mxu0 %v710
    %v1270 = vpop.f32.mrf.mxu0
    %v1271 = vadd.f32 0.0, %v1270
    %1272 = vmatmul.f32.gmra.mxu0 %v713
    %v1273 = vpop.f32.mrf.mxu0
    %v1274 = vadd.f32 0.0, %v1273
    %1275 = vmatmul.f32.gmra.mxu0 %v716
    %v1276 = vpop.f32.mrf.mxu0
    %v1277 = vadd.f32 0.0, %v1276
    %1278 = vmatmul.f32.gmra.mxu0 %v719
    %v1279 = vpop.f32.mrf.mxu0
    %v1280 = vadd.f32 0.0, %v1279
    %1281 = vmatmul.f32.gmra.mxu0 %v722
    %v1282 = vpop.f32.mrf.mxu0
    %v1283 = vadd.f32 0.0, %v1282
    %1284 = vmatmul.f32.gmra.mxu0 %v725
    %v1285 = vpop.f32.mrf.mxu0
    %v1286 = vadd.f32 0.0, %v1285
    %1287 = vmatmul.f32.gmra.mxu0 %v728
    %v1288 = vpop.f32.mrf.mxu0
    %v1289 = vadd.f32 0.0, %v1288
    %1290 = vmatmul.f32.gmra.mxu0 %v731
    %v1291 = vpop.f32.mrf.mxu0
    %v1292 = vadd.f32 0.0, %v1291
    %1293 = vmatmul.f32.gmra.mxu0 %v734
    %v1294 = vpop.f32.mrf.mxu0
    %v1295 = vadd.f32 0.0, %v1294
    %1296 = vmatmul.f32.gmra.mxu0 %v737
    %v1297 = vpop.f32.mrf.mxu0
    %v1298 = vadd.f32 0.0, %v1297
    %1299 = vmatmul.f32.gmra.mxu0 %v740
    %v1300 = vpop.f32.mrf.mxu0
    %v1301 = vadd.f32 0.0, %v1300
    %1302 = vmatmul.f32.gmra.mxu0 %v743
    %v1303 = vpop.f32.mrf.mxu0
    %v1304 = vadd.f32 0.0, %v1303
    %1305 = vmatmul.f32.gmra.mxu0 %v746
    %v1306 = vpop.f32.mrf.mxu0
    %v1307 = vadd.f32 0.0, %v1306
    %1308 = vmatmul.f32.gmra.mxu0 %v749
    %v1309 = vpop.f32.mrf.mxu0
    %v1310 = vadd.f32 0.0, %v1309
    %1311 = vmatmul.f32.gmra.mxu0 %v752
    %v1312 = vpop.f32.mrf.mxu0
    %v1313 = vadd.f32 0.0, %v1312
    %1314 = vmatmul.f32.gmra.mxu0 %v755
    %v1315 = vpop.f32.mrf.mxu0
    %v1316 = vadd.f32 0.0, %v1315
    %1317 = vmatmul.f32.gmra.mxu0 %v758
    %v1318 = vpop.f32.mrf.mxu0
    %v1319 = vadd.f32 0.0, %v1318
    %1320 = vmatmul.f32.gmra.mxu0 %v761
    %v1321 = vpop.f32.mrf.mxu0
    %v1322 = vadd.f32 0.0, %v1321
    %1323 = vmatmul.f32.gmra.mxu0 %v764
    %v1324 = vpop.f32.mrf.mxu0
    %v1325 = vadd.f32 0.0, %v1324
    %1326 = vmatmul.f32.gmra.mxu0 %v767
    %v1327 = vpop.f32.mrf.mxu0
    %v1328 = vadd.f32 0.0, %v1327
    %1329 = vmatmul.f32.gmra.mxu0 %v770
    %v1330 = vpop.f32.mrf.mxu0
    %v1331 = vadd.f32 0.0, %v1330
    %1332 = vmatmul.f32.gmra.mxu0 %v773
    %v1333 = vpop.f32.mrf.mxu0
    %v1334 = vadd.f32 0.0, %v1333
    %1335 = vmatmul.f32.gmra.mxu0 %v776
    %v1336 = vpop.f32.mrf.mxu0
    %v1337 = vadd.f32 0.0, %v1336
    %1338 = vmatmul.f32.gmra.mxu0 %v779
    %v1339 = vpop.f32.mrf.mxu0
    %v1340 = vadd.f32 0.0, %v1339
    %1341 = vmatmul.f32.gmra.mxu0 %v782
    %v1342 = vpop.f32.mrf.mxu0
    %v1343 = vadd.f32 0.0, %v1342
    %1344 = vmatmul.f32.gmra.mxu0 %v785
    %v1345 = vpop.f32.mrf.mxu0
    %v1346 = vadd.f32 0.0, %v1345
    %1347 = vmatmul.f32.gmra.mxu0 %v788
    %v1348 = vpop.f32.mrf.mxu0
    %v1349 = vadd.f32 0.0, %v1348
    %1350 = vmatmul.f32.gmra.mxu0 %v791
    %v1351 = vpop.f32.mrf.mxu0
    %v1352 = vadd.f32 0.0, %v1351
    %1353 = vdwg.mxu0
    %vm1354 = vcmask 261120
    %1355 = vst.msk [vmem:[#allocation2] sm:$0xff] %vm1354, %v815
    %1356 = vst.msk [vmem:[#allocation2 + $0x40] sm:$0xff] %vm1354, %v818
    %1357 = vst.msk [vmem:[#allocation2 + $0x80] sm:$0xff] %vm1354, %v821
    %1358 = vst.msk [vmem:[#allocation2 + $0xc0] sm:$0xff] %vm1354, %v824
    %1359 = vst.msk [vmem:[#allocation2 + $0x100] sm:$0xff] %vm1354, %v827
    %1360 = vst.msk [vmem:[#allocation2 + $0x140] sm:$0xff] %vm1354, %v830
    %1367 = vrot.lane.b32.xlu0 %v833, 32
    %v1368 = vpop.permute.xlu0 %1367
    %1369 = vrot.lane.b32.xlu0 %v836, 32
    %v1370 = vpop.permute.xlu0 %1369
    %1371 = vrot.lane.b32.xlu0 %v839, 32
    %v1372 = vpop.permute.xlu0 %1371
    %1373 = vrot.lane.b32.xlu0 %v842, 32
    %v1374 = vpop.permute.xlu0 %1373
    %1375 = vrot.lane.b32.xlu0 %v845, 32
    %v1376 = vpop.permute.xlu0 %1375
    %1377 = vrot.lane.b32.xlu0 %v848, 32
    %v1378 = vpop.permute.xlu0 %1377
    %vm1385 = vcmask 523520
    %1386 = vst.msk [vmem:[#allocation2] sm:$0xff] %vm1385, %v1368
    %1387 = vst.msk [vmem:[#allocation2 + $0x40] sm:$0xff] %vm1385, %v1370
    %1388 = vst.msk [vmem:[#allocation2 + $0x80] sm:$0xff] %vm1385, %v1372
    %1389 = vst.msk [vmem:[#allocation2 + $0xc0] sm:$0xff] %vm1385, %v1374
    %1390 = vst.msk [vmem:[#allocation2 + $0x100] sm:$0xff] %vm1385, %v1376
    %1391 = vst.msk [vmem:[#allocation2 + $0x140] sm:$0xff] %vm1385, %v1378
    %1398 = vrot.lane.b32.xlu0 %v851, 64
    %v1399 = vpop.permute.xlu0 %1398
    %1400 = vrot.lane.b32.xlu0 %v854, 64
    %v1401 = vpop.permute.xlu0 %1400
    %1402 = vrot.lane.b32.xlu0 %v857, 64
    %v1403 = vpop.permute.xlu0 %1402
    %1404 = vrot.lane.b32.xlu0 %v860, 64
    %v1405 = vpop.permute.xlu0 %1404
    %1406 = vrot.lane.b32.xlu0 %v863, 64
    %v1407 = vpop.permute.xlu0 %1406
    %1408 = vrot.lane.b32.xlu0 %v866, 64
    %v1409 = vpop.permute.xlu0 %1408
    %vm1416 = vcmask 785920
    %1417 = vst.msk [vmem:[#allocation2] sm:$0xff] %vm1416, %v1399
    %1418 = vst.msk [vmem:[#allocation2 + $0x40] sm:$0xff] %vm1416, %v1401
    %1419 = vst.msk [vmem:[#allocation2 + $0x80] sm:$0xff] %vm1416, %v1403
    %1420 = vst.msk [vmem:[#allocation2 + $0xc0] sm:$0xff] %vm1416, %v1405
    %1421 = vst.msk [vmem:[#allocation2 + $0x100] sm:$0xff] %vm1416, %v1407
    %1422 = vst.msk [vmem:[#allocation2 + $0x140] sm:$0xff] %vm1416, %v1409
    %1429 = vrot.lane.b32.xlu0 %v869, 96
    %v1430 = vpop.permute.xlu0 %1429
    %1431 = vrot.lane.b32.xlu0 %v872, 96
    %v1432 = vpop.permute.xlu0 %1431
    %1433 = vrot.lane.b32.xlu0 %v875, 96
    %v1434 = vpop.permute.xlu0 %1433
    %1435 = vrot.lane.b32.xlu0 %v878, 96
    %v1436 = vpop.permute.xlu0 %1435
    %1437 = vrot.lane.b32.xlu0 %v881, 96
    %v1438 = vpop.permute.xlu0 %1437
    %1439 = vrot.lane.b32.xlu0 %v884, 96
    %v1440 = vpop.permute.xlu0 %1439
    %vm1447 = vcmask 1048320
    %1448 = vst.msk [vmem:[#allocation2] sm:$0xff] %vm1447, %v1430
    %1449 = vst.msk [vmem:[#allocation2 + $0x40] sm:$0xff] %vm1447, %v1432
    %1450 = vst.msk [vmem:[#allocation2 + $0x80] sm:$0xff] %vm1447, %v1434
    %1451 = vst.msk [vmem:[#allocation2 + $0xc0] sm:$0xff] %vm1447, %v1436
    %1452 = vst.msk [vmem:[#allocation2 + $0x100] sm:$0xff] %vm1447, %v1438
    %1453 = vst.msk [vmem:[#allocation2 + $0x140] sm:$0xff] %vm1447, %v1440
    %1454 = vst.msk [vmem:[#allocation2 + $0x8] sm:$0xff] %vm1354, %v887
    %1455 = vst.msk [vmem:[#allocation2 + $0x48] sm:$0xff] %vm1354, %v890
    %1456 = vst.msk [vmem:[#allocation2 + $0x88] sm:$0xff] %vm1354, %v893
    %1457 = vst.msk [vmem:[#allocation2 + $0xc8] sm:$0xff] %vm1354, %v896
    %1458 = vst.msk [vmem:[#allocation2 + $0x108] sm:$0xff] %vm1354, %v899
    %1459 = vst.msk [vmem:[#allocation2 + $0x148] sm:$0xff] %vm1354, %v902
    %1466 = vrot.lane.b32.xlu0 %v905, 32
    %v1467 = vpop.permute.xlu0 %1466
    %1468 = vrot.lane.b32.xlu0 %v908, 32
    %v1469 = vpop.permute.xlu0 %1468
    %1470 = vrot.lane.b32.xlu0 %v911, 32
    %v1471 = vpop.permute.xlu0 %1470
    %1472 = vrot.lane.b32.xlu0 %v914, 32
    %v1473 = vpop.permute.xlu0 %1472
    %1474 = vrot.lane.b32.xlu0 %v917, 32
    %v1475 = vpop.permute.xlu0 %1474
    %1476 = vrot.lane.b32.xlu0 %v920, 32
    %v1477 = vpop.permute.xlu0 %1476
    %1484 = vst.msk [vmem:[#allocation2 + $0x8] sm:$0xff] %vm1385, %v1467
    %1485 = vst.msk [vmem:[#allocation2 + $0x48] sm:$0xff] %vm1385, %v1469
    %1486 = vst.msk [vmem:[#allocation2 + $0x88] sm:$0xff] %vm1385, %v1471
    %1487 = vst.msk [vmem:[#allocation2 + $0xc8] sm:$0xff] %vm1385, %v1473
    %1488 = vst.msk [vmem:[#allocation2 + $0x108] sm:$0xff] %vm1385, %v1475
    %1489 = vst.msk [vmem:[#allocation2 + $0x148] sm:$0xff] %vm1385, %v1477
    %1496 = vrot.lane.b32.xlu0 %v923, 64
    %v1497 = vpop.permute.xlu0 %1496
    %1498 = vrot.lane.b32.xlu0 %v926, 64
    %v1499 = vpop.permute.xlu0 %1498
    %1500 = vrot.lane.b32.xlu0 %v929, 64
    %v1501 = vpop.permute.xlu0 %1500
    %1502 = vrot.lane.b32.xlu0 %v932, 64
    %v1503 = vpop.permute.xlu0 %1502
    %1504 = vrot.lane.b32.xlu0 %v935, 64
    %v1505 = vpop.permute.xlu0 %1504
    %1506 = vrot.lane.b32.xlu0 %v938, 64
    %v1507 = vpop.permute.xlu0 %1506
    %1514 = vst.msk [vmem:[#allocation2 + $0x8] sm:$0xff] %vm1416, %v1497
    %1515 = vst.msk [vmem:[#allocation2 + $0x48] sm:$0xff] %vm1416, %v1499
    %1516 = vst.msk [vmem:[#allocation2 + $0x88] sm:$0xff] %vm1416, %v1501
    %1517 = vst.msk [vmem:[#allocation2 + $0xc8] sm:$0xff] %vm1416, %v1503
    %1518 = vst.msk [vmem:[#allocation2 + $0x108] sm:$0xff] %vm1416, %v1505
    %1519 = vst.msk [vmem:[#allocation2 + $0x148] sm:$0xff] %vm1416, %v1507
    %1526 = vrot.lane.b32.xlu0 %v941, 96
    %v1527 = vpop.permute.xlu0 %1526
    %1528 = vrot.lane.b32.xlu0 %v944, 96
    %v1529 = vpop.permute.xlu0 %1528
    %1530 = vrot.lane.b32.xlu0 %v947, 96
    %v1531 = vpop.permute.xlu0 %1530
    %1532 = vrot.lane.b32.xlu0 %v950, 96
    %v1533 = vpop.permute.xlu0 %1532
    %1534 = vrot.lane.b32.xlu0 %v953, 96
    %v1535 = vpop.permute.xlu0 %1534
    %1536 = vrot.lane.b32.xlu0 %v956, 96
    %v1537 = vpop.permute.xlu0 %1536
    %1544 = vst.msk [vmem:[#allocation2 + $0x8] sm:$0xff] %vm1447, %v1527
    %1545 = vst.msk [vmem:[#allocation2 + $0x48] sm:$0xff] %vm1447, %v1529
    %1546 = vst.msk [vmem:[#allocation2 + $0x88] sm:$0xff] %vm1447, %v1531
    %1547 = vst.msk [vmem:[#allocation2 + $0xc8] sm:$0xff] %vm1447, %v1533
    %1548 = vst.msk [vmem:[#allocation2 + $0x108] sm:$0xff] %vm1447, %v1535
    %1549 = vst.msk [vmem:[#allocation2 + $0x148] sm:$0xff] %vm1447, %v1537
    %1550 = vst.msk [vmem:[#allocation2 + $0x10] sm:$0xff] %vm1354, %v959
    %1551 = vst.msk [vmem:[#allocation2 + $0x50] sm:$0xff] %vm1354, %v962
    %1552 = vst.msk [vmem:[#allocation2 + $0x90] sm:$0xff] %vm1354, %v965
    %1553 = vst.msk [vmem:[#allocation2 + $0xd0] sm:$0xff] %vm1354, %v968
    %1554 = vst.msk [vmem:[#allocation2 + $0x110] sm:$0xff] %vm1354, %v971
    %1555 = vst.msk [vmem:[#allocation2 + $0x150] sm:$0xff] %vm1354, %v974
    %1562 = vrot.lane.b32.xlu0 %v977, 32
    %v1563 = vpop.permute.xlu0 %1562
    %1564 = vrot.lane.b32.xlu0 %v980, 32
    %v1565 = vpop.permute.xlu0 %1564
    %1566 = vrot.lane.b32.xlu0 %v983, 32
    %v1567 = vpop.permute.xlu0 %1566
    %1568 = vrot.lane.b32.xlu0 %v986, 32
    %v1569 = vpop.permute.xlu0 %1568
    %1570 = vrot.lane.b32.xlu0 %v989, 32
    %v1571 = vpop.permute.xlu0 %1570
    %1572 = vrot.lane.b32.xlu0 %v992, 32
    %v1573 = vpop.permute.xlu0 %1572
    %1580 = vst.msk [vmem:[#allocation2 + $0x10] sm:$0xff] %vm1385, %v1563
    %1581 = vst.msk [vmem:[#allocation2 + $0x50] sm:$0xff] %vm1385, %v1565
    %1582 = vst.msk [vmem:[#allocation2 + $0x90] sm:$0xff] %vm1385, %v1567
    %1583 = vst.msk [vmem:[#allocation2 + $0xd0] sm:$0xff] %vm1385, %v1569
    %1584 = vst.msk [vmem:[#allocation2 + $0x110] sm:$0xff] %vm1385, %v1571
    %1585 = vst.msk [vmem:[#allocation2 + $0x150] sm:$0xff] %vm1385, %v1573
    %1592 = vrot.lane.b32.xlu0 %v995, 64
    %v1593 = vpop.permute.xlu0 %1592
    %1594 = vrot.lane.b32.xlu0 %v998, 64
    %v1595 = vpop.permute.xlu0 %1594
    %1596 = vrot.lane.b32.xlu0 %v1001, 64
    %v1597 = vpop.permute.xlu0 %1596
    %1598 = vrot.lane.b32.xlu0 %v1004, 64
    %v1599 = vpop.permute.xlu0 %1598
    %1600 = vrot.lane.b32.xlu0 %v1007, 64
    %v1601 = vpop.permute.xlu0 %1600
    %1602 = vrot.lane.b32.xlu0 %v1010, 64
    %v1603 = vpop.permute.xlu0 %1602
    %1610 = vst.msk [vmem:[#allocation2 + $0x10] sm:$0xff] %vm1416, %v1593
    %1611 = vst.msk [vmem:[#allocation2 + $0x50] sm:$0xff] %vm1416, %v1595
    %1612 = vst.msk [vmem:[#allocation2 + $0x90] sm:$0xff] %vm1416, %v1597
    %1613 = vst.msk [vmem:[#allocation2 + $0xd0] sm:$0xff] %vm1416, %v1599
    %1614 = vst.msk [vmem:[#allocation2 + $0x110] sm:$0xff] %vm1416, %v1601
    %1615 = vst.msk [vmem:[#allocation2 + $0x150] sm:$0xff] %vm1416, %v1603
    %1622 = vrot.lane.b32.xlu0 %v1013, 96
    %v1623 = vpop.permute.xlu0 %1622
    %1624 = vrot.lane.b32.xlu0 %v1016, 96
    %v1625 = vpop.permute.xlu0 %1624
    %1626 = vrot.lane.b32.xlu0 %v1019, 96
    %v1627 = vpop.permute.xlu0 %1626
    %1628 = vrot.lane.b32.xlu0 %v1022, 96
    %v1629 = vpop.permute.xlu0 %1628
    %1630 = vrot.lane.b32.xlu0 %v1025, 96
    %v1631 = vpop.permute.xlu0 %1630
    %1632 = vrot.lane.b32.xlu0 %v1028, 96
    %v1633 = vpop.permute.xlu0 %1632
    %1640 = vst.msk [vmem:[#allocation2 + $0x10] sm:$0xff] %vm1447, %v1623
    %1641 = vst.msk [vmem:[#allocation2 + $0x50] sm:$0xff] %vm1447, %v1625
    %1642 = vst.msk [vmem:[#allocation2 + $0x90] sm:$0xff] %vm1447, %v1627
    %1643 = vst.msk [vmem:[#allocation2 + $0xd0] sm:$0xff] %vm1447, %v1629
    %1644 = vst.msk [vmem:[#allocation2 + $0x110] sm:$0xff] %vm1447, %v1631
    %1645 = vst.msk [vmem:[#allocation2 + $0x150] sm:$0xff] %vm1447, %v1633
    %1646 = vst.msk [vmem:[#allocation2 + $0x18] sm:$0xff] %vm1354, %v1031
    %1647 = vst.msk [vmem:[#allocation2 + $0x58] sm:$0xff] %vm1354, %v1034
    %1648 = vst.msk [vmem:[#allocation2 + $0x98] sm:$0xff] %vm1354, %v1037
    %1649 = vst.msk [vmem:[#allocation2 + $0xd8] sm:$0xff] %vm1354, %v1040
    %1650 = vst.msk [vmem:[#allocation2 + $0x118] sm:$0xff] %vm1354, %v1043
    %1651 = vst.msk [vmem:[#allocation2 + $0x158] sm:$0xff] %vm1354, %v1046
    %1658 = vrot.lane.b32.xlu0 %v1049, 32
    %v1659 = vpop.permute.xlu0 %1658
    %1660 = vrot.lane.b32.xlu0 %v1052, 32
    %v1661 = vpop.permute.xlu0 %1660
    %1662 = vrot.lane.b32.xlu0 %v1055, 32
    %v1663 = vpop.permute.xlu0 %1662
    %1664 = vrot.lane.b32.xlu0 %v1058, 32
    %v1665 = vpop.permute.xlu0 %1664
    %1666 = vrot.lane.b32.xlu0 %v1061, 32
    %v1667 = vpop.permute.xlu0 %1666
    %1668 = vrot.lane.b32.xlu0 %v1064, 32
    %v1669 = vpop.permute.xlu0 %1668
    %1676 = vst.msk [vmem:[#allocation2 + $0x18] sm:$0xff] %vm1385, %v1659
    %1677 = vst.msk [vmem:[#allocation2 + $0x58] sm:$0xff] %vm1385, %v1661
    %1678 = vst.msk [vmem:[#allocation2 + $0x98] sm:$0xff] %vm1385, %v1663
    %1679 = vst.msk [vmem:[#allocation2 + $0xd8] sm:$0xff] %vm1385, %v1665
    %1680 = vst.msk [vmem:[#allocation2 + $0x118] sm:$0xff] %vm1385, %v1667
    %1681 = vst.msk [vmem:[#allocation2 + $0x158] sm:$0xff] %vm1385, %v1669
    %1688 = vrot.lane.b32.xlu0 %v1067, 64
    %v1689 = vpop.permute.xlu0 %1688
    %1690 = vrot.lane.b32.xlu0 %v1070, 64
    %v1691 = vpop.permute.xlu0 %1690
    %1692 = vrot.lane.b32.xlu0 %v1073, 64
    %v1693 = vpop.permute.xlu0 %1692
    %1694 = vrot.lane.b32.xlu0 %v1076, 64
    %v1695 = vpop.permute.xlu0 %1694
    %1696 = vrot.lane.b32.xlu0 %v1079, 64
    %v1697 = vpop.permute.xlu0 %1696
    %1698 = vrot.lane.b32.xlu0 %v1082, 64
    %v1699 = vpop.permute.xlu0 %1698
    %1706 = vst.msk [vmem:[#allocation2 + $0x18] sm:$0xff] %vm1416, %v1689
    %1707 = vst.msk [vmem:[#allocation2 + $0x58] sm:$0xff] %vm1416, %v1691
    %1708 = vst.msk [vmem:[#allocation2 + $0x98] sm:$0xff] %vm1416, %v1693
    %1709 = vst.msk [vmem:[#allocation2 + $0xd8] sm:$0xff] %vm1416, %v1695
    %1710 = vst.msk [vmem:[#allocation2 + $0x118] sm:$0xff] %vm1416, %v1697
    %1711 = vst.msk [vmem:[#allocation2 + $0x158] sm:$0xff] %vm1416, %v1699
    %1718 = vrot.lane.b32.xlu0 %v1085, 96
    %v1719 = vpop.permute.xlu0 %1718
    %1720 = vrot.lane.b32.xlu0 %v1088, 96
    %v1721 = vpop.permute.xlu0 %1720
    %1722 = vrot.lane.b32.xlu0 %v1091, 96
    %v1723 = vpop.permute.xlu0 %1722
    %1724 = vrot.lane.b32.xlu0 %v1094, 96
    %v1725 = vpop.permute.xlu0 %1724
    %1726 = vrot.lane.b32.xlu0 %v1097, 96
    %v1727 = vpop.permute.xlu0 %1726
    %1728 = vrot.lane.b32.xlu0 %v1100, 96
    %v1729 = vpop.permute.xlu0 %1728
    %1736 = vst.msk [vmem:[#allocation2 + $0x18] sm:$0xff] %vm1447, %v1719
    %1737 = vst.msk [vmem:[#allocation2 + $0x58] sm:$0xff] %vm1447, %v1721
    %1738 = vst.msk [vmem:[#allocation2 + $0x98] sm:$0xff] %vm1447, %v1723
    %1739 = vst.msk [vmem:[#allocation2 + $0xd8] sm:$0xff] %vm1447, %v1725
    %1740 = vst.msk [vmem:[#allocation2 + $0x118] sm:$0xff] %vm1447, %v1727
    %1741 = vst.msk [vmem:[#allocation2 + $0x158] sm:$0xff] %vm1447, %v1729
    %1742 = vst.msk [vmem:[#allocation2 + $0x20] sm:$0xff] %vm1354, %v1103
    %1743 = vst.msk [vmem:[#allocation2 + $0x60] sm:$0xff] %vm1354, %v1106
    %1744 = vst.msk [vmem:[#allocation2 + $0xa0] sm:$0xff] %vm1354, %v1109
    %1745 = vst.msk [vmem:[#allocation2 + $0xe0] sm:$0xff] %vm1354, %v1112
    %1746 = vst.msk [vmem:[#allocation2 + $0x120] sm:$0xff] %vm1354, %v1115
    %1747 = vst.msk [vmem:[#allocation2 + $0x160] sm:$0xff] %vm1354, %v1118
    %1754 = vrot.lane.b32.xlu0 %v1121, 32
    %v1755 = vpop.permute.xlu0 %1754
    %1756 = vrot.lane.b32.xlu0 %v1124, 32
    %v1757 = vpop.permute.xlu0 %1756
    %1758 = vrot.lane.b32.xlu0 %v1127, 32
    %v1759 = vpop.permute.xlu0 %1758
    %1760 = vrot.lane.b32.xlu0 %v1130, 32
    %v1761 = vpop.permute.xlu0 %1760
    %1762 = vrot.lane.b32.xlu0 %v1133, 32
    %v1763 = vpop.permute.xlu0 %1762
    %1764 = vrot.lane.b32.xlu0 %v1136, 32
    %v1765 = vpop.permute.xlu0 %1764
    %1772 = vst.msk [vmem:[#allocation2 + $0x20] sm:$0xff] %vm1385, %v1755
    %1773 = vst.msk [vmem:[#allocation2 + $0x60] sm:$0xff] %vm1385, %v1757
    %1774 = vst.msk [vmem:[#allocation2 + $0xa0] sm:$0xff] %vm1385, %v1759
    %1775 = vst.msk [vmem:[#allocation2 + $0xe0] sm:$0xff] %vm1385, %v1761
    %1776 = vst.msk [vmem:[#allocation2 + $0x120] sm:$0xff] %vm1385, %v1763
    %1777 = vst.msk [vmem:[#allocation2 + $0x160] sm:$0xff] %vm1385, %v1765
    %1784 = vrot.lane.b32.xlu0 %v1139, 64
    %v1785 = vpop.permute.xlu0 %1784
    %1786 = vrot.lane.b32.xlu0 %v1142, 64
    %v1787 = vpop.permute.xlu0 %1786
    %1788 = vrot.lane.b32.xlu0 %v1145, 64
    %v1789 = vpop.permute.xlu0 %1788
    %1790 = vrot.lane.b32.xlu0 %v1148, 64
    %v1791 = vpop.permute.xlu0 %1790
    %1792 = vrot.lane.b32.xlu0 %v1151, 64
    %v1793 = vpop.permute.xlu0 %1792
    %1794 = vrot.lane.b32.xlu0 %v1154, 64
    %v1795 = vpop.permute.xlu0 %1794
    %1802 = vst.msk [vmem:[#allocation2 + $0x20] sm:$0xff] %vm1416, %v1785
    %1803 = vst.msk [vmem:[#allocation2 + $0x60] sm:$0xff] %vm1416, %v1787
    %1804 = vst.msk [vmem:[#allocation2 + $0xa0] sm:$0xff] %vm1416, %v1789
    %1805 = vst.msk [vmem:[#allocation2 + $0xe0] sm:$0xff] %vm1416, %v1791
    %1806 = vst.msk [vmem:[#allocation2 + $0x120] sm:$0xff] %vm1416, %v1793
    %1807 = vst.msk [vmem:[#allocation2 + $0x160] sm:$0xff] %vm1416, %v1795
    %1814 = vrot.lane.b32.xlu0 %v1157, 96
    %v1815 = vpop.permute.xlu0 %1814
    %1816 = vrot.lane.b32.xlu0 %v1160, 96
    %v1817 = vpop.permute.xlu0 %1816
    %1818 = vrot.lane.b32.xlu0 %v1163, 96
    %v1819 = vpop.permute.xlu0 %1818
    %1820 = vrot.lane.b32.xlu0 %v1166, 96
    %v1821 = vpop.permute.xlu0 %1820
    %1822 = vrot.lane.b32.xlu0 %v1169, 96
    %v1823 = vpop.permute.xlu0 %1822
    %1824 = vrot.lane.b32.xlu0 %v1172, 96
    %v1825 = vpop.permute.xlu0 %1824
    %1832 = vst.msk [vmem:[#allocation2 + $0x20] sm:$0xff] %vm1447, %v1815
    %1833 = vst.msk [vmem:[#allocation2 + $0x60] sm:$0xff] %vm1447, %v1817
    %1834 = vst.msk [vmem:[#allocation2 + $0xa0] sm:$0xff] %vm1447, %v1819
    %1835 = vst.msk [vmem:[#allocation2 + $0xe0] sm:$0xff] %vm1447, %v1821
    %1836 = vst.msk [vmem:[#allocation2 + $0x120] sm:$0xff] %vm1447, %v1823
    %1837 = vst.msk [vmem:[#allocation2 + $0x160] sm:$0xff] %vm1447, %v1825
    %1838 = vst.msk [vmem:[#allocation2 + $0x28] sm:$0xff] %vm1354, %v1175
    %1839 = vst.msk [vmem:[#allocation2 + $0x68] sm:$0xff] %vm1354, %v1178
    %1840 = vst.msk [vmem:[#allocation2 + $0xa8] sm:$0xff] %vm1354, %v1181
    %1841 = vst.msk [vmem:[#allocation2 + $0xe8] sm:$0xff] %vm1354, %v1184
    %1842 = vst.msk [vmem:[#allocation2 + $0x128] sm:$0xff] %vm1354, %v1187
    %1843 = vst.msk [vmem:[#allocation2 + $0x168] sm:$0xff] %vm1354, %v1190
    %1850 = vrot.lane.b32.xlu0 %v1193, 32
    %v1851 = vpop.permute.xlu0 %1850
    %1852 = vrot.lane.b32.xlu0 %v1196, 32
    %v1853 = vpop.permute.xlu0 %1852
    %1854 = vrot.lane.b32.xlu0 %v1199, 32
    %v1855 = vpop.permute.xlu0 %1854
    %1856 = vrot.lane.b32.xlu0 %v1202, 32
    %v1857 = vpop.permute.xlu0 %1856
    %1858 = vrot.lane.b32.xlu0 %v1205, 32
    %v1859 = vpop.permute.xlu0 %1858
    %1860 = vrot.lane.b32.xlu0 %v1208, 32
    %v1861 = vpop.permute.xlu0 %1860
    %1868 = vst.msk [vmem:[#allocation2 + $0x28] sm:$0xff] %vm1385, %v1851
    %1869 = vst.msk [vmem:[#allocation2 + $0x68] sm:$0xff] %vm1385, %v1853
    %1870 = vst.msk [vmem:[#allocation2 + $0xa8] sm:$0xff] %vm1385, %v1855
    %1871 = vst.msk [vmem:[#allocation2 + $0xe8] sm:$0xff] %vm1385, %v1857
    %1872 = vst.msk [vmem:[#allocation2 + $0x128] sm:$0xff] %vm1385, %v1859
    %1873 = vst.msk [vmem:[#allocation2 + $0x168] sm:$0xff] %vm1385, %v1861
    %1880 = vrot.lane.b32.xlu0 %v1211, 64
    %v1881 = vpop.permute.xlu0 %1880
    %1882 = vrot.lane.b32.xlu0 %v1214, 64
    %v1883 = vpop.permute.xlu0 %1882
    %1884 = vrot.lane.b32.xlu0 %v1217, 64
    %v1885 = vpop.permute.xlu0 %1884
    %1886 = vrot.lane.b32.xlu0 %v1220, 64
    %v1887 = vpop.permute.xlu0 %1886
    %1888 = vrot.lane.b32.xlu0 %v1223, 64
    %v1889 = vpop.permute.xlu0 %1888
    %1890 = vrot.lane.b32.xlu0 %v1226, 64
    %v1891 = vpop.permute.xlu0 %1890
    %1898 = vst.msk [vmem:[#allocation2 + $0x28] sm:$0xff] %vm1416, %v1881
    %1899 = vst.msk [vmem:[#allocation2 + $0x68] sm:$0xff] %vm1416, %v1883
    %1900 = vst.msk [vmem:[#allocation2 + $0xa8] sm:$0xff] %vm1416, %v1885
    %1901 = vst.msk [vmem:[#allocation2 + $0xe8] sm:$0xff] %vm1416, %v1887
    %1902 = vst.msk [vmem:[#allocation2 + $0x128] sm:$0xff] %vm1416, %v1889
    %1903 = vst.msk [vmem:[#allocation2 + $0x168] sm:$0xff] %vm1416, %v1891
    %1910 = vrot.lane.b32.xlu0 %v1229, 96
    %v1911 = vpop.permute.xlu0 %1910
    %1912 = vrot.lane.b32.xlu0 %v1232, 96
    %v1913 = vpop.permute.xlu0 %1912
    %1914 = vrot.lane.b32.xlu0 %v1235, 96
    %v1915 = vpop.permute.xlu0 %1914
    %1916 = vrot.lane.b32.xlu0 %v1238, 96
    %v1917 = vpop.permute.xlu0 %1916
    %1918 = vrot.lane.b32.xlu0 %v1241, 96
    %v1919 = vpop.permute.xlu0 %1918
    %1920 = vrot.lane.b32.xlu0 %v1244, 96
    %v1921 = vpop.permute.xlu0 %1920
    %1928 = vst.msk [vmem:[#allocation2 + $0x28] sm:$0xff] %vm1447, %v1911
    %1929 = vst.msk [vmem:[#allocation2 + $0x68] sm:$0xff] %vm1447, %v1913
    %1930 = vst.msk [vmem:[#allocation2 + $0xa8] sm:$0xff] %vm1447, %v1915
    %1931 = vst.msk [vmem:[#allocation2 + $0xe8] sm:$0xff] %vm1447, %v1917
    %1932 = vst.msk [vmem:[#allocation2 + $0x128] sm:$0xff] %vm1447, %v1919
    %1933 = vst.msk [vmem:[#allocation2 + $0x168] sm:$0xff] %vm1447, %v1921
    %1934 = vst.msk [vmem:[#allocation2 + $0x30] sm:$0xff] %vm1354, %v1247
    %1935 = vst.msk [vmem:[#allocation2 + $0x70] sm:$0xff] %vm1354, %v1250
    %1936 = vst.msk [vmem:[#allocation2 + $0xb0] sm:$0xff] %vm1354, %v1253
    %1937 = vst.msk [vmem:[#allocation2 + $0xf0] sm:$0xff] %vm1354, %v1256
    %1938 = vst.msk [vmem:[#allocation2 + $0x130] sm:$0xff] %vm1354, %v1259
    %1939 = vst.msk [vmem:[#allocation2 + $0x170] sm:$0xff] %vm1354, %v1262
    %1946 = vrot.lane.b32.xlu0 %v1265, 32
    %v1947 = vpop.permute.xlu0 %1946
    %1948 = vrot.lane.b32.xlu0 %v1268, 32
    %v1949 = vpop.permute.xlu0 %1948
    %1950 = vrot.lane.b32.xlu0 %v1271, 32
    %v1951 = vpop.permute.xlu0 %1950
    %1952 = vrot.lane.b32.xlu0 %v1274, 32
    %v1953 = vpop.permute.xlu0 %1952
    %1954 = vrot.lane.b32.xlu0 %v1277, 32
    %v1955 = vpop.permute.xlu0 %1954
    %1956 = vrot.lane.b32.xlu0 %v1280, 32
    %v1957 = vpop.permute.xlu0 %1956
    %1964 = vst.msk [vmem:[#allocation2 + $0x30] sm:$0xff] %vm1385, %v1947
    %1965 = vst.msk [vmem:[#allocation2 + $0x70] sm:$0xff] %vm1385, %v1949
    %1966 = vst.msk [vmem:[#allocation2 + $0xb0] sm:$0xff] %vm1385, %v1951
    %1967 = vst.msk [vmem:[#allocation2 + $0xf0] sm:$0xff] %vm1385, %v1953
    %1968 = vst.msk [vmem:[#allocation2 + $0x130] sm:$0xff] %vm1385, %v1955
    %1969 = vst.msk [vmem:[#allocation2 + $0x170] sm:$0xff] %vm1385, %v1957
    %1976 = vrot.lane.b32.xlu0 %v1283, 64
    %v1977 = vpop.permute.xlu0 %1976
    %1978 = vrot.lane.b32.xlu0 %v1286, 64
    %v1979 = vpop.permute.xlu0 %1978
    %1980 = vrot.lane.b32.xlu0 %v1289, 64
    %v1981 = vpop.permute.xlu0 %1980
    %1982 = vrot.lane.b32.xlu0 %v1292, 64
    %v1983 = vpop.permute.xlu0 %1982
    %1984 = vrot.lane.b32.xlu0 %v1295, 64
    %v1985 = vpop.permute.xlu0 %1984
    %1986 = vrot.lane.b32.xlu0 %v1298, 64
    %v1987 = vpop.permute.xlu0 %1986
    %1994 = vst.msk [vmem:[#allocation2 + $0x30] sm:$0xff] %vm1416, %v1977
    %1995 = vst.msk [vmem:[#allocation2 + $0x70] sm:$0xff] %vm1416, %v1979
    %1996 = vst.msk [vmem:[#allocation2 + $0xb0] sm:$0xff] %vm1416, %v1981
    %1997 = vst.msk [vmem:[#allocation2 + $0xf0] sm:$0xff] %vm1416, %v1983
    %1998 = vst.msk [vmem:[#allocation2 + $0x130] sm:$0xff] %vm1416, %v1985
    %1999 = vst.msk [vmem:[#allocation2 + $0x170] sm:$0xff] %vm1416, %v1987
    %2006 = vrot.lane.b32.xlu0 %v1301, 96
    %v2007 = vpop.permute.xlu0 %2006
    %2008 = vrot.lane.b32.xlu0 %v1304, 96
    %v2009 = vpop.permute.xlu0 %2008
    %2010 = vrot.lane.b32.xlu0 %v1307, 96
    %v2011 = vpop.permute.xlu0 %2010
    %2012 = vrot.lane.b32.xlu0 %v1310, 96
    %v2013 = vpop.permute.xlu0 %2012
    %2014 = vrot.lane.b32.xlu0 %v1313, 96
    %v2015 = vpop.permute.xlu0 %2014
    %2016 = vrot.lane.b32.xlu0 %v1316, 96
    %v2017 = vpop.permute.xlu0 %2016
    %2024 = vst.msk [vmem:[#allocation2 + $0x30] sm:$0xff] %vm1447, %v2007
    %2025 = vst.msk [vmem:[#allocation2 + $0x70] sm:$0xff] %vm1447, %v2009
    %2026 = vst.msk [vmem:[#allocation2 + $0xb0] sm:$0xff] %vm1447, %v2011
    %2027 = vst.msk [vmem:[#allocation2 + $0xf0] sm:$0xff] %vm1447, %v2013
    %2028 = vst.msk [vmem:[#allocation2 + $0x130] sm:$0xff] %vm1447, %v2015
    %2029 = vst.msk [vmem:[#allocation2 + $0x170] sm:$0xff] %vm1447, %v2017
    %2030 = vst.msk [vmem:[#allocation2 + $0x38] sm:$0xff] %vm1354, %v1319
    %2031 = vst.msk [vmem:[#allocation2 + $0x78] sm:$0xff] %vm1354, %v1322
    %2032 = vst.msk [vmem:[#allocation2 + $0xb8] sm:$0xff] %vm1354, %v1325
    %2033 = vst.msk [vmem:[#allocation2 + $0xf8] sm:$0xff] %vm1354, %v1328
    %2034 = vst.msk [vmem:[#allocation2 + $0x138] sm:$0xff] %vm1354, %v1331
    %2035 = vst.msk [vmem:[#allocation2 + $0x178] sm:$0xff] %vm1354, %v1334
    %2042 = vrot.lane.b32.xlu0 %v1337, 32
    %v2043 = vpop.permute.xlu0 %2042
    %2044 = vrot.lane.b32.xlu0 %v1340, 32
    %v2045 = vpop.permute.xlu0 %2044
    %2046 = vrot.lane.b32.xlu0 %v1343, 32
    %v2047 = vpop.permute.xlu0 %2046
    %2048 = vrot.lane.b32.xlu0 %v1346, 32
    %v2049 = vpop.permute.xlu0 %2048
    %2050 = vrot.lane.b32.xlu0 %v1349, 32
    %v2051 = vpop.permute.xlu0 %2050
    %2052 = vrot.lane.b32.xlu0 %v1352, 32
    %v2053 = vpop.permute.xlu0 %2052
    %2060 = vst.msk [vmem:[#allocation2 + $0x38] sm:$0xff] %vm1385, %v2043
    %2061 = vst.msk [vmem:[#allocation2 + $0x78] sm:$0xff] %vm1385, %v2045
    %2062 = vst.msk [vmem:[#allocation2 + $0xb8] sm:$0xff] %vm1385, %v2047
    %2063 = vst.msk [vmem:[#allocation2 + $0xf8] sm:$0xff] %vm1385, %v2049
    %2064 = vst.msk [vmem:[#allocation2 + $0x138] sm:$0xff] %vm1385, %v2051
    %2065 = vst.msk [vmem:[#allocation2 + $0x178] sm:$0xff] %vm1385, %v2053
    %v2066 = vld [vmem:[%s3] sm:$0xff]
    %v2067 = vld [vmem:[%s3 + $0x8] sm:$0xff]
    %v2068 = vld [vmem:[%s3 + $0x10] sm:$0xff]
    %v2069 = vld [vmem:[%s3 + $0x18] sm:$0xff]
    %v2070 = vld [vmem:[#allocation2] sm:$0xff]
    %v2071 = vld [vmem:[#allocation2 + $0x8] sm:$0xff]
    %v2072 = vld [vmem:[#allocation2 + $0x10] sm:$0xff]
    %v2073 = vld [vmem:[#allocation2 + $0x18] sm:$0xff]
    %v2074 = vld [vmem:[#allocation2 + $0x20] sm:$0xff]
    %v2075 = vld [vmem:[#allocation2 + $0x28] sm:$0xff]
    %v2076 = vld [vmem:[#allocation2 + $0x30] sm:$0xff]
    %v2077 = vld [vmem:[#allocation2 + $0x38] sm:$0xff]
    %v2078 = vld [vmem:[#allocation2 + $0x40] sm:$0xff]
    %v2079 = vld [vmem:[#allocation2 + $0x48] sm:$0xff]
    %v2080 = vld [vmem:[#allocation2 + $0x50] sm:$0xff]
    %v2081 = vld [vmem:[#allocation2 + $0x58] sm:$0xff]
    %v2082 = vld [vmem:[#allocation2 + $0x60] sm:$0xff]
    %v2083 = vld [vmem:[#allocation2 + $0x68] sm:$0xff]
    %v2084 = vld [vmem:[#allocation2 + $0x70] sm:$0xff]
    %v2085 = vld [vmem:[#allocation2 + $0x78] sm:$0xff]
    %v2086 = vld [vmem:[#allocation2 + $0x80] sm:$0xff]
    %v2087 = vld [vmem:[#allocation2 + $0x88] sm:$0xff]
    %v2088 = vld [vmem:[#allocation2 + $0x90] sm:$0xff]
    %v2089 = vld [vmem:[#allocation2 + $0x98] sm:$0xff]
    %v2090 = vld [vmem:[#allocation2 + $0xa0] sm:$0xff]
    %v2091 = vld [vmem:[#allocation2 + $0xa8] sm:$0xff]
    %v2092 = vld [vmem:[#allocation2 + $0xb0] sm:$0xff]
    %v2093 = vld [vmem:[#allocation2 + $0xb8] sm:$0xff]
    %v2094 = vld [vmem:[#allocation2 + $0xc0] sm:$0xff]
    %v2095 = vld [vmem:[#allocation2 + $0xc8] sm:$0xff]
    %v2096 = vld [vmem:[#allocation2 + $0xd0] sm:$0xff]
    %v2097 = vld [vmem:[#allocation2 + $0xd8] sm:$0xff]
    %v2098 = vld [vmem:[#allocation2 + $0xe0] sm:$0xff]
    %v2099 = vld [vmem:[#allocation2 + $0xe8] sm:$0xff]
    %v2100 = vld [vmem:[#allocation2 + $0xf0] sm:$0xff]
    %v2101 = vld [vmem:[#allocation2 + $0xf8] sm:$0xff]
    %v2102 = vld [vmem:[#allocation2 + $0x100] sm:$0xff]
    %v2103 = vld [vmem:[#allocation2 + $0x108] sm:$0xff]
    %v2104 = vld [vmem:[#allocation2 + $0x110] sm:$0xff]
    %v2105 = vld [vmem:[#allocation2 + $0x118] sm:$0xff]
    %v2106 = vld [vmem:[#allocation2 + $0x120] sm:$0xff]
    %v2107 = vld [vmem:[#allocation2 + $0x128] sm:$0xff]
    %v2108 = vld [vmem:[#allocation2 + $0x130] sm:$0xff]
    %v2109 = vld [vmem:[#allocation2 + $0x138] sm:$0xff]
    %v2110 = vld [vmem:[#allocation2 + $0x140] sm:$0xff]
    %v2111 = vld [vmem:[#allocation2 + $0x148] sm:$0xff]
    %v2112 = vld [vmem:[#allocation2 + $0x150] sm:$0xff]
    %v2113 = vld [vmem:[#allocation2 + $0x158] sm:$0xff]
    %v2114 = vld [vmem:[#allocation2 + $0x160] sm:$0xff]
    %v2115 = vld [vmem:[#allocation2 + $0x168] sm:$0xff]
    %v2116 = vld [vmem:[#allocation2 + $0x170] sm:$0xff]
    %v2117 = vld [vmem:[#allocation2 + $0x178] sm:$0xff]
    %vm2118 = vcmask 392192
    %v2120 = vsel %vm2118, %v2066, 0
    %v2123 = vsel %vm2118, %v2067, 0
    %v2126 = vsel %vm2118, %v2068, 0
    %v2129 = vsel %vm2118, %v2069, 0
    %2131 = vmatpush.msra.mxu0 0.0
    %2132 = vmatpush.msra.mxu0 0.0
    %2133 = vmatpush.msra.mxu0 0.0
    %2134 = vmatpush.msra.mxu0 0.0
    %2135 = vmatpush.msra.mxu0 0.0
    %2136 = vmatpush.msra.mxu0 0.0
    %2137 = vmatpush.msra.mxu0 0.0
    %2138 = vmatpush.msra.mxu0 0.0
    %2139 = vmatpush.msra.mxu0 0.0
    %2140 = vmatpush.msra.mxu0 0.0
    %2141 = vmatpush.msra.mxu0 %v2110
    %2142 = vmatpush.msra.mxu0 %v2102
    %2143 = vmatpush.msra.mxu0 %v2094
    %2144 = vmatpush.msra.mxu0 %v2086
    %2145 = vmatpush.msra.mxu0 %v2078
    %2146 = vmatpush.msra.mxu0 %v2070
    %2147 = vmatmul.f32.gmra.mxu0 %v2120
    %v2148 = vpop.f32.mrf.mxu0
    %v2149 = vadd.f32 0.0, %v2148
    %2150 = vmatmul.f32.gmra.mxu0 %v2123
    %v2151 = vpop.f32.mrf.mxu0
    %v2152 = vadd.f32 0.0, %v2151
    %2153 = vmatmul.f32.gmra.mxu0 %v2126
    %v2154 = vpop.f32.mrf.mxu0
    %v2155 = vadd.f32 0.0, %v2154
    %2156 = vmatmul.f32.gmra.mxu0 %v2129
    %v2157 = vpop.f32.mrf.mxu0
    %v2158 = vadd.f32 0.0, %v2157
    %2159 = vdwg.mxu0
    %2160 = vmatpush.msra.mxu0 0.0
    %2161 = vmatpush.msra.mxu0 0.0
    %2162 = vmatpush.msra.mxu0 0.0
    %2163 = vmatpush.msra.mxu0 0.0
    %2164 = vmatpush.msra.mxu0 0.0
    %2165 = vmatpush.msra.mxu0 0.0
    %2166 = vmatpush.msra.mxu0 0.0
    %2167 = vmatpush.msra.mxu0 0.0
    %2168 = vmatpush.msra.mxu0 0.0
    %2169 = vmatpush.msra.mxu0 0.0
    %2170 = vmatpush.msra.mxu0 %v2111
    %2171 = vmatpush.msra.mxu0 %v2103
    %2172 = vmatpush.msra.mxu0 %v2095
    %2173 = vmatpush.msra.mxu0 %v2087
    %2174 = vmatpush.msra.mxu0 %v2079
    %2175 = vmatpush.msra.mxu0 %v2071
    %2176 = vmatmul.f32.gmra.mxu0 %v2120
    %v2177 = vpop.f32.mrf.mxu0
    %v2178 = vadd.f32 0.0, %v2177
    %2179 = vmatmul.f32.gmra.mxu0 %v2123
    %v2180 = vpop.f32.mrf.mxu0
    %v2181 = vadd.f32 0.0, %v2180
    %2182 = vmatmul.f32.gmra.mxu0 %v2126
    %v2183 = vpop.f32.mrf.mxu0
    %v2184 = vadd.f32 0.0, %v2183
    %2185 = vmatmul.f32.gmra.mxu0 %v2129
    %v2186 = vpop.f32.mrf.mxu0
    %v2187 = vadd.f32 0.0, %v2186
    %2188 = vdwg.mxu0
    %2189 = vmatpush.msra.mxu0 0.0
    %2190 = vmatpush.msra.mxu0 0.0
    %2191 = vmatpush.msra.mxu0 0.0
    %2192 = vmatpush.msra.mxu0 0.0
    %2193 = vmatpush.msra.mxu0 0.0
    %2194 = vmatpush.msra.mxu0 0.0
    %2195 = vmatpush.msra.mxu0 0.0
    %2196 = vmatpush.msra.mxu0 0.0
    %2197 = vmatpush.msra.mxu0 0.0
    %2198 = vmatpush.msra.mxu0 0.0
    %2199 = vmatpush.msra.mxu0 %v2112
    %2200 = vmatpush.msra.mxu0 %v2104
    %2201 = vmatpush.msra.mxu0 %v2096
    %2202 = vmatpush.msra.mxu0 %v2088
    %2203 = vmatpush.msra.mxu0 %v2080
    %2204 = vmatpush.msra.mxu0 %v2072
    %2205 = vmatmul.f32.gmra.mxu0 %v2120
    %v2206 = vpop.f32.mrf.mxu0
    %v2207 = vadd.f32 0.0, %v2206
    %2208 = vmatmul.f32.gmra.mxu0 %v2123
    %v2209 = vpop.f32.mrf.mxu0
    %v2210 = vadd.f32 0.0, %v2209
    %2211 = vmatmul.f32.gmra.mxu0 %v2126
    %v2212 = vpop.f32.mrf.mxu0
    %v2213 = vadd.f32 0.0, %v2212
    %2214 = vmatmul.f32.gmra.mxu0 %v2129
    %v2215 = vpop.f32.mrf.mxu0
    %v2216 = vadd.f32 0.0, %v2215
    %2217 = vdwg.mxu0
    %2218 = vmatpush.msra.mxu0 0.0
    %2219 = vmatpush.msra.mxu0 0.0
    %2220 = vmatpush.msra.mxu0 0.0
    %2221 = vmatpush.msra.mxu0 0.0
    %2222 = vmatpush.msra.mxu0 0.0
    %2223 = vmatpush.msra.mxu0 0.0
    %2224 = vmatpush.msra.mxu0 0.0
    %2225 = vmatpush.msra.mxu0 0.0
    %2226 = vmatpush.msra.mxu0 0.0
    %2227 = vmatpush.msra.mxu0 0.0
    %2228 = vmatpush.msra.mxu0 %v2113
    %2229 = vmatpush.msra.mxu0 %v2105
    %2230 = vmatpush.msra.mxu0 %v2097
    %2231 = vmatpush.msra.mxu0 %v2089
    %2232 = vmatpush.msra.mxu0 %v2081
    %2233 = vmatpush.msra.mxu0 %v2073
    %2234 = vmatmul.f32.gmra.mxu0 %v2120
    %v2235 = vpop.f32.mrf.mxu0
    %v2236 = vadd.f32 0.0, %v2235
    %2237 = vmatmul.f32.gmra.mxu0 %v2123
    %v2238 = vpop.f32.mrf.mxu0
    %v2239 = vadd.f32 0.0, %v2238
    %2240 = vmatmul.f32.gmra.mxu0 %v2126
    %v2241 = vpop.f32.mrf.mxu0
    %v2242 = vadd.f32 0.0, %v2241
    %2243 = vmatmul.f32.gmra.mxu0 %v2129
    %v2244 = vpop.f32.mrf.mxu0
    %v2245 = vadd.f32 0.0, %v2244
    %2246 = vdwg.mxu0
    %2247 = vmatpush.msra.mxu0 0.0
    %2248 = vmatpush.msra.mxu0 0.0
    %2249 = vmatpush.msra.mxu0 0.0
    %2250 = vmatpush.msra.mxu0 0.0
    %2251 = vmatpush.msra.mxu0 0.0
    %2252 = vmatpush.msra.mxu0 0.0
    %2253 = vmatpush.msra.mxu0 0.0
    %2254 = vmatpush.msra.mxu0 0.0
    %2255 = vmatpush.msra.mxu0 0.0
    %2256 = vmatpush.msra.mxu0 0.0
    %2257 = vmatpush.msra.mxu0 %v2114
    %2258 = vmatpush.msra.mxu0 %v2106
    %2259 = vmatpush.msra.mxu0 %v2098
    %2260 = vmatpush.msra.mxu0 %v2090
    %2261 = vmatpush.msra.mxu0 %v2082
    %2262 = vmatpush.msra.mxu0 %v2074
    %2263 = vmatmul.f32.gmra.mxu0 %v2120
    %v2264 = vpop.f32.mrf.mxu0
    %v2265 = vadd.f32 0.0, %v2264
    %2266 = vmatmul.f32.gmra.mxu0 %v2123
    %v2267 = vpop.f32.mrf.mxu0
    %v2268 = vadd.f32 0.0, %v2267
    %2269 = vmatmul.f32.gmra.mxu0 %v2126
    %v2270 = vpop.f32.mrf.mxu0
    %v2271 = vadd.f32 0.0, %v2270
    %2272 = vmatmul.f32.gmra.mxu0 %v2129
    %v2273 = vpop.f32.mrf.mxu0
    %v2274 = vadd.f32 0.0, %v2273
    %2275 = vdwg.mxu0
    %2276 = vmatpush.msra.mxu0 0.0
    %2277 = vmatpush.msra.mxu0 0.0
    %2278 = vmatpush.msra.mxu0 0.0
    %2279 = vmatpush.msra.mxu0 0.0
    %2280 = vmatpush.msra.mxu0 0.0
    %2281 = vmatpush.msra.mxu0 0.0
    %2282 = vmatpush.msra.mxu0 0.0
    %2283 = vmatpush.msra.mxu0 0.0
    %2284 = vmatpush.msra.mxu0 0.0
    %2285 = vmatpush.msra.mxu0 0.0
    %2286 = vmatpush.msra.mxu0 %v2115
    %2287 = vmatpush.msra.mxu0 %v2107
    %2288 = vmatpush.msra.mxu0 %v2099
    %2289 = vmatpush.msra.mxu0 %v2091
    %2290 = vmatpush.msra.mxu0 %v2083
    %2291 = vmatpush.msra.mxu0 %v2075
    %2292 = vmatmul.f32.gmra.mxu0 %v2120
    %v2293 = vpop.f32.mrf.mxu0
    %v2294 = vadd.f32 0.0, %v2293
    %2295 = vmatmul.f32.gmra.mxu0 %v2123
    %v2296 = vpop.f32.mrf.mxu0
    %v2297 = vadd.f32 0.0, %v2296
    %2298 = vmatmul.f32.gmra.mxu0 %v2126
    %v2299 = vpop.f32.mrf.mxu0
    %v2300 = vadd.f32 0.0, %v2299
    %2301 = vmatmul.f32.gmra.mxu0 %v2129
    %v2302 = vpop.f32.mrf.mxu0
    %v2303 = vadd.f32 0.0, %v2302
    %2304 = vdwg.mxu0
    %2305 = vmatpush.msra.mxu0 0.0
    %2306 = vmatpush.msra.mxu0 0.0
    %2307 = vmatpush.msra.mxu0 0.0
    %2308 = vmatpush.msra.mxu0 0.0
    %2309 = vmatpush.msra.mxu0 0.0
    %2310 = vmatpush.msra.mxu0 0.0
    %2311 = vmatpush.msra.mxu0 0.0
    %2312 = vmatpush.msra.mxu0 0.0
    %2313 = vmatpush.msra.mxu0 0.0
    %2314 = vmatpush.msra.mxu0 0.0
    %2315 = vmatpush.msra.mxu0 %v2116
    %2316 = vmatpush.msra.mxu0 %v2108
    %2317 = vmatpush.msra.mxu0 %v2100
    %2318 = vmatpush.msra.mxu0 %v2092
    %2319 = vmatpush.msra.mxu0 %v2084
    %2320 = vmatpush.msra.mxu0 %v2076
    %2321 = vmatmul.f32.gmra.mxu0 %v2120
    %v2322 = vpop.f32.mrf.mxu0
    %v2323 = vadd.f32 0.0, %v2322
    %2324 = vmatmul.f32.gmra.mxu0 %v2123
    %v2325 = vpop.f32.mrf.mxu0
    %v2326 = vadd.f32 0.0, %v2325
    %2327 = vmatmul.f32.gmra.mxu0 %v2126
    %v2328 = vpop.f32.mrf.mxu0
    %v2329 = vadd.f32 0.0, %v2328
    %2330 = vmatmul.f32.gmra.mxu0 %v2129
    %v2331 = vpop.f32.mrf.mxu0
    %v2332 = vadd.f32 0.0, %v2331
    %2333 = vdwg.mxu0
    %2334 = vmatpush.msra.mxu0 0.0
    %2335 = vmatpush.msra.mxu0 0.0
    %2336 = vmatpush.msra.mxu0 0.0
    %2337 = vmatpush.msra.mxu0 0.0
    %2338 = vmatpush.msra.mxu0 0.0
    %2339 = vmatpush.msra.mxu0 0.0
    %2340 = vmatpush.msra.mxu0 0.0
    %2341 = vmatpush.msra.mxu0 0.0
    %2342 = vmatpush.msra.mxu0 0.0
    %2343 = vmatpush.msra.mxu0 0.0
    %2344 = vmatpush.msra.mxu0 %v2117
    %2345 = vmatpush.msra.mxu0 %v2109
    %2346 = vmatpush.msra.mxu0 %v2101
    %2347 = vmatpush.msra.mxu0 %v2093
    %2348 = vmatpush.msra.mxu0 %v2085
    %2349 = vmatpush.msra.mxu0 %v2077
    %2350 = vmatmul.f32.gmra.mxu0 %v2120
    %v2351 = vpop.f32.mrf.mxu0
    %v2352 = vadd.f32 0.0, %v2351
    %2353 = vmatmul.f32.gmra.mxu0 %v2123
    %v2354 = vpop.f32.mrf.mxu0
    %v2355 = vadd.f32 0.0, %v2354
    %2356 = vmatmul.f32.gmra.mxu0 %v2126
    %v2357 = vpop.f32.mrf.mxu0
    %v2358 = vadd.f32 0.0, %v2357
    %2359 = vmatmul.f32.gmra.mxu0 %v2129
    %v2360 = vpop.f32.mrf.mxu0
    %v2361 = vadd.f32 0.0, %v2360
    %2362 = vdwg.mxu0
    %v2363 = vmul.f32 %v2149, %v2149
    %v2364 = vmul.f32 %v2178, %v2178
    %v2365 = vmul.f32 %v2152, %v2152
    %v2366 = vmul.f32 %v2181, %v2181
    %v2367 = vmul.f32 %v2155, %v2155
    %v2368 = vmul.f32 %v2184, %v2184
    %v2369 = vmul.f32 %v2158, %v2158
    %v2370 = vmul.f32 %v2187, %v2187
    %v2371 = vmul.f32 %v2207, %v2207
    %v2372 = vmul.f32 %v2210, %v2210
    %v2373 = vmul.f32 %v2213, %v2213
    %v2374 = vmul.f32 %v2216, %v2216
    %2383 = vrot.lane.b32.xlu0 %v2178, 64
    %v2384 = vpop.permute.xlu0 %2383
    %2385 = vrot.lane.b32.xlu0 %v2207, 64
    %v2386 = vpop.permute.xlu0 %2385
    %2387 = vrot.lane.b32.xlu0 %v2181, 64
    %v2388 = vpop.permute.xlu0 %2387
    %2389 = vrot.lane.b32.xlu0 %v2210, 64
    %v2390 = vpop.permute.xlu0 %2389
    %2391 = vrot.lane.b32.xlu0 %v2184, 64
    %v2392 = vpop.permute.xlu0 %2391
    %2393 = vrot.lane.b32.xlu0 %v2213, 64
    %v2394 = vpop.permute.xlu0 %2393
    %2395 = vrot.lane.b32.xlu0 %v2187, 64
    %v2396 = vpop.permute.xlu0 %2395
    %2397 = vrot.lane.b32.xlu0 %v2216, 64
    %v2398 = vpop.permute.xlu0 %2397
    %vm2399 = vcmask 523264
    %v2400 = vsel %vm2399, %v2384, %v2386
    %v2401 = vsel %vm2399, %v2388, %v2390
    %v2402 = vsel %vm2399, %v2392, %v2394
    %v2403 = vsel %vm2399, %v2396, %v2398
    %v2412 = vmul.f32 %v2149, %v2400
    %v2413 = vmul.f32 %v2178, %v2386
    %v2414 = vmul.f32 %v2152, %v2401
    %v2415 = vmul.f32 %v2181, %v2390
    %v2416 = vmul.f32 %v2155, %v2402
    %v2417 = vmul.f32 %v2184, %v2394
    %v2418 = vmul.f32 %v2158, %v2403
    %v2419 = vmul.f32 %v2187, %v2398
    %v2420 = vsub.f32 %v2236, %v2363
    %v2421 = vsub.f32 %v2265, %v2364
    %v2422 = vsub.f32 %v2239, %v2365
    %v2423 = vsub.f32 %v2268, %v2366
    %v2424 = vsub.f32 %v2242, %v2367
    %v2425 = vsub.f32 %v2271, %v2368
    %v2426 = vsub.f32 %v2245, %v2369
    %v2427 = vsub.f32 %v2274, %v2370
    %v2428 = vsub.f32 %v2294, %v2371
    %v2429 = vsub.f32 %v2297, %v2372
    %v2430 = vsub.f32 %v2300, %v2373
    %v2431 = vsub.f32 %v2303, %v2374
    %v2432 = vsub.f32 %v2323, %v2412
    %v2433 = vsub.f32 %v2352, %v2413
    %v2434 = vsub.f32 %v2326, %v2414
    %v2435 = vsub.f32 %v2355, %v2415
    %v2436 = vsub.f32 %v2329, %v2416
    %v2437 = vsub.f32 %v2358, %v2417
    %v2438 = vsub.f32 %v2332, %v2418
    %v2439 = vsub.f32 %v2361, %v2419
    %v2440 = vmul.f32 %v2412, 2.0
    %v2441 = vmul.f32 %v2413, 2.0
    %v2442 = vmul.f32 %v2414, 2.0
    %v2443 = vmul.f32 %v2415, 2.0
    %v2444 = vmul.f32 %v2416, 2.0
    %v2445 = vmul.f32 %v2417, 2.0
    %v2446 = vmul.f32 %v2418, 2.0
    %v2447 = vmul.f32 %v2419, 2.0
    %v2448 = vadd.f32 %v2440, 0.0001
    %v2449 = vadd.f32 %v2441, 0.0001
    %v2450 = vadd.f32 %v2442, 0.0001
    %v2451 = vadd.f32 %v2443, 0.0001
    %v2452 = vadd.f32 %v2444, 0.0001
    %v2453 = vadd.f32 %v2445, 0.0001
    %v2454 = vadd.f32 %v2446, 0.0001
    %v2455 = vadd.f32 %v2447, 0.0001
    %v2456 = vmul.f32 %v2432, 2.0
    %v2457 = vmul.f32 %v2433, 2.0
    %v2458 = vmul.f32 %v2434, 2.0
    %v2459 = vmul.f32 %v2435, 2.0
    %v2460 = vmul.f32 %v2436, 2.0
    %v2461 = vmul.f32 %v2437, 2.0
    %v2462 = vmul.f32 %v2438, 2.0
    %v2463 = vmul.f32 %v2439, 2.0
    %v2464 = vadd.f32 %v2456, 0.0009
    %v2465 = vadd.f32 %v2457, 0.0009
    %v2466 = vadd.f32 %v2458, 0.0009
    %v2467 = vadd.f32 %v2459, 0.0009
    %v2468 = vadd.f32 %v2460, 0.0009
    %v2469 = vadd.f32 %v2461, 0.0009
    %v2470 = vadd.f32 %v2462, 0.0009
    %v2471 = vadd.f32 %v2463, 0.0009
    %v2472 = vmul.f32 %v2448, %v2464
    %v2473 = vmul.f32 %v2449, %v2465
    %v2474 = vmul.f32 %v2450, %v2466
    %v2475 = vmul.f32 %v2451, %v2467
    %v2476 = vmul.f32 %v2452, %v2468
    %v2477 = vmul.f32 %v2453, %v2469
    %v2478 = vmul.f32 %v2454, %v2470
    %v2479 = vmul.f32 %v2455, %v2471
    %2488 = vrot.lane.b32.xlu0 %v2364, 64
    %v2489 = vpop.permute.xlu0 %2488
    %2490 = vrot.lane.b32.xlu0 %v2371, 64
    %v2491 = vpop.permute.xlu0 %2490
    %2492 = vrot.lane.b32.xlu0 %v2366, 64
    %v2493 = vpop.permute.xlu0 %2492
    %2494 = vrot.lane.b32.xlu0 %v2372, 64
    %v2495 = vpop.permute.xlu0 %2494
    %2496 = vrot.lane.b32.xlu0 %v2368, 64
    %v2497 = vpop.permute.xlu0 %2496
    %2498 = vrot.lane.b32.xlu0 %v2373, 64
    %v2499 = vpop.permute.xlu0 %2498
    %2500 = vrot.lane.b32.xlu0 %v2370, 64
    %v2501 = vpop.permute.xlu0 %2500
    %2502 = vrot.lane.b32.xlu0 %v2374, 64
    %v2503 = vpop.permute.xlu0 %2502
    %v2504 = vsel %vm2399, %v2489, %v2491
    %v2505 = vsel %vm2399, %v2493, %v2495
    %v2506 = vsel %vm2399, %v2497, %v2499
    %v2507 = vsel %vm2399, %v2501, %v2503
    %v2516 = vadd.f32 %v2363, %v2504
    %v2517 = vadd.f32 %v2364, %v2491
    %v2518 = vadd.f32 %v2365, %v2505
    %v2519 = vadd.f32 %v2366, %v2495
    %v2520 = vadd.f32 %v2367, %v2506
    %v2521 = vadd.f32 %v2368, %v2499
    %v2522 = vadd.f32 %v2369, %v2507
    %v2523 = vadd.f32 %v2370, %v2503
    %v2524 = vadd.f32 %v2516, 0.0001
    %v2525 = vadd.f32 %v2517, 0.0001
    %v2526 = vadd.f32 %v2518, 0.0001
    %v2527 = vadd.f32 %v2519, 0.0001
    %v2528 = vadd.f32 %v2520, 0.0001
    %v2529 = vadd.f32 %v2521, 0.0001
    %v2530 = vadd.f32 %v2522, 0.0001
    %v2531 = vadd.f32 %v2523, 0.0001
    %2540 = vrot.lane.b32.xlu0 %v2421, 64
    %v2541 = vpop.permute.xlu0 %2540
    %2542 = vrot.lane.b32.xlu0 %v2428, 64
    %v2543 = vpop.permute.xlu0 %2542
    %2544 = vrot.lane.b32.xlu0 %v2423, 64
    %v2545 = vpop.permute.xlu0 %2544
    %2546 = vrot.lane.b32.xlu0 %v2429, 64
    %v2547 = vpop.permute.xlu0 %2546
    %2548 = vrot.lane.b32.xlu0 %v2425, 64
    %v2549 = vpop.permute.xlu0 %2548
    %2550 = vrot.lane.b32.xlu0 %v2430, 64
    %v2551 = vpop.permute.xlu0 %2550
    %2552 = vrot.lane.b32.xlu0 %v2427, 64
    %v2553 = vpop.permute.xlu0 %2552
    %2554 = vrot.lane.b32.xlu0 %v2431, 64
    %v2555 = vpop.permute.xlu0 %2554
    %v2556 = vsel %vm2399, %v2541, %v2543
    %v2557 = vsel %vm2399, %v2545, %v2547
    %v2558 = vsel %vm2399, %v2549, %v2551
    %v2559 = vsel %vm2399, %v2553, %v2555
    %v2568 = vadd.f32 %v2420, %v2556
    %v2569 = vadd.f32 %v2421, %v2543
    %v2570 = vadd.f32 %v2422, %v2557
    %v2571 = vadd.f32 %v2423, %v2547
    %v2572 = vadd.f32 %v2424, %v2558
    %v2573 = vadd.f32 %v2425, %v2551
    %v2574 = vadd.f32 %v2426, %v2559
    %v2575 = vadd.f32 %v2427, %v2555
    %v2576 = vadd.f32 %v2568, 0.0009
    %v2577 = vadd.f32 %v2569, 0.0009
    %v2578 = vadd.f32 %v2570, 0.0009
    %v2579 = vadd.f32 %v2571, 0.0009
    %v2580 = vadd.f32 %v2572, 0.0009
    %v2581 = vadd.f32 %v2573, 0.0009
    %v2582 = vadd.f32 %v2574, 0.0009
    %v2583 = vadd.f32 %v2575, 0.0009
    %v2584 = vmul.f32 %v2524, %v2576
    %v2585 = vmul.f32 %v2525, %v2577
    %v2586 = vmul.f32 %v2526, %v2578
    %v2587 = vmul.f32 %v2527, %v2579
    %v2588 = vmul.f32 %v2528, %v2580
    %v2589 = vmul.f32 %v2529, %v2581
    %v2590 = vmul.f32 %v2530, %v2582
    %v2591 = vmul.f32 %v2531, %v2583
    %v2592 = vrcp.pop %v2584
    %v2593 = vmul.f32 %v2584, %v2592
    %v2594 = vsub.f32 1.0, %v2593
    %v2595 = vmul.f32 %v2592, %v2594
    %v2596 = vadd.f32 %v2592, %v2595
    %vm2597 = vweird.f32 %v2584
    %vm2598 = vweird.f32 %v2592
    %vm2599 = vmor %vm2597, %vm2598
    %v2600 = vsel %vm2599, %v2592, %v2596
    %v2601 = vand.u32 2147483647, %v2584
    %vm2602 = vcmp.eq.f32.partialorder %v2601, 8.507059e+37
    %v2603 = vand.u32 %v2584, 2147483648
    %v2604 = vor.u32 1.1754944e-38, %v2603
    %v2605 = vsel %vm2602, %v2604, %v2600
    %v2606 = vmul.f32 %v2472, %v2605
    %v2607 = vrcp.pop %v2585
    %v2608 = vmul.f32 %v2585, %v2607
    %v2609 = vsub.f32 1.0, %v2608
    %v2610 = vmul.f32 %v2607, %v2609
    %v2611 = vadd.f32 %v2607, %v2610
    %vm2612 = vweird.f32 %v2585
    %vm2613 = vweird.f32 %v2607
    %vm2614 = vmor %vm2612, %vm2613
    %v2615 = vsel %vm2614, %v2607, %v2611
    %v2616 = vand.u32 2147483647, %v2585
    %vm2617 = vcmp.eq.f32.partialorder %v2616, 8.507059e+37
    %v2618 = vand.u32 %v2585, 2147483648
    %v2619 = vor.u32 1.1754944e-38, %v2618
    %v2620 = vsel %vm2617, %v2619, %v2615
    %v2621 = vmul.f32 %v2473, %v2620
    %v2622 = vrcp.pop %v2586
    %v2623 = vmul.f32 %v2586, %v2622
    %v2624 = vsub.f32 1.0, %v2623
    %v2625 = vmul.f32 %v2622, %v2624
    %v2626 = vadd.f32 %v2622, %v2625
    %vm2627 = vweird.f32 %v2586
    %vm2628 = vweird.f32 %v2622
    %vm2629 = vmor %vm2627, %vm2628
    %v2630 = vsel %vm2629, %v2622, %v2626
    %v2631 = vand.u32 2147483647, %v2586
    %vm2632 = vcmp.eq.f32.partialorder %v2631, 8.507059e+37
    %v2633 = vand.u32 %v2586, 2147483648
    %v2634 = vor.u32 1.1754944e-38, %v2633
    %v2635 = vsel %vm2632, %v2634, %v2630
    %v2636 = vmul.f32 %v2474, %v2635
    %v2637 = vrcp.pop %v2587
    %v2638 = vmul.f32 %v2587, %v2637
    %v2639 = vsub.f32 1.0, %v2638
    %v2640 = vmul.f32 %v2637, %v2639
    %v2641 = vadd.f32 %v2637, %v2640
    %vm2642 = vweird.f32 %v2587
    %vm2643 = vweird.f32 %v2637
    %vm2644 = vmor %vm2642, %vm2643
    %v2645 = vsel %vm2644, %v2637, %v2641
    %v2646 = vand.u32 2147483647, %v2587
    %vm2647 = vcmp.eq.f32.partialorder %v2646, 8.507059e+37
    %v2648 = vand.u32 %v2587, 2147483648
    %v2649 = vor.u32 1.1754944e-38, %v2648
    %v2650 = vsel %vm2647, %v2649, %v2645
    %v2651 = vmul.f32 %v2475, %v2650
    %v2652 = vrcp.pop %v2588
    %v2653 = vmul.f32 %v2588, %v2652
    %v2654 = vsub.f32 1.0, %v2653
    %v2655 = vmul.f32 %v2652, %v2654
    %v2656 = vadd.f32 %v2652, %v2655
    %vm2657 = vweird.f32 %v2588
    %vm2658 = vweird.f32 %v2652
    %vm2659 = vmor %vm2657, %vm2658
    %v2660 = vsel %vm2659, %v2652, %v2656
    %v2661 = vand.u32 2147483647, %v2588
    %vm2662 = vcmp.eq.f32.partialorder %v2661, 8.507059e+37
    %v2663 = vand.u32 %v2588, 2147483648
    %v2664 = vor.u32 1.1754944e-38, %v2663
    %v2665 = vsel %vm2662, %v2664, %v2660
    %v2666 = vmul.f32 %v2476, %v2665
    %v2667 = vrcp.pop %v2589
    %v2668 = vmul.f32 %v2589, %v2667
    %v2669 = vsub.f32 1.0, %v2668
    %v2670 = vmul.f32 %v2667, %v2669
    %v2671 = vadd.f32 %v2667, %v2670
    %vm2672 = vweird.f32 %v2589
    %vm2673 = vweird.f32 %v2667
    %vm2674 = vmor %vm2672, %vm2673
    %v2675 = vsel %vm2674, %v2667, %v2671
    %v2676 = vand.u32 2147483647, %v2589
    %vm2677 = vcmp.eq.f32.partialorder %v2676, 8.507059e+37
    %v2678 = vand.u32 %v2589, 2147483648
    %v2679 = vor.u32 1.1754944e-38, %v2678
    %v2680 = vsel %vm2677, %v2679, %v2675
    %v2681 = vmul.f32 %v2477, %v2680
    %v2682 = vrcp.pop %v2590
    %v2683 = vmul.f32 %v2590, %v2682
    %v2684 = vsub.f32 1.0, %v2683
    %v2685 = vmul.f32 %v2682, %v2684
    %v2686 = vadd.f32 %v2682, %v2685
    %vm2687 = vweird.f32 %v2590
    %vm2688 = vweird.f32 %v2682
    %vm2689 = vmor %vm2687, %vm2688
    %v2690 = vsel %vm2689, %v2682, %v2686
    %v2691 = vand.u32 2147483647, %v2590
    %vm2692 = vcmp.eq.f32.partialorder %v2691, 8.507059e+37
    %v2693 = vand.u32 %v2590, 2147483648
    %v2694 = vor.u32 1.1754944e-38, %v2693
    %v2695 = vsel %vm2692, %v2694, %v2690
    %v2696 = vmul.f32 %v2478, %v2695
    %v2697 = vrcp.pop %v2591
    %v2698 = vmul.f32 %v2591, %v2697
    %v2699 = vsub.f32 1.0, %v2698
    %v2700 = vmul.f32 %v2697, %v2699
    %v2701 = vadd.f32 %v2697, %v2700
    %vm2702 = vweird.f32 %v2591
    %vm2703 = vweird.f32 %v2697
    %vm2704 = vmor %vm2702, %vm2703
    %v2705 = vsel %vm2704, %v2697, %v2701
    %v2706 = vand.u32 2147483647, %v2591
    %vm2707 = vcmp.eq.f32.partialorder %v2706, 8.507059e+37
    %v2708 = vand.u32 %v2591, 2147483648
    %v2709 = vor.u32 1.1754944e-38, %v2708
    %v2710 = vsel %vm2707, %v2709, %v2705
    %v2711 = vmul.f32 %v2479, %v2710
    %v2712 = vsel %vm2399, %v2621, 0.0
    %v2713 = vadd.f32 %v2606, %v2712
    %v2714 = vadd.f32 %v2713, %v2636
    %v2715 = vsel %vm2399, %v2651, 0.0
    %v2716 = vadd.f32 %v2714, %v2715
    %v2717 = vadd.f32 %v2716, %v2666
    %v2718 = vsel %vm2399, %v2681, 0.0
    %v2719 = vadd.f32 %v2717, %v2718
    %v2720 = vadd.f32 %v2719, %v2696
    %v2721 = vsel %vm2399, %v2711, 0.0
    %v2722 = vadd.f32 %v2720, %v2721
    %2723 = vadd.xlane.f32.xlu0 %v2722
    %v2724 = vpop.xlane.xlu0 %2723
    %v2725 = vrot.slane %v2724, 4
    %v2726 = vadd.f32 %v2724, %v2725
    %v2727 = vrot.slane %v2726, 2
    %v2728 = vadd.f32 %v2726, %v2727
    %v2729 = vrot.slane %v2728, 1
    %v2730 = vadd.f32 %v2728, %v2729
    %s2731 = vtos %v2730
    %s2732 = smul.f32 %s2731, 0.00016276042
    %s2733 = smul.f32 %s2732, 0.0448
    %v2734 = vld [vmem:[%s4] sm:$0xff]
    %v2735 = vld [vmem:[%s4 + $0x8] sm:$0xff]
    %v2736 = vld [vmem:[%s4 + $0x10] sm:$0xff]
    %v2737 = vld [vmem:[%s4 + $0x18] sm:$0xff]
    %v2738 = vld [vmem:[%s4 + $0x20] sm:$0xff]
    %v2739 = vld [vmem:[%s4 + $0x28] sm:$0xff]
    %v2740 = vld [vmem:[%s4 + $0x30] sm:$0xff]
    %v2741 = vld [vmem:[%s4 + $0x38] sm:$0xff]
    %v2742 = vld [vmem:[%s4 + $0x40] sm:$0xff]
    %v2743 = vld [vmem:[%s4 + $0x48] sm:$0xff]
    %v2744 = vld [vmem:[%s4 + $0x50] sm:$0xff]
    %v2745 = vld [vmem:[%s4 + $0x58] sm:$0xff]
    %v2746 = vld [vmem:[%s4 + $0x60] sm:$0xff]
    %v2747 = vld [vmem:[%s4 + $0x68] sm:$0xff]
    %v2748 = vld [vmem:[%s4 + $0x70] sm:$0xff]
    %v2749 = vld [vmem:[%s4 + $0x78] sm:$0xff]
    %v2750 = vld [vmem:[%s4 + $0x80] sm:$0xff]
    %v2751 = vld [vmem:[%s4 + $0x88] sm:$0xff]
    %v2752 = vld [vmem:[%s4 + $0x90] sm:$0xff]
    %v2753 = vld [vmem:[%s4 + $0x98] sm:$0xff]
    %v2754 = vld [vmem:[%s4 + $0xa0] sm:$0xff]
    %v2755 = vld [vmem:[%s4 + $0xa8] sm:$0xff]
    %v2756 = vld [vmem:[%s4 + $0xb0] sm:$0xff]
    %v2757 = vld [vmem:[%s4 + $0xb8] sm:$0xff]
    %v2758 = vld [vmem:[%s5] sm:$0xff]
    %v2759 = vld [vmem:[%s5 + $0x8] sm:$0xff]
    %v2760 = vld [vmem:[%s5 + $0x10] sm:$0xff]
    %v2761 = vld [vmem:[%s5 + $0x18] sm:$0xff]
    %v2762 = vld [vmem:[%s5 + $0x20] sm:$0xff]
    %v2763 = vld [vmem:[%s5 + $0x28] sm:$0xff]
    %v2764 = vld [vmem:[%s5 + $0x30] sm:$0xff]
    %v2765 = vld [vmem:[%s5 + $0x38] sm:$0xff]
    %v2766 = vld [vmem:[%s5 + $0x40] sm:$0xff]
    %v2767 = vld [vmem:[%s5 + $0x48] sm:$0xff]
    %v2768 = vld [vmem:[%s5 + $0x50] sm:$0xff]
    %v2769 = vld [vmem:[%s5 + $0x58] sm:$0xff]
    %v2770 = vld [vmem:[%s5 + $0x60] sm:$0xff]
    %v2771 = vld [vmem:[%s5 + $0x68] sm:$0xff]
    %v2772 = vld [vmem:[%s5 + $0x70] sm:$0xff]
    %v2773 = vld [vmem:[%s5 + $0x78] sm:$0xff]
    %v2774 = vld [vmem:[%s5 + $0x80] sm:$0xff]
    %v2775 = vld [vmem:[%s5 + $0x88] sm:$0xff]
    %v2776 = vld [vmem:[%s5 + $0x90] sm:$0xff]
    %v2777 = vld [vmem:[%s5 + $0x98] sm:$0xff]
    %v2778 = vld [vmem:[%s5 + $0xa0] sm:$0xff]
    %v2779 = vld [vmem:[%s5 + $0xa8] sm:$0xff]
    %v2780 = vld [vmem:[%s5 + $0xb0] sm:$0xff]
    %v2781 = vld [vmem:[%s5 + $0xb8] sm:$0xff]
    %v2782 = vmul.f32 %v2734, %v2734
    %v2783 = vmul.f32 %v2735, %v2735
    %v2784 = vmul.f32 %v2736, %v2736
    %v2785 = vmul.f32 %v2737, %v2737
    %v2786 = vmul.f32 %v2738, %v2738
    %v2787 = vmul.f32 %v2739, %v2739
    %v2788 = vmul.f32 %v2740, %v2740
    %v2789 = vmul.f32 %v2741, %v2741
    %v2790 = vmul.f32 %v2742, %v2742
    %v2791 = vmul.f32 %v2743, %v2743
    %v2792 = vmul.f32 %v2744, %v2744
    %v2793 = vmul.f32 %v2745, %v2745
    %v2794 = vmul.f32 %v2746, %v2746
    %v2795 = vmul.f32 %v2747, %v2747
    %v2796 = vmul.f32 %v2748, %v2748
    %v2797 = vmul.f32 %v2749, %v2749
    %v2798 = vmul.f32 %v2750, %v2750
    %v2799 = vmul.f32 %v2751, %v2751
    %v2800 = vmul.f32 %v2752, %v2752
    %v2801 = vmul.f32 %v2753, %v2753
    %v2802 = vmul.f32 %v2754, %v2754
    %v2803 = vmul.f32 %v2755, %v2755
    %v2804 = vmul.f32 %v2756, %v2756
    %v2805 = vmul.f32 %v2757, %v2757
    %v2806 = vmul.f32 %v2758, %v2758
    %v2807 = vmul.f32 %v2759, %v2759
    %v2808 = vmul.f32 %v2760, %v2760
    %v2809 = vmul.f32 %v2761, %v2761
    %v2810 = vmul.f32 %v2762, %v2762
    %v2811 = vmul.f32 %v2763, %v2763
    %v2812 = vmul.f32 %v2764, %v2764
    %v2813 = vmul.f32 %v2765, %v2765
    %v2814 = vmul.f32 %v2766, %v2766
    %v2815 = vmul.f32 %v2767, %v2767
    %v2816 = vmul.f32 %v2768, %v2768
    %v2817 = vmul.f32 %v2769, %v2769
    %v2818 = vmul.f32 %v2770, %v2770
    %v2819 = vmul.f32 %v2771, %v2771
    %v2820 = vmul.f32 %v2772, %v2772
    %v2821 = vmul.f32 %v2773, %v2773
    %v2822 = vmul.f32 %v2774, %v2774
    %v2823 = vmul.f32 %v2775, %v2775
    %v2824 = vmul.f32 %v2776, %v2776
    %v2825 = vmul.f32 %v2777, %v2777
    %v2826 = vmul.f32 %v2778, %v2778
    %v2827 = vmul.f32 %v2779, %v2779
    %v2828 = vmul.f32 %v2780, %v2780
    %v2829 = vmul.f32 %v2781, %v2781
    %v2830 = vmul.f32 %v2734, %v2758
    %v2831 = vmul.f32 %v2735, %v2759
    %v2832 = vmul.f32 %v2736, %v2760
    %v2833 = vmul.f32 %v2737, %v2761
    %v2834 = vmul.f32 %v2738, %v2762
    %v2835 = vmul.f32 %v2739, %v2763
    %v2836 = vmul.f32 %v2740, %v2764
    %v2837 = vmul.f32 %v2741, %v2765
    %v2838 = vmul.f32 %v2742, %v2766
    %v2839 = vmul.f32 %v2743, %v2767
    %v2840 = vmul.f32 %v2744, %v2768
    %v2841 = vmul.f32 %v2745, %v2769
    %v2842 = vmul.f32 %v2746, %v2770
    %v2843 = vmul.f32 %v2747, %v2771
    %v2844 = vmul.f32 %v2748, %v2772
    %v2845 = vmul.f32 %v2749, %v2773
    %v2846 = vmul.f32 %v2750, %v2774
    %v2847 = vmul.f32 %v2751, %v2775
    %v2848 = vmul.f32 %v2752, %v2776
    %v2849 = vmul.f32 %v2753, %v2777
    %v2850 = vmul.f32 %v2754, %v2778
    %v2851 = vmul.f32 %v2755, %v2779
    %v2852 = vmul.f32 %v2756, %v2780
    %v2853 = vmul.f32 %v2757, %v2781
    %v2854 = vld [vmem:[%s6] sm:$0xff]
    %v2855 = vld [vmem:[%s6 + $0x8] sm:$0xff]
    %v2856 = vld [vmem:[%s6 + $0x10] sm:$0xff]
    %v2857 = vld [vmem:[%s6 + $0x18] sm:$0x3]
    %vm2858 = vcmask 211968
    %v2860 = vsel %vm2858, %v2734, 0
    %v2863 = vsel %vm2858, %v2735, 0
    %v2866 = vsel %vm2858, %v2736, 0
    %v2869 = vsel %vm2858, %v2737, 0
    %v2872 = vsel %vm2858, %v2738, 0
    %v2875 = vsel %vm2858, %v2739, 0
    %v2878 = vsel %vm2858, %v2740, 0
    %v2881 = vsel %vm2858, %v2741, 0
    %v2884 = vsel %vm2858, %v2742, 0
    %v2887 = vsel %vm2858, %v2743, 0
    %v2890 = vsel %vm2858, %v2744, 0
    %v2893 = vsel %vm2858, %v2745, 0
    %v2896 = vsel %vm2858, %v2746, 0
    %v2899 = vsel %vm2858, %v2747, 0
    %v2902 = vsel %vm2858, %v2748, 0
    %v2905 = vsel %vm2858, %v2749, 0
    %v2908 = vsel %vm2858, %v2750, 0
    %v2911 = vsel %vm2858, %v2751, 0
    %v2914 = vsel %vm2858, %v2752, 0
    %v2917 = vsel %vm2858, %v2753, 0
    %v2920 = vsel %vm2858, %v2754, 0
    %v2923 = vsel %vm2858, %v2755, 0
    %v2926 = vsel %vm2858, %v2756, 0
    %v2929 = vsel %vm2858, %v2757, 0
    %v2932 = vsel %vm2858, %v2758, 0
    %v2935 = vsel %vm2858, %v2759, 0
    %v2938 = vsel %vm2858, %v2760, 0
    %v2941 = vsel %vm2858, %v2761, 0
    %v2944 = vsel %vm2858, %v2762, 0
    %v2947 = vsel %vm2858, %v2763, 0
    %v2950 = vsel %vm2858, %v2764, 0
    %v2953 = vsel %vm2858, %v2765, 0
    %v2956 = vsel %vm2858, %v2766, 0
    %v2959 = vsel %vm2858, %v2767, 0
    %v2962 = vsel %vm2858, %v2768, 0
    %v2965 = vsel %vm2858, %v2769, 0
    %v2968 = vsel %vm2858, %v2770, 0
    %v2971 = vsel %vm2858, %v2771, 0
    %v2974 = vsel %vm2858, %v2772, 0
    %v2977 = vsel %vm2858, %v2773, 0
    %v2980 = vsel %vm2858, %v2774, 0
    %v2983 = vsel %vm2858, %v2775, 0
    %v2986 = vsel %vm2858, %v2776, 0
    %v2989 = vsel %vm2858, %v2777, 0
    %v2992 = vsel %vm2858, %v2778, 0
    %v2995 = vsel %vm2858, %v2779, 0
    %v2998 = vsel %vm2858, %v2780, 0
    %v3001 = vsel %vm2858, %v2781, 0
    %v3004 = vsel %vm2858, %v2782, 0
    %v3007 = vsel %vm2858, %v2783, 0
    %v3010 = vsel %vm2858, %v2784, 0
    %v3013 = vsel %vm2858, %v2785, 0
    %v3016 = vsel %vm2858, %v2786, 0
    %v3019 = vsel %vm2858, %v2787, 0
    %v3022 = vsel %vm2858, %v2788, 0
    %v3025 = vsel %vm2858, %v2789, 0
    %v3028 = vsel %vm2858, %v2790, 0
    %v3031 = vsel %vm2858, %v2791, 0
    %v3034 = vsel %vm2858, %v2792, 0
    %v3037 = vsel %vm2858, %v2793, 0
    %v3040 = vsel %vm2858, %v2794, 0
    %v3043 = vsel %vm2858, %v2795, 0
    %v3046 = vsel %vm2858, %v2796, 0
    %v3049 = vsel %vm2858, %v2797, 0
    %v3052 = vsel %vm2858, %v2798, 0
    %v3055 = vsel %vm2858, %v2799, 0
    %v3058 = vsel %vm2858, %v2800, 0
    %v3061 = vsel %vm2858, %v2801, 0
    %v3064 = vsel %vm2858, %v2802, 0
    %v3067 = vsel %vm2858, %v2803, 0
    %v3070 = vsel %vm2858, %v2804, 0
    %v3073 = vsel %vm2858, %v2805, 0
    %v3076 = vsel %vm2858, %v2806, 0
    %v3079 = vsel %vm2858, %v2807, 0
    %v3082 = vsel %vm2858, %v2808, 0
    %v3085 = vsel %vm2858, %v2809, 0
    %v3088 = vsel %vm2858, %v2810, 0
    %v3091 = vsel %vm2858, %v2811, 0
    %v3094 = vsel %vm2858, %v2812, 0
    %v3097 = vsel %vm2858, %v2813, 0
    %v3100 = vsel %vm2858, %v2814, 0
    %v3103 = vsel %vm2858, %v2815, 0
    %v3106 = vsel %vm2858, %v2816, 0
    %v3109 = vsel %vm2858, %v2817, 0
    %v3112 = vsel %vm2858, %v2818, 0
    %v3115 = vsel %vm2858, %v2819, 0
    %v3118 = vsel %vm2858, %v2820, 0
    %v3121 = vsel %vm2858, %v2821, 0
    %v3124 = vsel %vm2858, %v2822, 0
    %v3127 = vsel %vm2858, %v2823, 0
    %v3130 = vsel %vm2858, %v2824, 0
    %v3133 = vsel %vm2858, %v2825, 0
    %v3136 = vsel %vm2858, %v2826, 0
    %v3139 = vsel %vm2858, %v2827, 0
    %v3142 = vsel %vm2858, %v2828, 0
    %v3145 = vsel %vm2858, %v2829, 0
    %v3148 = vsel %vm2858, %v2830, 0
    %v3151 = vsel %vm2858, %v2831, 0
    %v3154 = vsel %vm2858, %v2832, 0
    %v3157 = vsel %vm2858, %v2833, 0
    %v3160 = vsel %vm2858, %v2834, 0
    %v3163 = vsel %vm2858, %v2835, 0
    %v3166 = vsel %vm2858, %v2836, 0
    %v3169 = vsel %vm2858, %v2837, 0
    %v3172 = vsel %vm2858, %v2838, 0
    %v3175 = vsel %vm2858, %v2839, 0
    %v3178 = vsel %vm2858, %v2840, 0
    %v3181 = vsel %vm2858, %v2841, 0
    %v3184 = vsel %vm2858, %v2842, 0
    %v3187 = vsel %vm2858, %v2843, 0
    %v3190 = vsel %vm2858, %v2844, 0
    %v3193 = vsel %vm2858, %v2845, 0
    %v3196 = vsel %vm2858, %v2846, 0
    %v3199 = vsel %vm2858, %v2847, 0
    %v3202 = vsel %vm2858, %v2848, 0
    %v3205 = vsel %vm2858, %v2849, 0
    %v3208 = vsel %vm2858, %v2850, 0
    %v3211 = vsel %vm2858, %v2851, 0
    %v3214 = vsel %vm2858, %v2852, 0
    %v3217 = vsel %vm2858, %v2853, 0
    %v3220 = vsel %vm793, %v2857, 0
    %3222 = vmatpush.msra.mxu0 0.0
    %3223 = vmatpush.msra.mxu0 0.0
    %3224 = vmatpush.msra.mxu0 0.0
    %3225 = vmatpush.msra.mxu0 0.0
    %3226 = vmatpush.msra.mxu0 0.0
    %3227 = vmatpush.msra.mxu0 0.0
    %3228 = vmatpush.msra.mxu0 0.0
    %3229 = vmatpush.msra.mxu0 0.0
    %3230 = vmatpush.msra.mxu0 0.0
    %3231 = vmatpush.msra.mxu0 0.0
    %3232 = vmatpush.msra.mxu0 0.0
    %3233 = vmatpush.msra.mxu0 0.0
    %3234 = vmatpush.msra.mxu0 %v3220
    %3235 = vmatpush.msra.mxu0 %v2856
    %3236 = vmatpush.msra.mxu0 %v2855
    %3237 = vmatpush.msra.mxu0 %v2854
    %3238 = vmatmul.f32.gmra.mxu0 %v2860
    %v3239 = vpop.f32.mrf.mxu0
    %v3240 = vadd.f32 0.0, %v3239
    %3241 = vmatmul.f32.gmra.mxu0 %v2863
    %v3242 = vpop.f32.mrf.mxu0
    %v3243 = vadd.f32 0.0, %v3242
    %3244 = vmatmul.f32.gmra.mxu0 %v2866
    %v3245 = vpop.f32.mrf.mxu0
    %v3246 = vadd.f32 0.0, %v3245
    %3247 = vmatmul.f32.gmra.mxu0 %v2869
    %v3248 = vpop.f32.mrf.mxu0
    %v3249 = vadd.f32 0.0, %v3248
    %3250 = vmatmul.f32.gmra.mxu0 %v2872
    %v3251 = vpop.f32.mrf.mxu0
    %v3252 = vadd.f32 0.0, %v3251
    %3253 = vmatmul.f32.gmra.mxu0 %v2875
    %v3254 = vpop.f32.mrf.mxu0
    %v3255 = vadd.f32 0.0, %v3254
    %3256 = vmatmul.f32.gmra.mxu0 %v2878
    %v3257 = vpop.f32.mrf.mxu0
    %v3258 = vadd.f32 0.0, %v3257
    %3259 = vmatmul.f32.gmra.mxu0 %v2881
    %v3260 = vpop.f32.mrf.mxu0
    %v3261 = vadd.f32 0.0, %v3260
    %3262 = vmatmul.f32.gmra.mxu0 %v2884
    %v3263 = vpop.f32.mrf.mxu0
    %v3264 = vadd.f32 0.0, %v3263
    %3265 = vmatmul.f32.gmra.mxu0 %v2887
    %v3266 = vpop.f32.mrf.mxu0
    %v3267 = vadd.f32 0.0, %v3266
    %3268 = vmatmul.f32.gmra.mxu0 %v2890
    %v3269 = vpop.f32.mrf.mxu0
    %v3270 = vadd.f32 0.0, %v3269
    %3271 = vmatmul.f32.gmra.mxu0 %v2893
    %v3272 = vpop.f32.mrf.mxu0
    %v3273 = vadd.f32 0.0, %v3272
    %3274 = vmatmul.f32.gmra.mxu0 %v2896
    %v3275 = vpop.f32.mrf.mxu0
    %v3276 = vadd.f32 0.0, %v3275
    %3277 = vmatmul.f32.gmra.mxu0 %v2899
    %v3278 = vpop.f32.mrf.mxu0
    %v3279 = vadd.f32 0.0, %v3278
    %3280 = vmatmul.f32.gmra.mxu0 %v2902
    %v3281 = vpop.f32.mrf.mxu0
    %v3282 = vadd.f32 0.0, %v3281
    %3283 = vmatmul.f32.gmra.mxu0 %v2905
    %v3284 = vpop.f32.mrf.mxu0
    %v3285 = vadd.f32 0.0, %v3284
    %3286 = vmatmul.f32.gmra.mxu0 %v2908
    %v3287 = vpop.f32.mrf.mxu0
    %v3288 = vadd.f32 0.0, %v3287
    %3289 = vmatmul.f32.gmra.mxu0 %v2911
    %v3290 = vpop.f32.mrf.mxu0
    %v3291 = vadd.f32 0.0, %v3290
    %3292 = vmatmul.f32.gmra.mxu0 %v2914
    %v3293 = vpop.f32.mrf.mxu0
    %v3294 = vadd.f32 0.0, %v3293
    %3295 = vmatmul.f32.gmra.mxu0 %v2917
    %v3296 = vpop.f32.mrf.mxu0
    %v3297 = vadd.f32 0.0, %v3296
    %3298 = vmatmul.f32.gmra.mxu0 %v2920
    %v3299 = vpop.f32.mrf.mxu0
    %v3300 = vadd.f32 0.0, %v3299
    %3301 = vmatmul.f32.gmra.mxu0 %v2923
    %v3302 = vpop.f32.mrf.mxu0
    %v3303 = vadd.f32 0.0, %v3302
    %3304 = vmatmul.f32.gmra.mxu0 %v2926
    %v3305 = vpop.f32.mrf.mxu0
    %v3306 = vadd.f32 0.0, %v3305
    %3307 = vmatmul.f32.gmra.mxu0 %v2929
    %v3308 = vpop.f32.mrf.mxu0
    %v3309 = vadd.f32 0.0, %v3308
    %3310 = vmatmul.f32.gmra.mxu0 %v2932
    %v3311 = vpop.f32.mrf.mxu0
    %v3312 = vadd.f32 0.0, %v3311
    %3313 = vmatmul.f32.gmra.mxu0 %v2935
    %v3314 = vpop.f32.mrf.mxu0
    %v3315 = vadd.f32 0.0, %v3314
    %3316 = vmatmul.f32.gmra.mxu0 %v2938
    %v3317 = vpop.f32.mrf.mxu0
    %v3318 = vadd.f32 0.0, %v3317
    %3319 = vmatmul.f32.gmra.mxu0 %v2941
    %v3320 = vpop.f32.mrf.mxu0
    %v3321 = vadd.f32 0.0, %v3320
    %3322 = vmatmul.f32.gmra.mxu0 %v2944
    %v3323 = vpop.f32.mrf.mxu0
    %v3324 = vadd.f32 0.0, %v3323
    %3325 = vmatmul.f32.gmra.mxu0 %v2947
    %v3326 = vpop.f32.mrf.mxu0
    %v3327 = vadd.f32 0.0, %v3326
    %3328 = vmatmul.f32.gmra.mxu0 %v2950
    %v3329 = vpop.f32.mrf.mxu0
    %v3330 = vadd.f32 0.0, %v3329
    %3331 = vmatmul.f32.gmra.mxu0 %v2953
    %v3332 = vpop.f32.mrf.mxu0
    %v3333 = vadd.f32 0.0, %v3332
    %3334 = vmatmul.f32.gmra.mxu0 %v2956
    %v3335 = vpop.f32.mrf.mxu0
    %v3336 = vadd.f32 0.0, %v3335
    %3337 = vmatmul.f32.gmra.mxu0 %v2959
    %v3338 = vpop.f32.mrf.mxu0
    %v3339 = vadd.f32 0.0, %v3338
    %3340 = vmatmul.f32.gmra.mxu0 %v2962
    %v3341 = vpop.f32.mrf.mxu0
    %v3342 = vadd.f32 0.0, %v3341
    %3343 = vmatmul.f32.gmra.mxu0 %v2965
    %v3344 = vpop.f32.mrf.mxu0
    %v3345 = vadd.f32 0.0, %v3344
    %3346 = vmatmul.f32.gmra.mxu0 %v2968
    %v3347 = vpop.f32.mrf.mxu0
    %v3348 = vadd.f32 0.0, %v3347
    %3349 = vmatmul.f32.gmra.mxu0 %v2971
    %v3350 = vpop.f32.mrf.mxu0
    %v3351 = vadd.f32 0.0, %v3350
    %3352 = vmatmul.f32.gmra.mxu0 %v2974
    %v3353 = vpop.f32.mrf.mxu0
    %v3354 = vadd.f32 0.0, %v3353
    %3355 = vmatmul.f32.gmra.mxu0 %v2977
    %v3356 = vpop.f32.mrf.mxu0
    %v3357 = vadd.f32 0.0, %v3356
    %3358 = vmatmul.f32.gmra.mxu0 %v2980
    %v3359 = vpop.f32.mrf.mxu0
    %v3360 = vadd.f32 0.0, %v3359
    %3361 = vmatmul.f32.gmra.mxu0 %v2983
    %v3362 = vpop.f32.mrf.mxu0
    %v3363 = vadd.f32 0.0, %v3362
    %3364 = vmatmul.f32.gmra.mxu0 %v2986
    %v3365 = vpop.f32.mrf.mxu0
    %v3366 = vadd.f32 0.0, %v3365
    %3367 = vmatmul.f32.gmra.mxu0 %v2989
    %v3368 = vpop.f32.mrf.mxu0
    %v3369 = vadd.f32 0.0, %v3368
    %3370 = vmatmul.f32.gmra.mxu0 %v2992
    %v3371 = vpop.f32.mrf.mxu0
    %v3372 = vadd.f32 0.0, %v3371
    %3373 = vmatmul.f32.gmra.mxu0 %v2995
    %v3374 = vpop.f32.mrf.mxu0
    %v3375 = vadd.f32 0.0, %v3374
    %3376 = vmatmul.f32.gmra.mxu0 %v2998
    %v3377 = vpop.f32.mrf.mxu0
    %v3378 = vadd.f32 0.0, %v3377
    %3379 = vmatmul.f32.gmra.mxu0 %v3001
    %v3380 = vpop.f32.mrf.mxu0
    %v3381 = vadd.f32 0.0, %v3380
    %3382 = vmatmul.f32.gmra.mxu0 %v3004
    %v3383 = vpop.f32.mrf.mxu0
    %v3384 = vadd.f32 0.0, %v3383
    %3385 = vmatmul.f32.gmra.mxu0 %v3007
    %v3386 = vpop.f32.mrf.mxu0
    %v3387 = vadd.f32 0.0, %v3386
    %3388 = vmatmul.f32.gmra.mxu0 %v3010
    %v3389 = vpop.f32.mrf.mxu0
    %v3390 = vadd.f32 0.0, %v3389
    %3391 = vmatmul.f32.gmra.mxu0 %v3013
    %v3392 = vpop.f32.mrf.mxu0
    %v3393 = vadd.f32 0.0, %v3392
    %3394 = vmatmul.f32.gmra.mxu0 %v3016
    %v3395 = vpop.f32.mrf.mxu0
    %v3396 = vadd.f32 0.0, %v3395
    %3397 = vmatmul.f32.gmra.mxu0 %v3019
    %v3398 = vpop.f32.mrf.mxu0
    %v3399 = vadd.f32 0.0, %v3398
    %3400 = vmatmul.f32.gmra.mxu0 %v3022
    %v3401 = vpop.f32.mrf.mxu0
    %v3402 = vadd.f32 0.0, %v3401
    %3403 = vmatmul.f32.gmra.mxu0 %v3025
    %v3404 = vpop.f32.mrf.mxu0
    %v3405 = vadd.f32 0.0, %v3404
    %3406 = vmatmul.f32.gmra.mxu0 %v3028
    %v3407 = vpop.f32.mrf.mxu0
    %v3408 = vadd.f32 0.0, %v3407
    %3409 = vmatmul.f32.gmra.mxu0 %v3031
    %v3410 = vpop.f32.mrf.mxu0
    %v3411 = vadd.f32 0.0, %v3410
    %3412 = vmatmul.f32.gmra.mxu0 %v3034
    %v3413 = vpop.f32.mrf.mxu0
    %v3414 = vadd.f32 0.0, %v3413
    %3415 = vmatmul.f32.gmra.mxu0 %v3037
    %v3416 = vpop.f32.mrf.mxu0
    %v3417 = vadd.f32 0.0, %v3416
    %3418 = vmatmul.f32.gmra.mxu0 %v3040
    %v3419 = vpop.f32.mrf.mxu0
    %v3420 = vadd.f32 0.0, %v3419
    %3421 = vmatmul.f32.gmra.mxu0 %v3043
    %v3422 = vpop.f32.mrf.mxu0
    %v3423 = vadd.f32 0.0, %v3422
    %3424 = vmatmul.f32.gmra.mxu0 %v3046
    %v3425 = vpop.f32.mrf.mxu0
    %v3426 = vadd.f32 0.0, %v3425
    %3427 = vmatmul.f32.gmra.mxu0 %v3049
    %v3428 = vpop.f32.mrf.mxu0
    %v3429 = vadd.f32 0.0, %v3428
    %3430 = vmatmul.f32.gmra.mxu0 %v3052
    %v3431 = vpop.f32.mrf.mxu0
    %v3432 = vadd.f32 0.0, %v3431
    %3433 = vmatmul.f32.gmra.mxu0 %v3055
    %v3434 = vpop.f32.mrf.mxu0
    %v3435 = vadd.f32 0.0, %v3434
    %3436 = vmatmul.f32.gmra.mxu0 %v3058
    %v3437 = vpop.f32.mrf.mxu0
    %v3438 = vadd.f32 0.0, %v3437
    %3439 = vmatmul.f32.gmra.mxu0 %v3061
    %v3440 = vpop.f32.mrf.mxu0
    %v3441 = vadd.f32 0.0, %v3440
    %3442 = vmatmul.f32.gmra.mxu0 %v3064
    %v3443 = vpop.f32.mrf.mxu0
    %v3444 = vadd.f32 0.0, %v3443
    %3445 = vmatmul.f32.gmra.mxu0 %v3067
    %v3446 = vpop.f32.mrf.mxu0
    %v3447 = vadd.f32 0.0, %v3446
    %3448 = vmatmul.f32.gmra.mxu0 %v3070
    %v3449 = vpop.f32.mrf.mxu0
    %v3450 = vadd.f32 0.0, %v3449
    %3451 = vmatmul.f32.gmra.mxu0 %v3073
    %v3452 = vpop.f32.mrf.mxu0
    %v3453 = vadd.f32 0.0, %v3452
    %3454 = vmatmul.f32.gmra.mxu0 %v3076
    %v3455 = vpop.f32.mrf.mxu0
    %v3456 = vadd.f32 0.0, %v3455
    %3457 = vmatmul.f32.gmra.mxu0 %v3079
    %v3458 = vpop.f32.mrf.mxu0
    %v3459 = vadd.f32 0.0, %v3458
    %3460 = vmatmul.f32.gmra.mxu0 %v3082
    %v3461 = vpop.f32.mrf.mxu0
    %v3462 = vadd.f32 0.0, %v3461
    %3463 = vmatmul.f32.gmra.mxu0 %v3085
    %v3464 = vpop.f32.mrf.mxu0
    %v3465 = vadd.f32 0.0, %v3464
    %3466 = vmatmul.f32.gmra.mxu0 %v3088
    %v3467 = vpop.f32.mrf.mxu0
    %v3468 = vadd.f32 0.0, %v3467
    %3469 = vmatmul.f32.gmra.mxu0 %v3091
    %v3470 = vpop.f32.mrf.mxu0
    %v3471 = vadd.f32 0.0, %v3470
    %3472 = vmatmul.f32.gmra.mxu0 %v3094
    %v3473 = vpop.f32.mrf.mxu0
    %v3474 = vadd.f32 0.0, %v3473
    %3475 = vmatmul.f32.gmra.mxu0 %v3097
    %v3476 = vpop.f32.mrf.mxu0
    %v3477 = vadd.f32 0.0, %v3476
    %3478 = vmatmul.f32.gmra.mxu0 %v3100
    %v3479 = vpop.f32.mrf.mxu0
    %v3480 = vadd.f32 0.0, %v3479
    %3481 = vmatmul.f32.gmra.mxu0 %v3103
    %v3482 = vpop.f32.mrf.mxu0
    %v3483 = vadd.f32 0.0, %v3482
    %3484 = vmatmul.f32.gmra.mxu0 %v3106
    %v3485 = vpop.f32.mrf.mxu0
    %v3486 = vadd.f32 0.0, %v3485
    %3487 = vmatmul.f32.gmra.mxu0 %v3109
    %v3488 = vpop.f32.mrf.mxu0
    %v3489 = vadd.f32 0.0, %v3488
    %3490 = vmatmul.f32.gmra.mxu0 %v3112
    %v3491 = vpop.f32.mrf.mxu0
    %v3492 = vadd.f32 0.0, %v3491
    %3493 = vmatmul.f32.gmra.mxu0 %v3115
    %v3494 = vpop.f32.mrf.mxu0
    %v3495 = vadd.f32 0.0, %v3494
    %3496 = vmatmul.f32.gmra.mxu0 %v3118
    %v3497 = vpop.f32.mrf.mxu0
    %v3498 = vadd.f32 0.0, %v3497
    %3499 = vmatmul.f32.gmra.mxu0 %v3121
    %v3500 = vpop.f32.mrf.mxu0
    %v3501 = vadd.f32 0.0, %v3500
    %3502 = vmatmul.f32.gmra.mxu0 %v3124
    %v3503 = vpop.f32.mrf.mxu0
    %v3504 = vadd.f32 0.0, %v3503
    %3505 = vmatmul.f32.gmra.mxu0 %v3127
    %v3506 = vpop.f32.mrf.mxu0
    %v3507 = vadd.f32 0.0, %v3506
    %3508 = vmatmul.f32.gmra.mxu0 %v3130
    %v3509 = vpop.f32.mrf.mxu0
    %v3510 = vadd.f32 0.0, %v3509
    %3511 = vmatmul.f32.gmra.mxu0 %v3133
    %v3512 = vpop.f32.mrf.mxu0
    %v3513 = vadd.f32 0.0, %v3512
    %3514 = vmatmul.f32.gmra.mxu0 %v3136
    %v3515 = vpop.f32.mrf.mxu0
    %v3516 = vadd.f32 0.0, %v3515
    %3517 = vmatmul.f32.gmra.mxu0 %v3139
    %v3518 = vpop.f32.mrf.mxu0
    %v3519 = vadd.f32 0.0, %v3518
    %3520 = vmatmul.f32.gmra.mxu0 %v3142
    %v3521 = vpop.f32.mrf.mxu0
    %v3522 = vadd.f32 0.0, %v3521
    %3523 = vmatmul.f32.gmra.mxu0 %v3145
    %v3524 = vpop.f32.mrf.mxu0
    %v3525 = vadd.f32 0.0, %v3524
    %3526 = vmatmul.f32.gmra.mxu0 %v3148
    %v3527 = vpop.f32.mrf.mxu0
    %v3528 = vadd.f32 0.0, %v3527
    %3529 = vmatmul.f32.gmra.mxu0 %v3151
    %v3530 = vpop.f32.mrf.mxu0
    %v3531 = vadd.f32 0.0, %v3530
    %3532 = vmatmul.f32.gmra.mxu0 %v3154
    %v3533 = vpop.f32.mrf.mxu0
    %v3534 = vadd.f32 0.0, %v3533
    %3535 = vmatmul.f32.gmra.mxu0 %v3157
    %v3536 = vpop.f32.mrf.mxu0
    %v3537 = vadd.f32 0.0, %v3536
    %3538 = vmatmul.f32.gmra.mxu0 %v3160
    %v3539 = vpop.f32.mrf.mxu0
    %v3540 = vadd.f32 0.0, %v3539
    %3541 = vmatmul.f32.gmra.mxu0 %v3163
    %v3542 = vpop.f32.mrf.mxu0
    %v3543 = vadd.f32 0.0, %v3542
    %3544 = vmatmul.f32.gmra.mxu0 %v3166
    %v3545 = vpop.f32.mrf.mxu0
    %v3546 = vadd.f32 0.0, %v3545
    %3547 = vmatmul.f32.gmra.mxu0 %v3169
    %v3548 = vpop.f32.mrf.mxu0
    %v3549 = vadd.f32 0.0, %v3548
    %3550 = vmatmul.f32.gmra.mxu0 %v3172
    %v3551 = vpop.f32.mrf.mxu0
    %v3552 = vadd.f32 0.0, %v3551
    %3553 = vmatmul.f32.gmra.mxu0 %v3175
    %v3554 = vpop.f32.mrf.mxu0
    %v3555 = vadd.f32 0.0, %v3554
    %3556 = vmatmul.f32.gmra.mxu0 %v3178
    %v3557 = vpop.f32.mrf.mxu0
    %v3558 = vadd.f32 0.0, %v3557
    %3559 = vmatmul.f32.gmra.mxu0 %v3181
    %v3560 = vpop.f32.mrf.mxu0
    %v3561 = vadd.f32 0.0, %v3560
    %3562 = vmatmul.f32.gmra.mxu0 %v3184
    %v3563 = vpop.f32.mrf.mxu0
    %v3564 = vadd.f32 0.0, %v3563
    %3565 = vmatmul.f32.gmra.mxu0 %v3187
    %v3566 = vpop.f32.mrf.mxu0
    %v3567 = vadd.f32 0.0, %v3566
    %3568 = vmatmul.f32.gmra.mxu0 %v3190
    %v3569 = vpop.f32.mrf.mxu0
    %v3570 = vadd.f32 0.0, %v3569
    %3571 = vmatmul.f32.gmra.mxu0 %v3193
    %v3572 = vpop.f32.mrf.mxu0
    %v3573 = vadd.f32 0.0, %v3572
    %3574 = vmatmul.f32.gmra.mxu0 %v3196
    %v3575 = vpop.f32.mrf.mxu0
    %v3576 = vadd.f32 0.0, %v3575
    %3577 = vmatmul.f32.gmra.mxu0 %v3199
    %v3578 = vpop.f32.mrf.mxu0
    %v3579 = vadd.f32 0.0, %v3578
    %3580 = vmatmul.f32.gmra.mxu0 %v3202
    %v3581 = vpop.f32.mrf.mxu0
    %v3582 = vadd.f32 0.0, %v3581
    %3583 = vmatmul.f32.gmra.mxu0 %v3205
    %v3584 = vpop.f32.mrf.mxu0
    %v3585 = vadd.f32 0.0, %v3584
    %3586 = vmatmul.f32.gmra.mxu0 %v3208
    %v3587 = vpop.f32.mrf.mxu0
    %v3588 = vadd.f32 0.0, %v3587
    %3589 = vmatmul.f32.gmra.mxu0 %v3211
    %v3590 = vpop.f32.mrf.mxu0
    %v3591 = vadd.f32 0.0, %v3590
    %3592 = vmatmul.f32.gmra.mxu0 %v3214
    %v3593 = vpop.f32.mrf.mxu0
    %v3594 = vadd.f32 0.0, %v3593
    %3595 = vmatmul.f32.gmra.mxu0 %v3217
    %v3596 = vpop.f32.mrf.mxu0
    %v3597 = vadd.f32 0.0, %v3596
    %3598 = vdwg.mxu0
    %vm3599 = vcmask 130048
    %3600 = vst.msk [vmem:[#allocation3] sm:$0xff] %vm3599, %v3240
    %3601 = vst.msk [vmem:[#allocation3 + $0x20] sm:$0xff] %vm3599, %v3243
    %3602 = vst.msk [vmem:[#allocation3 + $0x40] sm:$0xff] %vm3599, %v3246
    %3603 = vst.msk [vmem:[#allocation3 + $0x60] sm:$0xff] %vm3599, %v3249
    %3608 = vrot.lane.b32.xlu0 %v3252, 16
    %v3609 = vpop.permute.xlu0 %3608
    %3610 = vrot.lane.b32.xlu0 %v3255, 16
    %v3611 = vpop.permute.xlu0 %3610
    %3612 = vrot.lane.b32.xlu0 %v3258, 16
    %v3613 = vpop.permute.xlu0 %3612
    %3614 = vrot.lane.b32.xlu0 %v3261, 16
    %v3615 = vpop.permute.xlu0 %3614
    %vm3620 = vcmask 261248
    %3621 = vst.msk [vmem:[#allocation3] sm:$0xff] %vm3620, %v3609
    %3622 = vst.msk [vmem:[#allocation3 + $0x20] sm:$0xff] %vm3620, %v3611
    %3623 = vst.msk [vmem:[#allocation3 + $0x40] sm:$0xff] %vm3620, %v3613
    %3624 = vst.msk [vmem:[#allocation3 + $0x60] sm:$0xff] %vm3620, %v3615
    %3629 = vrot.lane.b32.xlu0 %v3264, 32
    %v3630 = vpop.permute.xlu0 %3629
    %3631 = vrot.lane.b32.xlu0 %v3267, 32
    %v3632 = vpop.permute.xlu0 %3631
    %3633 = vrot.lane.b32.xlu0 %v3270, 32
    %v3634 = vpop.permute.xlu0 %3633
    %3635 = vrot.lane.b32.xlu0 %v3273, 32
    %v3636 = vpop.permute.xlu0 %3635
    %vm3641 = vcmask 392448
    %3642 = vst.msk [vmem:[#allocation3] sm:$0xff] %vm3641, %v3630
    %3643 = vst.msk [vmem:[#allocation3 + $0x20] sm:$0xff] %vm3641, %v3632
    %3644 = vst.msk [vmem:[#allocation3 + $0x40] sm:$0xff] %vm3641, %v3634
    %3645 = vst.msk [vmem:[#allocation3 + $0x60] sm:$0xff] %vm3641, %v3636
    %3650 = vrot.lane.b32.xlu0 %v3276, 48
    %v3651 = vpop.permute.xlu0 %3650
    %3652 = vrot.lane.b32.xlu0 %v3279, 48
    %v3653 = vpop.permute.xlu0 %3652
    %3654 = vrot.lane.b32.xlu0 %v3282, 48
    %v3655 = vpop.permute.xlu0 %3654
    %3656 = vrot.lane.b32.xlu0 %v3285, 48
    %v3657 = vpop.permute.xlu0 %3656
    %vm3662 = vcmask 523648
    %3663 = vst.msk [vmem:[#allocation3] sm:$0xff] %vm3662, %v3651
    %3664 = vst.msk [vmem:[#allocation3 + $0x20] sm:$0xff] %vm3662, %v3653
    %3665 = vst.msk [vmem:[#allocation3 + $0x40] sm:$0xff] %vm3662, %v3655
    %3666 = vst.msk [vmem:[#allocation3 + $0x60] sm:$0xff] %vm3662, %v3657
    %3671 = vrot.lane.b32.xlu0 %v3288, 64
    %v3672 = vpop.permute.xlu0 %3671
    %3673 = vrot.lane.b32.xlu0 %v3291, 64
    %v3674 = vpop.permute.xlu0 %3673
    %3675 = vrot.lane.b32.xlu0 %v3294, 64
    %v3676 = vpop.permute.xlu0 %3675
    %3677 = vrot.lane.b32.xlu0 %v3297, 64
    %v3678 = vpop.permute.xlu0 %3677
    %vm3683 = vcmask 654848
    %3684 = vst.msk [vmem:[#allocation3] sm:$0xff] %vm3683, %v3672
    %3685 = vst.msk [vmem:[#allocation3 + $0x20] sm:$0xff] %vm3683, %v3674
    %3686 = vst.msk [vmem:[#allocation3 + $0x40] sm:$0xff] %vm3683, %v3676
    %3687 = vst.msk [vmem:[#allocation3 + $0x60] sm:$0xff] %vm3683, %v3678
    %3692 = vrot.lane.b32.xlu0 %v3300, 80
    %v3693 = vpop.permute.xlu0 %3692
    %3694 = vrot.lane.b32.xlu0 %v3303, 80
    %v3695 = vpop.permute.xlu0 %3694
    %3696 = vrot.lane.b32.xlu0 %v3306, 80
    %v3697 = vpop.permute.xlu0 %3696
    %3698 = vrot.lane.b32.xlu0 %v3309, 80
    %v3699 = vpop.permute.xlu0 %3698
    %vm3704 = vcmask 786048
    %3705 = vst.msk [vmem:[#allocation3] sm:$0xff] %vm3704, %v3693
    %3706 = vst.msk [vmem:[#allocation3 + $0x20] sm:$0xff] %vm3704, %v3695
    %3707 = vst.msk [vmem:[#allocation3 + $0x40] sm:$0xff] %vm3704, %v3697
    %3708 = vst.msk [vmem:[#allocation3 + $0x60] sm:$0xff] %vm3704, %v3699
    %3713 = vrot.lane.b32.xlu0 %v3312, 96
    %v3714 = vpop.permute.xlu0 %3713
    %3715 = vrot.lane.b32.xlu0 %v3315, 96
    %v3716 = vpop.permute.xlu0 %3715
    %3717 = vrot.lane.b32.xlu0 %v3318, 96
    %v3718 = vpop.permute.xlu0 %3717
    %3719 = vrot.lane.b32.xlu0 %v3321, 96
    %v3720 = vpop.permute.xlu0 %3719
    %vm3725 = vcmask 917248
    %3726 = vst.msk [vmem:[#allocation3] sm:$0xff] %vm3725, %v3714
    %3727 = vst.msk [vmem:[#allocation3 + $0x20] sm:$0xff] %vm3725, %v3716
    %3728 = vst.msk [vmem:[#allocation3 + $0x40] sm:$0xff] %vm3725, %v3718
    %3729 = vst.msk [vmem:[#allocation3 + $0x60] sm:$0xff] %vm3725, %v3720
    %3734 = vrot.lane.b32.xlu0 %v3324, 112
    %v3735 = vpop.permute.xlu0 %3734
    %3736 = vrot.lane.b32.xlu0 %v3327, 112
    %v3737 = vpop.permute.xlu0 %3736
    %3738 = vrot.lane.b32.xlu0 %v3330, 112
    %v3739 = vpop.permute.xlu0 %3738
    %3740 = vrot.lane.b32.xlu0 %v3333, 112
    %v3741 = vpop.permute.xlu0 %3740
    %vm3746 = vcmask 1048448
    %3747 = vst.msk [vmem:[#allocation3] sm:$0xff] %vm3746, %v3735
    %3748 = vst.msk [vmem:[#allocation3 + $0x20] sm:$0xff] %vm3746, %v3737
    %3749 = vst.msk [vmem:[#allocation3 + $0x40] sm:$0xff] %vm3746, %v3739
    %3750 = vst.msk [vmem:[#allocation3 + $0x60] sm:$0xff] %vm3746, %v3741
    %3751 = vst.msk [vmem:[#allocation3 + $0x8] sm:$0xff] %vm3599, %v3336
    %3752 = vst.msk [vmem:[#allocation3 + $0x28] sm:$0xff] %vm3599, %v3339
    %3753 = vst.msk [vmem:[#allocation3 + $0x48] sm:$0xff] %vm3599, %v3342
    %3754 = vst.msk [vmem:[#allocation3 + $0x68] sm:$0xff] %vm3599, %v3345
    %3759 = vrot.lane.b32.xlu0 %v3348, 16
    %v3760 = vpop.permute.xlu0 %3759
    %3761 = vrot.lane.b32.xlu0 %v3351, 16
    %v3762 = vpop.permute.xlu0 %3761
    %3763 = vrot.lane.b32.xlu0 %v3354, 16
    %v3764 = vpop.permute.xlu0 %3763
    %3765 = vrot.lane.b32.xlu0 %v3357, 16
    %v3766 = vpop.permute.xlu0 %3765
    %3771 = vst.msk [vmem:[#allocation3 + $0x8] sm:$0xff] %vm3620, %v3760
    %3772 = vst.msk [vmem:[#allocation3 + $0x28] sm:$0xff] %vm3620, %v3762
    %3773 = vst.msk [vmem:[#allocation3 + $0x48] sm:$0xff] %vm3620, %v3764
    %3774 = vst.msk [vmem:[#allocation3 + $0x68] sm:$0xff] %vm3620, %v3766
    %3779 = vrot.lane.b32.xlu0 %v3360, 32
    %v3780 = vpop.permute.xlu0 %3779
    %3781 = vrot.lane.b32.xlu0 %v3363, 32
    %v3782 = vpop.permute.xlu0 %3781
    %3783 = vrot.lane.b32.xlu0 %v3366, 32
    %v3784 = vpop.permute.xlu0 %3783
    %3785 = vrot.lane.b32.xlu0 %v3369, 32
    %v3786 = vpop.permute.xlu0 %3785
    %3791 = vst.msk [vmem:[#allocation3 + $0x8] sm:$0xff] %vm3641, %v3780
    %3792 = vst.msk [vmem:[#allocation3 + $0x28] sm:$0xff] %vm3641, %v3782
    %3793 = vst.msk [vmem:[#allocation3 + $0x48] sm:$0xff] %vm3641, %v3784
    %3794 = vst.msk [vmem:[#allocation3 + $0x68] sm:$0xff] %vm3641, %v3786
    %3799 = vrot.lane.b32.xlu0 %v3372, 48
    %v3800 = vpop.permute.xlu0 %3799
    %3801 = vrot.lane.b32.xlu0 %v3375, 48
    %v3802 = vpop.permute.xlu0 %3801
    %3803 = vrot.lane.b32.xlu0 %v3378, 48
    %v3804 = vpop.permute.xlu0 %3803
    %3805 = vrot.lane.b32.xlu0 %v3381, 48
    %v3806 = vpop.permute.xlu0 %3805
    %3811 = vst.msk [vmem:[#allocation3 + $0x8] sm:$0xff] %vm3662, %v3800
    %3812 = vst.msk [vmem:[#allocation3 + $0x28] sm:$0xff] %vm3662, %v3802
    %3813 = vst.msk [vmem:[#allocation3 + $0x48] sm:$0xff] %vm3662, %v3804
    %3814 = vst.msk [vmem:[#allocation3 + $0x68] sm:$0xff] %vm3662, %v3806
    %3819 = vrot.lane.b32.xlu0 %v3384, 64
    %v3820 = vpop.permute.xlu0 %3819
    %3821 = vrot.lane.b32.xlu0 %v3387, 64
    %v3822 = vpop.permute.xlu0 %3821
    %3823 = vrot.lane.b32.xlu0 %v3390, 64
    %v3824 = vpop.permute.xlu0 %3823
    %3825 = vrot.lane.b32.xlu0 %v3393, 64
    %v3826 = vpop.permute.xlu0 %3825
    %3831 = vst.msk [vmem:[#allocation3 + $0x8] sm:$0xff] %vm3683, %v3820
    %3832 = vst.msk [vmem:[#allocation3 + $0x28] sm:$0xff] %vm3683, %v3822
    %3833 = vst.msk [vmem:[#allocation3 + $0x48] sm:$0xff] %vm3683, %v3824
    %3834 = vst.msk [vmem:[#allocation3 + $0x68] sm:$0xff] %vm3683, %v3826
    %3839 = vrot.lane.b32.xlu0 %v3396, 80
    %v3840 = vpop.permute.xlu0 %3839
    %3841 = vrot.lane.b32.xlu0 %v3399, 80
    %v3842 = vpop.permute.xlu0 %3841
    %3843 = vrot.lane.b32.xlu0 %v3402, 80
    %v3844 = vpop.permute.xlu0 %3843
    %3845 = vrot.lane.b32.xlu0 %v3405, 80
    %v3846 = vpop.permute.xlu0 %3845
    %3851 = vst.msk [vmem:[#allocation3 + $0x8] sm:$0xff] %vm3704, %v3840
    %3852 = vst.msk [vmem:[#allocation3 + $0x28] sm:$0xff] %vm3704, %v3842
    %3853 = vst.msk [vmem:[#allocation3 + $0x48] sm:$0xff] %vm3704, %v3844
    %3854 = vst.msk [vmem:[#allocation3 + $0x68] sm:$0xff] %vm3704, %v3846
    %3859 = vrot.lane.b32.xlu0 %v3408, 96
    %v3860 = vpop.permute.xlu0 %3859
    %3861 = vrot.lane.b32.xlu0 %v3411, 96
    %v3862 = vpop.permute.xlu0 %3861
    %3863 = vrot.lane.b32.xlu0 %v3414, 96
    %v3864 = vpop.permute.xlu0 %3863
    %3865 = vrot.lane.b32.xlu0 %v3417, 96
    %v3866 = vpop.permute.xlu0 %3865
    %3871 = vst.msk [vmem:[#allocation3 + $0x8] sm:$0xff] %vm3725, %v3860
    %3872 = vst.msk [vmem:[#allocation3 + $0x28] sm:$0xff] %vm3725, %v3862
    %3873 = vst.msk [vmem:[#allocation3 + $0x48] sm:$0xff] %vm3725, %v3864
    %3874 = vst.msk [vmem:[#allocation3 + $0x68] sm:$0xff] %vm3725, %v3866
    %3879 = vrot.lane.b32.xlu0 %v3420, 112
    %v3880 = vpop.permute.xlu0 %3879
    %3881 = vrot.lane.b32.xlu0 %v3423, 112
    %v3882 = vpop.permute.xlu0 %3881
    %3883 = vrot.lane.b32.xlu0 %v3426, 112
    %v3884 = vpop.permute.xlu0 %3883
    %3885 = vrot.lane.b32.xlu0 %v3429, 112
    %v3886 = vpop.permute.xlu0 %3885
    %3891 = vst.msk [vmem:[#allocation3 + $0x8] sm:$0xff] %vm3746, %v3880
    %3892 = vst.msk [vmem:[#allocation3 + $0x28] sm:$0xff] %vm3746, %v3882
    %3893 = vst.msk [vmem:[#allocation3 + $0x48] sm:$0xff] %vm3746, %v3884
    %3894 = vst.msk [vmem:[#allocation3 + $0x68] sm:$0xff] %vm3746, %v3886
    %3895 = vst.msk [vmem:[#allocation3 + $0x10] sm:$0xff] %vm3599, %v3432
    %3896 = vst.msk [vmem:[#allocation3 + $0x30] sm:$0xff] %vm3599, %v3435
    %3897 = vst.msk [vmem:[#allocation3 + $0x50] sm:$0xff] %vm3599, %v3438
    %3898 = vst.msk [vmem:[#allocation3 + $0x70] sm:$0xff] %vm3599, %v3441
    %3903 = vrot.lane.b32.xlu0 %v3444, 16
    %v3904 = vpop.permute.xlu0 %3903
    %3905 = vrot.lane.b32.xlu0 %v3447, 16
    %v3906 = vpop.permute.xlu0 %3905
    %3907 = vrot.lane.b32.xlu0 %v3450, 16
    %v3908 = vpop.permute.xlu0 %3907
    %3909 = vrot.lane.b32.xlu0 %v3453, 16
    %v3910 = vpop.permute.xlu0 %3909
    %3915 = vst.msk [vmem:[#allocation3 + $0x10] sm:$0xff] %vm3620, %v3904
    %3916 = vst.msk [vmem:[#allocation3 + $0x30] sm:$0xff] %vm3620, %v3906
    %3917 = vst.msk [vmem:[#allocation3 + $0x50] sm:$0xff] %vm3620, %v3908
    %3918 = vst.msk [vmem:[#allocation3 + $0x70] sm:$0xff] %vm3620, %v3910
    %3923 = vrot.lane.b32.xlu0 %v3456, 32
    %v3924 = vpop.permute.xlu0 %3923
    %3925 = vrot.lane.b32.xlu0 %v3459, 32
    %v3926 = vpop.permute.xlu0 %3925
    %3927 = vrot.lane.b32.xlu0 %v3462, 32
    %v3928 = vpop.permute.xlu0 %3927
    %3929 = vrot.lane.b32.xlu0 %v3465, 32
    %v3930 = vpop.permute.xlu0 %3929
    %3935 = vst.msk [vmem:[#allocation3 + $0x10] sm:$0xff] %vm3641, %v3924
    %3936 = vst.msk [vmem:[#allocation3 + $0x30] sm:$0xff] %vm3641, %v3926
    %3937 = vst.msk [vmem:[#allocation3 + $0x50] sm:$0xff] %vm3641, %v3928
    %3938 = vst.msk [vmem:[#allocation3 + $0x70] sm:$0xff] %vm3641, %v3930
    %3943 = vrot.lane.b32.xlu0 %v3468, 48
    %v3944 = vpop.permute.xlu0 %3943
    %3945 = vrot.lane.b32.xlu0 %v3471, 48
    %v3946 = vpop.permute.xlu0 %3945
    %3947 = vrot.lane.b32.xlu0 %v3474, 48
    %v3948 = vpop.permute.xlu0 %3947
    %3949 = vrot.lane.b32.xlu0 %v3477, 48
    %v3950 = vpop.permute.xlu0 %3949
    %3955 = vst.msk [vmem:[#allocation3 + $0x10] sm:$0xff] %vm3662, %v3944
    %3956 = vst.msk [vmem:[#allocation3 + $0x30] sm:$0xff] %vm3662, %v3946
    %3957 = vst.msk [vmem:[#allocation3 + $0x50] sm:$0xff] %vm3662, %v3948
    %3958 = vst.msk [vmem:[#allocation3 + $0x70] sm:$0xff] %vm3662, %v3950
    %3963 = vrot.lane.b32.xlu0 %v3480, 64
    %v3964 = vpop.permute.xlu0 %3963
    %3965 = vrot.lane.b32.xlu0 %v3483, 64
    %v3966 = vpop.permute.xlu0 %3965
    %3967 = vrot.lane.b32.xlu0 %v3486, 64
    %v3968 = vpop.permute.xlu0 %3967
    %3969 = vrot.lane.b32.xlu0 %v3489, 64
    %v3970 = vpop.permute.xlu0 %3969
    %3975 = vst.msk [vmem:[#allocation3 + $0x10] sm:$0xff] %vm3683, %v3964
    %3976 = vst.msk [vmem:[#allocation3 + $0x30] sm:$0xff] %vm3683, %v3966
    %3977 = vst.msk [vmem:[#allocation3 + $0x50] sm:$0xff] %vm3683, %v3968
    %3978 = vst.msk [vmem:[#allocation3 + $0x70] sm:$0xff] %vm3683, %v3970
    %3983 = vrot.lane.b32.xlu0 %v3492, 80
    %v3984 = vpop.permute.xlu0 %3983
    %3985 = vrot.lane.b32.xlu0 %v3495, 80
    %v3986 = vpop.permute.xlu0 %3985
    %3987 = vrot.lane.b32.xlu0 %v3498, 80
    %v3988 = vpop.permute.xlu0 %3987
    %3989 = vrot.lane.b32.xlu0 %v3501, 80
    %v3990 = vpop.permute.xlu0 %3989
    %3995 = vst.msk [vmem:[#allocation3 + $0x10] sm:$0xff] %vm3704, %v3984
    %3996 = vst.msk [vmem:[#allocation3 + $0x30] sm:$0xff] %vm3704, %v3986
    %3997 = vst.msk [vmem:[#allocation3 + $0x50] sm:$0xff] %vm3704, %v3988
    %3998 = vst.msk [vmem:[#allocation3 + $0x70] sm:$0xff] %vm3704, %v3990
    %4003 = vrot.lane.b32.xlu0 %v3504, 96
    %v4004 = vpop.permute.xlu0 %4003
    %4005 = vrot.lane.b32.xlu0 %v3507, 96
    %v4006 = vpop.permute.xlu0 %4005
    %4007 = vrot.lane.b32.xlu0 %v3510, 96
    %v4008 = vpop.permute.xlu0 %4007
    %4009 = vrot.lane.b32.xlu0 %v3513, 96
    %v4010 = vpop.permute.xlu0 %4009
    %4015 = vst.msk [vmem:[#allocation3 + $0x10] sm:$0xff] %vm3725, %v4004
    %4016 = vst.msk [vmem:[#allocation3 + $0x30] sm:$0xff] %vm3725, %v4006
    %4017 = vst.msk [vmem:[#allocation3 + $0x50] sm:$0xff] %vm3725, %v4008
    %4018 = vst.msk [vmem:[#allocation3 + $0x70] sm:$0xff] %vm3725, %v4010
    %4023 = vrot.lane.b32.xlu0 %v3516, 112
    %v4024 = vpop.permute.xlu0 %4023
    %4025 = vrot.lane.b32.xlu0 %v3519, 112
    %v4026 = vpop.permute.xlu0 %4025
    %4027 = vrot.lane.b32.xlu0 %v3522, 112
    %v4028 = vpop.permute.xlu0 %4027
    %4029 = vrot.lane.b32.xlu0 %v3525, 112
    %v4030 = vpop.permute.xlu0 %4029
    %4035 = vst.msk [vmem:[#allocation3 + $0x10] sm:$0xff] %vm3746, %v4024
    %4036 = vst.msk [vmem:[#allocation3 + $0x30] sm:$0xff] %vm3746, %v4026
    %4037 = vst.msk [vmem:[#allocation3 + $0x50] sm:$0xff] %vm3746, %v4028
    %4038 = vst.msk [vmem:[#allocation3 + $0x70] sm:$0xff] %vm3746, %v4030
    %4039 = vst.msk [vmem:[#allocation3 + $0x18] sm:$0xff] %vm3599, %v3528
    %4040 = vst.msk [vmem:[#allocation3 + $0x38] sm:$0xff] %vm3599, %v3531
    %4041 = vst.msk [vmem:[#allocation3 + $0x58] sm:$0xff] %vm3599, %v3534
    %4042 = vst.msk [vmem:[#allocation3 + $0x78] sm:$0xff] %vm3599, %v3537
    %4047 = vrot.lane.b32.xlu0 %v3540, 16
    %v4048 = vpop.permute.xlu0 %4047
    %4049 = vrot.lane.b32.xlu0 %v3543, 16
    %v4050 = vpop.permute.xlu0 %4049
    %4051 = vrot.lane.b32.xlu0 %v3546, 16
    %v4052 = vpop.permute.xlu0 %4051
    %4053 = vrot.lane.b32.xlu0 %v3549, 16
    %v4054 = vpop.permute.xlu0 %4053
    %4059 = vst.msk [vmem:[#allocation3 + $0x18] sm:$0xff] %vm3620, %v4048
    %4060 = vst.msk [vmem:[#allocation3 + $0x38] sm:$0xff] %vm3620, %v4050
    %4061 = vst.msk [vmem:[#allocation3 + $0x58] sm:$0xff] %vm3620, %v4052
    %4062 = vst.msk [vmem:[#allocation3 + $0x78] sm:$0xff] %vm3620, %v4054
    %4067 = vrot.lane.b32.xlu0 %v3552, 32
    %v4068 = vpop.permute.xlu0 %4067
    %4069 = vrot.lane.b32.xlu0 %v3555, 32
    %v4070 = vpop.permute.xlu0 %4069
    %4071 = vrot.lane.b32.xlu0 %v3558, 32
    %v4072 = vpop.permute.xlu0 %4071
    %4073 = vrot.lane.b32.xlu0 %v3561, 32
    %v4074 = vpop.permute.xlu0 %4073
    %4079 = vst.msk [vmem:[#allocation3 + $0x18] sm:$0xff] %vm3641, %v4068
    %4080 = vst.msk [vmem:[#allocation3 + $0x38] sm:$0xff] %vm3641, %v4070
    %4081 = vst.msk [vmem:[#allocation3 + $0x58] sm:$0xff] %vm3641, %v4072
    %4082 = vst.msk [vmem:[#allocation3 + $0x78] sm:$0xff] %vm3641, %v4074
    %4087 = vrot.lane.b32.xlu0 %v3564, 48
    %v4088 = vpop.permute.xlu0 %4087
    %4089 = vrot.lane.b32.xlu0 %v3567, 48
    %v4090 = vpop.permute.xlu0 %4089
    %4091 = vrot.lane.b32.xlu0 %v3570, 48
    %v4092 = vpop.permute.xlu0 %4091
    %4093 = vrot.lane.b32.xlu0 %v3573, 48
    %v4094 = vpop.permute.xlu0 %4093
    %4099 = vst.msk [vmem:[#allocation3 + $0x18] sm:$0xff] %vm3662, %v4088
    %4100 = vst.msk [vmem:[#allocation3 + $0x38] sm:$0xff] %vm3662, %v4090
    %4101 = vst.msk [vmem:[#allocation3 + $0x58] sm:$0xff] %vm3662, %v4092
    %4102 = vst.msk [vmem:[#allocation3 + $0x78] sm:$0xff] %vm3662, %v4094
    %4107 = vrot.lane.b32.xlu0 %v3576, 64
    %v4108 = vpop.permute.xlu0 %4107
    %4109 = vrot.lane.b32.xlu0 %v3579, 64
    %v4110 = vpop.permute.xlu0 %4109
    %4111 = vrot.lane.b32.xlu0 %v3582, 64
    %v4112 = vpop.permute.xlu0 %4111
    %4113 = vrot.lane.b32.xlu0 %v3585, 64
    %v4114 = vpop.permute.xlu0 %4113
    %4119 = vst.msk [vmem:[#allocation3 + $0x18] sm:$0xff] %vm3683, %v4108
    %4120 = vst.msk [vmem:[#allocation3 + $0x38] sm:$0xff] %vm3683, %v4110
    %4121 = vst.msk [vmem:[#allocation3 + $0x58] sm:$0xff] %vm3683, %v4112
    %4122 = vst.msk [vmem:[#allocation3 + $0x78] sm:$0xff] %vm3683, %v4114
    %4127 = vrot.lane.b32.xlu0 %v3588, 80
    %v4128 = vpop.permute.xlu0 %4127
    %4129 = vrot.lane.b32.xlu0 %v3591, 80
    %v4130 = vpop.permute.xlu0 %4129
    %4131 = vrot.lane.b32.xlu0 %v3594, 80
    %v4132 = vpop.permute.xlu0 %4131
    %4133 = vrot.lane.b32.xlu0 %v3597, 80
    %v4134 = vpop.permute.xlu0 %4133
    %4139 = vst.msk [vmem:[#allocation3 + $0x18] sm:$0xff] %vm3704, %v4128
    %4140 = vst.msk [vmem:[#allocation3 + $0x38] sm:$0xff] %vm3704, %v4130
    %4141 = vst.msk [vmem:[#allocation3 + $0x58] sm:$0xff] %vm3704, %v4132
    %4142 = vst.msk [vmem:[#allocation3 + $0x78] sm:$0xff] %vm3704, %v4134
    %v4143 = vld [vmem:[%s7] sm:$0xff]
    %v4144 = vld [vmem:[%s7 + $0x8] sm:$0xff]
    %v4145 = vld [vmem:[#allocation3] sm:$0xff]
    %v4146 = vld [vmem:[#allocation3 + $0x8] sm:$0xff]
    %v4147 = vld [vmem:[#allocation3 + $0x10] sm:$0xff]
    %v4148 = vld [vmem:[#allocation3 + $0x18] sm:$0xff]
    %v4149 = vld [vmem:[#allocation3 + $0x20] sm:$0xff]
    %v4150 = vld [vmem:[#allocation3 + $0x28] sm:$0xff]
    %v4151 = vld [vmem:[#allocation3 + $0x30] sm:$0xff]
    %v4152 = vld [vmem:[#allocation3 + $0x38] sm:$0xff]
    %v4153 = vld [vmem:[#allocation3 + $0x40] sm:$0xff]
    %v4154 = vld [vmem:[#allocation3 + $0x48] sm:$0xff]
    %v4155 = vld [vmem:[#allocation3 + $0x50] sm:$0xff]
    %v4156 = vld [vmem:[#allocation3 + $0x58] sm:$0xff]
    %v4157 = vld [vmem:[#allocation3 + $0x60] sm:$0xff]
    %v4158 = vld [vmem:[#allocation3 + $0x68] sm:$0xff]
    %v4159 = vld [vmem:[#allocation3 + $0x70] sm:$0xff]
    %v4160 = vld [vmem:[#allocation3 + $0x78] sm:$0xff]
    %v4162 = vsel %vm1354, %v4143, 0
    %v4165 = vsel %vm1354, %v4144, 0
    %4167 = vmatpush.msra.mxu0 0.0
    %4168 = vmatpush.msra.mxu0 0.0
    %4169 = vmatpush.msra.mxu0 0.0
    %4170 = vmatpush.msra.mxu0 0.0
    %4171 = vmatpush.msra.mxu0 0.0
    %4172 = vmatpush.msra.mxu0 0.0
    %4173 = vmatpush.msra.mxu0 0.0
    %4174 = vmatpush.msra.mxu0 0.0
    %4175 = vmatpush.msra.mxu0 0.0
    %4176 = vmatpush.msra.mxu0 0.0
    %4177 = vmatpush.msra.mxu0 0.0
    %4178 = vmatpush.msra.mxu0 0.0
    %4179 = vmatpush.msra.mxu0 %v4157
    %4180 = vmatpush.msra.mxu0 %v4153
    %4181 = vmatpush.msra.mxu0 %v4149
    %4182 = vmatpush.msra.mxu0 %v4145
    %4183 = vmatmul.f32.gmra.mxu0 %v4162
    %v4184 = vpop.f32.mrf.mxu0
    %v4185 = vadd.f32 0.0, %v4184
    %4186 = vmatmul.f32.gmra.mxu0 %v4165
    %v4187 = vpop.f32.mrf.mxu0
    %v4188 = vadd.f32 0.0, %v4187
    %4189 = vdwg.mxu0
    %4190 = vmatpush.msra.mxu0 0.0
    %4191 = vmatpush.msra.mxu0 0.0
    %4192 = vmatpush.msra.mxu0 0.0
    %4193 = vmatpush.msra.mxu0 0.0
    %4194 = vmatpush.msra.mxu0 0.0
    %4195 = vmatpush.msra.mxu0 0.0
    %4196 = vmatpush.msra.mxu0 0.0
    %4197 = vmatpush.msra.mxu0 0.0
    %4198 = vmatpush.msra.mxu0 0.0
    %4199 = vmatpush.msra.mxu0 0.0
    %4200 = vmatpush.msra.mxu0 0.0
    %4201 = vmatpush.msra.mxu0 0.0
    %4202 = vmatpush.msra.mxu0 %v4158
    %4203 = vmatpush.msra.mxu0 %v4154
    %4204 = vmatpush.msra.mxu0 %v4150
    %4205 = vmatpush.msra.mxu0 %v4146
    %4206 = vmatmul.f32.gmra.mxu0 %v4162
    %v4207 = vpop.f32.mrf.mxu0
    %v4208 = vadd.f32 0.0, %v4207
    %4209 = vmatmul.f32.gmra.mxu0 %v4165
    %v4210 = vpop.f32.mrf.mxu0
    %v4211 = vadd.f32 0.0, %v4210
    %4212 = vdwg.mxu0
    %4213 = vmatpush.msra.mxu0 0.0
    %4214 = vmatpush.msra.mxu0 0.0
    %4215 = vmatpush.msra.mxu0 0.0
    %4216 = vmatpush.msra.mxu0 0.0
    %4217 = vmatpush.msra.mxu0 0.0
    %4218 = vmatpush.msra.mxu0 0.0
    %4219 = vmatpush.msra.mxu0 0.0
    %4220 = vmatpush.msra.mxu0 0.0
    %4221 = vmatpush.msra.mxu0 0.0
    %4222 = vmatpush.msra.mxu0 0.0
    %4223 = vmatpush.msra.mxu0 0.0
    %4224 = vmatpush.msra.mxu0 0.0
    %4225 = vmatpush.msra.mxu0 %v4159
    %4226 = vmatpush.msra.mxu0 %v4155
    %4227 = vmatpush.msra.mxu0 %v4151
    %4228 = vmatpush.msra.mxu0 %v4147
    %4229 = vmatmul.f32.gmra.mxu0 %v4162
    %v4230 = vpop.f32.mrf.mxu0
    %v4231 = vadd.f32 0.0, %v4230
    %4232 = vmatmul.f32.gmra.mxu0 %v4165
    %v4233 = vpop.f32.mrf.mxu0
    %v4234 = vadd.f32 0.0, %v4233
    %4235 = vdwg.mxu0
    %4236 = vmatpush.msra.mxu0 0.0
    %4237 = vmatpush.msra.mxu0 0.0
    %4238 = vmatpush.msra.mxu0 0.0
    %4239 = vmatpush.msra.mxu0 0.0
    %4240 = vmatpush.msra.mxu0 0.0
    %4241 = vmatpush.msra.mxu0 0.0
    %4242 = vmatpush.msra.mxu0 0.0
    %4243 = vmatpush.msra.mxu0 0.0
    %4244 = vmatpush.msra.mxu0 0.0
    %4245 = vmatpush.msra.mxu0 0.0
    %4246 = vmatpush.msra.mxu0 0.0
    %4247 = vmatpush.msra.mxu0 0.0
    %4248 = vmatpush.msra.mxu0 %v4160
    %4249 = vmatpush.msra.mxu0 %v4156
    %4250 = vmatpush.msra.mxu0 %v4152
    %4251 = vmatpush.msra.mxu0 %v4148
    %4252 = vmatmul.f32.gmra.mxu0 %v4162
    %v4253 = vpop.f32.mrf.mxu0
    %v4254 = vadd.f32 0.0, %v4253
    %4255 = vmatmul.f32.gmra.mxu0 %v4165
    %v4256 = vpop.f32.mrf.mxu0
    %v4257 = vadd.f32 0.0, %v4256
    %4258 = vdwg.mxu0
    %v4259 = vmul.f32 %v4185, %v4185
    %v4260 = vmul.f32 %v4188, %v4188
    %v4261 = vmul.f32 %v4208, %v4208
    %v4262 = vmul.f32 %v4211, %v4211
    %4267 = vrot.lane.b32.xlu0 %v4185, 32
    %v4268 = vpop.permute.xlu0 %4267
    %4269 = vrot.lane.b32.xlu0 %v4208, 32
    %v4270 = vpop.permute.xlu0 %4269
    %4271 = vrot.lane.b32.xlu0 %v4188, 32
    %v4272 = vpop.permute.xlu0 %4271
    %4273 = vrot.lane.b32.xlu0 %v4211, 32
    %v4274 = vpop.permute.xlu0 %4273
    %v4275 = vsel %vm1354, %v4268, %v4270
    %v4276 = vsel %vm1354, %v4272, %v4274
    %v4279 = vmul.f32 %v4185, %v4275
    %v4280 = vmul.f32 %v4188, %v4276
    %4283 = vrot.lane.b32.xlu0 %v4259, 64
    %v4284 = vpop.permute.xlu0 %4283
    %4285 = vrot.lane.b32.xlu0 %v4260, 64
    %v4286 = vpop.permute.xlu0 %4285
    %v4289 = vsub.f32 %v4208, %v4284
    %v4290 = vsub.f32 %v4231, %v4284
    %v4291 = vsub.f32 %v4211, %v4286
    %v4292 = vsub.f32 %v4234, %v4286
    %4295 = vrot.lane.b32.xlu0 %v4261, 64
    %v4296 = vpop.permute.xlu0 %4295
    %4297 = vrot.lane.b32.xlu0 %v4262, 64
    %v4298 = vpop.permute.xlu0 %4297
    %v4299 = vsel %vm2399, %v4284, %v4296
    %v4300 = vsel %vm2399, %v4286, %v4298
    %v4303 = vsub.f32 %v4231, %v4299
    %v4304 = vsub.f32 %v4234, %v4300
    %v4305 = vsub.f32 %v4254, %v4279
    %v4306 = vsub.f32 %v4257, %v4280
    %v4307 = vmul.f32 %v4279, 2.0
    %v4308 = vmul.f32 %v4280, 2.0
    %v4309 = vadd.f32 %v4307, 0.0001
    %v4310 = vadd.f32 %v4308, 0.0001
    %v4311 = vmul.f32 %v4305, 2.0
    %v4312 = vmul.f32 %v4306, 2.0
    %v4313 = vadd.f32 %v4311, 0.0009
    %v4314 = vadd.f32 %v4312, 0.0009
    %v4315 = vmul.f32 %v4309, %v4313
    %v4316 = vmul.f32 %v4310, %v4314
    %4317 = vrot.lane.b32.xlu0 %v4259, 32
    %v4318 = vpop.permute.xlu0 %4317
    %4319 = vrot.lane.b32.xlu0 %v4261, 32
    %v4320 = vpop.permute.xlu0 %4319
    %4321 = vrot.lane.b32.xlu0 %v4260, 32
    %v4322 = vpop.permute.xlu0 %4321
    %4323 = vrot.lane.b32.xlu0 %v4262, 32
    %v4324 = vpop.permute.xlu0 %4323
    %v4325 = vsel %vm1354, %v4318, %v4320
    %v4326 = vsel %vm1354, %v4322, %v4324
    %v4329 = vadd.f32 %v4259, %v4325
    %v4330 = vadd.f32 %v4260, %v4326
    %v4331 = vadd.f32 %v4329, 0.0001
    %v4332 = vadd.f32 %v4330, 0.0001
    %4335 = vrot.lane.b32.xlu0 %v4303, 32
    %v4336 = vpop.permute.xlu0 %4335
    %4337 = vrot.lane.b32.xlu0 %v4304, 32
    %v4338 = vpop.permute.xlu0 %4337
    %v4341 = vadd.f32 %v4289, %v4336
    %v4342 = vadd.f32 %v4290, %v4336
    %v4343 = vadd.f32 %v4291, %v4338
    %v4344 = vadd.f32 %v4292, %v4338
    %v4345 = vadd.f32 %v4341, 0.0009
    %v4346 = vadd.f32 %v4342, 0.0009
    %v4347 = vadd.f32 %v4343, 0.0009
    %v4348 = vadd.f32 %v4344, 0.0009
    %4353 = vrot.lane.b32.xlu0 %v4345, 64
    %v4354 = vpop.permute.xlu0 %4353
    %4355 = vrot.lane.b32.xlu0 %v4346, 64
    %v4356 = vpop.permute.xlu0 %4355
    %4357 = vrot.lane.b32.xlu0 %v4347, 64
    %v4358 = vpop.permute.xlu0 %4357
    %4359 = vrot.lane.b32.xlu0 %v4348, 64
    %v4360 = vpop.permute.xlu0 %4359
    %v4361 = vsel %vm2399, %v4354, %v4356
    %v4362 = vsel %vm2399, %v4358, %v4360
    %v4365 = vmul.f32 %v4331, %v4361
    %v4366 = vmul.f32 %v4332, %v4362
    %v4367 = vrcp.pop %v4365
    %v4368 = vmul.f32 %v4365, %v4367
    %v4369 = vsub.f32 1.0, %v4368
    %v4370 = vmul.f32 %v4367, %v4369
    %v4371 = vadd.f32 %v4367, %v4370
    %vm4372 = vweird.f32 %v4365
    %vm4373 = vweird.f32 %v4367
    %vm4374 = vmor %vm4372, %vm4373
    %v4375 = vsel %vm4374, %v4367, %v4371
    %v4376 = vand.u32 2147483647, %v4365
    %vm4377 = vcmp.eq.f32.partialorder %v4376, 8.507059e+37
    %v4378 = vand.u32 %v4365, 2147483648
    %v4379 = vor.u32 1.1754944e-38, %v4378
    %v4380 = vsel %vm4377, %v4379, %v4375
    %v4381 = vmul.f32 %v4315, %v4380
    %v4382 = vrcp.pop %v4366
    %v4383 = vmul.f32 %v4366, %v4382
    %v4384 = vsub.f32 1.0, %v4383
    %v4385 = vmul.f32 %v4382, %v4384
    %v4386 = vadd.f32 %v4382, %v4385
    %vm4387 = vweird.f32 %v4366
    %vm4388 = vweird.f32 %v4382
    %vm4389 = vmor %vm4387, %vm4388
    %v4390 = vsel %vm4389, %v4382, %v4386
    %v4391 = vand.u32 2147483647, %v4366
    %vm4392 = vcmp.eq.f32.partialorder %v4391, 8.507059e+37
    %v4393 = vand.u32 %v4366, 2147483648
    %v4394 = vor.u32 1.1754944e-38, %v4393
    %v4395 = vsel %vm4392, %v4394, %v4390
    %v4396 = vmul.f32 %v4316, %v4395
    %vm4397 = vcmask 785408
    %v4398 = vsel %vm4397, %v4381, 0.0
    %v4399 = vsel %vm4397, %v4396, 0.0
    %v4400 = vadd.f32 %v4398, %v4399
    %4401 = vadd.xlane.f32.xlu0 %v4400
    %v4402 = vpop.xlane.xlu0 %4401
    %v4403 = vrot.slane %v4402, 4
    %v4404 = vadd.f32 %v4402, %v4403
    %v4405 = vrot.slane %v4404, 2
    %v4406 = vadd.f32 %v4404, %v4405
    %v4407 = vrot.slane %v4406, 1
    %v4408 = vadd.f32 %v4406, %v4407
    %s4409 = vtos %v4408
    %s4410 = smul.f32 %s4409, 0.0006510417
    %s4411 = smul.f32 %s4410, 0.2856
    %s4412 = smul.f32 %s2733, %s4411
    %v4413 = vld [vmem:[%s8] sm:$0xff]
    %v4414 = vld [vmem:[%s8 + $0x8] sm:$0xff]
    %v4415 = vld [vmem:[%s8 + $0x10] sm:$0xff]
    %v4416 = vld [vmem:[%s8 + $0x18] sm:$0xff]
    %v4417 = vld [vmem:[%s8 + $0x20] sm:$0xff]
    %v4418 = vld [vmem:[%s8 + $0x28] sm:$0xff]
    %v4419 = vld [vmem:[%s8 + $0x30] sm:$0xff]
    %v4420 = vld [vmem:[%s8 + $0x38] sm:$0xff]
    %v4421 = vld [vmem:[%s8 + $0x40] sm:$0xff]
    %v4422 = vld [vmem:[%s8 + $0x48] sm:$0xff]
    %v4423 = vld [vmem:[%s8 + $0x50] sm:$0xff]
    %v4424 = vld [vmem:[%s8 + $0x58] sm:$0xff]
    %v4425 = vld [vmem:[%s8 + $0x60] sm:$0xff]
    %v4426 = vld [vmem:[%s8 + $0x68] sm:$0xff]
    %v4427 = vld [vmem:[%s8 + $0x70] sm:$0xff]
    %v4428 = vld [vmem:[%s8 + $0x78] sm:$0xff]
    %v4429 = vld [vmem:[%s8 + $0x80] sm:$0xff]
    %v4430 = vld [vmem:[%s8 + $0x88] sm:$0xff]
    %v4431 = vld [vmem:[%s9] sm:$0xff]
    %v4432 = vld [vmem:[%s9 + $0x8] sm:$0xff]
    %v4433 = vld [vmem:[%s9 + $0x10] sm:$0xff]
    %v4434 = vld [vmem:[%s9 + $0x18] sm:$0xff]
    %v4435 = vld [vmem:[%s9 + $0x20] sm:$0xff]
    %v4436 = vld [vmem:[%s9 + $0x28] sm:$0xff]
    %v4437 = vld [vmem:[%s9 + $0x30] sm:$0xff]
    %v4438 = vld [vmem:[%s9 + $0x38] sm:$0xff]
    %v4439 = vld [vmem:[%s9 + $0x40] sm:$0xff]
    %v4440 = vld [vmem:[%s9 + $0x48] sm:$0xff]
    %v4441 = vld [vmem:[%s9 + $0x50] sm:$0xff]
    %v4442 = vld [vmem:[%s9 + $0x58] sm:$0xff]
    %v4443 = vld [vmem:[%s9 + $0x60] sm:$0xff]
    %v4444 = vld [vmem:[%s9 + $0x68] sm:$0xff]
    %v4445 = vld [vmem:[%s9 + $0x70] sm:$0xff]
    %v4446 = vld [vmem:[%s9 + $0x78] sm:$0xff]
    %v4447 = vld [vmem:[%s9 + $0x80] sm:$0xff]
    %v4448 = vld [vmem:[%s9 + $0x88] sm:$0xff]
    %v4449 = vmul.f32 %v4413, %v4413
    %v4450 = vmul.f32 %v4414, %v4414
    %v4451 = vmul.f32 %v4415, %v4415
    %v4452 = vmul.f32 %v4416, %v4416
    %v4453 = vmul.f32 %v4417, %v4417
    %v4454 = vmul.f32 %v4418, %v4418
    %v4455 = vmul.f32 %v4419, %v4419
    %v4456 = vmul.f32 %v4420, %v4420
    %v4457 = vmul.f32 %v4421, %v4421
    %v4458 = vmul.f32 %v4422, %v4422
    %v4459 = vmul.f32 %v4423, %v4423
    %v4460 = vmul.f32 %v4424, %v4424
    %v4461 = vmul.f32 %v4425, %v4425
    %v4462 = vmul.f32 %v4426, %v4426
    %v4463 = vmul.f32 %v4427, %v4427
    %v4464 = vmul.f32 %v4428, %v4428
    %v4465 = vmul.f32 %v4429, %v4429
    %v4466 = vmul.f32 %v4430, %v4430
    %v4467 = vmul.f32 %v4431, %v4431
    %v4468 = vmul.f32 %v4432, %v4432
    %v4469 = vmul.f32 %v4433, %v4433
    %v4470 = vmul.f32 %v4434, %v4434
    %v4471 = vmul.f32 %v4435, %v4435
    %v4472 = vmul.f32 %v4436, %v4436
    %v4473 = vmul.f32 %v4437, %v4437
    %v4474 = vmul.f32 %v4438, %v4438
    %v4475 = vmul.f32 %v4439, %v4439
    %v4476 = vmul.f32 %v4440, %v4440
    %v4477 = vmul.f32 %v4441, %v4441
    %v4478 = vmul.f32 %v4442, %v4442
    %v4479 = vmul.f32 %v4443, %v4443
    %v4480 = vmul.f32 %v4444, %v4444
    %v4481 = vmul.f32 %v4445, %v4445
    %v4482 = vmul.f32 %v4446, %v4446
    %v4483 = vmul.f32 %v4447, %v4447
    %v4484 = vmul.f32 %v4448, %v4448
    %v4485 = vmul.f32 %v4413, %v4431
    %v4486 = vmul.f32 %v4414, %v4432
    %v4487 = vmul.f32 %v4415, %v4433
    %v4488 = vmul.f32 %v4416, %v4434
    %v4489 = vmul.f32 %v4417, %v4435
    %v4490 = vmul.f32 %v4418, %v4436
    %v4491 = vmul.f32 %v4419, %v4437
    %v4492 = vmul.f32 %v4420, %v4438
    %v4493 = vmul.f32 %v4421, %v4439
    %v4494 = vmul.f32 %v4422, %v4440
    %v4495 = vmul.f32 %v4423, %v4441
    %v4496 = vmul.f32 %v4424, %v4442
    %v4497 = vmul.f32 %v4425, %v4443
    %v4498 = vmul.f32 %v4426, %v4444
    %v4499 = vmul.f32 %v4427, %v4445
    %v4500 = vmul.f32 %v4428, %v4446
    %v4501 = vmul.f32 %v4429, %v4447
    %v4502 = vmul.f32 %v4430, %v4448
    %v4503 = vld [vmem:[%s10] sm:$0xff]
    %v4504 = vld [vmem:[%s10 + $0x8] sm:$0xff]
    %v4505 = vld [vmem:[%s10 + $0x10] sm:$0x3]
    %vm4506 = vcmask 146432
    %v4508 = vsel %vm4506, %v4413, 0
    %v4511 = vsel %vm4506, %v4414, 0
    %v4514 = vsel %vm4506, %v4415, 0
    %v4517 = vsel %vm4506, %v4416, 0
    %v4520 = vsel %vm4506, %v4417, 0
    %v4523 = vsel %vm4506, %v4418, 0
    %v4526 = vsel %vm4506, %v4419, 0
    %v4529 = vsel %vm4506, %v4420, 0
    %v4532 = vsel %vm4506, %v4421, 0
    %v4535 = vsel %vm4506, %v4422, 0
    %v4538 = vsel %vm4506, %v4423, 0
    %v4541 = vsel %vm4506, %v4424, 0
    %v4544 = vsel %vm4506, %v4425, 0
    %v4547 = vsel %vm4506, %v4426, 0
    %v4550 = vsel %vm4506, %v4427, 0
    %v4553 = vsel %vm4506, %v4428, 0
    %v4556 = vsel %vm4506, %v4429, 0
    %v4559 = vsel %vm4506, %v4430, 0
    %v4562 = vsel %vm4506, %v4431, 0
    %v4565 = vsel %vm4506, %v4432, 0
    %v4568 = vsel %vm4506, %v4433, 0
    %v4571 = vsel %vm4506, %v4434, 0
    %v4574 = vsel %vm4506, %v4435, 0
    %v4577 = vsel %vm4506, %v4436, 0
    %v4580 = vsel %vm4506, %v4437, 0
    %v4583 = vsel %vm4506, %v4438, 0
    %v4586 = vsel %vm4506, %v4439, 0
    %v4589 = vsel %vm4506, %v4440, 0
    %v4592 = vsel %vm4506, %v4441, 0
    %v4595 = vsel %vm4506, %v4442, 0
    %v4598 = vsel %vm4506, %v4443, 0
    %v4601 = vsel %vm4506, %v4444, 0
    %v4604 = vsel %vm4506, %v4445, 0
    %v4607 = vsel %vm4506, %v4446, 0
    %v4610 = vsel %vm4506, %v4447, 0
    %v4613 = vsel %vm4506, %v4448, 0
    %v4616 = vsel %vm4506, %v4449, 0
    %v4619 = vsel %vm4506, %v4450, 0
    %v4622 = vsel %vm4506, %v4451, 0
    %v4625 = vsel %vm4506, %v4452, 0
    %v4628 = vsel %vm4506, %v4453, 0
    %v4631 = vsel %vm4506, %v4454, 0
    %v4634 = vsel %vm4506, %v4455, 0
    %v4637 = vsel %vm4506, %v4456, 0
    %v4640 = vsel %vm4506, %v4457, 0
    %v4643 = vsel %vm4506, %v4458, 0
    %v4646 = vsel %vm4506, %v4459, 0
    %v4649 = vsel %vm4506, %v4460, 0
    %v4652 = vsel %vm4506, %v4461, 0
    %v4655 = vsel %vm4506, %v4462, 0
    %v4658 = vsel %vm4506, %v4463, 0
    %v4661 = vsel %vm4506, %v4464, 0
    %v4664 = vsel %vm4506, %v4465, 0
    %v4667 = vsel %vm4506, %v4466, 0
    %v4670 = vsel %vm4506, %v4467, 0
    %v4673 = vsel %vm4506, %v4468, 0
    %v4676 = vsel %vm4506, %v4469, 0
    %v4679 = vsel %vm4506, %v4470, 0
    %v4682 = vsel %vm4506, %v4471, 0
    %v4685 = vsel %vm4506, %v4472, 0
    %v4688 = vsel %vm4506, %v4473, 0
    %v4691 = vsel %vm4506, %v4474, 0
    %v4694 = vsel %vm4506, %v4475, 0
    %v4697 = vsel %vm4506, %v4476, 0
    %v4700 = vsel %vm4506, %v4477, 0
    %v4703 = vsel %vm4506, %v4478, 0
    %v4706 = vsel %vm4506, %v4479, 0
    %v4709 = vsel %vm4506, %v4480, 0
    %v4712 = vsel %vm4506, %v4481, 0
    %v4715 = vsel %vm4506, %v4482, 0
    %v4718 = vsel %vm4506, %v4483, 0
    %v4721 = vsel %vm4506, %v4484, 0
    %v4724 = vsel %vm4506, %v4485, 0
    %v4727 = vsel %vm4506, %v4486, 0
    %v4730 = vsel %vm4506, %v4487, 0
    %v4733 = vsel %vm4506, %v4488, 0
    %v4736 = vsel %vm4506, %v4489, 0
    %v4739 = vsel %vm4506, %v4490, 0
    %v4742 = vsel %vm4506, %v4491, 0
    %v4745 = vsel %vm4506, %v4492, 0
    %v4748 = vsel %vm4506, %v4493, 0
    %v4751 = vsel %vm4506, %v4494, 0
    %v4754 = vsel %vm4506, %v4495, 0
    %v4757 = vsel %vm4506, %v4496, 0
    %v4760 = vsel %vm4506, %v4497, 0
    %v4763 = vsel %vm4506, %v4498, 0
    %v4766 = vsel %vm4506, %v4499, 0
    %v4769 = vsel %vm4506, %v4500, 0
    %v4772 = vsel %vm4506, %v4501, 0
    %v4775 = vsel %vm4506, %v4502, 0
    %v4778 = vsel %vm793, %v4505, 0
    %4780 = vmatpush.msra.mxu0 0.0
    %4781 = vmatpush.msra.mxu0 0.0
    %4782 = vmatpush.msra.mxu0 0.0
    %4783 = vmatpush.msra.mxu0 0.0
    %4784 = vmatpush.msra.mxu0 0.0
    %4785 = vmatpush.msra.mxu0 0.0
    %4786 = vmatpush.msra.mxu0 0.0
    %4787 = vmatpush.msra.mxu0 0.0
    %4788 = vmatpush.msra.mxu0 0.0
    %4789 = vmatpush.msra.mxu0 0.0
    %4790 = vmatpush.msra.mxu0 0.0
    %4791 = vmatpush.msra.mxu0 0.0
    %4792 = vmatpush.msra.mxu0 0.0
    %4793 = vmatpush.msra.mxu0 %v4778
    %4794 = vmatpush.msra.mxu0 %v4504
    %4795 = vmatpush.msra.mxu0 %v4503
    %4796 = vmatmul.f32.gmra.mxu0 %v4508
    %v4797 = vpop.f32.mrf.mxu0
    %v4798 = vadd.f32 0.0, %v4797
    %4799 = vmatmul.f32.gmra.mxu0 %v4511
    %v4800 = vpop.f32.mrf.mxu0
    %v4801 = vadd.f32 0.0, %v4800
    %4802 = vmatmul.f32.gmra.mxu0 %v4514
    %v4803 = vpop.f32.mrf.mxu0
    %v4804 = vadd.f32 0.0, %v4803
    %4805 = vmatmul.f32.gmra.mxu0 %v4517
    %v4806 = vpop.f32.mrf.mxu0
    %v4807 = vadd.f32 0.0, %v4806
    %4808 = vmatmul.f32.gmra.mxu0 %v4520
    %v4809 = vpop.f32.mrf.mxu0
    %v4810 = vadd.f32 0.0, %v4809
    %4811 = vmatmul.f32.gmra.mxu0 %v4523
    %v4812 = vpop.f32.mrf.mxu0
    %v4813 = vadd.f32 0.0, %v4812
    %4814 = vmatmul.f32.gmra.mxu0 %v4526
    %v4815 = vpop.f32.mrf.mxu0
    %v4816 = vadd.f32 0.0, %v4815
    %4817 = vmatmul.f32.gmra.mxu0 %v4529
    %v4818 = vpop.f32.mrf.mxu0
    %v4819 = vadd.f32 0.0, %v4818
    %4820 = vmatmul.f32.gmra.mxu0 %v4532
    %v4821 = vpop.f32.mrf.mxu0
    %v4822 = vadd.f32 0.0, %v4821
    %4823 = vmatmul.f32.gmra.mxu0 %v4535
    %v4824 = vpop.f32.mrf.mxu0
    %v4825 = vadd.f32 0.0, %v4824
    %4826 = vmatmul.f32.gmra.mxu0 %v4538
    %v4827 = vpop.f32.mrf.mxu0
    %v4828 = vadd.f32 0.0, %v4827
    %4829 = vmatmul.f32.gmra.mxu0 %v4541
    %v4830 = vpop.f32.mrf.mxu0
    %v4831 = vadd.f32 0.0, %v4830
    %4832 = vmatmul.f32.gmra.mxu0 %v4544
    %v4833 = vpop.f32.mrf.mxu0
    %v4834 = vadd.f32 0.0, %v4833
    %4835 = vmatmul.f32.gmra.mxu0 %v4547
    %v4836 = vpop.f32.mrf.mxu0
    %v4837 = vadd.f32 0.0, %v4836
    %4838 = vmatmul.f32.gmra.mxu0 %v4550
    %v4839 = vpop.f32.mrf.mxu0
    %v4840 = vadd.f32 0.0, %v4839
    %4841 = vmatmul.f32.gmra.mxu0 %v4553
    %v4842 = vpop.f32.mrf.mxu0
    %v4843 = vadd.f32 0.0, %v4842
    %4844 = vmatmul.f32.gmra.mxu0 %v4556
    %v4845 = vpop.f32.mrf.mxu0
    %v4846 = vadd.f32 0.0, %v4845
    %4847 = vmatmul.f32.gmra.mxu0 %v4559
    %v4848 = vpop.f32.mrf.mxu0
    %v4849 = vadd.f32 0.0, %v4848
    %4850 = vmatmul.f32.gmra.mxu0 %v4562
    %v4851 = vpop.f32.mrf.mxu0
    %v4852 = vadd.f32 0.0, %v4851
    %4853 = vmatmul.f32.gmra.mxu0 %v4565
    %v4854 = vpop.f32.mrf.mxu0
    %v4855 = vadd.f32 0.0, %v4854
    %4856 = vmatmul.f32.gmra.mxu0 %v4568
    %v4857 = vpop.f32.mrf.mxu0
    %v4858 = vadd.f32 0.0, %v4857
    %4859 = vmatmul.f32.gmra.mxu0 %v4571
    %v4860 = vpop.f32.mrf.mxu0
    %v4861 = vadd.f32 0.0, %v4860
    %4862 = vmatmul.f32.gmra.mxu0 %v4574
    %v4863 = vpop.f32.mrf.mxu0
    %v4864 = vadd.f32 0.0, %v4863
    %4865 = vmatmul.f32.gmra.mxu0 %v4577
    %v4866 = vpop.f32.mrf.mxu0
    %v4867 = vadd.f32 0.0, %v4866
    %4868 = vmatmul.f32.gmra.mxu0 %v4580
    %v4869 = vpop.f32.mrf.mxu0
    %v4870 = vadd.f32 0.0, %v4869
    %4871 = vmatmul.f32.gmra.mxu0 %v4583
    %v4872 = vpop.f32.mrf.mxu0
    %v4873 = vadd.f32 0.0, %v4872
    %4874 = vmatmul.f32.gmra.mxu0 %v4586
    %v4875 = vpop.f32.mrf.mxu0
    %v4876 = vadd.f32 0.0, %v4875
    %4877 = vmatmul.f32.gmra.mxu0 %v4589
    %v4878 = vpop.f32.mrf.mxu0
    %v4879 = vadd.f32 0.0, %v4878
    %4880 = vmatmul.f32.gmra.mxu0 %v4592
    %v4881 = vpop.f32.mrf.mxu0
    %v4882 = vadd.f32 0.0, %v4881
    %4883 = vmatmul.f32.gmra.mxu0 %v4595
    %v4884 = vpop.f32.mrf.mxu0
    %v4885 = vadd.f32 0.0, %v4884
    %4886 = vmatmul.f32.gmra.mxu0 %v4598
    %v4887 = vpop.f32.mrf.mxu0
    %v4888 = vadd.f32 0.0, %v4887
    %4889 = vmatmul.f32.gmra.mxu0 %v4601
    %v4890 = vpop.f32.mrf.mxu0
    %v4891 = vadd.f32 0.0, %v4890
    %4892 = vmatmul.f32.gmra.mxu0 %v4604
    %v4893 = vpop.f32.mrf.mxu0
    %v4894 = vadd.f32 0.0, %v4893
    %4895 = vmatmul.f32.gmra.mxu0 %v4607
    %v4896 = vpop.f32.mrf.mxu0
    %v4897 = vadd.f32 0.0, %v4896
    %4898 = vmatmul.f32.gmra.mxu0 %v4610
    %v4899 = vpop.f32.mrf.mxu0
    %v4900 = vadd.f32 0.0, %v4899
    %4901 = vmatmul.f32.gmra.mxu0 %v4613
    %v4902 = vpop.f32.mrf.mxu0
    %v4903 = vadd.f32 0.0, %v4902
    %4904 = vmatmul.f32.gmra.mxu0 %v4616
    %v4905 = vpop.f32.mrf.mxu0
    %v4906 = vadd.f32 0.0, %v4905
    %4907 = vmatmul.f32.gmra.mxu0 %v4619
    %v4908 = vpop.f32.mrf.mxu0
    %v4909 = vadd.f32 0.0, %v4908
    %4910 = vmatmul.f32.gmra.mxu0 %v4622
    %v4911 = vpop.f32.mrf.mxu0
    %v4912 = vadd.f32 0.0, %v4911
    %4913 = vmatmul.f32.gmra.mxu0 %v4625
    %v4914 = vpop.f32.mrf.mxu0
    %v4915 = vadd.f32 0.0, %v4914
    %4916 = vmatmul.f32.gmra.mxu0 %v4628
    %v4917 = vpop.f32.mrf.mxu0
    %v4918 = vadd.f32 0.0, %v4917
    %4919 = vmatmul.f32.gmra.mxu0 %v4631
    %v4920 = vpop.f32.mrf.mxu0
    %v4921 = vadd.f32 0.0, %v4920
    %4922 = vmatmul.f32.gmra.mxu0 %v4634
    %v4923 = vpop.f32.mrf.mxu0
    %v4924 = vadd.f32 0.0, %v4923
    %4925 = vmatmul.f32.gmra.mxu0 %v4637
    %v4926 = vpop.f32.mrf.mxu0
    %v4927 = vadd.f32 0.0, %v4926
    %4928 = vmatmul.f32.gmra.mxu0 %v4640
    %v4929 = vpop.f32.mrf.mxu0
    %v4930 = vadd.f32 0.0, %v4929
    %4931 = vmatmul.f32.gmra.mxu0 %v4643
    %v4932 = vpop.f32.mrf.mxu0
    %v4933 = vadd.f32 0.0, %v4932
    %4934 = vmatmul.f32.gmra.mxu0 %v4646
    %v4935 = vpop.f32.mrf.mxu0
    %v4936 = vadd.f32 0.0, %v4935
    %4937 = vmatmul.f32.gmra.mxu0 %v4649
    %v4938 = vpop.f32.mrf.mxu0
    %v4939 = vadd.f32 0.0, %v4938
    %4940 = vmatmul.f32.gmra.mxu0 %v4652
    %v4941 = vpop.f32.mrf.mxu0
    %v4942 = vadd.f32 0.0, %v4941
    %4943 = vmatmul.f32.gmra.mxu0 %v4655
    %v4944 = vpop.f32.mrf.mxu0
    %v4945 = vadd.f32 0.0, %v4944
    %4946 = vmatmul.f32.gmra.mxu0 %v4658
    %v4947 = vpop.f32.mrf.mxu0
    %v4948 = vadd.f32 0.0, %v4947
    %4949 = vmatmul.f32.gmra.mxu0 %v4661
    %v4950 = vpop.f32.mrf.mxu0
    %v4951 = vadd.f32 0.0, %v4950
    %4952 = vmatmul.f32.gmra.mxu0 %v4664
    %v4953 = vpop.f32.mrf.mxu0
    %v4954 = vadd.f32 0.0, %v4953
    %4955 = vmatmul.f32.gmra.mxu0 %v4667
    %v4956 = vpop.f32.mrf.mxu0
    %v4957 = vadd.f32 0.0, %v4956
    %4958 = vmatmul.f32.gmra.mxu0 %v4670
    %v4959 = vpop.f32.mrf.mxu0
    %v4960 = vadd.f32 0.0, %v4959
    %4961 = vmatmul.f32.gmra.mxu0 %v4673
    %v4962 = vpop.f32.mrf.mxu0
    %v4963 = vadd.f32 0.0, %v4962
    %4964 = vmatmul.f32.gmra.mxu0 %v4676
    %v4965 = vpop.f32.mrf.mxu0
    %v4966 = vadd.f32 0.0, %v4965
    %4967 = vmatmul.f32.gmra.mxu0 %v4679
    %v4968 = vpop.f32.mrf.mxu0
    %v4969 = vadd.f32 0.0, %v4968
    %4970 = vmatmul.f32.gmra.mxu0 %v4682
    %v4971 = vpop.f32.mrf.mxu0
    %v4972 = vadd.f32 0.0, %v4971
    %4973 = vmatmul.f32.gmra.mxu0 %v4685
    %v4974 = vpop.f32.mrf.mxu0
    %v4975 = vadd.f32 0.0, %v4974
    %4976 = vmatmul.f32.gmra.mxu0 %v4688
    %v4977 = vpop.f32.mrf.mxu0
    %v4978 = vadd.f32 0.0, %v4977
    %4979 = vmatmul.f32.gmra.mxu0 %v4691
    %v4980 = vpop.f32.mrf.mxu0
    %v4981 = vadd.f32 0.0, %v4980
    %4982 = vmatmul.f32.gmra.mxu0 %v4694
    %v4983 = vpop.f32.mrf.mxu0
    %v4984 = vadd.f32 0.0, %v4983
    %4985 = vmatmul.f32.gmra.mxu0 %v4697
    %v4986 = vpop.f32.mrf.mxu0
    %v4987 = vadd.f32 0.0, %v4986
    %4988 = vmatmul.f32.gmra.mxu0 %v4700
    %v4989 = vpop.f32.mrf.mxu0
    %v4990 = vadd.f32 0.0, %v4989
    %4991 = vmatmul.f32.gmra.mxu0 %v4703
    %v4992 = vpop.f32.mrf.mxu0
    %v4993 = vadd.f32 0.0, %v4992
    %4994 = vmatmul.f32.gmra.mxu0 %v4706
    %v4995 = vpop.f32.mrf.mxu0
    %v4996 = vadd.f32 0.0, %v4995
    %4997 = vmatmul.f32.gmra.mxu0 %v4709
    %v4998 = vpop.f32.mrf.mxu0
    %v4999 = vadd.f32 0.0, %v4998
    %5000 = vmatmul.f32.gmra.mxu0 %v4712
    %v5001 = vpop.f32.mrf.mxu0
    %v5002 = vadd.f32 0.0, %v5001
    %5003 = vmatmul.f32.gmra.mxu0 %v4715
    %v5004 = vpop.f32.mrf.mxu0
    %v5005 = vadd.f32 0.0, %v5004
    %5006 = vmatmul.f32.gmra.mxu0 %v4718
    %v5007 = vpop.f32.mrf.mxu0
    %v5008 = vadd.f32 0.0, %v5007
    %5009 = vmatmul.f32.gmra.mxu0 %v4721
    %v5010 = vpop.f32.mrf.mxu0
    %v5011 = vadd.f32 0.0, %v5010
    %5012 = vmatmul.f32.gmra.mxu0 %v4724
    %v5013 = vpop.f32.mrf.mxu0
    %v5014 = vadd.f32 0.0, %v5013
    %5015 = vmatmul.f32.gmra.mxu0 %v4727
    %v5016 = vpop.f32.mrf.mxu0
    %v5017 = vadd.f32 0.0, %v5016
    %5018 = vmatmul.f32.gmra.mxu0 %v4730
    %v5019 = vpop.f32.mrf.mxu0
    %v5020 = vadd.f32 0.0, %v5019
    %5021 = vmatmul.f32.gmra.mxu0 %v4733
    %v5022 = vpop.f32.mrf.mxu0
    %v5023 = vadd.f32 0.0, %v5022
    %5024 = vmatmul.f32.gmra.mxu0 %v4736
    %v5025 = vpop.f32.mrf.mxu0
    %v5026 = vadd.f32 0.0, %v5025
    %5027 = vmatmul.f32.gmra.mxu0 %v4739
    %v5028 = vpop.f32.mrf.mxu0
    %v5029 = vadd.f32 0.0, %v5028
    %5030 = vmatmul.f32.gmra.mxu0 %v4742
    %v5031 = vpop.f32.mrf.mxu0
    %v5032 = vadd.f32 0.0, %v5031
    %5033 = vmatmul.f32.gmra.mxu0 %v4745
    %v5034 = vpop.f32.mrf.mxu0
    %v5035 = vadd.f32 0.0, %v5034
    %5036 = vmatmul.f32.gmra.mxu0 %v4748
    %v5037 = vpop.f32.mrf.mxu0
    %v5038 = vadd.f32 0.0, %v5037
    %5039 = vmatmul.f32.gmra.mxu0 %v4751
    %v5040 = vpop.f32.mrf.mxu0
    %v5041 = vadd.f32 0.0, %v5040
    %5042 = vmatmul.f32.gmra.mxu0 %v4754
    %v5043 = vpop.f32.mrf.mxu0
    %v5044 = vadd.f32 0.0, %v5043
    %5045 = vmatmul.f32.gmra.mxu0 %v4757
    %v5046 = vpop.f32.mrf.mxu0
    %v5047 = vadd.f32 0.0, %v5046
    %5048 = vmatmul.f32.gmra.mxu0 %v4760
    %v5049 = vpop.f32.mrf.mxu0
    %v5050 = vadd.f32 0.0, %v5049
    %5051 = vmatmul.f32.gmra.mxu0 %v4763
    %v5052 = vpop.f32.mrf.mxu0
    %v5053 = vadd.f32 0.0, %v5052
    %5054 = vmatmul.f32.gmra.mxu0 %v4766
    %v5055 = vpop.f32.mrf.mxu0
    %v5056 = vadd.f32 0.0, %v5055
    %5057 = vmatmul.f32.gmra.mxu0 %v4769
    %v5058 = vpop.f32.mrf.mxu0
    %v5059 = vadd.f32 0.0, %v5058
    %5060 = vmatmul.f32.gmra.mxu0 %v4772
    %v5061 = vpop.f32.mrf.mxu0
    %v5062 = vadd.f32 0.0, %v5061
    %5063 = vmatmul.f32.gmra.mxu0 %v4775
    %v5064 = vpop.f32.mrf.mxu0
    %v5065 = vadd.f32 0.0, %v5064
    %5066 = vdwg.mxu0
    %vm5067 = vcmask 64512
    %5068 = vst.msk [vmem:[#allocation4] sm:$0xff] %vm5067, %v4798
    %5069 = vst.msk [vmem:[#allocation4 + $0x10] sm:$0xff] %vm5067, %v4801
    %5070 = vst.msk [vmem:[#allocation4 + $0x20] sm:$0xff] %vm5067, %v4804
    %5074 = vrot.lane.b32.xlu0 %v4807, 8
    %v5075 = vpop.permute.xlu0 %5074
    %5076 = vrot.lane.b32.xlu0 %v4810, 8
    %v5077 = vpop.permute.xlu0 %5076
    %5078 = vrot.lane.b32.xlu0 %v4813, 8
    %v5079 = vpop.permute.xlu0 %5078
    %vm5083 = vcmask 130112
    %5084 = vst.msk [vmem:[#allocation4] sm:$0xff] %vm5083, %v5075
    %5085 = vst.msk [vmem:[#allocation4 + $0x10] sm:$0xff] %vm5083, %v5077
    %5086 = vst.msk [vmem:[#allocation4 + $0x20] sm:$0xff] %vm5083, %v5079
    %5090 = vrot.lane.b32.xlu0 %v4816, 16
    %v5091 = vpop.permute.xlu0 %5090
    %5092 = vrot.lane.b32.xlu0 %v4819, 16
    %v5093 = vpop.permute.xlu0 %5092
    %5094 = vrot.lane.b32.xlu0 %v4822, 16
    %v5095 = vpop.permute.xlu0 %5094
    %vm5099 = vcmask 195712
    %5100 = vst.msk [vmem:[#allocation4] sm:$0xff] %vm5099, %v5091
    %5101 = vst.msk [vmem:[#allocation4 + $0x10] sm:$0xff] %vm5099, %v5093
    %5102 = vst.msk [vmem:[#allocation4 + $0x20] sm:$0xff] %vm5099, %v5095
    %5106 = vrot.lane.b32.xlu0 %v4825, 24
    %v5107 = vpop.permute.xlu0 %5106
    %5108 = vrot.lane.b32.xlu0 %v4828, 24
    %v5109 = vpop.permute.xlu0 %5108
    %5110 = vrot.lane.b32.xlu0 %v4831, 24
    %v5111 = vpop.permute.xlu0 %5110
    %vm5115 = vcmask 261312
    %5116 = vst.msk [vmem:[#allocation4] sm:$0xff] %vm5115, %v5107
    %5117 = vst.msk [vmem:[#allocation4 + $0x10] sm:$0xff] %vm5115, %v5109
    %5118 = vst.msk [vmem:[#allocation4 + $0x20] sm:$0xff] %vm5115, %v5111
    %5122 = vrot.lane.b32.xlu0 %v4834, 32
    %v5123 = vpop.permute.xlu0 %5122
    %5124 = vrot.lane.b32.xlu0 %v4837, 32
    %v5125 = vpop.permute.xlu0 %5124
    %5126 = vrot.lane.b32.xlu0 %v4840, 32
    %v5127 = vpop.permute.xlu0 %5126
    %vm5131 = vcmask 326912
    %5132 = vst.msk [vmem:[#allocation4] sm:$0xff] %vm5131, %v5123
    %5133 = vst.msk [vmem:[#allocation4 + $0x10] sm:$0xff] %vm5131, %v5125
    %5134 = vst.msk [vmem:[#allocation4 + $0x20] sm:$0xff] %vm5131, %v5127
    %5138 = vrot.lane.b32.xlu0 %v4843, 40
    %v5139 = vpop.permute.xlu0 %5138
    %5140 = vrot.lane.b32.xlu0 %v4846, 40
    %v5141 = vpop.permute.xlu0 %5140
    %5142 = vrot.lane.b32.xlu0 %v4849, 40
    %v5143 = vpop.permute.xlu0 %5142
    %vm5147 = vcmask 392512
    %5148 = vst.msk [vmem:[#allocation4] sm:$0xff] %vm5147, %v5139
    %5149 = vst.msk [vmem:[#allocation4 + $0x10] sm:$0xff] %vm5147, %v5141
    %5150 = vst.msk [vmem:[#allocation4 + $0x20] sm:$0xff] %vm5147, %v5143
    %5154 = vrot.lane.b32.xlu0 %v4852, 48
    %v5155 = vpop.permute.xlu0 %5154
    %5156 = vrot.lane.b32.xlu0 %v4855, 48
    %v5157 = vpop.permute.xlu0 %5156
    %5158 = vrot.lane.b32.xlu0 %v4858, 48
    %v5159 = vpop.permute.xlu0 %5158
    %vm5163 = vcmask 458112
    %5164 = vst.msk [vmem:[#allocation4] sm:$0xff] %vm5163, %v5155
    %5165 = vst.msk [vmem:[#allocation4 + $0x10] sm:$0xff] %vm5163, %v5157
    %5166 = vst.msk [vmem:[#allocation4 + $0x20] sm:$0xff] %vm5163, %v5159
    %5170 = vrot.lane.b32.xlu0 %v4861, 56
    %v5171 = vpop.permute.xlu0 %5170
    %5172 = vrot.lane.b32.xlu0 %v4864, 56
    %v5173 = vpop.permute.xlu0 %5172
    %5174 = vrot.lane.b32.xlu0 %v4867, 56
    %v5175 = vpop.permute.xlu0 %5174
    %vm5179 = vcmask 523712
    %5180 = vst.msk [vmem:[#allocation4] sm:$0xff] %vm5179, %v5171
    %5181 = vst.msk [vmem:[#allocation4 + $0x10] sm:$0xff] %vm5179, %v5173
    %5182 = vst.msk [vmem:[#allocation4 + $0x20] sm:$0xff] %vm5179, %v5175
    %5186 = vrot.lane.b32.xlu0 %v4870, 64
    %v5187 = vpop.permute.xlu0 %5186
    %5188 = vrot.lane.b32.xlu0 %v4873, 64
    %v5189 = vpop.permute.xlu0 %5188
    %5190 = vrot.lane.b32.xlu0 %v4876, 64
    %v5191 = vpop.permute.xlu0 %5190
    %vm5195 = vcmask 589312
    %5196 = vst.msk [vmem:[#allocation4] sm:$0xff] %vm5195, %v5187
    %5197 = vst.msk [vmem:[#allocation4 + $0x10] sm:$0xff] %vm5195, %v5189
    %5198 = vst.msk [vmem:[#allocation4 + $0x20] sm:$0xff] %vm5195, %v5191
    %5202 = vrot.lane.b32.xlu0 %v4879, 72
    %v5203 = vpop.permute.xlu0 %5202
    %5204 = vrot.lane.b32.xlu0 %v4882, 72
    %v5205 = vpop.permute.xlu0 %5204
    %5206 = vrot.lane.b32.xlu0 %v4885, 72
    %v5207 = vpop.permute.xlu0 %5206
    %vm5211 = vcmask 654912
    %5212 = vst.msk [vmem:[#allocation4] sm:$0xff] %vm5211, %v5203
    %5213 = vst.msk [vmem:[#allocation4 + $0x10] sm:$0xff] %vm5211, %v5205
    %5214 = vst.msk [vmem:[#allocation4 + $0x20] sm:$0xff] %vm5211, %v5207
    %5218 = vrot.lane.b32.xlu0 %v4888, 80
    %v5219 = vpop.permute.xlu0 %5218
    %5220 = vrot.lane.b32.xlu0 %v4891, 80
    %v5221 = vpop.permute.xlu0 %5220
    %5222 = vrot.lane.b32.xlu0 %v4894, 80
    %v5223 = vpop.permute.xlu0 %5222
    %vm5227 = vcmask 720512
    %5228 = vst.msk [vmem:[#allocation4] sm:$0xff] %vm5227, %v5219
    %5229 = vst.msk [vmem:[#allocation4 + $0x10] sm:$0xff] %vm5227, %v5221
    %5230 = vst.msk [vmem:[#allocation4 + $0x20] sm:$0xff] %vm5227, %v5223
    %5234 = vrot.lane.b32.xlu0 %v4897, 88
    %v5235 = vpop.permute.xlu0 %5234
    %5236 = vrot.lane.b32.xlu0 %v4900, 88
    %v5237 = vpop.permute.xlu0 %5236
    %5238 = vrot.lane.b32.xlu0 %v4903, 88
    %v5239 = vpop.permute.xlu0 %5238
    %vm5243 = vcmask 786112
    %5244 = vst.msk [vmem:[#allocation4] sm:$0xff] %vm5243, %v5235
    %5245 = vst.msk [vmem:[#allocation4 + $0x10] sm:$0xff] %vm5243, %v5237
    %5246 = vst.msk [vmem:[#allocation4 + $0x20] sm:$0xff] %vm5243, %v5239
    %5250 = vrot.lane.b32.xlu0 %v4906, 96
    %v5251 = vpop.permute.xlu0 %5250
    %5252 = vrot.lane.b32.xlu0 %v4909, 96
    %v5253 = vpop.permute.xlu0 %5252
    %5254 = vrot.lane.b32.xlu0 %v4912, 96
    %v5255 = vpop.permute.xlu0 %5254
    %vm5259 = vcmask 851712
    %5260 = vst.msk [vmem:[#allocation4] sm:$0xff] %vm5259, %v5251
    %5261 = vst.msk [vmem:[#allocation4 + $0x10] sm:$0xff] %vm5259, %v5253
    %5262 = vst.msk [vmem:[#allocation4 + $0x20] sm:$0xff] %vm5259, %v5255
    %5266 = vrot.lane.b32.xlu0 %v4915, 104
    %v5267 = vpop.permute.xlu0 %5266
    %5268 = vrot.lane.b32.xlu0 %v4918, 104
    %v5269 = vpop.permute.xlu0 %5268
    %5270 = vrot.lane.b32.xlu0 %v4921, 104
    %v5271 = vpop.permute.xlu0 %5270
    %vm5275 = vcmask 917312
    %5276 = vst.msk [vmem:[#allocation4] sm:$0xff] %vm5275, %v5267
    %5277 = vst.msk [vmem:[#allocation4 + $0x10] sm:$0xff] %vm5275, %v5269
    %5278 = vst.msk [vmem:[#allocation4 + $0x20] sm:$0xff] %vm5275, %v5271
    %5282 = vrot.lane.b32.xlu0 %v4924, 112
    %v5283 = vpop.permute.xlu0 %5282
    %5284 = vrot.lane.b32.xlu0 %v4927, 112
    %v5285 = vpop.permute.xlu0 %5284
    %5286 = vrot.lane.b32.xlu0 %v4930, 112
    %v5287 = vpop.permute.xlu0 %5286
    %vm5291 = vcmask 982912
    %5292 = vst.msk [vmem:[#allocation4] sm:$0xff] %vm5291, %v5283
    %5293 = vst.msk [vmem:[#allocation4 + $0x10] sm:$0xff] %vm5291, %v5285
    %5294 = vst.msk [vmem:[#allocation4 + $0x20] sm:$0xff] %vm5291, %v5287
    %5298 = vrot.lane.b32.xlu0 %v4933, 120
    %v5299 = vpop.permute.xlu0 %5298
    %5300 = vrot.lane.b32.xlu0 %v4936, 120
    %v5301 = vpop.permute.xlu0 %5300
    %5302 = vrot.lane.b32.xlu0 %v4939, 120
    %v5303 = vpop.permute.xlu0 %5302
    %vm5307 = vcmask 1048512
    %5308 = vst.msk [vmem:[#allocation4] sm:$0xff] %vm5307, %v5299
    %5309 = vst.msk [vmem:[#allocation4 + $0x10] sm:$0xff] %vm5307, %v5301
    %5310 = vst.msk [vmem:[#allocation4 + $0x20] sm:$0xff] %vm5307, %v5303
    %5311 = vst.msk [vmem:[#allocation4 + $0x8] sm:$0xff] %vm5067, %v4942
    %5312 = vst.msk [vmem:[#allocation4 + $0x18] sm:$0xff] %vm5067, %v4945
    %5313 = vst.msk [vmem:[#allocation4 + $0x28] sm:$0xff] %vm5067, %v4948
    %5317 = vrot.lane.b32.xlu0 %v4951, 8
    %v5318 = vpop.permute.xlu0 %5317
    %5319 = vrot.lane.b32.xlu0 %v4954, 8
    %v5320 = vpop.permute.xlu0 %5319
    %5321 = vrot.lane.b32.xlu0 %v4957, 8
    %v5322 = vpop.permute.xlu0 %5321
    %5326 = vst.msk [vmem:[#allocation4 + $0x8] sm:$0xff] %vm5083, %v5318
    %5327 = vst.msk [vmem:[#allocation4 + $0x18] sm:$0xff] %vm5083, %v5320
    %5328 = vst.msk [vmem:[#allocation4 + $0x28] sm:$0xff] %vm5083, %v5322
    %5332 = vrot.lane.b32.xlu0 %v4960, 16
    %v5333 = vpop.permute.xlu0 %5332
    %5334 = vrot.lane.b32.xlu0 %v4963, 16
    %v5335 = vpop.permute.xlu0 %5334
    %5336 = vrot.lane.b32.xlu0 %v4966, 16
    %v5337 = vpop.permute.xlu0 %5336
    %5341 = vst.msk [vmem:[#allocation4 + $0x8] sm:$0xff] %vm5099, %v5333
    %5342 = vst.msk [vmem:[#allocation4 + $0x18] sm:$0xff] %vm5099, %v5335
    %5343 = vst.msk [vmem:[#allocation4 + $0x28] sm:$0xff] %vm5099, %v5337
    %5347 = vrot.lane.b32.xlu0 %v4969, 24
    %v5348 = vpop.permute.xlu0 %5347
    %5349 = vrot.lane.b32.xlu0 %v4972, 24
    %v5350 = vpop.permute.xlu0 %5349
    %5351 = vrot.lane.b32.xlu0 %v4975, 24
    %v5352 = vpop.permute.xlu0 %5351
    %5356 = vst.msk [vmem:[#allocation4 + $0x8] sm:$0xff] %vm5115, %v5348
    %5357 = vst.msk [vmem:[#allocation4 + $0x18] sm:$0xff] %vm5115, %v5350
    %5358 = vst.msk [vmem:[#allocation4 + $0x28] sm:$0xff] %vm5115, %v5352
    %5362 = vrot.lane.b32.xlu0 %v4978, 32
    %v5363 = vpop.permute.xlu0 %5362
    %5364 = vrot.lane.b32.xlu0 %v4981, 32
    %v5365 = vpop.permute.xlu0 %5364
    %5366 = vrot.lane.b32.xlu0 %v4984, 32
    %v5367 = vpop.permute.xlu0 %5366
    %5371 = vst.msk [vmem:[#allocation4 + $0x8] sm:$0xff] %vm5131, %v5363
    %5372 = vst.msk [vmem:[#allocation4 + $0x18] sm:$0xff] %vm5131, %v5365
    %5373 = vst.msk [vmem:[#allocation4 + $0x28] sm:$0xff] %vm5131, %v5367
    %5377 = vrot.lane.b32.xlu0 %v4987, 40
    %v5378 = vpop.permute.xlu0 %5377
    %5379 = vrot.lane.b32.xlu0 %v4990, 40
    %v5380 = vpop.permute.xlu0 %5379
    %5381 = vrot.lane.b32.xlu0 %v4993, 40
    %v5382 = vpop.permute.xlu0 %5381
    %5386 = vst.msk [vmem:[#allocation4 + $0x8] sm:$0xff] %vm5147, %v5378
    %5387 = vst.msk [vmem:[#allocation4 + $0x18] sm:$0xff] %vm5147, %v5380
    %5388 = vst.msk [vmem:[#allocation4 + $0x28] sm:$0xff] %vm5147, %v5382
    %5392 = vrot.lane.b32.xlu0 %v4996, 48
    %v5393 = vpop.permute.xlu0 %5392
    %5394 = vrot.lane.b32.xlu0 %v4999, 48
    %v5395 = vpop.permute.xlu0 %5394
    %5396 = vrot.lane.b32.xlu0 %v5002, 48
    %v5397 = vpop.permute.xlu0 %5396
    %5401 = vst.msk [vmem:[#allocation4 + $0x8] sm:$0xff] %vm5163, %v5393
    %5402 = vst.msk [vmem:[#allocation4 + $0x18] sm:$0xff] %vm5163, %v5395
    %5403 = vst.msk [vmem:[#allocation4 + $0x28] sm:$0xff] %vm5163, %v5397
    %5407 = vrot.lane.b32.xlu0 %v5005, 56
    %v5408 = vpop.permute.xlu0 %5407
    %5409 = vrot.lane.b32.xlu0 %v5008, 56
    %v5410 = vpop.permute.xlu0 %5409
    %5411 = vrot.lane.b32.xlu0 %v5011, 56
    %v5412 = vpop.permute.xlu0 %5411
    %5416 = vst.msk [vmem:[#allocation4 + $0x8] sm:$0xff] %vm5179, %v5408
    %5417 = vst.msk [vmem:[#allocation4 + $0x18] sm:$0xff] %vm5179, %v5410
    %5418 = vst.msk [vmem:[#allocation4 + $0x28] sm:$0xff] %vm5179, %v5412
    %5422 = vrot.lane.b32.xlu0 %v5014, 64
    %v5423 = vpop.permute.xlu0 %5422
    %5424 = vrot.lane.b32.xlu0 %v5017, 64
    %v5425 = vpop.permute.xlu0 %5424
    %5426 = vrot.lane.b32.xlu0 %v5020, 64
    %v5427 = vpop.permute.xlu0 %5426
    %5431 = vst.msk [vmem:[#allocation4 + $0x8] sm:$0xff] %vm5195, %v5423
    %5432 = vst.msk [vmem:[#allocation4 + $0x18] sm:$0xff] %vm5195, %v5425
    %5433 = vst.msk [vmem:[#allocation4 + $0x28] sm:$0xff] %vm5195, %v5427
    %5437 = vrot.lane.b32.xlu0 %v5023, 72
    %v5438 = vpop.permute.xlu0 %5437
    %5439 = vrot.lane.b32.xlu0 %v5026, 72
    %v5440 = vpop.permute.xlu0 %5439
    %5441 = vrot.lane.b32.xlu0 %v5029, 72
    %v5442 = vpop.permute.xlu0 %5441
    %5446 = vst.msk [vmem:[#allocation4 + $0x8] sm:$0xff] %vm5211, %v5438
    %5447 = vst.msk [vmem:[#allocation4 + $0x18] sm:$0xff] %vm5211, %v5440
    %5448 = vst.msk [vmem:[#allocation4 + $0x28] sm:$0xff] %vm5211, %v5442
    %5452 = vrot.lane.b32.xlu0 %v5032, 80
    %v5453 = vpop.permute.xlu0 %5452
    %5454 = vrot.lane.b32.xlu0 %v5035, 80
    %v5455 = vpop.permute.xlu0 %5454
    %5456 = vrot.lane.b32.xlu0 %v5038, 80
    %v5457 = vpop.permute.xlu0 %5456
    %5461 = vst.msk [vmem:[#allocation4 + $0x8] sm:$0xff] %vm5227, %v5453
    %5462 = vst.msk [vmem:[#allocation4 + $0x18] sm:$0xff] %vm5227, %v5455
    %5463 = vst.msk [vmem:[#allocation4 + $0x28] sm:$0xff] %vm5227, %v5457
    %5467 = vrot.lane.b32.xlu0 %v5041, 88
    %v5468 = vpop.permute.xlu0 %5467
    %5469 = vrot.lane.b32.xlu0 %v5044, 88
    %v5470 = vpop.permute.xlu0 %5469
    %5471 = vrot.lane.b32.xlu0 %v5047, 88
    %v5472 = vpop.permute.xlu0 %5471
    %5476 = vst.msk [vmem:[#allocation4 + $0x8] sm:$0xff] %vm5243, %v5468
    %5477 = vst.msk [vmem:[#allocation4 + $0x18] sm:$0xff] %vm5243, %v5470
    %5478 = vst.msk [vmem:[#allocation4 + $0x28] sm:$0xff] %vm5243, %v5472
    %5482 = vrot.lane.b32.xlu0 %v5050, 96
    %v5483 = vpop.permute.xlu0 %5482
    %5484 = vrot.lane.b32.xlu0 %v5053, 96
    %v5485 = vpop.permute.xlu0 %5484
    %5486 = vrot.lane.b32.xlu0 %v5056, 96
    %v5487 = vpop.permute.xlu0 %5486
    %5491 = vst.msk [vmem:[#allocation4 + $0x8] sm:$0xff] %vm5259, %v5483
    %5492 = vst.msk [vmem:[#allocation4 + $0x18] sm:$0xff] %vm5259, %v5485
    %5493 = vst.msk [vmem:[#allocation4 + $0x28] sm:$0xff] %vm5259, %v5487
    %5497 = vrot.lane.b32.xlu0 %v5059, 104
    %v5498 = vpop.permute.xlu0 %5497
    %5499 = vrot.lane.b32.xlu0 %v5062, 104
    %v5500 = vpop.permute.xlu0 %5499
    %5501 = vrot.lane.b32.xlu0 %v5065, 104
    %v5502 = vpop.permute.xlu0 %5501
    %5506 = vst.msk [vmem:[#allocation4 + $0x8] sm:$0xff] %vm5275, %v5498
    %5507 = vst.msk [vmem:[#allocation4 + $0x18] sm:$0xff] %vm5275, %v5500
    %5508 = vst.msk [vmem:[#allocation4 + $0x28] sm:$0xff] %vm5275, %v5502
    %v5509 = vld [vmem:[%s11] sm:$0xff]
    %v5510 = vld [vmem:[#allocation4] sm:$0xff]
    %v5511 = vld [vmem:[#allocation4 + $0x8] sm:$0xff]
    %v5512 = vld [vmem:[#allocation4 + $0x10] sm:$0xff]
    %v5513 = vld [vmem:[#allocation4 + $0x18] sm:$0xff]
    %v5514 = vld [vmem:[#allocation4 + $0x20] sm:$0xff]
    %v5515 = vld [vmem:[#allocation4 + $0x28] sm:$0xff]
    %vm5516 = vcmask 195584
    %v5518 = vsel %vm5516, %v5509, 0
    %5520 = vmatpush.msra.mxu0 0.0
    %5521 = vmatpush.msra.mxu0 0.0
    %5522 = vmatpush.msra.mxu0 0.0
    %5523 = vmatpush.msra.mxu0 0.0
    %5524 = vmatpush.msra.mxu0 0.0
    %5525 = vmatpush.msra.mxu0 0.0
    %5526 = vmatpush.msra.mxu0 0.0
    %5527 = vmatpush.msra.mxu0 0.0
    %5528 = vmatpush.msra.mxu0 0.0
    %5529 = vmatpush.msra.mxu0 0.0
    %5530 = vmatpush.msra.mxu0 0.0
    %5531 = vmatpush.msra.mxu0 0.0
    %5532 = vmatpush.msra.mxu0 0.0
    %5533 = vmatpush.msra.mxu0 %v5514
    %5534 = vmatpush.msra.mxu0 %v5512
    %5535 = vmatpush.msra.mxu0 %v5510
    %5536 = vmatmul.f32.gmra.mxu0 %v5518
    %v5537 = vpop.f32.mrf.mxu0
    %v5538 = vadd.f32 0.0, %v5537
    %5539 = vdwg.mxu0
    %5540 = vmatpush.msra.mxu0 0.0
    %5541 = vmatpush.msra.mxu0 0.0
    %5542 = vmatpush.msra.mxu0 0.0
    %5543 = vmatpush.msra.mxu0 0.0
    %5544 = vmatpush.msra.mxu0 0.0
    %5545 = vmatpush.msra.mxu0 0.0
    %5546 = vmatpush.msra.mxu0 0.0
    %5547 = vmatpush.msra.mxu0 0.0
    %5548 = vmatpush.msra.mxu0 0.0
    %5549 = vmatpush.msra.mxu0 0.0
    %5550 = vmatpush.msra.mxu0 0.0
    %5551 = vmatpush.msra.mxu0 0.0
    %5552 = vmatpush.msra.mxu0 0.0
    %5553 = vmatpush.msra.mxu0 %v5515
    %5554 = vmatpush.msra.mxu0 %v5513
    %5555 = vmatpush.msra.mxu0 %v5511
    %5556 = vmatmul.f32.gmra.mxu0 %v5518
    %v5557 = vpop.f32.mrf.mxu0
    %v5558 = vadd.f32 0.0, %v5557
    %5559 = vdwg.mxu0
    %v5560 = vmul.f32 %v5538, %v5538
    %5562 = vrot.lane.b32.xlu0 %v5538, 80
    %v5563 = vpop.permute.xlu0 %5562
    %v5565 = vmul.f32 %v5538, %v5563
    %5567 = vrot.lane.b32.xlu0 %v5560, 96
    %v5568 = vpop.permute.xlu0 %5567
    %v5570 = vsub.f32 %v5538, %v5568
    %v5571 = vsub.f32 %v5558, %v5568
    %5573 = vrot.lane.b32.xlu0 %v5565, 64
    %v5574 = vpop.permute.xlu0 %5573
    %v5576 = vsub.f32 %v5558, %v5574
    %v5577 = vmul.f32 %v5565, 2.0
    %v5578 = vadd.f32 %v5577, 0.0001
    %v5579 = vmul.f32 %v5576, 2.0
    %v5580 = vadd.f32 %v5579, 0.0009
    %5582 = vrot.lane.b32.xlu0 %v5580, 64
    %v5583 = vpop.permute.xlu0 %5582
    %v5585 = vmul.f32 %v5578, %v5583
    %5586 = vrot.lane.b32.xlu0 %v5560, 80
    %v5587 = vpop.permute.xlu0 %5586
    %v5589 = vadd.f32 %v5560, %v5587
    %v5590 = vadd.f32 %v5589, 0.0001
    %5592 = vrot.lane.b32.xlu0 %v5571, 80
    %v5593 = vpop.permute.xlu0 %5592
    %v5595 = vadd.f32 %v5570, %v5593
    %v5596 = vadd.f32 %v5571, %v5593
    %v5597 = vadd.f32 %v5595, 0.0009
    %v5598 = vadd.f32 %v5596, 0.0009
    %5601 = vrot.lane.b32.xlu0 %v5597, 32
    %v5602 = vpop.permute.xlu0 %5601
    %5603 = vrot.lane.b32.xlu0 %v5598, 32
    %v5604 = vpop.permute.xlu0 %5603
    %v5605 = vsel %vm1354, %v5602, %v5604
    %v5607 = vmul.f32 %v5590, %v5605
    %v5608 = vrcp.pop %v5607
    %v5609 = vmul.f32 %v5607, %v5608
    %v5610 = vsub.f32 1.0, %v5609
    %v5611 = vmul.f32 %v5608, %v5610
    %v5612 = vadd.f32 %v5608, %v5611
    %vm5613 = vweird.f32 %v5607
    %vm5614 = vweird.f32 %v5608
    %vm5615 = vmor %vm5613, %vm5614
    %v5616 = vsel %vm5615, %v5608, %v5612
    %v5617 = vand.u32 2147483647, %v5607
    %vm5618 = vcmp.eq.f32.partialorder %v5617, 8.507059e+37
    %v5619 = vand.u32 %v5607, 2147483648
    %v5620 = vor.u32 1.1754944e-38, %v5619
    %v5621 = vsel %vm5618, %v5620, %v5616
    %v5622 = vmul.f32 %v5585, %v5621
    %v5623 = vsel %vm2118, %v5622, 0.0
    %5624 = vadd.xlane.f32.xlu0 %v5623
    %v5625 = vpop.xlane.xlu0 %5624
    %v5626 = vrot.slane %v5625, 4
    %v5627 = vadd.f32 %v5625, %v5626
    %v5628 = vrot.slane %v5627, 2
    %v5629 = vadd.f32 %v5627, %v5628
    %v5630 = vrot.slane %v5629, 1
    %v5631 = vadd.f32 %v5629, %v5630
    %s5632 = vtos %v5631
    %s5633 = smul.f32 %s5632, 0.0026041667
    %s5634 = smul.f32 %s5633, 0.3001
    %s5635 = smul.f32 %s4412, %s5634
    %v5636 = vld [vmem:[%s12] sm:$0xff]
    %v5637 = vld [vmem:[%s12 + $0x8] sm:$0xff]
    %v5638 = vld [vmem:[%s12 + $0x10] sm:$0xff]
    %v5639 = vld [vmem:[%s12 + $0x18] sm:$0xff]
    %v5640 = vld [vmem:[%s12 + $0x20] sm:$0xff]
    %v5641 = vld [vmem:[%s12 + $0x28] sm:$0xff]
    %v5642 = vld [vmem:[%s12 + $0x30] sm:$0xff]
    %v5643 = vld [vmem:[%s12 + $0x38] sm:$0xff]
    %v5644 = vld [vmem:[%s12 + $0x40] sm:$0xff]
    %v5645 = vld [vmem:[%s12 + $0x48] sm:$0xff]
    %v5646 = vld [vmem:[%s12 + $0x50] sm:$0xff]
    %v5647 = vld [vmem:[%s12 + $0x58] sm:$0xff]
    %v5648 = vld [vmem:[%s13] sm:$0xff]
    %v5649 = vld [vmem:[%s13 + $0x8] sm:$0xff]
    %v5650 = vld [vmem:[%s13 + $0x10] sm:$0xff]
    %v5651 = vld [vmem:[%s13 + $0x18] sm:$0xff]
    %v5652 = vld [vmem:[%s13 + $0x20] sm:$0xff]
    %v5653 = vld [vmem:[%s13 + $0x28] sm:$0xff]
    %v5654 = vld [vmem:[%s13 + $0x30] sm:$0xff]
    %v5655 = vld [vmem:[%s13 + $0x38] sm:$0xff]
    %v5656 = vld [vmem:[%s13 + $0x40] sm:$0xff]
    %v5657 = vld [vmem:[%s13 + $0x48] sm:$0xff]
    %v5658 = vld [vmem:[%s13 + $0x50] sm:$0xff]
    %v5659 = vld [vmem:[%s13 + $0x58] sm:$0xff]
    %v5660 = vmul.f32 %v5636, %v5636
    %v5661 = vmul.f32 %v5637, %v5637
    %v5662 = vmul.f32 %v5638, %v5638
    %v5663 = vmul.f32 %v5639, %v5639
    %v5664 = vmul.f32 %v5640, %v5640
    %v5665 = vmul.f32 %v5641, %v5641
    %v5666 = vmul.f32 %v5642, %v5642
    %v5667 = vmul.f32 %v5643, %v5643
    %v5668 = vmul.f32 %v5644, %v5644
    %v5669 = vmul.f32 %v5645, %v5645
    %v5670 = vmul.f32 %v5646, %v5646
    %v5671 = vmul.f32 %v5647, %v5647
    %v5672 = vmul.f32 %v5648, %v5648
    %v5673 = vmul.f32 %v5649, %v5649
    %v5674 = vmul.f32 %v5650, %v5650
    %v5675 = vmul.f32 %v5651, %v5651
    %v5676 = vmul.f32 %v5652, %v5652
    %v5677 = vmul.f32 %v5653, %v5653
    %v5678 = vmul.f32 %v5654, %v5654
    %v5679 = vmul.f32 %v5655, %v5655
    %v5680 = vmul.f32 %v5656, %v5656
    %v5681 = vmul.f32 %v5657, %v5657
    %v5682 = vmul.f32 %v5658, %v5658
    %v5683 = vmul.f32 %v5659, %v5659
    %v5684 = vmul.f32 %v5636, %v5648
    %v5685 = vmul.f32 %v5637, %v5649
    %v5686 = vmul.f32 %v5638, %v5650
    %v5687 = vmul.f32 %v5639, %v5651
    %v5688 = vmul.f32 %v5640, %v5652
    %v5689 = vmul.f32 %v5641, %v5653
    %v5690 = vmul.f32 %v5642, %v5654
    %v5691 = vmul.f32 %v5643, %v5655
    %v5692 = vmul.f32 %v5644, %v5656
    %v5693 = vmul.f32 %v5645, %v5657
    %v5694 = vmul.f32 %v5646, %v5658
    %v5695 = vmul.f32 %v5647, %v5659
    %v5696 = vld [vmem:[%s14] sm:$0xff]
    %v5697 = vld [vmem:[%s14 + $0x8] sm:$0x3f]
    %vm5698 = vcmask 113664
    %v5700 = vsel %vm5698, %v5636, 0
    %v5703 = vsel %vm5698, %v5637, 0
    %v5706 = vsel %vm5698, %v5638, 0
    %v5709 = vsel %vm5698, %v5639, 0
    %v5712 = vsel %vm5698, %v5640, 0
    %v5715 = vsel %vm5698, %v5641, 0
    %v5718 = vsel %vm5698, %v5642, 0
    %v5721 = vsel %vm5698, %v5643, 0
    %v5724 = vsel %vm5698, %v5644, 0
    %v5727 = vsel %vm5698, %v5645, 0
    %v5730 = vsel %vm5698, %v5646, 0
    %v5733 = vsel %vm5698, %v5647, 0
    %v5736 = vsel %vm5698, %v5648, 0
    %v5739 = vsel %vm5698, %v5649, 0
    %v5742 = vsel %vm5698, %v5650, 0
    %v5745 = vsel %vm5698, %v5651, 0
    %v5748 = vsel %vm5698, %v5652, 0
    %v5751 = vsel %vm5698, %v5653, 0
    %v5754 = vsel %vm5698, %v5654, 0
    %v5757 = vsel %vm5698, %v5655, 0
    %v5760 = vsel %vm5698, %v5656, 0
    %v5763 = vsel %vm5698, %v5657, 0
    %v5766 = vsel %vm5698, %v5658, 0
    %v5769 = vsel %vm5698, %v5659, 0
    %v5772 = vsel %vm5698, %v5660, 0
    %v5775 = vsel %vm5698, %v5661, 0
    %v5778 = vsel %vm5698, %v5662, 0
    %v5781 = vsel %vm5698, %v5663, 0
    %v5784 = vsel %vm5698, %v5664, 0
    %v5787 = vsel %vm5698, %v5665, 0
    %v5790 = vsel %vm5698, %v5666, 0
    %v5793 = vsel %vm5698, %v5667, 0
    %v5796 = vsel %vm5698, %v5668, 0
    %v5799 = vsel %vm5698, %v5669, 0
    %v5802 = vsel %vm5698, %v5670, 0
    %v5805 = vsel %vm5698, %v5671, 0
    %v5808 = vsel %vm5698, %v5672, 0
    %v5811 = vsel %vm5698, %v5673, 0
    %v5814 = vsel %vm5698, %v5674, 0
    %v5817 = vsel %vm5698, %v5675, 0
    %v5820 = vsel %vm5698, %v5676, 0
    %v5823 = vsel %vm5698, %v5677, 0
    %v5826 = vsel %vm5698, %v5678, 0
    %v5829 = vsel %vm5698, %v5679, 0
    %v5832 = vsel %vm5698, %v5680, 0
    %v5835 = vsel %vm5698, %v5681, 0
    %v5838 = vsel %vm5698, %v5682, 0
    %v5841 = vsel %vm5698, %v5683, 0
    %v5844 = vsel %vm5698, %v5684, 0
    %v5847 = vsel %vm5698, %v5685, 0
    %v5850 = vsel %vm5698, %v5686, 0
    %v5853 = vsel %vm5698, %v5687, 0
    %v5856 = vsel %vm5698, %v5688, 0
    %v5859 = vsel %vm5698, %v5689, 0
    %v5862 = vsel %vm5698, %v5690, 0
    %v5865 = vsel %vm5698, %v5691, 0
    %v5868 = vsel %vm5698, %v5692, 0
    %v5871 = vsel %vm5698, %v5693, 0
    %v5874 = vsel %vm5698, %v5694, 0
    %v5877 = vsel %vm5698, %v5695, 0
    %vm5879 = vcmask 1045504
    %v5881 = vsel %vm5879, %v5697, 0
    %5883 = vmatpush.msra.mxu0 0.0
    %5884 = vmatpush.msra.mxu0 0.0
    %5885 = vmatpush.msra.mxu0 0.0
    %5886 = vmatpush.msra.mxu0 0.0
    %5887 = vmatpush.msra.mxu0 0.0
    %5888 = vmatpush.msra.mxu0 0.0
    %5889 = vmatpush.msra.mxu0 0.0
    %5890 = vmatpush.msra.mxu0 0.0
    %5891 = vmatpush.msra.mxu0 0.0
    %5892 = vmatpush.msra.mxu0 0.0
    %5893 = vmatpush.msra.mxu0 0.0
    %5894 = vmatpush.msra.mxu0 0.0
    %5895 = vmatpush.msra.mxu0 0.0
    %5896 = vmatpush.msra.mxu0 0.0
    %5897 = vmatpush.msra.mxu0 %v5881
    %5898 = vmatpush.msra.mxu0 %v5696
    %5899 = vmatmul.f32.gmra.mxu0 %v5700
    %v5900 = vpop.f32.mrf.mxu0
    %v5901 = vadd.f32 0.0, %v5900
    %5902 = vmatmul.f32.gmra.mxu0 %v5703
    %v5903 = vpop.f32.mrf.mxu0
    %v5904 = vadd.f32 0.0, %v5903
    %5905 = vmatmul.f32.gmra.mxu0 %v5706
    %v5906 = vpop.f32.mrf.mxu0
    %v5907 = vadd.f32 0.0, %v5906
    %5908 = vmatmul.f32.gmra.mxu0 %v5709
    %v5909 = vpop.f32.mrf.mxu0
    %v5910 = vadd.f32 0.0, %v5909
    %5911 = vmatmul.f32.gmra.mxu0 %v5712
    %v5912 = vpop.f32.mrf.mxu0
    %v5913 = vadd.f32 0.0, %v5912
    %5914 = vmatmul.f32.gmra.mxu0 %v5715
    %v5915 = vpop.f32.mrf.mxu0
    %v5916 = vadd.f32 0.0, %v5915
    %5917 = vmatmul.f32.gmra.mxu0 %v5718
    %v5918 = vpop.f32.mrf.mxu0
    %v5919 = vadd.f32 0.0, %v5918
    %5920 = vmatmul.f32.gmra.mxu0 %v5721
    %v5921 = vpop.f32.mrf.mxu0
    %v5922 = vadd.f32 0.0, %v5921
    %5923 = vmatmul.f32.gmra.mxu0 %v5724
    %v5924 = vpop.f32.mrf.mxu0
    %v5925 = vadd.f32 0.0, %v5924
    %5926 = vmatmul.f32.gmra.mxu0 %v5727
    %v5927 = vpop.f32.mrf.mxu0
    %v5928 = vadd.f32 0.0, %v5927
    %5929 = vmatmul.f32.gmra.mxu0 %v5730
    %v5930 = vpop.f32.mrf.mxu0
    %v5931 = vadd.f32 0.0, %v5930
    %5932 = vmatmul.f32.gmra.mxu0 %v5733
    %v5933 = vpop.f32.mrf.mxu0
    %v5934 = vadd.f32 0.0, %v5933
    %5935 = vmatmul.f32.gmra.mxu0 %v5736
    %v5936 = vpop.f32.mrf.mxu0
    %v5937 = vadd.f32 0.0, %v5936
    %5938 = vmatmul.f32.gmra.mxu0 %v5739
    %v5939 = vpop.f32.mrf.mxu0
    %v5940 = vadd.f32 0.0, %v5939
    %5941 = vmatmul.f32.gmra.mxu0 %v5742
    %v5942 = vpop.f32.mrf.mxu0
    %v5943 = vadd.f32 0.0, %v5942
    %5944 = vmatmul.f32.gmra.mxu0 %v5745
    %v5945 = vpop.f32.mrf.mxu0
    %v5946 = vadd.f32 0.0, %v5945
    %5947 = vmatmul.f32.gmra.mxu0 %v5748
    %v5948 = vpop.f32.mrf.mxu0
    %v5949 = vadd.f32 0.0, %v5948
    %5950 = vmatmul.f32.gmra.mxu0 %v5751
    %v5951 = vpop.f32.mrf.mxu0
    %v5952 = vadd.f32 0.0, %v5951
    %5953 = vmatmul.f32.gmra.mxu0 %v5754
    %v5954 = vpop.f32.mrf.mxu0
    %v5955 = vadd.f32 0.0, %v5954
    %5956 = vmatmul.f32.gmra.mxu0 %v5757
    %v5957 = vpop.f32.mrf.mxu0
    %v5958 = vadd.f32 0.0, %v5957
    %5959 = vmatmul.f32.gmra.mxu0 %v5760
    %v5960 = vpop.f32.mrf.mxu0
    %v5961 = vadd.f32 0.0, %v5960
    %5962 = vmatmul.f32.gmra.mxu0 %v5763
    %v5963 = vpop.f32.mrf.mxu0
    %v5964 = vadd.f32 0.0, %v5963
    %5965 = vmatmul.f32.gmra.mxu0 %v5766
    %v5966 = vpop.f32.mrf.mxu0
    %v5967 = vadd.f32 0.0, %v5966
    %5968 = vmatmul.f32.gmra.mxu0 %v5769
    %v5969 = vpop.f32.mrf.mxu0
    %v5970 = vadd.f32 0.0, %v5969
    %5971 = vmatmul.f32.gmra.mxu0 %v5772
    %v5972 = vpop.f32.mrf.mxu0
    %v5973 = vadd.f32 0.0, %v5972
    %5974 = vmatmul.f32.gmra.mxu0 %v5775
    %v5975 = vpop.f32.mrf.mxu0
    %v5976 = vadd.f32 0.0, %v5975
    %5977 = vmatmul.f32.gmra.mxu0 %v5778
    %v5978 = vpop.f32.mrf.mxu0
    %v5979 = vadd.f32 0.0, %v5978
    %5980 = vmatmul.f32.gmra.mxu0 %v5781
    %v5981 = vpop.f32.mrf.mxu0
    %v5982 = vadd.f32 0.0, %v5981
    %5983 = vmatmul.f32.gmra.mxu0 %v5784
    %v5984 = vpop.f32.mrf.mxu0
    %v5985 = vadd.f32 0.0, %v5984
    %5986 = vmatmul.f32.gmra.mxu0 %v5787
    %v5987 = vpop.f32.mrf.mxu0
    %v5988 = vadd.f32 0.0, %v5987
    %5989 = vmatmul.f32.gmra.mxu0 %v5790
    %v5990 = vpop.f32.mrf.mxu0
    %v5991 = vadd.f32 0.0, %v5990
    %5992 = vmatmul.f32.gmra.mxu0 %v5793
    %v5993 = vpop.f32.mrf.mxu0
    %v5994 = vadd.f32 0.0, %v5993
    %5995 = vmatmul.f32.gmra.mxu0 %v5796
    %v5996 = vpop.f32.mrf.mxu0
    %v5997 = vadd.f32 0.0, %v5996
    %5998 = vmatmul.f32.gmra.mxu0 %v5799
    %v5999 = vpop.f32.mrf.mxu0
    %v6000 = vadd.f32 0.0, %v5999
    %6001 = vmatmul.f32.gmra.mxu0 %v5802
    %v6002 = vpop.f32.mrf.mxu0
    %v6003 = vadd.f32 0.0, %v6002
    %6004 = vmatmul.f32.gmra.mxu0 %v5805
    %v6005 = vpop.f32.mrf.mxu0
    %v6006 = vadd.f32 0.0, %v6005
    %6007 = vmatmul.f32.gmra.mxu0 %v5808
    %v6008 = vpop.f32.mrf.mxu0
    %v6009 = vadd.f32 0.0, %v6008
    %6010 = vmatmul.f32.gmra.mxu0 %v5811
    %v6011 = vpop.f32.mrf.mxu0
    %v6012 = vadd.f32 0.0, %v6011
    %6013 = vmatmul.f32.gmra.mxu0 %v5814
    %v6014 = vpop.f32.mrf.mxu0
    %v6015 = vadd.f32 0.0, %v6014
    %6016 = vmatmul.f32.gmra.mxu0 %v5817
    %v6017 = vpop.f32.mrf.mxu0
    %v6018 = vadd.f32 0.0, %v6017
    %6019 = vmatmul.f32.gmra.mxu0 %v5820
    %v6020 = vpop.f32.mrf.mxu0
    %v6021 = vadd.f32 0.0, %v6020
    %6022 = vmatmul.f32.gmra.mxu0 %v5823
    %v6023 = vpop.f32.mrf.mxu0
    %v6024 = vadd.f32 0.0, %v6023
    %6025 = vmatmul.f32.gmra.mxu0 %v5826
    %v6026 = vpop.f32.mrf.mxu0
    %v6027 = vadd.f32 0.0, %v6026
    %6028 = vmatmul.f32.gmra.mxu0 %v5829
    %v6029 = vpop.f32.mrf.mxu0
    %v6030 = vadd.f32 0.0, %v6029
    %6031 = vmatmul.f32.gmra.mxu0 %v5832
    %v6032 = vpop.f32.mrf.mxu0
    %v6033 = vadd.f32 0.0, %v6032
    %6034 = vmatmul.f32.gmra.mxu0 %v5835
    %v6035 = vpop.f32.mrf.mxu0
    %v6036 = vadd.f32 0.0, %v6035
    %6037 = vmatmul.f32.gmra.mxu0 %v5838
    %v6038 = vpop.f32.mrf.mxu0
    %v6039 = vadd.f32 0.0, %v6038
    %6040 = vmatmul.f32.gmra.mxu0 %v5841
    %v6041 = vpop.f32.mrf.mxu0
    %v6042 = vadd.f32 0.0, %v6041
    %6043 = vmatmul.f32.gmra.mxu0 %v5844
    %v6044 = vpop.f32.mrf.mxu0
    %v6045 = vadd.f32 0.0, %v6044
    %6046 = vmatmul.f32.gmra.mxu0 %v5847
    %v6047 = vpop.f32.mrf.mxu0
    %v6048 = vadd.f32 0.0, %v6047
    %6049 = vmatmul.f32.gmra.mxu0 %v5850
    %v6050 = vpop.f32.mrf.mxu0
    %v6051 = vadd.f32 0.0, %v6050
    %6052 = vmatmul.f32.gmra.mxu0 %v5853
    %v6053 = vpop.f32.mrf.mxu0
    %v6054 = vadd.f32 0.0, %v6053
    %6055 = vmatmul.f32.gmra.mxu0 %v5856
    %v6056 = vpop.f32.mrf.mxu0
    %v6057 = vadd.f32 0.0, %v6056
    %6058 = vmatmul.f32.gmra.mxu0 %v5859
    %v6059 = vpop.f32.mrf.mxu0
    %v6060 = vadd.f32 0.0, %v6059
    %6061 = vmatmul.f32.gmra.mxu0 %v5862
    %v6062 = vpop.f32.mrf.mxu0
    %v6063 = vadd.f32 0.0, %v6062
    %6064 = vmatmul.f32.gmra.mxu0 %v5865
    %v6065 = vpop.f32.mrf.mxu0
    %v6066 = vadd.f32 0.0, %v6065
    %6067 = vmatmul.f32.gmra.mxu0 %v5868
    %v6068 = vpop.f32.mrf.mxu0
    %v6069 = vadd.f32 0.0, %v6068
    %6070 = vmatmul.f32.gmra.mxu0 %v5871
    %v6071 = vpop.f32.mrf.mxu0
    %v6072 = vadd.f32 0.0, %v6071
    %6073 = vmatmul.f32.gmra.mxu0 %v5874
    %v6074 = vpop.f32.mrf.mxu0
    %v6075 = vadd.f32 0.0, %v6074
    %6076 = vmatmul.f32.gmra.mxu0 %v5877
    %v6077 = vpop.f32.mrf.mxu0
    %v6078 = vadd.f32 0.0, %v6077
    %6079 = vdwg.mxu0
    %vm6080 = vcmask 31744
    %6081 = vst.msk [vmem:[#allocation5] sm:$0xff] %vm6080, %v5901
    %6082 = vst.msk [vmem:[#allocation5 + $0x8] sm:$0xff] %vm6080, %v5904
    %6085 = vrot.lane.b32.xlu0 %v5907, 4
    %v6086 = vpop.permute.xlu0 %6085
    %6087 = vrot.lane.b32.xlu0 %v5910, 4
    %v6088 = vpop.permute.xlu0 %6087
    %vm6091 = vcmask 64544
    %6092 = vst.msk [vmem:[#allocation5] sm:$0xff] %vm6091, %v6086
    %6093 = vst.msk [vmem:[#allocation5 + $0x8] sm:$0xff] %vm6091, %v6088
    %6096 = vrot.lane.b32.xlu0 %v5913, 8
    %v6097 = vpop.permute.xlu0 %6096
    %6098 = vrot.lane.b32.xlu0 %v5916, 8
    %v6099 = vpop.permute.xlu0 %6098
    %vm6102 = vcmask 97344
    %6103 = vst.msk [vmem:[#allocation5] sm:$0xff] %vm6102, %v6097
    %6104 = vst.msk [vmem:[#allocation5 + $0x8] sm:$0xff] %vm6102, %v6099
    %6107 = vrot.lane.b32.xlu0 %v5919, 12
    %v6108 = vpop.permute.xlu0 %6107
    %6109 = vrot.lane.b32.xlu0 %v5922, 12
    %v6110 = vpop.permute.xlu0 %6109
    %vm6113 = vcmask 130144
    %6114 = vst.msk [vmem:[#allocation5] sm:$0xff] %vm6113, %v6108
    %6115 = vst.msk [vmem:[#allocation5 + $0x8] sm:$0xff] %vm6113, %v6110
    %6118 = vrot.lane.b32.xlu0 %v5925, 16
    %v6119 = vpop.permute.xlu0 %6118
    %6120 = vrot.lane.b32.xlu0 %v5928, 16
    %v6121 = vpop.permute.xlu0 %6120
    %vm6124 = vcmask 162944
    %6125 = vst.msk [vmem:[#allocation5] sm:$0xff] %vm6124, %v6119
    %6126 = vst.msk [vmem:[#allocation5 + $0x8] sm:$0xff] %vm6124, %v6121
    %6129 = vrot.lane.b32.xlu0 %v5931, 20
    %v6130 = vpop.permute.xlu0 %6129
    %6131 = vrot.lane.b32.xlu0 %v5934, 20
    %v6132 = vpop.permute.xlu0 %6131
    %vm6135 = vcmask 195744
    %6136 = vst.msk [vmem:[#allocation5] sm:$0xff] %vm6135, %v6130
    %6137 = vst.msk [vmem:[#allocation5 + $0x8] sm:$0xff] %vm6135, %v6132
    %6140 = vrot.lane.b32.xlu0 %v5937, 24
    %v6141 = vpop.permute.xlu0 %6140
    %6142 = vrot.lane.b32.xlu0 %v5940, 24
    %v6143 = vpop.permute.xlu0 %6142
    %vm6146 = vcmask 228544
    %6147 = vst.msk [vmem:[#allocation5] sm:$0xff] %vm6146, %v6141
    %6148 = vst.msk [vmem:[#allocation5 + $0x8] sm:$0xff] %vm6146, %v6143
    %6151 = vrot.lane.b32.xlu0 %v5943, 28
    %v6152 = vpop.permute.xlu0 %6151
    %6153 = vrot.lane.b32.xlu0 %v5946, 28
    %v6154 = vpop.permute.xlu0 %6153
    %vm6157 = vcmask 261344
    %6158 = vst.msk [vmem:[#allocation5] sm:$0xff] %vm6157, %v6152
    %6159 = vst.msk [vmem:[#allocation5 + $0x8] sm:$0xff] %vm6157, %v6154
    %6162 = vrot.lane.b32.xlu0 %v5949, 32
    %v6163 = vpop.permute.xlu0 %6162
    %6164 = vrot.lane.b32.xlu0 %v5952, 32
    %v6165 = vpop.permute.xlu0 %6164
    %vm6168 = vcmask 294144
    %6169 = vst.msk [vmem:[#allocation5] sm:$0xff] %vm6168, %v6163
    %6170 = vst.msk [vmem:[#allocation5 + $0x8] sm:$0xff] %vm6168, %v6165
    %6173 = vrot.lane.b32.xlu0 %v5955, 36
    %v6174 = vpop.permute.xlu0 %6173
    %6175 = vrot.lane.b32.xlu0 %v5958, 36
    %v6176 = vpop.permute.xlu0 %6175
    %vm6179 = vcmask 326944
    %6180 = vst.msk [vmem:[#allocation5] sm:$0xff] %vm6179, %v6174
    %6181 = vst.msk [vmem:[#allocation5 + $0x8] sm:$0xff] %vm6179, %v6176
    %6184 = vrot.lane.b32.xlu0 %v5961, 40
    %v6185 = vpop.permute.xlu0 %6184
    %6186 = vrot.lane.b32.xlu0 %v5964, 40
    %v6187 = vpop.permute.xlu0 %6186
    %vm6190 = vcmask 359744
    %6191 = vst.msk [vmem:[#allocation5] sm:$0xff] %vm6190, %v6185
    %6192 = vst.msk [vmem:[#allocation5 + $0x8] sm:$0xff] %vm6190, %v6187
    %6195 = vrot.lane.b32.xlu0 %v5967, 44
    %v6196 = vpop.permute.xlu0 %6195
    %6197 = vrot.lane.b32.xlu0 %v5970, 44
    %v6198 = vpop.permute.xlu0 %6197
    %vm6201 = vcmask 392544
    %6202 = vst.msk [vmem:[#allocation5] sm:$0xff] %vm6201, %v6196
    %6203 = vst.msk [vmem:[#allocation5 + $0x8] sm:$0xff] %vm6201, %v6198
    %6206 = vrot.lane.b32.xlu0 %v5973, 48
    %v6207 = vpop.permute.xlu0 %6206
    %6208 = vrot.lane.b32.xlu0 %v5976, 48
    %v6209 = vpop.permute.xlu0 %6208
    %vm6212 = vcmask 425344
    %6213 = vst.msk [vmem:[#allocation5] sm:$0xff] %vm6212, %v6207
    %6214 = vst.msk [vmem:[#allocation5 + $0x8] sm:$0xff] %vm6212, %v6209
    %6217 = vrot.lane.b32.xlu0 %v5979, 52
    %v6218 = vpop.permute.xlu0 %6217
    %6219 = vrot.lane.b32.xlu0 %v5982, 52
    %v6220 = vpop.permute.xlu0 %6219
    %vm6223 = vcmask 458144
    %6224 = vst.msk [vmem:[#allocation5] sm:$0xff] %vm6223, %v6218
    %6225 = vst.msk [vmem:[#allocation5 + $0x8] sm:$0xff] %vm6223, %v6220
    %6228 = vrot.lane.b32.xlu0 %v5985, 56
    %v6229 = vpop.permute.xlu0 %6228
    %6230 = vrot.lane.b32.xlu0 %v5988, 56
    %v6231 = vpop.permute.xlu0 %6230
    %vm6234 = vcmask 490944
    %6235 = vst.msk [vmem:[#allocation5] sm:$0xff] %vm6234, %v6229
    %6236 = vst.msk [vmem:[#allocation5 + $0x8] sm:$0xff] %vm6234, %v6231
    %6239 = vrot.lane.b32.xlu0 %v5991, 60
    %v6240 = vpop.permute.xlu0 %6239
    %6241 = vrot.lane.b32.xlu0 %v5994, 60
    %v6242 = vpop.permute.xlu0 %6241
    %vm6245 = vcmask 523744
    %6246 = vst.msk [vmem:[#allocation5] sm:$0xff] %vm6245, %v6240
    %6247 = vst.msk [vmem:[#allocation5 + $0x8] sm:$0xff] %vm6245, %v6242
    %6250 = vrot.lane.b32.xlu0 %v5997, 64
    %v6251 = vpop.permute.xlu0 %6250
    %6252 = vrot.lane.b32.xlu0 %v6000, 64
    %v6253 = vpop.permute.xlu0 %6252
    %vm6256 = vcmask 556544
    %6257 = vst.msk [vmem:[#allocation5] sm:$0xff] %vm6256, %v6251
    %6258 = vst.msk [vmem:[#allocation5 + $0x8] sm:$0xff] %vm6256, %v6253
    %6261 = vrot.lane.b32.xlu0 %v6003, 68
    %v6262 = vpop.permute.xlu0 %6261
    %6263 = vrot.lane.b32.xlu0 %v6006, 68
    %v6264 = vpop.permute.xlu0 %6263
    %vm6267 = vcmask 589344
    %6268 = vst.msk [vmem:[#allocation5] sm:$0xff] %vm6267, %v6262
    %6269 = vst.msk [vmem:[#allocation5 + $0x8] sm:$0xff] %vm6267, %v6264
    %6272 = vrot.lane.b32.xlu0 %v6009, 72
    %v6273 = vpop.permute.xlu0 %6272
    %6274 = vrot.lane.b32.xlu0 %v6012, 72
    %v6275 = vpop.permute.xlu0 %6274
    %vm6278 = vcmask 622144
    %6279 = vst.msk [vmem:[#allocation5] sm:$0xff] %vm6278, %v6273
    %6280 = vst.msk [vmem:[#allocation5 + $0x8] sm:$0xff] %vm6278, %v6275
    %6283 = vrot.lane.b32.xlu0 %v6015, 76
    %v6284 = vpop.permute.xlu0 %6283
    %6285 = vrot.lane.b32.xlu0 %v6018, 76
    %v6286 = vpop.permute.xlu0 %6285
    %vm6289 = vcmask 654944
    %6290 = vst.msk [vmem:[#allocation5] sm:$0xff] %vm6289, %v6284
    %6291 = vst.msk [vmem:[#allocation5 + $0x8] sm:$0xff] %vm6289, %v6286
    %6294 = vrot.lane.b32.xlu0 %v6021, 80
    %v6295 = vpop.permute.xlu0 %6294
    %6296 = vrot.lane.b32.xlu0 %v6024, 80
    %v6297 = vpop.permute.xlu0 %6296
    %vm6300 = vcmask 687744
    %6301 = vst.msk [vmem:[#allocation5] sm:$0xff] %vm6300, %v6295
    %6302 = vst.msk [vmem:[#allocation5 + $0x8] sm:$0xff] %vm6300, %v6297
    %6305 = vrot.lane.b32.xlu0 %v6027, 84
    %v6306 = vpop.permute.xlu0 %6305
    %6307 = vrot.lane.b32.xlu0 %v6030, 84
    %v6308 = vpop.permute.xlu0 %6307
    %vm6311 = vcmask 720544
    %6312 = vst.msk [vmem:[#allocation5] sm:$0xff] %vm6311, %v6306
    %6313 = vst.msk [vmem:[#allocation5 + $0x8] sm:$0xff] %vm6311, %v6308
    %6316 = vrot.lane.b32.xlu0 %v6033, 88
    %v6317 = vpop.permute.xlu0 %6316
    %6318 = vrot.lane.b32.xlu0 %v6036, 88
    %v6319 = vpop.permute.xlu0 %6318
    %vm6322 = vcmask 753344
    %6323 = vst.msk [vmem:[#allocation5] sm:$0xff] %vm6322, %v6317
    %6324 = vst.msk [vmem:[#allocation5 + $0x8] sm:$0xff] %vm6322, %v6319
    %6327 = vrot.lane.b32.xlu0 %v6039, 92
    %v6328 = vpop.permute.xlu0 %6327
    %6329 = vrot.lane.b32.xlu0 %v6042, 92
    %v6330 = vpop.permute.xlu0 %6329
    %vm6333 = vcmask 786144
    %6334 = vst.msk [vmem:[#allocation5] sm:$0xff] %vm6333, %v6328
    %6335 = vst.msk [vmem:[#allocation5 + $0x8] sm:$0xff] %vm6333, %v6330
    %6338 = vrot.lane.b32.xlu0 %v6045, 96
    %v6339 = vpop.permute.xlu0 %6338
    %6340 = vrot.lane.b32.xlu0 %v6048, 96
    %v6341 = vpop.permute.xlu0 %6340
    %vm6344 = vcmask 818944
    %6345 = vst.msk [vmem:[#allocation5] sm:$0xff] %vm6344, %v6339
    %6346 = vst.msk [vmem:[#allocation5 + $0x8] sm:$0xff] %vm6344, %v6341
    %6349 = vrot.lane.b32.xlu0 %v6051, 100
    %v6350 = vpop.permute.xlu0 %6349
    %6351 = vrot.lane.b32.xlu0 %v6054, 100
    %v6352 = vpop.permute.xlu0 %6351
    %vm6355 = vcmask 851744
    %6356 = vst.msk [vmem:[#allocation5] sm:$0xff] %vm6355, %v6350
    %6357 = vst.msk [vmem:[#allocation5 + $0x8] sm:$0xff] %vm6355, %v6352
    %6360 = vrot.lane.b32.xlu0 %v6057, 104
    %v6361 = vpop.permute.xlu0 %6360
    %6362 = vrot.lane.b32.xlu0 %v6060, 104
    %v6363 = vpop.permute.xlu0 %6362
    %vm6366 = vcmask 884544
    %6367 = vst.msk [vmem:[#allocation5] sm:$0xff] %vm6366, %v6361
    %6368 = vst.msk [vmem:[#allocation5 + $0x8] sm:$0xff] %vm6366, %v6363
    %6371 = vrot.lane.b32.xlu0 %v6063, 108
    %v6372 = vpop.permute.xlu0 %6371
    %6373 = vrot.lane.b32.xlu0 %v6066, 108
    %v6374 = vpop.permute.xlu0 %6373
    %vm6377 = vcmask 917344
    %6378 = vst.msk [vmem:[#allocation5] sm:$0xff] %vm6377, %v6372
    %6379 = vst.msk [vmem:[#allocation5 + $0x8] sm:$0xff] %vm6377, %v6374
    %6382 = vrot.lane.b32.xlu0 %v6069, 112
    %v6383 = vpop.permute.xlu0 %6382
    %6384 = vrot.lane.b32.xlu0 %v6072, 112
    %v6385 = vpop.permute.xlu0 %6384
    %vm6388 = vcmask 950144
    %6389 = vst.msk [vmem:[#allocation5] sm:$0xff] %vm6388, %v6383
    %6390 = vst.msk [vmem:[#allocation5 + $0x8] sm:$0xff] %vm6388, %v6385
    %6393 = vrot.lane.b32.xlu0 %v6075, 116
    %v6394 = vpop.permute.xlu0 %6393
    %6395 = vrot.lane.b32.xlu0 %v6078, 116
    %v6396 = vpop.permute.xlu0 %6395
    %vm6399 = vcmask 982944
    %6400 = vst.msk [vmem:[#allocation5] sm:$0xff] %vm6399, %v6394
    %6401 = vst.msk [vmem:[#allocation5 + $0x8] sm:$0xff] %vm6399, %v6396
    %v6402 = vld [vmem:[%s15] sm:$0xf]
    %v6403 = vld [vmem:[#allocation5] sm:$0xff]
    %v6404 = vld [vmem:[#allocation5 + $0x8] sm:$0xff]
    %v6406 = vsel %vm3599, %v6402, 0
    %6408 = vmatpush.msra.mxu0 0.0
    %6409 = vmatpush.msra.mxu0 0.0
    %6410 = vmatpush.msra.mxu0 0.0
    %6411 = vmatpush.msra.mxu0 0.0
    %6412 = vmatpush.msra.mxu0 0.0
    %6413 = vmatpush.msra.mxu0 0.0
    %6414 = vmatpush.msra.mxu0 0.0
    %6415 = vmatpush.msra.mxu0 0.0
    %6416 = vmatpush.msra.mxu0 0.0
    %6417 = vmatpush.msra.mxu0 0.0
    %6418 = vmatpush.msra.mxu0 0.0
    %6419 = vmatpush.msra.mxu0 0.0
    %6420 = vmatpush.msra.mxu0 0.0
    %6421 = vmatpush.msra.mxu0 0.0
    %6422 = vmatpush.msra.mxu0 %v6404
    %6423 = vmatpush.msra.mxu0 %v6403
    %6424 = vmatmul.f32.gmra.mxu0 %v6406
    %v6425 = vpop.f32.mrf.mxu0
    %v6426 = vadd.f32 0.0, %v6425
    %6427 = vdwg.mxu0
    %v6428 = vmul.f32 %v6426, %v6426
    %6430 = vrot.lane.b32.xlu0 %v6426, 104
    %v6431 = vpop.permute.xlu0 %6430
    %v6433 = vmul.f32 %v6426, %v6431
    %6435 = vrot.lane.b32.xlu0 %v6428, 48
    %v6436 = vpop.permute.xlu0 %6435
    %v6438 = vsub.f32 %v6426, %v6436
    %6440 = vrot.lane.b32.xlu0 %v6433, 96
    %v6441 = vpop.permute.xlu0 %6440
    %v6443 = vsub.f32 %v6426, %v6441
    %v6444 = vmul.f32 %v6433, 2.0
    %v6445 = vadd.f32 %v6444, 0.0001
    %v6446 = vmul.f32 %v6443, 2.0
    %v6447 = vadd.f32 %v6446, 0.0009
    %6449 = vrot.lane.b32.xlu0 %v6447, 32
    %v6450 = vpop.permute.xlu0 %6449
    %v6452 = vmul.f32 %v6445, %v6450
    %6453 = vrot.lane.b32.xlu0 %v6428, 104
    %v6454 = vpop.permute.xlu0 %6453
    %v6456 = vadd.f32 %v6428, %v6454
    %v6457 = vadd.f32 %v6456, 0.0001
    %6459 = vrot.lane.b32.xlu0 %v6438, 104
    %v6460 = vpop.permute.xlu0 %6459
    %v6462 = vadd.f32 %v6438, %v6460
    %v6463 = vadd.f32 %v6462, 0.0009
    %6465 = vrot.lane.b32.xlu0 %v6463, 80
    %v6466 = vpop.permute.xlu0 %6465
    %v6468 = vmul.f32 %v6457, %v6466
    %v6469 = vrcp.pop %v6468
    %v6470 = vmul.f32 %v6468, %v6469
    %v6471 = vsub.f32 1.0, %v6470
    %v6472 = vmul.f32 %v6469, %v6471
    %v6473 = vadd.f32 %v6469, %v6472
    %vm6474 = vweird.f32 %v6468
    %vm6475 = vweird.f32 %v6469
    %vm6476 = vmor %vm6474, %vm6475
    %v6477 = vsel %vm6476, %v6469, %v6473
    %v6478 = vand.u32 2147483647, %v6468
    %vm6479 = vcmp.eq.f32.partialorder %v6478, 8.507059e+37
    %v6480 = vand.u32 %v6468, 2147483648
    %v6481 = vor.u32 1.1754944e-38, %v6480
    %v6482 = vsel %vm6479, %v6481, %v6477
    %v6483 = vmul.f32 %v6452, %v6482
    %vm6484 = vcmask 191488
    %v6485 = vsel %vm6484, %v6483, 0.0
    %6486 = vadd.xlane.f32.xlu0 %v6485
    %v6487 = vpop.xlane.xlu0 %6486
    %v6488 = vrot.slane %v6487, 4
    %v6489 = vadd.f32 %v6487, %v6488
    %v6490 = vrot.slane %v6489, 2
    %v6491 = vadd.f32 %v6489, %v6490
    %v6492 = vrot.slane %v6491, 1
    %v6493 = vadd.f32 %v6491, %v6492
    %s6494 = vtos %v6493
    %s6495 = smul.f32 %s6494, 0.010416667
    %s6496 = smul.f32 %s6495, 0.2363
    %s6497 = smul.f32 %s5635, %s6496
    %v6498 = vld [vmem:[%s16] sm:$0xff]
    %v6499 = vld [vmem:[%s16 + $0x8] sm:$0xff]
    %v6500 = vld [vmem:[%s16 + $0x10] sm:$0xff]
    %v6501 = vld [vmem:[%s16 + $0x18] sm:$0xff]
    %v6502 = vld [vmem:[%s16 + $0x20] sm:$0xff]
    %v6503 = vld [vmem:[%s16 + $0x28] sm:$0xff]
    %v6504 = vld [vmem:[%s16 + $0x30] sm:$0xff]
    %v6505 = vld [vmem:[%s16 + $0x38] sm:$0xff]
    %v6506 = vld [vmem:[%s16 + $0x40] sm:$0xff]
    %v6507 = vld [vmem:[%s16 + $0x48] sm:$0xff]
    %v6508 = vld [vmem:[%s16 + $0x50] sm:$0xff]
    %v6509 = vld [vmem:[%s16 + $0x58] sm:$0xff]
    %v6510 = vld [vmem:[%s17] sm:$0xff]
    %v6511 = vld [vmem:[%s17 + $0x8] sm:$0xff]
    %v6512 = vld [vmem:[%s17 + $0x10] sm:$0xff]
    %v6513 = vld [vmem:[%s17 + $0x18] sm:$0xff]
    %v6514 = vld [vmem:[%s17 + $0x20] sm:$0xff]
    %v6515 = vld [vmem:[%s17 + $0x28] sm:$0xff]
    %v6516 = vld [vmem:[%s17 + $0x30] sm:$0xff]
    %v6517 = vld [vmem:[%s17 + $0x38] sm:$0xff]
    %v6518 = vld [vmem:[%s17 + $0x40] sm:$0xff]
    %v6519 = vld [vmem:[%s17 + $0x48] sm:$0xff]
    %v6520 = vld [vmem:[%s17 + $0x50] sm:$0xff]
    %v6521 = vld [vmem:[%s17 + $0x58] sm:$0xff]
    %v6522 = vmul.f32 %v6498, %v6498
    %v6523 = vmul.f32 %v6499, %v6499
    %v6524 = vmul.f32 %v6500, %v6500
    %v6525 = vmul.f32 %v6501, %v6501
    %v6526 = vmul.f32 %v6502, %v6502
    %v6527 = vmul.f32 %v6503, %v6503
    %v6528 = vmul.f32 %v6504, %v6504
    %v6529 = vmul.f32 %v6505, %v6505
    %v6530 = vmul.f32 %v6506, %v6506
    %v6531 = vmul.f32 %v6507, %v6507
    %v6532 = vmul.f32 %v6508, %v6508
    %v6533 = vmul.f32 %v6509, %v6509
    %v6534 = vmul.f32 %v6510, %v6510
    %v6535 = vmul.f32 %v6511, %v6511
    %v6536 = vmul.f32 %v6512, %v6512
    %v6537 = vmul.f32 %v6513, %v6513
    %v6538 = vmul.f32 %v6514, %v6514
    %v6539 = vmul.f32 %v6515, %v6515
    %v6540 = vmul.f32 %v6516, %v6516
    %v6541 = vmul.f32 %v6517, %v6517
    %v6542 = vmul.f32 %v6518, %v6518
    %v6543 = vmul.f32 %v6519, %v6519
    %v6544 = vmul.f32 %v6520, %v6520
    %v6545 = vmul.f32 %v6521, %v6521
    %v6546 = vmul.f32 %v6498, %v6510
    %v6547 = vmul.f32 %v6499, %v6511
    %v6548 = vmul.f32 %v6500, %v6512
    %v6549 = vmul.f32 %v6501, %v6513
    %v6550 = vmul.f32 %v6502, %v6514
    %v6551 = vmul.f32 %v6503, %v6515
    %v6552 = vmul.f32 %v6504, %v6516
    %v6553 = vmul.f32 %v6505, %v6517
    %v6554 = vmul.f32 %v6506, %v6518
    %v6555 = vmul.f32 %v6507, %v6519
    %v6556 = vmul.f32 %v6508, %v6520
    %v6557 = vmul.f32 %v6509, %v6521
    %v6558 = vld [vmem:[%s18] sm:$0xff]
    %v6559 = vld [vmem:[%s18 + $0x8] sm:$0xf]
    %vm6560 = vcmask 97280
    %v6562 = vsel %vm6560, %v6498, 0
    %v6565 = vsel %vm6560, %v6499, 0
    %v6568 = vsel %vm6560, %v6500, 0
    %v6571 = vsel %vm6560, %v6501, 0
    %v6574 = vsel %vm6560, %v6502, 0
    %v6577 = vsel %vm6560, %v6503, 0
    %v6580 = vsel %vm6560, %v6504, 0
    %v6583 = vsel %vm6560, %v6505, 0
    %v6586 = vsel %vm6560, %v6506, 0
    %v6589 = vsel %vm6560, %v6507, 0
    %v6592 = vsel %vm6560, %v6508, 0
    %v6595 = vsel %vm6560, %v6509, 0
    %v6598 = vsel %vm6560, %v6510, 0
    %v6601 = vsel %vm6560, %v6511, 0
    %v6604 = vsel %vm6560, %v6512, 0
    %v6607 = vsel %vm6560, %v6513, 0
    %v6610 = vsel %vm6560, %v6514, 0
    %v6613 = vsel %vm6560, %v6515, 0
    %v6616 = vsel %vm6560, %v6516, 0
    %v6619 = vsel %vm6560, %v6517, 0
    %v6622 = vsel %vm6560, %v6518, 0
    %v6625 = vsel %vm6560, %v6519, 0
    %v6628 = vsel %vm6560, %v6520, 0
    %v6631 = vsel %vm6560, %v6521, 0
    %v6634 = vsel %vm6560, %v6522, 0
    %v6637 = vsel %vm6560, %v6523, 0
    %v6640 = vsel %vm6560, %v6524, 0
    %v6643 = vsel %vm6560, %v6525, 0
    %v6646 = vsel %vm6560, %v6526, 0
    %v6649 = vsel %vm6560, %v6527, 0
    %v6652 = vsel %vm6560, %v6528, 0
    %v6655 = vsel %vm6560, %v6529, 0
    %v6658 = vsel %vm6560, %v6530, 0
    %v6661 = vsel %vm6560, %v6531, 0
    %v6664 = vsel %vm6560, %v6532, 0
    %v6667 = vsel %vm6560, %v6533, 0
    %v6670 = vsel %vm6560, %v6534, 0
    %v6673 = vsel %vm6560, %v6535, 0
    %v6676 = vsel %vm6560, %v6536, 0
    %v6679 = vsel %vm6560, %v6537, 0
    %v6682 = vsel %vm6560, %v6538, 0
    %v6685 = vsel %vm6560, %v6539, 0
    %v6688 = vsel %vm6560, %v6540, 0
    %v6691 = vsel %vm6560, %v6541, 0
    %v6694 = vsel %vm6560, %v6542, 0
    %v6697 = vsel %vm6560, %v6543, 0
    %v6700 = vsel %vm6560, %v6544, 0
    %v6703 = vsel %vm6560, %v6545, 0
    %v6706 = vsel %vm6560, %v6546, 0
    %v6709 = vsel %vm6560, %v6547, 0
    %v6712 = vsel %vm6560, %v6548, 0
    %v6715 = vsel %vm6560, %v6549, 0
    %v6718 = vsel %vm6560, %v6550, 0
    %v6721 = vsel %vm6560, %v6551, 0
    %v6724 = vsel %vm6560, %v6552, 0
    %v6727 = vsel %vm6560, %v6553, 0
    %v6730 = vsel %vm6560, %v6554, 0
    %v6733 = vsel %vm6560, %v6555, 0
    %v6736 = vsel %vm6560, %v6556, 0
    %v6739 = vsel %vm6560, %v6557, 0
    %vm6741 = vcmask 1043456
    %v6743 = vsel %vm6741, %v6559, 0
    %6745 = vmatpush.msra.mxu0 0.0
    %6746 = vmatpush.msra.mxu0 0.0
    %6747 = vmatpush.msra.mxu0 0.0
    %6748 = vmatpush.msra.mxu0 0.0
    %6749 = vmatpush.msra.mxu0 0.0
    %6750 = vmatpush.msra.mxu0 0.0
    %6751 = vmatpush.msra.mxu0 0.0
    %6752 = vmatpush.msra.mxu0 0.0
    %6753 = vmatpush.msra.mxu0 0.0
    %6754 = vmatpush.msra.mxu0 0.0
    %6755 = vmatpush.msra.mxu0 0.0
    %6756 = vmatpush.msra.mxu0 0.0
    %6757 = vmatpush.msra.mxu0 0.0
    %6758 = vmatpush.msra.mxu0 0.0
    %6759 = vmatpush.msra.mxu0 %v6743
    %6760 = vmatpush.msra.mxu0 %v6558
    %6761 = vmatmul.f32.gmra.mxu0 %v6562
    %v6762 = vpop.f32.mrf.mxu0
    %v6763 = vadd.f32 0.0, %v6762
    %6764 = vmatmul.f32.gmra.mxu0 %v6565
    %v6765 = vpop.f32.mrf.mxu0
    %v6766 = vadd.f32 0.0, %v6765
    %6767 = vmatmul.f32.gmra.mxu0 %v6568
    %v6768 = vpop.f32.mrf.mxu0
    %v6769 = vadd.f32 0.0, %v6768
    %6770 = vmatmul.f32.gmra.mxu0 %v6571
    %v6771 = vpop.f32.mrf.mxu0
    %v6772 = vadd.f32 0.0, %v6771
    %6773 = vmatmul.f32.gmra.mxu0 %v6574
    %v6774 = vpop.f32.mrf.mxu0
    %v6775 = vadd.f32 0.0, %v6774
    %6776 = vmatmul.f32.gmra.mxu0 %v6577
    %v6777 = vpop.f32.mrf.mxu0
    %v6778 = vadd.f32 0.0, %v6777
    %6779 = vmatmul.f32.gmra.mxu0 %v6580
    %v6780 = vpop.f32.mrf.mxu0
    %v6781 = vadd.f32 0.0, %v6780
    %6782 = vmatmul.f32.gmra.mxu0 %v6583
    %v6783 = vpop.f32.mrf.mxu0
    %v6784 = vadd.f32 0.0, %v6783
    %6785 = vmatmul.f32.gmra.mxu0 %v6586
    %v6786 = vpop.f32.mrf.mxu0
    %v6787 = vadd.f32 0.0, %v6786
    %6788 = vmatmul.f32.gmra.mxu0 %v6589
    %v6789 = vpop.f32.mrf.mxu0
    %v6790 = vadd.f32 0.0, %v6789
    %6791 = vmatmul.f32.gmra.mxu0 %v6592
    %v6792 = vpop.f32.mrf.mxu0
    %v6793 = vadd.f32 0.0, %v6792
    %6794 = vmatmul.f32.gmra.mxu0 %v6595
    %v6795 = vpop.f32.mrf.mxu0
    %v6796 = vadd.f32 0.0, %v6795
    %6797 = vmatmul.f32.gmra.mxu0 %v6598
    %v6798 = vpop.f32.mrf.mxu0
    %v6799 = vadd.f32 0.0, %v6798
    %6800 = vmatmul.f32.gmra.mxu0 %v6601
    %v6801 = vpop.f32.mrf.mxu0
    %v6802 = vadd.f32 0.0, %v6801
    %6803 = vmatmul.f32.gmra.mxu0 %v6604
    %v6804 = vpop.f32.mrf.mxu0
    %v6805 = vadd.f32 0.0, %v6804
    %6806 = vmatmul.f32.gmra.mxu0 %v6607
    %v6807 = vpop.f32.mrf.mxu0
    %v6808 = vadd.f32 0.0, %v6807
    %6809 = vmatmul.f32.gmra.mxu0 %v6610
    %v6810 = vpop.f32.mrf.mxu0
    %v6811 = vadd.f32 0.0, %v6810
    %6812 = vmatmul.f32.gmra.mxu0 %v6613
    %v6813 = vpop.f32.mrf.mxu0
    %v6814 = vadd.f32 0.0, %v6813
    %6815 = vmatmul.f32.gmra.mxu0 %v6616
    %v6816 = vpop.f32.mrf.mxu0
    %v6817 = vadd.f32 0.0, %v6816
    %6818 = vmatmul.f32.gmra.mxu0 %v6619
    %v6819 = vpop.f32.mrf.mxu0
    %v6820 = vadd.f32 0.0, %v6819
    %6821 = vmatmul.f32.gmra.mxu0 %v6622
    %v6822 = vpop.f32.mrf.mxu0
    %v6823 = vadd.f32 0.0, %v6822
    %6824 = vmatmul.f32.gmra.mxu0 %v6625
    %v6825 = vpop.f32.mrf.mxu0
    %v6826 = vadd.f32 0.0, %v6825
    %6827 = vmatmul.f32.gmra.mxu0 %v6628
    %v6828 = vpop.f32.mrf.mxu0
    %v6829 = vadd.f32 0.0, %v6828
    %6830 = vmatmul.f32.gmra.mxu0 %v6631
    %v6831 = vpop.f32.mrf.mxu0
    %v6832 = vadd.f32 0.0, %v6831
    %6833 = vmatmul.f32.gmra.mxu0 %v6634
    %v6834 = vpop.f32.mrf.mxu0
    %v6835 = vadd.f32 0.0, %v6834
    %6836 = vmatmul.f32.gmra.mxu0 %v6637
    %v6837 = vpop.f32.mrf.mxu0
    %v6838 = vadd.f32 0.0, %v6837
    %6839 = vmatmul.f32.gmra.mxu0 %v6640
    %v6840 = vpop.f32.mrf.mxu0
    %v6841 = vadd.f32 0.0, %v6840
    %6842 = vmatmul.f32.gmra.mxu0 %v6643
    %v6843 = vpop.f32.mrf.mxu0
    %v6844 = vadd.f32 0.0, %v6843
    %6845 = vmatmul.f32.gmra.mxu0 %v6646
    %v6846 = vpop.f32.mrf.mxu0
    %v6847 = vadd.f32 0.0, %v6846
    %6848 = vmatmul.f32.gmra.mxu0 %v6649
    %v6849 = vpop.f32.mrf.mxu0
    %v6850 = vadd.f32 0.0, %v6849
    %6851 = vmatmul.f32.gmra.mxu0 %v6652
    %v6852 = vpop.f32.mrf.mxu0
    %v6853 = vadd.f32 0.0, %v6852
    %6854 = vmatmul.f32.gmra.mxu0 %v6655
    %v6855 = vpop.f32.mrf.mxu0
    %v6856 = vadd.f32 0.0, %v6855
    %6857 = vmatmul.f32.gmra.mxu0 %v6658
    %v6858 = vpop.f32.mrf.mxu0
    %v6859 = vadd.f32 0.0, %v6858
    %6860 = vmatmul.f32.gmra.mxu0 %v6661
    %v6861 = vpop.f32.mrf.mxu0
    %v6862 = vadd.f32 0.0, %v6861
    %6863 = vmatmul.f32.gmra.mxu0 %v6664
    %v6864 = vpop.f32.mrf.mxu0
    %v6865 = vadd.f32 0.0, %v6864
    %6866 = vmatmul.f32.gmra.mxu0 %v6667
    %v6867 = vpop.f32.mrf.mxu0
    %v6868 = vadd.f32 0.0, %v6867
    %6869 = vmatmul.f32.gmra.mxu0 %v6670
    %v6870 = vpop.f32.mrf.mxu0
    %v6871 = vadd.f32 0.0, %v6870
    %6872 = vmatmul.f32.gmra.mxu0 %v6673
    %v6873 = vpop.f32.mrf.mxu0
    %v6874 = vadd.f32 0.0, %v6873
    %6875 = vmatmul.f32.gmra.mxu0 %v6676
    %v6876 = vpop.f32.mrf.mxu0
    %v6877 = vadd.f32 0.0, %v6876
    %6878 = vmatmul.f32.gmra.mxu0 %v6679
    %v6879 = vpop.f32.mrf.mxu0
    %v6880 = vadd.f32 0.0, %v6879
    %6881 = vmatmul.f32.gmra.mxu0 %v6682
    %v6882 = vpop.f32.mrf.mxu0
    %v6883 = vadd.f32 0.0, %v6882
    %6884 = vmatmul.f32.gmra.mxu0 %v6685
    %v6885 = vpop.f32.mrf.mxu0
    %v6886 = vadd.f32 0.0, %v6885
    %6887 = vmatmul.f32.gmra.mxu0 %v6688
    %v6888 = vpop.f32.mrf.mxu0
    %v6889 = vadd.f32 0.0, %v6888
    %6890 = vmatmul.f32.gmra.mxu0 %v6691
    %v6891 = vpop.f32.mrf.mxu0
    %v6892 = vadd.f32 0.0, %v6891
    %6893 = vmatmul.f32.gmra.mxu0 %v6694
    %v6894 = vpop.f32.mrf.mxu0
    %v6895 = vadd.f32 0.0, %v6894
    %6896 = vmatmul.f32.gmra.mxu0 %v6697
    %v6897 = vpop.f32.mrf.mxu0
    %v6898 = vadd.f32 0.0, %v6897
    %6899 = vmatmul.f32.gmra.mxu0 %v6700
    %v6900 = vpop.f32.mrf.mxu0
    %v6901 = vadd.f32 0.0, %v6900
    %6902 = vmatmul.f32.gmra.mxu0 %v6703
    %v6903 = vpop.f32.mrf.mxu0
    %v6904 = vadd.f32 0.0, %v6903
    %6905 = vmatmul.f32.gmra.mxu0 %v6706
    %v6906 = vpop.f32.mrf.mxu0
    %v6907 = vadd.f32 0.0, %v6906
    %6908 = vmatmul.f32.gmra.mxu0 %v6709
    %v6909 = vpop.f32.mrf.mxu0
    %v6910 = vadd.f32 0.0, %v6909
    %6911 = vmatmul.f32.gmra.mxu0 %v6712
    %v6912 = vpop.f32.mrf.mxu0
    %v6913 = vadd.f32 0.0, %v6912
    %6914 = vmatmul.f32.gmra.mxu0 %v6715
    %v6915 = vpop.f32.mrf.mxu0
    %v6916 = vadd.f32 0.0, %v6915
    %6917 = vmatmul.f32.gmra.mxu0 %v6718
    %v6918 = vpop.f32.mrf.mxu0
    %v6919 = vadd.f32 0.0, %v6918
    %6920 = vmatmul.f32.gmra.mxu0 %v6721
    %v6921 = vpop.f32.mrf.mxu0
    %v6922 = vadd.f32 0.0, %v6921
    %6923 = vmatmul.f32.gmra.mxu0 %v6724
    %v6924 = vpop.f32.mrf.mxu0
    %v6925 = vadd.f32 0.0, %v6924
    %6926 = vmatmul.f32.gmra.mxu0 %v6727
    %v6927 = vpop.f32.mrf.mxu0
    %v6928 = vadd.f32 0.0, %v6927
    %6929 = vmatmul.f32.gmra.mxu0 %v6730
    %v6930 = vpop.f32.mrf.mxu0
    %v6931 = vadd.f32 0.0, %v6930
    %6932 = vmatmul.f32.gmra.mxu0 %v6733
    %v6933 = vpop.f32.mrf.mxu0
    %v6934 = vadd.f32 0.0, %v6933
    %6935 = vmatmul.f32.gmra.mxu0 %v6736
    %v6936 = vpop.f32.mrf.mxu0
    %v6937 = vadd.f32 0.0, %v6936
    %6938 = vmatmul.f32.gmra.mxu0 %v6739
    %v6939 = vpop.f32.mrf.mxu0
    %v6940 = vadd.f32 0.0, %v6939
    %6941 = vdwg.mxu0
    %vm6942 = vcmask 15360
    %6943 = vst.msk [vmem:[#allocation6] sm:$0xff] %vm6942, %v6763
    %6944 = vst.msk [vmem:[#allocation6 + $0x8] sm:$0xff] %vm6942, %v6766
    %6947 = vrot.lane.b32.xlu0 %v6769, 2
    %v6948 = vpop.permute.xlu0 %6947
    %6949 = vrot.lane.b32.xlu0 %v6772, 2
    %v6950 = vpop.permute.xlu0 %6949
    %vm6953 = vcmask 31760
    %6954 = vst.msk [vmem:[#allocation6] sm:$0xff] %vm6953, %v6948
    %6955 = vst.msk [vmem:[#allocation6 + $0x8] sm:$0xff] %vm6953, %v6950
    %6958 = vrot.lane.b32.xlu0 %v6775, 4
    %v6959 = vpop.permute.xlu0 %6958
    %6960 = vrot.lane.b32.xlu0 %v6778, 4
    %v6961 = vpop.permute.xlu0 %6960
    %vm6964 = vcmask 48160
    %6965 = vst.msk [vmem:[#allocation6] sm:$0xff] %vm6964, %v6959
    %6966 = vst.msk [vmem:[#allocation6 + $0x8] sm:$0xff] %vm6964, %v6961
    %6969 = vrot.lane.b32.xlu0 %v6781, 6
    %v6970 = vpop.permute.xlu0 %6969
    %6971 = vrot.lane.b32.xlu0 %v6784, 6
    %v6972 = vpop.permute.xlu0 %6971
    %vm6975 = vcmask 64560
    %6976 = vst.msk [vmem:[#allocation6] sm:$0xff] %vm6975, %v6970
    %6977 = vst.msk [vmem:[#allocation6 + $0x8] sm:$0xff] %vm6975, %v6972
    %6980 = vrot.lane.b32.xlu0 %v6787, 8
    %v6981 = vpop.permute.xlu0 %6980
    %6982 = vrot.lane.b32.xlu0 %v6790, 8
    %v6983 = vpop.permute.xlu0 %6982
    %vm6986 = vcmask 80960
    %6987 = vst.msk [vmem:[#allocation6] sm:$0xff] %vm6986, %v6981
    %6988 = vst.msk [vmem:[#allocation6 + $0x8] sm:$0xff] %vm6986, %v6983
    %6991 = vrot.lane.b32.xlu0 %v6793, 10
    %v6992 = vpop.permute.xlu0 %6991
    %6993 = vrot.lane.b32.xlu0 %v6796, 10
    %v6994 = vpop.permute.xlu0 %6993
    %vm6997 = vcmask 97360
    %6998 = vst.msk [vmem:[#allocation6] sm:$0xff] %vm6997, %v6992
    %6999 = vst.msk [vmem:[#allocation6 + $0x8] sm:$0xff] %vm6997, %v6994
    %7002 = vrot.lane.b32.xlu0 %v6799, 12
    %v7003 = vpop.permute.xlu0 %7002
    %7004 = vrot.lane.b32.xlu0 %v6802, 12
    %v7005 = vpop.permute.xlu0 %7004
    %vm7008 = vcmask 113760
    %7009 = vst.msk [vmem:[#allocation6] sm:$0xff] %vm7008, %v7003
    %7010 = vst.msk [vmem:[#allocation6 + $0x8] sm:$0xff] %vm7008, %v7005
    %7013 = vrot.lane.b32.xlu0 %v6805, 14
    %v7014 = vpop.permute.xlu0 %7013
    %7015 = vrot.lane.b32.xlu0 %v6808, 14
    %v7016 = vpop.permute.xlu0 %7015
    %vm7019 = vcmask 130160
    %7020 = vst.msk [vmem:[#allocation6] sm:$0xff] %vm7019, %v7014
    %7021 = vst.msk [vmem:[#allocation6 + $0x8] sm:$0xff] %vm7019, %v7016
    %7024 = vrot.lane.b32.xlu0 %v6811, 16
    %v7025 = vpop.permute.xlu0 %7024
    %7026 = vrot.lane.b32.xlu0 %v6814, 16
    %v7027 = vpop.permute.xlu0 %7026
    %vm7030 = vcmask 146560
    %7031 = vst.msk [vmem:[#allocation6] sm:$0xff] %vm7030, %v7025
    %7032 = vst.msk [vmem:[#allocation6 + $0x8] sm:$0xff] %vm7030, %v7027
    %7035 = vrot.lane.b32.xlu0 %v6817, 18
    %v7036 = vpop.permute.xlu0 %7035
    %7037 = vrot.lane.b32.xlu0 %v6820, 18
    %v7038 = vpop.permute.xlu0 %7037
    %vm7041 = vcmask 162960
    %7042 = vst.msk [vmem:[#allocation6] sm:$0xff] %vm7041, %v7036
    %7043 = vst.msk [vmem:[#allocation6 + $0x8] sm:$0xff] %vm7041, %v7038
    %7046 = vrot.lane.b32.xlu0 %v6823, 20
    %v7047 = vpop.permute.xlu0 %7046
    %7048 = vrot.lane.b32.xlu0 %v6826, 20
    %v7049 = vpop.permute.xlu0 %7048
    %vm7052 = vcmask 179360
    %7053 = vst.msk [vmem:[#allocation6] sm:$0xff] %vm7052, %v7047
    %7054 = vst.msk [vmem:[#allocation6 + $0x8] sm:$0xff] %vm7052, %v7049
    %7057 = vrot.lane.b32.xlu0 %v6829, 22
    %v7058 = vpop.permute.xlu0 %7057
    %7059 = vrot.lane.b32.xlu0 %v6832, 22
    %v7060 = vpop.permute.xlu0 %7059
    %vm7063 = vcmask 195760
    %7064 = vst.msk [vmem:[#allocation6] sm:$0xff] %vm7063, %v7058
    %7065 = vst.msk [vmem:[#allocation6 + $0x8] sm:$0xff] %vm7063, %v7060
    %7068 = vrot.lane.b32.xlu0 %v6835, 24
    %v7069 = vpop.permute.xlu0 %7068
    %7070 = vrot.lane.b32.xlu0 %v6838, 24
    %v7071 = vpop.permute.xlu0 %7070
    %vm7074 = vcmask 212160
    %7075 = vst.msk [vmem:[#allocation6] sm:$0xff] %vm7074, %v7069
    %7076 = vst.msk [vmem:[#allocation6 + $0x8] sm:$0xff] %vm7074, %v7071
    %7079 = vrot.lane.b32.xlu0 %v6841, 26
    %v7080 = vpop.permute.xlu0 %7079
    %7081 = vrot.lane.b32.xlu0 %v6844, 26
    %v7082 = vpop.permute.xlu0 %7081
    %vm7085 = vcmask 228560
    %7086 = vst.msk [vmem:[#allocation6] sm:$0xff] %vm7085, %v7080
    %7087 = vst.msk [vmem:[#allocation6 + $0x8] sm:$0xff] %vm7085, %v7082
    %7090 = vrot.lane.b32.xlu0 %v6847, 28
    %v7091 = vpop.permute.xlu0 %7090
    %7092 = vrot.lane.b32.xlu0 %v6850, 28
    %v7093 = vpop.permute.xlu0 %7092
    %vm7096 = vcmask 244960
    %7097 = vst.msk [vmem:[#allocation6] sm:$0xff] %vm7096, %v7091
    %7098 = vst.msk [vmem:[#allocation6 + $0x8] sm:$0xff] %vm7096, %v7093
    %7101 = vrot.lane.b32.xlu0 %v6853, 30
    %v7102 = vpop.permute.xlu0 %7101
    %7103 = vrot.lane.b32.xlu0 %v6856, 30
    %v7104 = vpop.permute.xlu0 %7103
    %vm7107 = vcmask 261360
    %7108 = vst.msk [vmem:[#allocation6] sm:$0xff] %vm7107, %v7102
    %7109 = vst.msk [vmem:[#allocation6 + $0x8] sm:$0xff] %vm7107, %v7104
    %7112 = vrot.lane.b32.xlu0 %v6859, 32
    %v7113 = vpop.permute.xlu0 %7112
    %7114 = vrot.lane.b32.xlu0 %v6862, 32
    %v7115 = vpop.permute.xlu0 %7114
    %vm7118 = vcmask 277760
    %7119 = vst.msk [vmem:[#allocation6] sm:$0xff] %vm7118, %v7113
    %7120 = vst.msk [vmem:[#allocation6 + $0x8] sm:$0xff] %vm7118, %v7115
    %7123 = vrot.lane.b32.xlu0 %v6865, 34
    %v7124 = vpop.permute.xlu0 %7123
    %7125 = vrot.lane.b32.xlu0 %v6868, 34
    %v7126 = vpop.permute.xlu0 %7125
    %vm7129 = vcmask 294160
    %7130 = vst.msk [vmem:[#allocation6] sm:$0xff] %vm7129, %v7124
    %7131 = vst.msk [vmem:[#allocation6 + $0x8] sm:$0xff] %vm7129, %v7126
    %7134 = vrot.lane.b32.xlu0 %v6871, 36
    %v7135 = vpop.permute.xlu0 %7134
    %7136 = vrot.lane.b32.xlu0 %v6874, 36
    %v7137 = vpop.permute.xlu0 %7136
    %vm7140 = vcmask 310560
    %7141 = vst.msk [vmem:[#allocation6] sm:$0xff] %vm7140, %v7135
    %7142 = vst.msk [vmem:[#allocation6 + $0x8] sm:$0xff] %vm7140, %v7137
    %7145 = vrot.lane.b32.xlu0 %v6877, 38
    %v7146 = vpop.permute.xlu0 %7145
    %7147 = vrot.lane.b32.xlu0 %v6880, 38
    %v7148 = vpop.permute.xlu0 %7147
    %vm7151 = vcmask 326960
    %7152 = vst.msk [vmem:[#allocation6] sm:$0xff] %vm7151, %v7146
    %7153 = vst.msk [vmem:[#allocation6 + $0x8] sm:$0xff] %vm7151, %v7148
    %7156 = vrot.lane.b32.xlu0 %v6883, 40
    %v7157 = vpop.permute.xlu0 %7156
    %7158 = vrot.lane.b32.xlu0 %v6886, 40
    %v7159 = vpop.permute.xlu0 %7158
    %vm7162 = vcmask 343360
    %7163 = vst.msk [vmem:[#allocation6] sm:$0xff] %vm7162, %v7157
    %7164 = vst.msk [vmem:[#allocation6 + $0x8] sm:$0xff] %vm7162, %v7159
    %7167 = vrot.lane.b32.xlu0 %v6889, 42
    %v7168 = vpop.permute.xlu0 %7167
    %7169 = vrot.lane.b32.xlu0 %v6892, 42
    %v7170 = vpop.permute.xlu0 %7169
    %vm7173 = vcmask 359760
    %7174 = vst.msk [vmem:[#allocation6] sm:$0xff] %vm7173, %v7168
    %7175 = vst.msk [vmem:[#allocation6 + $0x8] sm:$0xff] %vm7173, %v7170
    %7178 = vrot.lane.b32.xlu0 %v6895, 44
    %v7179 = vpop.permute.xlu0 %7178
    %7180 = vrot.lane.b32.xlu0 %v6898, 44
    %v7181 = vpop.permute.xlu0 %7180
    %vm7184 = vcmask 376160
    %7185 = vst.msk [vmem:[#allocation6] sm:$0xff] %vm7184, %v7179
    %7186 = vst.msk [vmem:[#allocation6 + $0x8] sm:$0xff] %vm7184, %v7181
    %7189 = vrot.lane.b32.xlu0 %v6901, 46
    %v7190 = vpop.permute.xlu0 %7189
    %7191 = vrot.lane.b32.xlu0 %v6904, 46
    %v7192 = vpop.permute.xlu0 %7191
    %vm7195 = vcmask 392560
    %7196 = vst.msk [vmem:[#allocation6] sm:$0xff] %vm7195, %v7190
    %7197 = vst.msk [vmem:[#allocation6 + $0x8] sm:$0xff] %vm7195, %v7192
    %7200 = vrot.lane.b32.xlu0 %v6907, 48
    %v7201 = vpop.permute.xlu0 %7200
    %7202 = vrot.lane.b32.xlu0 %v6910, 48
    %v7203 = vpop.permute.xlu0 %7202
    %vm7206 = vcmask 408960
    %7207 = vst.msk [vmem:[#allocation6] sm:$0xff] %vm7206, %v7201
    %7208 = vst.msk [vmem:[#allocation6 + $0x8] sm:$0xff] %vm7206, %v7203
    %7211 = vrot.lane.b32.xlu0 %v6913, 50
    %v7212 = vpop.permute.xlu0 %7211
    %7213 = vrot.lane.b32.xlu0 %v6916, 50
    %v7214 = vpop.permute.xlu0 %7213
    %vm7217 = vcmask 425360
    %7218 = vst.msk [vmem:[#allocation6] sm:$0xff] %vm7217, %v7212
    %7219 = vst.msk [vmem:[#allocation6 + $0x8] sm:$0xff] %vm7217, %v7214
    %7222 = vrot.lane.b32.xlu0 %v6919, 52
    %v7223 = vpop.permute.xlu0 %7222
    %7224 = vrot.lane.b32.xlu0 %v6922, 52
    %v7225 = vpop.permute.xlu0 %7224
    %vm7228 = vcmask 441760
    %7229 = vst.msk [vmem:[#allocation6] sm:$0xff] %vm7228, %v7223
    %7230 = vst.msk [vmem:[#allocation6 + $0x8] sm:$0xff] %vm7228, %v7225
    %7233 = vrot.lane.b32.xlu0 %v6925, 54
    %v7234 = vpop.permute.xlu0 %7233
    %7235 = vrot.lane.b32.xlu0 %v6928, 54
    %v7236 = vpop.permute.xlu0 %7235
    %vm7239 = vcmask 458160
    %7240 = vst.msk [vmem:[#allocation6] sm:$0xff] %vm7239, %v7234
    %7241 = vst.msk [vmem:[#allocation6 + $0x8] sm:$0xff] %vm7239, %v7236
    %7244 = vrot.lane.b32.xlu0 %v6931, 56
    %v7245 = vpop.permute.xlu0 %7244
    %7246 = vrot.lane.b32.xlu0 %v6934, 56
    %v7247 = vpop.permute.xlu0 %7246
    %vm7250 = vcmask 474560
    %7251 = vst.msk [vmem:[#allocation6] sm:$0xff] %vm7250, %v7245
    %7252 = vst.msk [vmem:[#allocation6 + $0x8] sm:$0xff] %vm7250, %v7247
    %7255 = vrot.lane.b32.xlu0 %v6937, 58
    %v7256 = vpop.permute.xlu0 %7255
    %7257 = vrot.lane.b32.xlu0 %v6940, 58
    %v7258 = vpop.permute.xlu0 %7257
    %vm7261 = vcmask 490960
    %7262 = vst.msk [vmem:[#allocation6] sm:$0xff] %vm7261, %v7256
    %7263 = vst.msk [vmem:[#allocation6 + $0x8] sm:$0xff] %vm7261, %v7258
    %v7264 = vld [vmem:[%s19] sm:$0x3]
    %v7265 = vld [vmem:[#allocation6] sm:$0xff]
    %v7266 = vld [vmem:[#allocation6 + $0x8] sm:$0xff]
    %v7268 = vsel %vm3599, %v7264, 0
    %7270 = vmatpush.msra.mxu0 0.0
    %7271 = vmatpush.msra.mxu0 0.0
    %7272 = vmatpush.msra.mxu0 0.0
    %7273 = vmatpush.msra.mxu0 0.0
    %7274 = vmatpush.msra.mxu0 0.0
    %7275 = vmatpush.msra.mxu0 0.0
    %7276 = vmatpush.msra.mxu0 0.0
    %7277 = vmatpush.msra.mxu0 0.0
    %7278 = vmatpush.msra.mxu0 0.0
    %7279 = vmatpush.msra.mxu0 0.0
    %7280 = vmatpush.msra.mxu0 0.0
    %7281 = vmatpush.msra.mxu0 0.0
    %7282 = vmatpush.msra.mxu0 0.0
    %7283 = vmatpush.msra.mxu0 0.0
    %7284 = vmatpush.msra.mxu0 %v7266
    %7285 = vmatpush.msra.mxu0 %v7265
    %7286 = vmatmul.f32.gmra.mxu0 %v7268
    %v7287 = vpop.f32.mrf.mxu0
    %v7288 = vadd.f32 0.0, %v7287
    %7289 = vdwg.mxu0
    %v7290 = vmul.f32 %v7288, %v7288
    %7292 = vrot.lane.b32.xlu0 %v7288, 116
    %v7293 = vpop.permute.xlu0 %7292
    %v7295 = vmul.f32 %v7288, %v7293
    %7297 = vrot.lane.b32.xlu0 %v7290, 24
    %v7298 = vpop.permute.xlu0 %7297
    %v7300 = vsub.f32 %v7288, %v7298
    %7302 = vrot.lane.b32.xlu0 %v7295, 48
    %v7303 = vpop.permute.xlu0 %7302
    %v7305 = vsub.f32 %v7288, %v7303
    %v7306 = vmul.f32 %v7295, 2.0
    %v7307 = vadd.f32 %v7306, 0.0001
    %v7308 = vmul.f32 %v7305, 2.0
    %v7309 = vadd.f32 %v7308, 0.0009
    %7311 = vrot.lane.b32.xlu0 %v7309, 80
    %v7312 = vpop.permute.xlu0 %7311
    %v7314 = vmul.f32 %v7307, %v7312
    %7315 = vrot.lane.b32.xlu0 %v7290, 116
    %v7316 = vpop.permute.xlu0 %7315
    %v7318 = vadd.f32 %v7290, %v7316
    %v7319 = vadd.f32 %v7318, 0.0001
    %7321 = vrot.lane.b32.xlu0 %v7300, 116
    %v7322 = vpop.permute.xlu0 %7321
    %v7324 = vadd.f32 %v7300, %v7322
    %v7325 = vadd.f32 %v7324, 0.0009
    %7327 = vrot.lane.b32.xlu0 %v7325, 104
    %v7328 = vpop.permute.xlu0 %7327
    %v7330 = vmul.f32 %v7319, %v7328
    %v7331 = vrcp.pop %v7330
    %v7332 = vmul.f32 %v7330, %v7331
    %v7333 = vsub.f32 1.0, %v7332
    %v7334 = vmul.f32 %v7331, %v7333
    %v7335 = vadd.f32 %v7331, %v7334
    %vm7336 = vweird.f32 %v7330
    %vm7337 = vweird.f32 %v7331
    %vm7338 = vmor %vm7336, %vm7337
    %v7339 = vsel %vm7338, %v7331, %v7335
    %v7340 = vand.u32 2147483647, %v7330
    %vm7341 = vcmp.eq.f32.partialorder %v7340, 8.507059e+37
    %v7342 = vand.u32 %v7330, 2147483648
    %v7343 = vor.u32 1.1754944e-38, %v7342
    %v7344 = vsel %vm7341, %v7343, %v7339
    %v7345 = vmul.f32 %v7314, %v7344
    %vm7346 = vcmask 91136
    %v7347 = vsel %vm7346, %v7345, 0.0
    %7348 = vadd.xlane.f32.xlu0 %v7347
    %v7349 = vpop.xlane.xlu0 %7348
    %v7350 = vrot.slane %v7349, 4
    %v7351 = vadd.f32 %v7349, %v7350
    %v7352 = vrot.slane %v7351, 2
    %v7353 = vadd.f32 %v7351, %v7352
    %v7354 = vrot.slane %v7353, 1
    %v7355 = vadd.f32 %v7353, %v7354
    %s7356 = vtos %v7355
    %s7357 = smul.f32 %s7356, 0.041666668
    %s7358 = smul.f32 %s7357, 0.1333
    %s7359 = smul.f32 %s6497, %s7358
    %s7360 = scalar_lea.smem [#allocation7], 0
    %7361 = sst [smem:[%s7360]] %s7359
    // Predicated region
    $region82: #{ms_ssim.1} parent=1 // pred_check
      _
    $region83: #{ms_ssim.1} parent=1 // pred_check_branch
      %7363 = sbr.rel (0) target = $region85
    $region84: #{ms_ssim.1} parent=1 // pred_region
      %7365 = vsyncadd [#allocation8], 0
      %s7367 = sshll.u32 %s20, 4
      %s7368 = int_to_ptr.hbm [resolvable:$true] %s7367
      %7370 = dma.smem_to_hbm [#allocation7], 16, %s7368, [#allocation8]
    $region85: #{ms_ssim.1} parent=1 // pred_fallthru
      _
    // Predicated region
    $region86: #{ms_ssim.1} parent=1 // pred_check
      _
    $region87: #{ms_ssim.1} parent=1 // pred_check_branch
      %7372 = sbr.rel (0) target = $region89
    $region88: #{ms_ssim.1} parent=1 // pred_region
      %7374 = dma.done [#allocation8], 16
    $region89: #{ms_ssim.1} parent=1 // pred_fallthru
      _
    %7375 = sfence
    %7376 = vsyncpa [#allocation8], 1

</llo_original>
